<compile_context>
chip_gen: v6e
topology: v6e:2x2x1
jax: 0.10.0
libtpu: 0.0.40
codegen_flags: <defaults>
</compile_context>

<pallas_src>
import functools

import jax
import jax.numpy as jnp
from jax import lax
from jax.experimental import pallas as pl
from jax.experimental.pallas import tpu as pltpu


# ----------------------------- in-kernel helpers -----------------------------

def _dot(a, b):
    """bf16 x bf16 -> f32 MXU matmul (no-op cast if already bf16)."""
    return jnp.dot(a.astype(jnp.bfloat16), b.astype(jnp.bfloat16),
                   preferred_element_type=jnp.float32)


def _conv3x3_relu(x, w_ref, mask_ref, b, H, W):
    """3x3 conv (stride 1, zero pad 1) + bias + ReLU on a (H*W, Cin) slab.

    x:        (H*W, Cin) f32, rows in (h, w) row-major order.
    w_ref:    (9, Cin, Cout) bf16 ref, tap-major (dy, dx) i.e. flattened HWIO.
    mask_ref: (9, H*W, 1) f32 ref, precomputed zero-padding boundary masks.
    b:        (1, Cout) f32.
    Returns (H*W, Cout) f32.
    """
    HW = H * W
    acc = None
    t = 0
    for dy in (-1, 0, 1):
        for dx in (-1, 0, 1):
            s = dy * W + dx
            if s == 0:
                tap = x
            else:
                # tap[r] = x[r + s]; wrapped / out-of-image rows are zeroed
                # by the precomputed boundary mask.
                tap = pltpu.roll(x, (-s) % HW, axis=0) * mask_ref[t]
            d = _dot(tap, w_ref[t])
            acc = d if acc is None else acc + d
            t += 1
    return jnp.maximum(acc + b, 0.0)


def _maxpool2x2(y, sel_ref, H, W):
    """2x2 / stride-2 max pool on a (H*W, C) row-major slab -> (H*W/4, C).

    sel_ref: (H*W/4, H*W) bf16 precomputed 0/1 anchor-row selection matrix.
    """
    HW = H * W
    # After these two steps row r holds the max over the 2x2 window anchored at r.
    m = jnp.maximum(y, pltpu.roll(y, HW - 1, axis=0))   # pair along w
    m = jnp.maximum(m, pltpu.roll(m, HW - W, axis=0))   # pair along h
    # Compact the (2*ho, 2*wo) anchor rows with a tiny 0/1 selection matmul.
    return jnp.dot(sel_ref[...], m.astype(jnp.bfloat16),
                   preferred_element_type=jnp.float32)


# ----------------------------- fused kernel -----------------------------

def _hybrid_kernel(img_ref, tab_ref,
                   w1_ref, b1_ref, m1_ref,
                   w2_ref, b2_ref, m2_ref,
                   w3_ref, b3_ref, m3_ref,
                   sel1_ref, sel2_ref,
                   wi_ref, bi_ref, wc_ref, bc_ref,
                   wfi_ref, wfc_ref, bfu_ref, wo_ref, bo_ref,
                   out_ref, *, H, W):
    # ---- conv tower (one sample per grid step, fully VMEM-resident) ----
    x = img_ref[0]                                              # (H*W, 3) f32
    x = _conv3x3_relu(x, w1_ref, m1_ref, b1_ref[...], H, W)     # (H*W, 16)
    x = _maxpool2x2(x, sel1_ref, H, W)
    H2, W2 = H // 2, W // 2
    x = _conv3x3_relu(x, w2_ref, m2_ref, b2_ref[...], H2, W2)   # (H2*W2, 32)
    x = _maxpool2x2(x, sel2_ref, H2, W2)
    H3, W3 = H2 // 2, W2 // 2
    x = _conv3x3_relu(x, w3_ref, m3_ref, b3_ref[...], H3, W3)   # (H3*W3, 64)
    # AdaptiveAvgPool2d((1, 1)) == row mean of the (H3*W3, 64) slab.
    pooled = jnp.sum(x, axis=0, keepdims=True) * (1.0 / float(H3 * W3))  # (1, 64)

    # ---- fusion head ----
    x_img = _dot(pooled, wi_ref[...]) + bi_ref[...]             # (1, F)
    x_csv = _dot(tab_ref[0], wc_ref[...]) + bc_ref[...]         # (1, F)
    # cat([x_img, x_csv], dim=1) @ Wf == x_img @ Wf[:F] + x_csv @ Wf[F:]
    h = _dot(x_img, wfi_ref[...]) + _dot(x_csv, wfc_ref[...]) + bfu_ref[...]
    h = jnp.maximum(h, 0.0)
    out_ref[0] = (_dot(h, wo_ref[...]) + bo_ref[...]).astype(out_ref.dtype)


# ----------------------------- shape-only constants -----------------------------

def _conv_masks(H, W):
    """(9, H*W, 1) f32 boundary masks for the 3x3 taps (tap-major dy, dx)."""
    r = jnp.arange(H * W)
    h, w = r // W, r % W
    rows = []
    for dy in (-1, 0, 1):
        for dx in (-1, 0, 1):
            v = ((h + dy >= 0) & (h + dy < H) & (w + dx >= 0) & (w + dx < W))
            rows.append(v.astype(jnp.float32))
    return jnp.stack(rows, 0).reshape(9, H * W, 1)


def _pool_sel(H, W):
    """(H*W/4, H*W) bf16 0/1 matrix selecting the 2x2-pool anchor rows."""
    Ho, Wo = H // 2, W // 2
    k = jnp.arange(Ho * Wo)[:, None]
    c = jnp.arange(H * W)[None, :]
    anchor = 2 * (k // Wo) * W + 2 * (k % Wo)
    return (c == anchor).astype(jnp.bfloat16)


# ----------------------------- wrapper -----------------------------

def hybridnet_forward(image_nchw, tabular, params):
    N, Cin, H, W = image_nchw.shape
    csv_dim = tabular.shape[-1]
    F = params["w_img"].shape[1]
    Hd = params["wf_img"].shape[1]
    bf16 = jnp.bfloat16

    # NCHW -> (N, H*W, C) row-major slab; channels on the lane dim.
    img = jnp.transpose(image_nchw, (0, 2, 3, 1)).reshape(N, H * W, Cin)
    tab = tabular.reshape(N, 1, csv_dim)

    H2, W2, H3, W3 = H // 2, W // 2, H // 4, W // 4
    # Shape-only constants: constant-folded by XLA, DMA'd into VMEM exactly once
    # (constant index_map => no re-fetch across grid steps).
    m1, m2, m3 = _conv_masks(H, W), _conv_masks(H2, W2), _conv_masks(H3, W3)
    sel1, sel2 = _pool_sel(H, W), _pool_sel(H2, W2)

    def per_sample(shape):
        nd = len(shape)
        return pl.BlockSpec((1,) + shape, lambda n: (n,) + (0,) * nd)

    def shared(shape):
        nd = len(shape)
        return pl.BlockSpec(shape, lambda n: (0,) * nd)

    c1, c2, c3 = 16, 32, 64
    in_specs = [
        per_sample((H * W, Cin)),            # image slab
        per_sample((1, csv_dim)),            # tabular row
        shared((9, Cin, c1)), shared((1, c1)), shared((9, H * W, 1)),
        shared((9, c1, c2)), shared((1, c2)), shared((9, H2 * W2, 1)),
        shared((9, c2, c3)), shared((1, c3)), shared((9, H3 * W3, 1)),
        shared((H2 * W2, H * W)), shared((H3 * W3, H2 * W2)),
        shared((c3, F)), shared((1, F)),
        shared((csv_dim, F)), shared((1, F)),
        shared((F, Hd)), shared((F, Hd)), shared((1, Hd)),
        shared((Hd, 2)), shared((1, 2)),
    ]

    out = pl.pallas_call(
        functools.partial(_hybrid_kernel, H=H, W=W),
        out_shape=jax.ShapeDtypeStruct((N, 1, 2), jnp.float32),
        grid=(N,),
        in_specs=in_specs,
        out_specs=pl.BlockSpec((1, 1, 2), lambda n: (n, 0, 0)),
        compiler_params=pltpu.CompilerParams(
            dimension_semantics=("parallel",)),   # 2 TCs on v7x; harmless on v5e/v6e
    )(img, tab,
      params["conv1_w"].astype(bf16), params["conv1_b"], m1,
      params["conv2_w"].astype(bf16), params["conv2_b"], m2,
      params["conv3_w"].astype(bf16), params["conv3_b"], m3,
      sel1, sel2,
      params["w_img"].astype(bf16), params["b_img"],
      params["w_csv"].astype(bf16), params["b_csv"],
      params["wf_img"].astype(bf16), params["wf_csv"].astype(bf16), params["bf"],
      params["wout"].astype(bf16), params["bout"])
    return out.reshape(N, 2)


# ----------------------------- params & reference -----------------------------

def init_params(csv_input_dim, image_feature_dim, fusion_hidden_dim, key):
    ks = jax.random.split(key, 15)
    F, Hd = image_feature_dim, fusion_hidden_dim

    def w(k, shape, fan_in):
        return jax.random.normal(k, shape, jnp.float32) / jnp.sqrt(float(fan_in))

    return {
        "conv1_w": w(ks[0], (9, 3, 16), 27), "conv1_b": w(ks[1], (1, 16), 27),
        "conv2_w": w(ks[2], (9, 16, 32), 144), "conv2_b": w(ks[3], (1, 32), 144),
        "conv3_w": w(ks[4], (9, 32, 64), 288), "conv3_b": w(ks[5], (1, 64), 288),
        "w_img": w(ks[6], (64, F), 64), "b_img": w(ks[7], (1, F), 64),
        "w_csv": w(ks[8], (csv_input_dim, F), csv_input_dim),
        "b_csv": w(ks[9], (1, F), csv_input_dim),
        "wf_img": w(ks[10], (F, Hd), 2 * F), "wf_csv": w(ks[11], (F, Hd), 2 * F),
        "bf": w(ks[12], (1, Hd), 2 * F),
        "wout": w(ks[13], (Hd, 2), Hd), "bout": w(ks[14], (1, 2), Hd),
    }


def reference_forward(image_nchw, tabular, params):
    """Pure-JAX reference mirroring the PyTorch forward (same bf16 MXU numerics)."""
    x = jnp.transpose(image_nchw, (0, 2, 3, 1))  # NHWC

    def conv(x, w9, b):
        cin, cout = w9.shape[1], w9.shape[2]
        w_hwio = w9.reshape(3, 3, cin, cout).astype(jnp.bfloat16)
        y = lax.conv_general_dilated(
            x.astype(jnp.bfloat16), w_hwio, window_strides=(1, 1), padding="SAME",
            dimension_numbers=("NHWC", "HWIO", "NHWC"),
            preferred_element_type=jnp.float32)
        return jnp.maximum(y + b.reshape(1, 1, 1, cout), 0.0)

    def pool(x):
        return lax.reduce_window(x, -jnp.inf, lax.max, (1, 2, 2, 1), (1, 2, 2, 1), "VALID")

    def dot(a, b):
        return jnp.dot(a.astype(jnp.bfloat16), b.astype(jnp.bfloat16),
                       preferred_element_type=jnp.float32)

    x = pool(conv(x, params["conv1_w"], params["conv1_b"]))
    x = pool(conv(x, params["conv2_w"], params["conv2_b"]))
    x = conv(x, params["conv3_w"], params["conv3_b"])
    x = jnp.mean(x, axis=(1, 2))                               # AdaptiveAvgPool2d((1,1))
    x_img = dot(x, params["w_img"]) + params["b_img"]
    x_csv = dot(tabular, params["w_csv"]) + params["b_csv"]
    h = jnp.maximum(dot(x_img, params["wf_img"]) + dot(x_csv, params["wf_csv"])
                    + params["bf"], 0.0)
    return dot(h, params["wout"]) + params["bout"]


# ----------------------------- main -----------------------------

if __name__ == "__main__":
    import numpy as np

    csv_input_dim, image_feature_dim, fusion_hidden_dim = 8, 32, 32
    key = jax.random.PRNGKey(0)
    k_img, k_csv, k_par = jax.random.split(key, 3)

    image = jax.random.normal(k_img, (2, 3, 16, 16), jnp.float32)   # NCHW, like PyTorch
    tabular = jax.random.normal(k_csv, (2, csv_input_dim), jnp.float32)
    params = init_params(csv_input_dim, image_feature_dim, fusion_hidden_dim, k_par)

    logits = jax.block_until_ready(jax.jit(hybridnet_forward)(image, tabular, params))
    ref = jax.block_until_ready(reference_forward(image, tabular, params))

    assert logits.shape == (2, 2)
    np.testing.assert_allclose(np.asarray(logits), np.asarray(ref), rtol=2e-2, atol=2e-2)
    print("KERNEL_OK")
</pallas_src>

<mosaic_0001>
module attributes {stable_mosaic.version = 11 : i64} {
  func.func @_hybrid_kernel(%arg0: i32, %arg1: memref<1x256x3xf32, #tpu.memory_space<vmem>>, %arg2: memref<1x1x8xf32, #tpu.memory_space<vmem>>, %arg3: memref<9x3x16xbf16, #tpu.memory_space<vmem>>, %arg4: memref<1x16xf32, #tpu.memory_space<vmem>>, %arg5: memref<9x256x1xf32, #tpu.memory_space<vmem>>, %arg6: memref<9x16x32xbf16, #tpu.memory_space<vmem>>, %arg7: memref<1x32xf32, #tpu.memory_space<vmem>>, %arg8: memref<9x64x1xf32, #tpu.memory_space<vmem>>, %arg9: memref<9x32x64xbf16, #tpu.memory_space<vmem>>, %arg10: memref<1x64xf32, #tpu.memory_space<vmem>>, %arg11: memref<9x16x1xf32, #tpu.memory_space<vmem>>, %arg12: memref<64x256xbf16, #tpu.memory_space<vmem>>, %arg13: memref<16x64xbf16, #tpu.memory_space<vmem>>, %arg14: memref<64x32xbf16, #tpu.memory_space<vmem>>, %arg15: memref<1x32xf32, #tpu.memory_space<vmem>>, %arg16: memref<8x32xbf16, #tpu.memory_space<vmem>>, %arg17: memref<1x32xf32, #tpu.memory_space<vmem>>, %arg18: memref<32x32xbf16, #tpu.memory_space<vmem>>, %arg19: memref<32x32xbf16, #tpu.memory_space<vmem>>, %arg20: memref<1x32xf32, #tpu.memory_space<vmem>>, %arg21: memref<32x2xbf16, #tpu.memory_space<vmem>>, %arg22: memref<1x2xf32, #tpu.memory_space<vmem>>, %arg23: memref<1x1x2xf32, #tpu.memory_space<vmem>>) attributes {dimension_semantics = [#tpu.dimension_semantics<parallel>], iteration_bounds = array<i64: 2>, scalar_prefetch = 0 : i64, scratch_operands = 0 : i64, tpu.core_type = #tpu.core_type<tc>, window_params = [{transform_indices = @transform_0, window_bounds = array<i64: 1, 256, 3>}, {transform_indices = @transform_1, window_bounds = array<i64: 1, 1, 8>}, {pipeline_mode = #tpu.pipeline_mode<synchronous>, transform_indices = @transform_2, window_bounds = array<i64: 9, 3, 16>}, {pipeline_mode = #tpu.pipeline_mode<synchronous>, transform_indices = @transform_3, window_bounds = array<i64: 1, 16>}, {pipeline_mode = #tpu.pipeline_mode<synchronous>, transform_indices = @transform_4, window_bounds = array<i64: 9, 256, 1>}, {pipeline_mode = #tpu.pipeline_mode<synchronous>, transform_indices = @transform_5, window_bounds = array<i64: 9, 16, 32>}, {pipeline_mode = #tpu.pipeline_mode<synchronous>, transform_indices = @transform_6, window_bounds = array<i64: 1, 32>}, {pipeline_mode = #tpu.pipeline_mode<synchronous>, transform_indices = @transform_7, window_bounds = array<i64: 9, 64, 1>}, {pipeline_mode = #tpu.pipeline_mode<synchronous>, transform_indices = @transform_8, window_bounds = array<i64: 9, 32, 64>}, {pipeline_mode = #tpu.pipeline_mode<synchronous>, transform_indices = @transform_9, window_bounds = array<i64: 1, 64>}, {pipeline_mode = #tpu.pipeline_mode<synchronous>, transform_indices = @transform_10, window_bounds = array<i64: 9, 16, 1>}, {pipeline_mode = #tpu.pipeline_mode<synchronous>, transform_indices = @transform_11, window_bounds = array<i64: 64, 256>}, {pipeline_mode = #tpu.pipeline_mode<synchronous>, transform_indices = @transform_12, window_bounds = array<i64: 16, 64>}, {pipeline_mode = #tpu.pipeline_mode<synchronous>, transform_indices = @transform_13, window_bounds = array<i64: 64, 32>}, {pipeline_mode = #tpu.pipeline_mode<synchronous>, transform_indices = @transform_14, window_bounds = array<i64: 1, 32>}, {pipeline_mode = #tpu.pipeline_mode<synchronous>, transform_indices = @transform_15, window_bounds = array<i64: 8, 32>}, {pipeline_mode = #tpu.pipeline_mode<synchronous>, transform_indices = @transform_16, window_bounds = array<i64: 1, 32>}, {pipeline_mode = #tpu.pipeline_mode<synchronous>, transform_indices = @transform_17, window_bounds = array<i64: 32, 32>}, {pipeline_mode = #tpu.pipeline_mode<synchronous>, transform_indices = @transform_18, window_bounds = array<i64: 32, 32>}, {pipeline_mode = #tpu.pipeline_mode<synchronous>, transform_indices = @transform_19, window_bounds = array<i64: 1, 32>}, {pipeline_mode = #tpu.pipeline_mode<synchronous>, transform_indices = @transform_20, window_bounds = array<i64: 32, 2>}, {pipeline_mode = #tpu.pipeline_mode<synchronous>, transform_indices = @transform_21, window_bounds = array<i64: 1, 2>}, {transform_indices = @transform_22, window_bounds = array<i64: 1, 1, 2>}]} {
    %c0 = arith.constant 0 : index
    %c0_0 = arith.constant 0 : index
    %c0_1 = arith.constant 0 : index
    %0 = vector.load %arg1[%c0, %c0_0, %c0_1] : memref<1x256x3xf32, #tpu.memory_space<vmem>>, vector<1x256x3xf32>
    %1 = vector.shape_cast %0 : vector<1x256x3xf32> to vector<256x3xf32>
    %c0_2 = arith.constant 0 : index
    %c0_3 = arith.constant 0 : index
    %2 = vector.load %arg4[%c0_2, %c0_3] : memref<1x16xf32, #tpu.memory_space<vmem>>, vector<1x16xf32>
    %c17_i32 = arith.constant 17 : i32
    %3 = tpu.dynamic_rotate %1 by %c17_i32 dim 0 : vector<256x3xf32>, i32 -> vector<256x3xf32>
    %c0_4 = arith.constant 0 : index
    %c0_5 = arith.constant 0 : index
    %c0_6 = arith.constant 0 : index
    %4 = vector.load %arg5[%c0_4, %c0_5, %c0_6] : memref<9x256x1xf32, #tpu.memory_space<vmem>>, vector<1x256x1xf32>
    %5 = vector.shape_cast %4 : vector<1x256x1xf32> to vector<256x1xf32>
    %6 = vector.broadcast %5 : vector<256x1xf32> to vector<256x3xf32>
    %7 = arith.mulf %3, %6 : vector<256x3xf32>
    %c0_7 = arith.constant 0 : index
    %c0_8 = arith.constant 0 : index
    %c0_9 = arith.constant 0 : index
    %8 = vector.load %arg3[%c0_7, %c0_8, %c0_9] : memref<9x3x16xbf16, #tpu.memory_space<vmem>>, vector<1x3x16xbf16>
    %9 = vector.shape_cast %8 : vector<1x3x16xbf16> to vector<3x16xbf16>
    %10 = arith.truncf %7 : vector<256x3xf32> to vector<256x3xbf16>
    %cst = arith.constant dense<0.000000e+00> : vector<256x16xf32>
    %11 = tpu.matmul %10, %9, %cst {dimension_numbers = #tpu.dot_dimension_numbers<[1], [0], [0], [1], [0, 0, 1, 1], [], []>} : vector<256x3xbf16>, vector<3x16xbf16>, vector<256x16xf32> -> vector<256x16xf32>
    %c16_i32 = arith.constant 16 : i32
    %12 = tpu.dynamic_rotate %1 by %c16_i32 dim 0 : vector<256x3xf32>, i32 -> vector<256x3xf32>
    %c1 = arith.constant 1 : index
    %c0_10 = arith.constant 0 : index
    %c0_11 = arith.constant 0 : index
    %13 = vector.load %arg5[%c1, %c0_10, %c0_11] : memref<9x256x1xf32, #tpu.memory_space<vmem>>, vector<1x256x1xf32>
    %14 = vector.shape_cast %13 : vector<1x256x1xf32> to vector<256x1xf32>
    %15 = vector.broadcast %14 : vector<256x1xf32> to vector<256x3xf32>
    %16 = arith.mulf %12, %15 : vector<256x3xf32>
    %c1_12 = arith.constant 1 : index
    %c0_13 = arith.constant 0 : index
    %c0_14 = arith.constant 0 : index
    %17 = vector.load %arg3[%c1_12, %c0_13, %c0_14] : memref<9x3x16xbf16, #tpu.memory_space<vmem>>, vector<1x3x16xbf16>
    %18 = vector.shape_cast %17 : vector<1x3x16xbf16> to vector<3x16xbf16>
    %19 = arith.truncf %16 : vector<256x3xf32> to vector<256x3xbf16>
    %cst_15 = arith.constant dense<0.000000e+00> : vector<256x16xf32>
    %20 = tpu.matmul %19, %18, %cst_15 {dimension_numbers = #tpu.dot_dimension_numbers<[1], [0], [0], [1], [0, 0, 1, 1], [], []>} : vector<256x3xbf16>, vector<3x16xbf16>, vector<256x16xf32> -> vector<256x16xf32>
    %21 = arith.addf %11, %20 : vector<256x16xf32>
    %c15_i32 = arith.constant 15 : i32
    %22 = tpu.dynamic_rotate %1 by %c15_i32 dim 0 : vector<256x3xf32>, i32 -> vector<256x3xf32>
    %c2 = arith.constant 2 : index
    %c0_16 = arith.constant 0 : index
    %c0_17 = arith.constant 0 : index
    %23 = vector.load %arg5[%c2, %c0_16, %c0_17] : memref<9x256x1xf32, #tpu.memory_space<vmem>>, vector<1x256x1xf32>
    %24 = vector.shape_cast %23 : vector<1x256x1xf32> to vector<256x1xf32>
    %25 = vector.broadcast %24 : vector<256x1xf32> to vector<256x3xf32>
    %26 = arith.mulf %22, %25 : vector<256x3xf32>
    %c2_18 = arith.constant 2 : index
    %c0_19 = arith.constant 0 : index
    %c0_20 = arith.constant 0 : index
    %27 = vector.load %arg3[%c2_18, %c0_19, %c0_20] : memref<9x3x16xbf16, #tpu.memory_space<vmem>>, vector<1x3x16xbf16>
    %28 = vector.shape_cast %27 : vector<1x3x16xbf16> to vector<3x16xbf16>
    %29 = arith.truncf %26 : vector<256x3xf32> to vector<256x3xbf16>
    %cst_21 = arith.constant dense<0.000000e+00> : vector<256x16xf32>
    %30 = tpu.matmul %29, %28, %cst_21 {dimension_numbers = #tpu.dot_dimension_numbers<[1], [0], [0], [1], [0, 0, 1, 1], [], []>} : vector<256x3xbf16>, vector<3x16xbf16>, vector<256x16xf32> -> vector<256x16xf32>
    %31 = arith.addf %21, %30 : vector<256x16xf32>
    %c1_i32 = arith.constant 1 : i32
    %32 = tpu.dynamic_rotate %1 by %c1_i32 dim 0 : vector<256x3xf32>, i32 -> vector<256x3xf32>
    %c3 = arith.constant 3 : index
    %c0_22 = arith.constant 0 : index
    %c0_23 = arith.constant 0 : index
    %33 = vector.load %arg5[%c3, %c0_22, %c0_23] : memref<9x256x1xf32, #tpu.memory_space<vmem>>, vector<1x256x1xf32>
    %34 = vector.shape_cast %33 : vector<1x256x1xf32> to vector<256x1xf32>
    %35 = vector.broadcast %34 : vector<256x1xf32> to vector<256x3xf32>
    %36 = arith.mulf %32, %35 : vector<256x3xf32>
    %c3_24 = arith.constant 3 : index
    %c0_25 = arith.constant 0 : index
    %c0_26 = arith.constant 0 : index
    %37 = vector.load %arg3[%c3_24, %c0_25, %c0_26] : memref<9x3x16xbf16, #tpu.memory_space<vmem>>, vector<1x3x16xbf16>
    %38 = vector.shape_cast %37 : vector<1x3x16xbf16> to vector<3x16xbf16>
    %39 = arith.truncf %36 : vector<256x3xf32> to vector<256x3xbf16>
    %cst_27 = arith.constant dense<0.000000e+00> : vector<256x16xf32>
    %40 = tpu.matmul %39, %38, %cst_27 {dimension_numbers = #tpu.dot_dimension_numbers<[1], [0], [0], [1], [0, 0, 1, 1], [], []>} : vector<256x3xbf16>, vector<3x16xbf16>, vector<256x16xf32> -> vector<256x16xf32>
    %41 = arith.addf %31, %40 : vector<256x16xf32>
    %c4 = arith.constant 4 : index
    %c0_28 = arith.constant 0 : index
    %c0_29 = arith.constant 0 : index
    %42 = vector.load %arg3[%c4, %c0_28, %c0_29] : memref<9x3x16xbf16, #tpu.memory_space<vmem>>, vector<1x3x16xbf16>
    %43 = vector.shape_cast %42 : vector<1x3x16xbf16> to vector<3x16xbf16>
    %44 = arith.truncf %1 : vector<256x3xf32> to vector<256x3xbf16>
    %cst_30 = arith.constant dense<0.000000e+00> : vector<256x16xf32>
    %45 = tpu.matmul %44, %43, %cst_30 {dimension_numbers = #tpu.dot_dimension_numbers<[1], [0], [0], [1], [0, 0, 1, 1], [], []>} : vector<256x3xbf16>, vector<3x16xbf16>, vector<256x16xf32> -> vector<256x16xf32>
    %46 = arith.addf %41, %45 : vector<256x16xf32>
    %c255_i32 = arith.constant 255 : i32
    %47 = tpu.dynamic_rotate %1 by %c255_i32 dim 0 : vector<256x3xf32>, i32 -> vector<256x3xf32>
    %c5 = arith.constant 5 : index
    %c0_31 = arith.constant 0 : index
    %c0_32 = arith.constant 0 : index
    %48 = vector.load %arg5[%c5, %c0_31, %c0_32] : memref<9x256x1xf32, #tpu.memory_space<vmem>>, vector<1x256x1xf32>
    %49 = vector.shape_cast %48 : vector<1x256x1xf32> to vector<256x1xf32>
    %50 = vector.broadcast %49 : vector<256x1xf32> to vector<256x3xf32>
    %51 = arith.mulf %47, %50 : vector<256x3xf32>
    %c5_33 = arith.constant 5 : index
    %c0_34 = arith.constant 0 : index
    %c0_35 = arith.constant 0 : index
    %52 = vector.load %arg3[%c5_33, %c0_34, %c0_35] : memref<9x3x16xbf16, #tpu.memory_space<vmem>>, vector<1x3x16xbf16>
    %53 = vector.shape_cast %52 : vector<1x3x16xbf16> to vector<3x16xbf16>
    %54 = arith.truncf %51 : vector<256x3xf32> to vector<256x3xbf16>
    %cst_36 = arith.constant dense<0.000000e+00> : vector<256x16xf32>
    %55 = tpu.matmul %54, %53, %cst_36 {dimension_numbers = #tpu.dot_dimension_numbers<[1], [0], [0], [1], [0, 0, 1, 1], [], []>} : vector<256x3xbf16>, vector<3x16xbf16>, vector<256x16xf32> -> vector<256x16xf32>
    %56 = arith.addf %46, %55 : vector<256x16xf32>
    %c241_i32 = arith.constant 241 : i32
    %57 = tpu.dynamic_rotate %1 by %c241_i32 dim 0 : vector<256x3xf32>, i32 -> vector<256x3xf32>
    %c6 = arith.constant 6 : index
    %c0_37 = arith.constant 0 : index
    %c0_38 = arith.constant 0 : index
    %58 = vector.load %arg5[%c6, %c0_37, %c0_38] : memref<9x256x1xf32, #tpu.memory_space<vmem>>, vector<1x256x1xf32>
    %59 = vector.shape_cast %58 : vector<1x256x1xf32> to vector<256x1xf32>
    %60 = vector.broadcast %59 : vector<256x1xf32> to vector<256x3xf32>
    %61 = arith.mulf %57, %60 : vector<256x3xf32>
    %c6_39 = arith.constant 6 : index
    %c0_40 = arith.constant 0 : index
    %c0_41 = arith.constant 0 : index
    %62 = vector.load %arg3[%c6_39, %c0_40, %c0_41] : memref<9x3x16xbf16, #tpu.memory_space<vmem>>, vector<1x3x16xbf16>
    %63 = vector.shape_cast %62 : vector<1x3x16xbf16> to vector<3x16xbf16>
    %64 = arith.truncf %61 : vector<256x3xf32> to vector<256x3xbf16>
    %cst_42 = arith.constant dense<0.000000e+00> : vector<256x16xf32>
    %65 = tpu.matmul %64, %63, %cst_42 {dimension_numbers = #tpu.dot_dimension_numbers<[1], [0], [0], [1], [0, 0, 1, 1], [], []>} : vector<256x3xbf16>, vector<3x16xbf16>, vector<256x16xf32> -> vector<256x16xf32>
    %66 = arith.addf %56, %65 : vector<256x16xf32>
    %c240_i32 = arith.constant 240 : i32
    %67 = tpu.dynamic_rotate %1 by %c240_i32 dim 0 : vector<256x3xf32>, i32 -> vector<256x3xf32>
    %c7 = arith.constant 7 : index
    %c0_43 = arith.constant 0 : index
    %c0_44 = arith.constant 0 : index
    %68 = vector.load %arg5[%c7, %c0_43, %c0_44] : memref<9x256x1xf32, #tpu.memory_space<vmem>>, vector<1x256x1xf32>
    %69 = vector.shape_cast %68 : vector<1x256x1xf32> to vector<256x1xf32>
    %70 = vector.broadcast %69 : vector<256x1xf32> to vector<256x3xf32>
    %71 = arith.mulf %67, %70 : vector<256x3xf32>
    %c7_45 = arith.constant 7 : index
    %c0_46 = arith.constant 0 : index
    %c0_47 = arith.constant 0 : index
    %72 = vector.load %arg3[%c7_45, %c0_46, %c0_47] : memref<9x3x16xbf16, #tpu.memory_space<vmem>>, vector<1x3x16xbf16>
    %73 = vector.shape_cast %72 : vector<1x3x16xbf16> to vector<3x16xbf16>
    %74 = arith.truncf %71 : vector<256x3xf32> to vector<256x3xbf16>
    %cst_48 = arith.constant dense<0.000000e+00> : vector<256x16xf32>
    %75 = tpu.matmul %74, %73, %cst_48 {dimension_numbers = #tpu.dot_dimension_numbers<[1], [0], [0], [1], [0, 0, 1, 1], [], []>} : vector<256x3xbf16>, vector<3x16xbf16>, vector<256x16xf32> -> vector<256x16xf32>
    %76 = arith.addf %66, %75 : vector<256x16xf32>
    %c239_i32 = arith.constant 239 : i32
    %77 = tpu.dynamic_rotate %1 by %c239_i32 dim 0 : vector<256x3xf32>, i32 -> vector<256x3xf32>
    %c8 = arith.constant 8 : index
    %c0_49 = arith.constant 0 : index
    %c0_50 = arith.constant 0 : index
    %78 = vector.load %arg5[%c8, %c0_49, %c0_50] : memref<9x256x1xf32, #tpu.memory_space<vmem>>, vector<1x256x1xf32>
    %79 = vector.shape_cast %78 : vector<1x256x1xf32> to vector<256x1xf32>
    %80 = vector.broadcast %79 : vector<256x1xf32> to vector<256x3xf32>
    %81 = arith.mulf %77, %80 : vector<256x3xf32>
    %c8_51 = arith.constant 8 : index
    %c0_52 = arith.constant 0 : index
    %c0_53 = arith.constant 0 : index
    %82 = vector.load %arg3[%c8_51, %c0_52, %c0_53] : memref<9x3x16xbf16, #tpu.memory_space<vmem>>, vector<1x3x16xbf16>
    %83 = vector.shape_cast %82 : vector<1x3x16xbf16> to vector<3x16xbf16>
    %84 = arith.truncf %81 : vector<256x3xf32> to vector<256x3xbf16>
    %cst_54 = arith.constant dense<0.000000e+00> : vector<256x16xf32>
    %85 = tpu.matmul %84, %83, %cst_54 {dimension_numbers = #tpu.dot_dimension_numbers<[1], [0], [0], [1], [0, 0, 1, 1], [], []>} : vector<256x3xbf16>, vector<3x16xbf16>, vector<256x16xf32> -> vector<256x16xf32>
    %86 = arith.addf %76, %85 : vector<256x16xf32>
    %87 = vector.broadcast %2 : vector<1x16xf32> to vector<256x16xf32>
    %88 = arith.addf %86, %87 : vector<256x16xf32>
    %cst_55 = arith.constant 0.000000e+00 : f32
    %89 = vector.broadcast %cst_55 : f32 to vector<256x16xf32>
    %90 = arith.maximumf %88, %89 : vector<256x16xf32>
    %c255_i32_56 = arith.constant 255 : i32
    %91 = tpu.dynamic_rotate %90 by %c255_i32_56 dim 0 : vector<256x16xf32>, i32 -> vector<256x16xf32>
    %92 = arith.maximumf %90, %91 : vector<256x16xf32>
    %c240_i32_57 = arith.constant 240 : i32
    %93 = tpu.dynamic_rotate %92 by %c240_i32_57 dim 0 : vector<256x16xf32>, i32 -> vector<256x16xf32>
    %94 = arith.maximumf %92, %93 : vector<256x16xf32>
    %c0_58 = arith.constant 0 : index
    %c0_59 = arith.constant 0 : index
    %95 = vector.load %arg12[%c0_58, %c0_59] : memref<64x256xbf16, #tpu.memory_space<vmem>>, vector<64x256xbf16>
    %96 = arith.truncf %94 : vector<256x16xf32> to vector<256x16xbf16>
    %cst_60 = arith.constant dense<0.000000e+00> : vector<64x16xf32>
    %97 = tpu.matmul %95, %96, %cst_60 {dimension_numbers = #tpu.dot_dimension_numbers<[1], [0], [0], [1], [0, 0, 1, 1], [], []>} : vector<64x256xbf16>, vector<256x16xbf16>, vector<64x16xf32> -> vector<64x16xf32>
    %c0_61 = arith.constant 0 : index
    %c0_62 = arith.constant 0 : index
    %98 = vector.load %arg7[%c0_61, %c0_62] : memref<1x32xf32, #tpu.memory_space<vmem>>, vector<1x32xf32>
    %c9_i32 = arith.constant 9 : i32
    %99 = tpu.dynamic_rotate %97 by %c9_i32 dim 0 : vector<64x16xf32>, i32 -> vector<64x16xf32>
    %c0_63 = arith.constant 0 : index
    %c0_64 = arith.constant 0 : index
    %c0_65 = arith.constant 0 : index
    %100 = vector.load %arg8[%c0_63, %c0_64, %c0_65] : memref<9x64x1xf32, #tpu.memory_space<vmem>>, vector<1x64x1xf32>
    %101 = vector.shape_cast %100 : vector<1x64x1xf32> to vector<64x1xf32>
    %102 = vector.broadcast %101 : vector<64x1xf32> to vector<64x16xf32>
    %103 = arith.mulf %99, %102 : vector<64x16xf32>
    %c0_66 = arith.constant 0 : index
    %c0_67 = arith.constant 0 : index
    %c0_68 = arith.constant 0 : index
    %104 = vector.load %arg6[%c0_66, %c0_67, %c0_68] : memref<9x16x32xbf16, #tpu.memory_space<vmem>>, vector<1x16x32xbf16>
    %105 = vector.shape_cast %104 : vector<1x16x32xbf16> to vector<16x32xbf16>
    %106 = arith.truncf %103 : vector<64x16xf32> to vector<64x16xbf16>
    %cst_69 = arith.constant dense<0.000000e+00> : vector<64x32xf32>
    %107 = tpu.matmul %106, %105, %cst_69 {dimension_numbers = #tpu.dot_dimension_numbers<[1], [0], [0], [1], [0, 0, 1, 1], [], []>} : vector<64x16xbf16>, vector<16x32xbf16>, vector<64x32xf32> -> vector<64x32xf32>
    %c8_i32 = arith.constant 8 : i32
    %108 = tpu.dynamic_rotate %97 by %c8_i32 dim 0 : vector<64x16xf32>, i32 -> vector<64x16xf32>
    %c1_70 = arith.constant 1 : index
    %c0_71 = arith.constant 0 : index
    %c0_72 = arith.constant 0 : index
    %109 = vector.load %arg8[%c1_70, %c0_71, %c0_72] : memref<9x64x1xf32, #tpu.memory_space<vmem>>, vector<1x64x1xf32>
    %110 = vector.shape_cast %109 : vector<1x64x1xf32> to vector<64x1xf32>
    %111 = vector.broadcast %110 : vector<64x1xf32> to vector<64x16xf32>
    %112 = arith.mulf %108, %111 : vector<64x16xf32>
    %c1_73 = arith.constant 1 : index
    %c0_74 = arith.constant 0 : index
    %c0_75 = arith.constant 0 : index
    %113 = vector.load %arg6[%c1_73, %c0_74, %c0_75] : memref<9x16x32xbf16, #tpu.memory_space<vmem>>, vector<1x16x32xbf16>
    %114 = vector.shape_cast %113 : vector<1x16x32xbf16> to vector<16x32xbf16>
    %115 = arith.truncf %112 : vector<64x16xf32> to vector<64x16xbf16>
    %cst_76 = arith.constant dense<0.000000e+00> : vector<64x32xf32>
    %116 = tpu.matmul %115, %114, %cst_76 {dimension_numbers = #tpu.dot_dimension_numbers<[1], [0], [0], [1], [0, 0, 1, 1], [], []>} : vector<64x16xbf16>, vector<16x32xbf16>, vector<64x32xf32> -> vector<64x32xf32>
    %117 = arith.addf %107, %116 : vector<64x32xf32>
    %c7_i32 = arith.constant 7 : i32
    %118 = tpu.dynamic_rotate %97 by %c7_i32 dim 0 : vector<64x16xf32>, i32 -> vector<64x16xf32>
    %c2_77 = arith.constant 2 : index
    %c0_78 = arith.constant 0 : index
    %c0_79 = arith.constant 0 : index
    %119 = vector.load %arg8[%c2_77, %c0_78, %c0_79] : memref<9x64x1xf32, #tpu.memory_space<vmem>>, vector<1x64x1xf32>
    %120 = vector.shape_cast %119 : vector<1x64x1xf32> to vector<64x1xf32>
    %121 = vector.broadcast %120 : vector<64x1xf32> to vector<64x16xf32>
    %122 = arith.mulf %118, %121 : vector<64x16xf32>
    %c2_80 = arith.constant 2 : index
    %c0_81 = arith.constant 0 : index
    %c0_82 = arith.constant 0 : index
    %123 = vector.load %arg6[%c2_80, %c0_81, %c0_82] : memref<9x16x32xbf16, #tpu.memory_space<vmem>>, vector<1x16x32xbf16>
    %124 = vector.shape_cast %123 : vector<1x16x32xbf16> to vector<16x32xbf16>
    %125 = arith.truncf %122 : vector<64x16xf32> to vector<64x16xbf16>
    %cst_83 = arith.constant dense<0.000000e+00> : vector<64x32xf32>
    %126 = tpu.matmul %125, %124, %cst_83 {dimension_numbers = #tpu.dot_dimension_numbers<[1], [0], [0], [1], [0, 0, 1, 1], [], []>} : vector<64x16xbf16>, vector<16x32xbf16>, vector<64x32xf32> -> vector<64x32xf32>
    %127 = arith.addf %117, %126 : vector<64x32xf32>
    %c1_i32_84 = arith.constant 1 : i32
    %128 = tpu.dynamic_rotate %97 by %c1_i32_84 dim 0 : vector<64x16xf32>, i32 -> vector<64x16xf32>
    %c3_85 = arith.constant 3 : index
    %c0_86 = arith.constant 0 : index
    %c0_87 = arith.constant 0 : index
    %129 = vector.load %arg8[%c3_85, %c0_86, %c0_87] : memref<9x64x1xf32, #tpu.memory_space<vmem>>, vector<1x64x1xf32>
    %130 = vector.shape_cast %129 : vector<1x64x1xf32> to vector<64x1xf32>
    %131 = vector.broadcast %130 : vector<64x1xf32> to vector<64x16xf32>
    %132 = arith.mulf %128, %131 : vector<64x16xf32>
    %c3_88 = arith.constant 3 : index
    %c0_89 = arith.constant 0 : index
    %c0_90 = arith.constant 0 : index
    %133 = vector.load %arg6[%c3_88, %c0_89, %c0_90] : memref<9x16x32xbf16, #tpu.memory_space<vmem>>, vector<1x16x32xbf16>
    %134 = vector.shape_cast %133 : vector<1x16x32xbf16> to vector<16x32xbf16>
    %135 = arith.truncf %132 : vector<64x16xf32> to vector<64x16xbf16>
    %cst_91 = arith.constant dense<0.000000e+00> : vector<64x32xf32>
    %136 = tpu.matmul %135, %134, %cst_91 {dimension_numbers = #tpu.dot_dimension_numbers<[1], [0], [0], [1], [0, 0, 1, 1], [], []>} : vector<64x16xbf16>, vector<16x32xbf16>, vector<64x32xf32> -> vector<64x32xf32>
    %137 = arith.addf %127, %136 : vector<64x32xf32>
    %c4_92 = arith.constant 4 : index
    %c0_93 = arith.constant 0 : index
    %c0_94 = arith.constant 0 : index
    %138 = vector.load %arg6[%c4_92, %c0_93, %c0_94] : memref<9x16x32xbf16, #tpu.memory_space<vmem>>, vector<1x16x32xbf16>
    %139 = vector.shape_cast %138 : vector<1x16x32xbf16> to vector<16x32xbf16>
    %140 = arith.truncf %97 : vector<64x16xf32> to vector<64x16xbf16>
    %cst_95 = arith.constant dense<0.000000e+00> : vector<64x32xf32>
    %141 = tpu.matmul %140, %139, %cst_95 {dimension_numbers = #tpu.dot_dimension_numbers<[1], [0], [0], [1], [0, 0, 1, 1], [], []>} : vector<64x16xbf16>, vector<16x32xbf16>, vector<64x32xf32> -> vector<64x32xf32>
    %142 = arith.addf %137, %141 : vector<64x32xf32>
    %c63_i32 = arith.constant 63 : i32
    %143 = tpu.dynamic_rotate %97 by %c63_i32 dim 0 : vector<64x16xf32>, i32 -> vector<64x16xf32>
    %c5_96 = arith.constant 5 : index
    %c0_97 = arith.constant 0 : index
    %c0_98 = arith.constant 0 : index
    %144 = vector.load %arg8[%c5_96, %c0_97, %c0_98] : memref<9x64x1xf32, #tpu.memory_space<vmem>>, vector<1x64x1xf32>
    %145 = vector.shape_cast %144 : vector<1x64x1xf32> to vector<64x1xf32>
    %146 = vector.broadcast %145 : vector<64x1xf32> to vector<64x16xf32>
    %147 = arith.mulf %143, %146 : vector<64x16xf32>
    %c5_99 = arith.constant 5 : index
    %c0_100 = arith.constant 0 : index
    %c0_101 = arith.constant 0 : index
    %148 = vector.load %arg6[%c5_99, %c0_100, %c0_101] : memref<9x16x32xbf16, #tpu.memory_space<vmem>>, vector<1x16x32xbf16>
    %149 = vector.shape_cast %148 : vector<1x16x32xbf16> to vector<16x32xbf16>
    %150 = arith.truncf %147 : vector<64x16xf32> to vector<64x16xbf16>
    %cst_102 = arith.constant dense<0.000000e+00> : vector<64x32xf32>
    %151 = tpu.matmul %150, %149, %cst_102 {dimension_numbers = #tpu.dot_dimension_numbers<[1], [0], [0], [1], [0, 0, 1, 1], [], []>} : vector<64x16xbf16>, vector<16x32xbf16>, vector<64x32xf32> -> vector<64x32xf32>
    %152 = arith.addf %142, %151 : vector<64x32xf32>
    %c57_i32 = arith.constant 57 : i32
    %153 = tpu.dynamic_rotate %97 by %c57_i32 dim 0 : vector<64x16xf32>, i32 -> vector<64x16xf32>
    %c6_103 = arith.constant 6 : index
    %c0_104 = arith.constant 0 : index
    %c0_105 = arith.constant 0 : index
    %154 = vector.load %arg8[%c6_103, %c0_104, %c0_105] : memref<9x64x1xf32, #tpu.memory_space<vmem>>, vector<1x64x1xf32>
    %155 = vector.shape_cast %154 : vector<1x64x1xf32> to vector<64x1xf32>
    %156 = vector.broadcast %155 : vector<64x1xf32> to vector<64x16xf32>
    %157 = arith.mulf %153, %156 : vector<64x16xf32>
    %c6_106 = arith.constant 6 : index
    %c0_107 = arith.constant 0 : index
    %c0_108 = arith.constant 0 : index
    %158 = vector.load %arg6[%c6_106, %c0_107, %c0_108] : memref<9x16x32xbf16, #tpu.memory_space<vmem>>, vector<1x16x32xbf16>
    %159 = vector.shape_cast %158 : vector<1x16x32xbf16> to vector<16x32xbf16>
    %160 = arith.truncf %157 : vector<64x16xf32> to vector<64x16xbf16>
    %cst_109 = arith.constant dense<0.000000e+00> : vector<64x32xf32>
    %161 = tpu.matmul %160, %159, %cst_109 {dimension_numbers = #tpu.dot_dimension_numbers<[1], [0], [0], [1], [0, 0, 1, 1], [], []>} : vector<64x16xbf16>, vector<16x32xbf16>, vector<64x32xf32> -> vector<64x32xf32>
    %162 = arith.addf %152, %161 : vector<64x32xf32>
    %c56_i32 = arith.constant 56 : i32
    %163 = tpu.dynamic_rotate %97 by %c56_i32 dim 0 : vector<64x16xf32>, i32 -> vector<64x16xf32>
    %c7_110 = arith.constant 7 : index
    %c0_111 = arith.constant 0 : index
    %c0_112 = arith.constant 0 : index
    %164 = vector.load %arg8[%c7_110, %c0_111, %c0_112] : memref<9x64x1xf32, #tpu.memory_space<vmem>>, vector<1x64x1xf32>
    %165 = vector.shape_cast %164 : vector<1x64x1xf32> to vector<64x1xf32>
    %166 = vector.broadcast %165 : vector<64x1xf32> to vector<64x16xf32>
    %167 = arith.mulf %163, %166 : vector<64x16xf32>
    %c7_113 = arith.constant 7 : index
    %c0_114 = arith.constant 0 : index
    %c0_115 = arith.constant 0 : index
    %168 = vector.load %arg6[%c7_113, %c0_114, %c0_115] : memref<9x16x32xbf16, #tpu.memory_space<vmem>>, vector<1x16x32xbf16>
    %169 = vector.shape_cast %168 : vector<1x16x32xbf16> to vector<16x32xbf16>
    %170 = arith.truncf %167 : vector<64x16xf32> to vector<64x16xbf16>
    %cst_116 = arith.constant dense<0.000000e+00> : vector<64x32xf32>
    %171 = tpu.matmul %170, %169, %cst_116 {dimension_numbers = #tpu.dot_dimension_numbers<[1], [0], [0], [1], [0, 0, 1, 1], [], []>} : vector<64x16xbf16>, vector<16x32xbf16>, vector<64x32xf32> -> vector<64x32xf32>
    %172 = arith.addf %162, %171 : vector<64x32xf32>
    %c55_i32 = arith.constant 55 : i32
    %173 = tpu.dynamic_rotate %97 by %c55_i32 dim 0 : vector<64x16xf32>, i32 -> vector<64x16xf32>
    %c8_117 = arith.constant 8 : index
    %c0_118 = arith.constant 0 : index
    %c0_119 = arith.constant 0 : index
    %174 = vector.load %arg8[%c8_117, %c0_118, %c0_119] : memref<9x64x1xf32, #tpu.memory_space<vmem>>, vector<1x64x1xf32>
    %175 = vector.shape_cast %174 : vector<1x64x1xf32> to vector<64x1xf32>
    %176 = vector.broadcast %175 : vector<64x1xf32> to vector<64x16xf32>
    %177 = arith.mulf %173, %176 : vector<64x16xf32>
    %c8_120 = arith.constant 8 : index
    %c0_121 = arith.constant 0 : index
    %c0_122 = arith.constant 0 : index
    %178 = vector.load %arg6[%c8_120, %c0_121, %c0_122] : memref<9x16x32xbf16, #tpu.memory_space<vmem>>, vector<1x16x32xbf16>
    %179 = vector.shape_cast %178 : vector<1x16x32xbf16> to vector<16x32xbf16>
    %180 = arith.truncf %177 : vector<64x16xf32> to vector<64x16xbf16>
    %cst_123 = arith.constant dense<0.000000e+00> : vector<64x32xf32>
    %181 = tpu.matmul %180, %179, %cst_123 {dimension_numbers = #tpu.dot_dimension_numbers<[1], [0], [0], [1], [0, 0, 1, 1], [], []>} : vector<64x16xbf16>, vector<16x32xbf16>, vector<64x32xf32> -> vector<64x32xf32>
    %182 = arith.addf %172, %181 : vector<64x32xf32>
    %183 = vector.broadcast %98 : vector<1x32xf32> to vector<64x32xf32>
    %184 = arith.addf %182, %183 : vector<64x32xf32>
    %cst_124 = arith.constant 0.000000e+00 : f32
    %185 = vector.broadcast %cst_124 : f32 to vector<64x32xf32>
    %186 = arith.maximumf %184, %185 : vector<64x32xf32>
    %c63_i32_125 = arith.constant 63 : i32
    %187 = tpu.dynamic_rotate %186 by %c63_i32_125 dim 0 : vector<64x32xf32>, i32 -> vector<64x32xf32>
    %188 = arith.maximumf %186, %187 : vector<64x32xf32>
    %c56_i32_126 = arith.constant 56 : i32
    %189 = tpu.dynamic_rotate %188 by %c56_i32_126 dim 0 : vector<64x32xf32>, i32 -> vector<64x32xf32>
    %190 = arith.maximumf %188, %189 : vector<64x32xf32>
    %c0_127 = arith.constant 0 : index
    %c0_128 = arith.constant 0 : index
    %191 = vector.load %arg13[%c0_127, %c0_128] : memref<16x64xbf16, #tpu.memory_space<vmem>>, vector<16x64xbf16>
    %192 = arith.truncf %190 : vector<64x32xf32> to vector<64x32xbf16>
    %cst_129 = arith.constant dense<0.000000e+00> : vector<16x32xf32>
    %193 = tpu.matmul %191, %192, %cst_129 {dimension_numbers = #tpu.dot_dimension_numbers<[1], [0], [0], [1], [0, 0, 1, 1], [], []>} : vector<16x64xbf16>, vector<64x32xbf16>, vector<16x32xf32> -> vector<16x32xf32>
    %c0_130 = arith.constant 0 : index
    %c0_131 = arith.constant 0 : index
    %194 = vector.load %arg10[%c0_130, %c0_131] : memref<1x64xf32, #tpu.memory_space<vmem>>, vector<1x64xf32>
    %c5_i32 = arith.constant 5 : i32
    %195 = tpu.dynamic_rotate %193 by %c5_i32 dim 0 : vector<16x32xf32>, i32 -> vector<16x32xf32>
    %c0_132 = arith.constant 0 : index
    %c0_133 = arith.constant 0 : index
    %c0_134 = arith.constant 0 : index
    %196 = vector.load %arg11[%c0_132, %c0_133, %c0_134] : memref<9x16x1xf32, #tpu.memory_space<vmem>>, vector<1x16x1xf32>
    %197 = vector.shape_cast %196 : vector<1x16x1xf32> to vector<16x1xf32>
    %198 = vector.broadcast %197 : vector<16x1xf32> to vector<16x32xf32>
    %199 = arith.mulf %195, %198 : vector<16x32xf32>
    %c0_135 = arith.constant 0 : index
    %c0_136 = arith.constant 0 : index
    %c0_137 = arith.constant 0 : index
    %200 = vector.load %arg9[%c0_135, %c0_136, %c0_137] : memref<9x32x64xbf16, #tpu.memory_space<vmem>>, vector<1x32x64xbf16>
    %201 = vector.shape_cast %200 : vector<1x32x64xbf16> to vector<32x64xbf16>
    %202 = arith.truncf %199 : vector<16x32xf32> to vector<16x32xbf16>
    %cst_138 = arith.constant dense<0.000000e+00> : vector<16x64xf32>
    %203 = tpu.matmul %202, %201, %cst_138 {dimension_numbers = #tpu.dot_dimension_numbers<[1], [0], [0], [1], [0, 0, 1, 1], [], []>} : vector<16x32xbf16>, vector<32x64xbf16>, vector<16x64xf32> -> vector<16x64xf32>
    %c4_i32 = arith.constant 4 : i32
    %204 = tpu.dynamic_rotate %193 by %c4_i32 dim 0 : vector<16x32xf32>, i32 -> vector<16x32xf32>
    %c1_139 = arith.constant 1 : index
    %c0_140 = arith.constant 0 : index
    %c0_141 = arith.constant 0 : index
    %205 = vector.load %arg11[%c1_139, %c0_140, %c0_141] : memref<9x16x1xf32, #tpu.memory_space<vmem>>, vector<1x16x1xf32>
    %206 = vector.shape_cast %205 : vector<1x16x1xf32> to vector<16x1xf32>
    %207 = vector.broadcast %206 : vector<16x1xf32> to vector<16x32xf32>
    %208 = arith.mulf %204, %207 : vector<16x32xf32>
    %c1_142 = arith.constant 1 : index
    %c0_143 = arith.constant 0 : index
    %c0_144 = arith.constant 0 : index
    %209 = vector.load %arg9[%c1_142, %c0_143, %c0_144] : memref<9x32x64xbf16, #tpu.memory_space<vmem>>, vector<1x32x64xbf16>
    %210 = vector.shape_cast %209 : vector<1x32x64xbf16> to vector<32x64xbf16>
    %211 = arith.truncf %208 : vector<16x32xf32> to vector<16x32xbf16>
    %cst_145 = arith.constant dense<0.000000e+00> : vector<16x64xf32>
    %212 = tpu.matmul %211, %210, %cst_145 {dimension_numbers = #tpu.dot_dimension_numbers<[1], [0], [0], [1], [0, 0, 1, 1], [], []>} : vector<16x32xbf16>, vector<32x64xbf16>, vector<16x64xf32> -> vector<16x64xf32>
    %213 = arith.addf %203, %212 : vector<16x64xf32>
    %c3_i32 = arith.constant 3 : i32
    %214 = tpu.dynamic_rotate %193 by %c3_i32 dim 0 : vector<16x32xf32>, i32 -> vector<16x32xf32>
    %c2_146 = arith.constant 2 : index
    %c0_147 = arith.constant 0 : index
    %c0_148 = arith.constant 0 : index
    %215 = vector.load %arg11[%c2_146, %c0_147, %c0_148] : memref<9x16x1xf32, #tpu.memory_space<vmem>>, vector<1x16x1xf32>
    %216 = vector.shape_cast %215 : vector<1x16x1xf32> to vector<16x1xf32>
    %217 = vector.broadcast %216 : vector<16x1xf32> to vector<16x32xf32>
    %218 = arith.mulf %214, %217 : vector<16x32xf32>
    %c2_149 = arith.constant 2 : index
    %c0_150 = arith.constant 0 : index
    %c0_151 = arith.constant 0 : index
    %219 = vector.load %arg9[%c2_149, %c0_150, %c0_151] : memref<9x32x64xbf16, #tpu.memory_space<vmem>>, vector<1x32x64xbf16>
    %220 = vector.shape_cast %219 : vector<1x32x64xbf16> to vector<32x64xbf16>
    %221 = arith.truncf %218 : vector<16x32xf32> to vector<16x32xbf16>
    %cst_152 = arith.constant dense<0.000000e+00> : vector<16x64xf32>
    %222 = tpu.matmul %221, %220, %cst_152 {dimension_numbers = #tpu.dot_dimension_numbers<[1], [0], [0], [1], [0, 0, 1, 1], [], []>} : vector<16x32xbf16>, vector<32x64xbf16>, vector<16x64xf32> -> vector<16x64xf32>
    %223 = arith.addf %213, %222 : vector<16x64xf32>
    %c1_i32_153 = arith.constant 1 : i32
    %224 = tpu.dynamic_rotate %193 by %c1_i32_153 dim 0 : vector<16x32xf32>, i32 -> vector<16x32xf32>
    %c3_154 = arith.constant 3 : index
    %c0_155 = arith.constant 0 : index
    %c0_156 = arith.constant 0 : index
    %225 = vector.load %arg11[%c3_154, %c0_155, %c0_156] : memref<9x16x1xf32, #tpu.memory_space<vmem>>, vector<1x16x1xf32>
    %226 = vector.shape_cast %225 : vector<1x16x1xf32> to vector<16x1xf32>
    %227 = vector.broadcast %226 : vector<16x1xf32> to vector<16x32xf32>
    %228 = arith.mulf %224, %227 : vector<16x32xf32>
    %c3_157 = arith.constant 3 : index
    %c0_158 = arith.constant 0 : index
    %c0_159 = arith.constant 0 : index
    %229 = vector.load %arg9[%c3_157, %c0_158, %c0_159] : memref<9x32x64xbf16, #tpu.memory_space<vmem>>, vector<1x32x64xbf16>
    %230 = vector.shape_cast %229 : vector<1x32x64xbf16> to vector<32x64xbf16>
    %231 = arith.truncf %228 : vector<16x32xf32> to vector<16x32xbf16>
    %cst_160 = arith.constant dense<0.000000e+00> : vector<16x64xf32>
    %232 = tpu.matmul %231, %230, %cst_160 {dimension_numbers = #tpu.dot_dimension_numbers<[1], [0], [0], [1], [0, 0, 1, 1], [], []>} : vector<16x32xbf16>, vector<32x64xbf16>, vector<16x64xf32> -> vector<16x64xf32>
    %233 = arith.addf %223, %232 : vector<16x64xf32>
    %c4_161 = arith.constant 4 : index
    %c0_162 = arith.constant 0 : index
    %c0_163 = arith.constant 0 : index
    %234 = vector.load %arg9[%c4_161, %c0_162, %c0_163] : memref<9x32x64xbf16, #tpu.memory_space<vmem>>, vector<1x32x64xbf16>
    %235 = vector.shape_cast %234 : vector<1x32x64xbf16> to vector<32x64xbf16>
    %236 = arith.truncf %193 : vector<16x32xf32> to vector<16x32xbf16>
    %cst_164 = arith.constant dense<0.000000e+00> : vector<16x64xf32>
    %237 = tpu.matmul %236, %235, %cst_164 {dimension_numbers = #tpu.dot_dimension_numbers<[1], [0], [0], [1], [0, 0, 1, 1], [], []>} : vector<16x32xbf16>, vector<32x64xbf16>, vector<16x64xf32> -> vector<16x64xf32>
    %238 = arith.addf %233, %237 : vector<16x64xf32>
    %c15_i32_165 = arith.constant 15 : i32
    %239 = tpu.dynamic_rotate %193 by %c15_i32_165 dim 0 : vector<16x32xf32>, i32 -> vector<16x32xf32>
    %c5_166 = arith.constant 5 : index
    %c0_167 = arith.constant 0 : index
    %c0_168 = arith.constant 0 : index
    %240 = vector.load %arg11[%c5_166, %c0_167, %c0_168] : memref<9x16x1xf32, #tpu.memory_space<vmem>>, vector<1x16x1xf32>
    %241 = vector.shape_cast %240 : vector<1x16x1xf32> to vector<16x1xf32>
    %242 = vector.broadcast %241 : vector<16x1xf32> to vector<16x32xf32>
    %243 = arith.mulf %239, %242 : vector<16x32xf32>
    %c5_169 = arith.constant 5 : index
    %c0_170 = arith.constant 0 : index
    %c0_171 = arith.constant 0 : index
    %244 = vector.load %arg9[%c5_169, %c0_170, %c0_171] : memref<9x32x64xbf16, #tpu.memory_space<vmem>>, vector<1x32x64xbf16>
    %245 = vector.shape_cast %244 : vector<1x32x64xbf16> to vector<32x64xbf16>
    %246 = arith.truncf %243 : vector<16x32xf32> to vector<16x32xbf16>
    %cst_172 = arith.constant dense<0.000000e+00> : vector<16x64xf32>
    %247 = tpu.matmul %246, %245, %cst_172 {dimension_numbers = #tpu.dot_dimension_numbers<[1], [0], [0], [1], [0, 0, 1, 1], [], []>} : vector<16x32xbf16>, vector<32x64xbf16>, vector<16x64xf32> -> vector<16x64xf32>
    %248 = arith.addf %238, %247 : vector<16x64xf32>
    %c13_i32 = arith.constant 13 : i32
    %249 = tpu.dynamic_rotate %193 by %c13_i32 dim 0 : vector<16x32xf32>, i32 -> vector<16x32xf32>
    %c6_173 = arith.constant 6 : index
    %c0_174 = arith.constant 0 : index
    %c0_175 = arith.constant 0 : index
    %250 = vector.load %arg11[%c6_173, %c0_174, %c0_175] : memref<9x16x1xf32, #tpu.memory_space<vmem>>, vector<1x16x1xf32>
    %251 = vector.shape_cast %250 : vector<1x16x1xf32> to vector<16x1xf32>
    %252 = vector.broadcast %251 : vector<16x1xf32> to vector<16x32xf32>
    %253 = arith.mulf %249, %252 : vector<16x32xf32>
    %c6_176 = arith.constant 6 : index
    %c0_177 = arith.constant 0 : index
    %c0_178 = arith.constant 0 : index
    %254 = vector.load %arg9[%c6_176, %c0_177, %c0_178] : memref<9x32x64xbf16, #tpu.memory_space<vmem>>, vector<1x32x64xbf16>
    %255 = vector.shape_cast %254 : vector<1x32x64xbf16> to vector<32x64xbf16>
    %256 = arith.truncf %253 : vector<16x32xf32> to vector<16x32xbf16>
    %cst_179 = arith.constant dense<0.000000e+00> : vector<16x64xf32>
    %257 = tpu.matmul %256, %255, %cst_179 {dimension_numbers = #tpu.dot_dimension_numbers<[1], [0], [0], [1], [0, 0, 1, 1], [], []>} : vector<16x32xbf16>, vector<32x64xbf16>, vector<16x64xf32> -> vector<16x64xf32>
    %258 = arith.addf %248, %257 : vector<16x64xf32>
    %c12_i32 = arith.constant 12 : i32
    %259 = tpu.dynamic_rotate %193 by %c12_i32 dim 0 : vector<16x32xf32>, i32 -> vector<16x32xf32>
    %c7_180 = arith.constant 7 : index
    %c0_181 = arith.constant 0 : index
    %c0_182 = arith.constant 0 : index
    %260 = vector.load %arg11[%c7_180, %c0_181, %c0_182] : memref<9x16x1xf32, #tpu.memory_space<vmem>>, vector<1x16x1xf32>
    %261 = vector.shape_cast %260 : vector<1x16x1xf32> to vector<16x1xf32>
    %262 = vector.broadcast %261 : vector<16x1xf32> to vector<16x32xf32>
    %263 = arith.mulf %259, %262 : vector<16x32xf32>
    %c7_183 = arith.constant 7 : index
    %c0_184 = arith.constant 0 : index
    %c0_185 = arith.constant 0 : index
    %264 = vector.load %arg9[%c7_183, %c0_184, %c0_185] : memref<9x32x64xbf16, #tpu.memory_space<vmem>>, vector<1x32x64xbf16>
    %265 = vector.shape_cast %264 : vector<1x32x64xbf16> to vector<32x64xbf16>
    %266 = arith.truncf %263 : vector<16x32xf32> to vector<16x32xbf16>
    %cst_186 = arith.constant dense<0.000000e+00> : vector<16x64xf32>
    %267 = tpu.matmul %266, %265, %cst_186 {dimension_numbers = #tpu.dot_dimension_numbers<[1], [0], [0], [1], [0, 0, 1, 1], [], []>} : vector<16x32xbf16>, vector<32x64xbf16>, vector<16x64xf32> -> vector<16x64xf32>
    %268 = arith.addf %258, %267 : vector<16x64xf32>
    %c11_i32 = arith.constant 11 : i32
    %269 = tpu.dynamic_rotate %193 by %c11_i32 dim 0 : vector<16x32xf32>, i32 -> vector<16x32xf32>
    %c8_187 = arith.constant 8 : index
    %c0_188 = arith.constant 0 : index
    %c0_189 = arith.constant 0 : index
    %270 = vector.load %arg11[%c8_187, %c0_188, %c0_189] : memref<9x16x1xf32, #tpu.memory_space<vmem>>, vector<1x16x1xf32>
    %271 = vector.shape_cast %270 : vector<1x16x1xf32> to vector<16x1xf32>
    %272 = vector.broadcast %271 : vector<16x1xf32> to vector<16x32xf32>
    %273 = arith.mulf %269, %272 : vector<16x32xf32>
    %c8_190 = arith.constant 8 : index
    %c0_191 = arith.constant 0 : index
    %c0_192 = arith.constant 0 : index
    %274 = vector.load %arg9[%c8_190, %c0_191, %c0_192] : memref<9x32x64xbf16, #tpu.memory_space<vmem>>, vector<1x32x64xbf16>
    %275 = vector.shape_cast %274 : vector<1x32x64xbf16> to vector<32x64xbf16>
    %276 = arith.truncf %273 : vector<16x32xf32> to vector<16x32xbf16>
    %cst_193 = arith.constant dense<0.000000e+00> : vector<16x64xf32>
    %277 = tpu.matmul %276, %275, %cst_193 {dimension_numbers = #tpu.dot_dimension_numbers<[1], [0], [0], [1], [0, 0, 1, 1], [], []>} : vector<16x32xbf16>, vector<32x64xbf16>, vector<16x64xf32> -> vector<16x64xf32>
    %278 = arith.addf %268, %277 : vector<16x64xf32>
    %279 = vector.broadcast %194 : vector<1x64xf32> to vector<16x64xf32>
    %280 = arith.addf %278, %279 : vector<16x64xf32>
    %cst_194 = arith.constant 0.000000e+00 : f32
    %281 = vector.broadcast %cst_194 : f32 to vector<16x64xf32>
    %282 = arith.maximumf %280, %281 : vector<16x64xf32>
    %cst_195 = arith.constant dense<0.000000e+00> : vector<64xf32>
    %283 = vector.multi_reduction <add>, %282, %cst_195 [0] : vector<16x64xf32> to vector<64xf32>
    %284 = vector.shape_cast %283 : vector<64xf32> to vector<1x64xf32>
    %cst_196 = arith.constant 6.250000e-02 : f32
    %285 = vector.broadcast %cst_196 : f32 to vector<1x64xf32>
    %286 = arith.mulf %284, %285 : vector<1x64xf32>
    %c0_197 = arith.constant 0 : index
    %c0_198 = arith.constant 0 : index
    %287 = vector.load %arg14[%c0_197, %c0_198] : memref<64x32xbf16, #tpu.memory_space<vmem>>, vector<64x32xbf16>
    %288 = arith.truncf %286 : vector<1x64xf32> to vector<1x64xbf16>
    %cst_199 = arith.constant dense<0.000000e+00> : vector<1x32xf32>
    %289 = tpu.matmul %288, %287, %cst_199 {dimension_numbers = #tpu.dot_dimension_numbers<[1], [0], [0], [1], [0, 0, 1, 1], [], []>} : vector<1x64xbf16>, vector<64x32xbf16>, vector<1x32xf32> -> vector<1x32xf32>
    %c0_200 = arith.constant 0 : index
    %c0_201 = arith.constant 0 : index
    %290 = vector.load %arg15[%c0_200, %c0_201] : memref<1x32xf32, #tpu.memory_space<vmem>>, vector<1x32xf32>
    %291 = arith.addf %289, %290 : vector<1x32xf32>
    %c0_202 = arith.constant 0 : index
    %c0_203 = arith.constant 0 : index
    %c0_204 = arith.constant 0 : index
    %292 = vector.load %arg2[%c0_202, %c0_203, %c0_204] : memref<1x1x8xf32, #tpu.memory_space<vmem>>, vector<1x1x8xf32>
    %293 = vector.shape_cast %292 : vector<1x1x8xf32> to vector<1x8xf32>
    %c0_205 = arith.constant 0 : index
    %c0_206 = arith.constant 0 : index
    %294 = vector.load %arg16[%c0_205, %c0_206] : memref<8x32xbf16, #tpu.memory_space<vmem>>, vector<8x32xbf16>
    %295 = arith.truncf %293 : vector<1x8xf32> to vector<1x8xbf16>
    %cst_207 = arith.constant dense<0.000000e+00> : vector<1x32xf32>
    %296 = tpu.matmul %295, %294, %cst_207 {dimension_numbers = #tpu.dot_dimension_numbers<[1], [0], [0], [1], [0, 0, 1, 1], [], []>} : vector<1x8xbf16>, vector<8x32xbf16>, vector<1x32xf32> -> vector<1x32xf32>
    %c0_208 = arith.constant 0 : index
    %c0_209 = arith.constant 0 : index
    %297 = vector.load %arg17[%c0_208, %c0_209] : memref<1x32xf32, #tpu.memory_space<vmem>>, vector<1x32xf32>
    %298 = arith.addf %296, %297 : vector<1x32xf32>
    %c0_210 = arith.constant 0 : index
    %c0_211 = arith.constant 0 : index
    %299 = vector.load %arg18[%c0_210, %c0_211] : memref<32x32xbf16, #tpu.memory_space<vmem>>, vector<32x32xbf16>
    %300 = arith.truncf %291 : vector<1x32xf32> to vector<1x32xbf16>
    %cst_212 = arith.constant dense<0.000000e+00> : vector<1x32xf32>
    %301 = tpu.matmul %300, %299, %cst_212 {dimension_numbers = #tpu.dot_dimension_numbers<[1], [0], [0], [1], [0, 0, 1, 1], [], []>} : vector<1x32xbf16>, vector<32x32xbf16>, vector<1x32xf32> -> vector<1x32xf32>
    %c0_213 = arith.constant 0 : index
    %c0_214 = arith.constant 0 : index
    %302 = vector.load %arg19[%c0_213, %c0_214] : memref<32x32xbf16, #tpu.memory_space<vmem>>, vector<32x32xbf16>
    %303 = arith.truncf %298 : vector<1x32xf32> to vector<1x32xbf16>
    %cst_215 = arith.constant dense<0.000000e+00> : vector<1x32xf32>
    %304 = tpu.matmul %303, %302, %cst_215 {dimension_numbers = #tpu.dot_dimension_numbers<[1], [0], [0], [1], [0, 0, 1, 1], [], []>} : vector<1x32xbf16>, vector<32x32xbf16>, vector<1x32xf32> -> vector<1x32xf32>
    %305 = arith.addf %301, %304 : vector<1x32xf32>
    %c0_216 = arith.constant 0 : index
    %c0_217 = arith.constant 0 : index
    %306 = vector.load %arg20[%c0_216, %c0_217] : memref<1x32xf32, #tpu.memory_space<vmem>>, vector<1x32xf32>
    %307 = arith.addf %305, %306 : vector<1x32xf32>
    %cst_218 = arith.constant 0.000000e+00 : f32
    %308 = vector.broadcast %cst_218 : f32 to vector<1x32xf32>
    %309 = arith.maximumf %307, %308 : vector<1x32xf32>
    %c0_219 = arith.constant 0 : index
    %c0_220 = arith.constant 0 : index
    %310 = vector.load %arg21[%c0_219, %c0_220] : memref<32x2xbf16, #tpu.memory_space<vmem>>, vector<32x2xbf16>
    %311 = arith.truncf %309 : vector<1x32xf32> to vector<1x32xbf16>
    %cst_221 = arith.constant dense<0.000000e+00> : vector<1x2xf32>
    %312 = tpu.matmul %311, %310, %cst_221 {dimension_numbers = #tpu.dot_dimension_numbers<[1], [0], [0], [1], [0, 0, 1, 1], [], []>} : vector<1x32xbf16>, vector<32x2xbf16>, vector<1x2xf32> -> vector<1x2xf32>
    %c0_222 = arith.constant 0 : index
    %c0_223 = arith.constant 0 : index
    %313 = vector.load %arg22[%c0_222, %c0_223] : memref<1x2xf32, #tpu.memory_space<vmem>>, vector<1x2xf32>
    %314 = arith.addf %312, %313 : vector<1x2xf32>
    %c0_224 = arith.constant 0 : index
    %c0_225 = arith.constant 0 : index
    %c0_226 = arith.constant 0 : index
    %315 = vector.load %arg23[%c0_224, %c0_225, %c0_226] : memref<1x1x2xf32, #tpu.memory_space<vmem>>, vector<1x1x2xf32>
    %316 = vector.shape_cast %315 : vector<1x1x2xf32> to vector<1x2xf32>
    %317 = vector.shape_cast %314 : vector<1x2xf32> to vector<1x1x2xf32>
    tpu.vector_store %arg23[%c0_224, %c0_225, %c0_226], %317 {strides = array<i32>} : memref<1x1x2xf32, #tpu.memory_space<vmem>>, vector<1x1x2xf32>,
    return
  }
  func.func @transform_0(%arg0: i32) -> (i32, i32, i32) {
    %c0_i32 = arith.constant 0 : i32
    %c0_i32_0 = arith.constant 0 : i32
    %c0_i32_1 = arith.constant 0 : i32
    return %arg0, %c0_i32, %c0_i32_0 : i32, i32, i32
  }
  func.func @transform_1(%arg0: i32) -> (i32, i32, i32) {
    %c0_i32 = arith.constant 0 : i32
    %c0_i32_0 = arith.constant 0 : i32
    %c0_i32_1 = arith.constant 0 : i32
    return %arg0, %c0_i32, %c0_i32_0 : i32, i32, i32
  }
  func.func @transform_2(%arg0: i32) -> (i32, i32, i32) {
    %c0_i32 = arith.constant 0 : i32
    %c0_i32_0 = arith.constant 0 : i32
    %c0_i32_1 = arith.constant 0 : i32
    %c0_i32_2 = arith.constant 0 : i32
    return %c0_i32, %c0_i32_0, %c0_i32_1 : i32, i32, i32
  }
  func.func @transform_3(%arg0: i32) -> (i32, i32) {
    %c0_i32 = arith.constant 0 : i32
    %c0_i32_0 = arith.constant 0 : i32
    %c0_i32_1 = arith.constant 0 : i32
    return %c0_i32, %c0_i32_0 : i32, i32
  }
  func.func @transform_4(%arg0: i32) -> (i32, i32, i32) {
    %c0_i32 = arith.constant 0 : i32
    %c0_i32_0 = arith.constant 0 : i32
    %c0_i32_1 = arith.constant 0 : i32
    %c0_i32_2 = arith.constant 0 : i32
    return %c0_i32, %c0_i32_0, %c0_i32_1 : i32, i32, i32
  }
  func.func @transform_5(%arg0: i32) -> (i32, i32, i32) {
    %c0_i32 = arith.constant 0 : i32
    %c0_i32_0 = arith.constant 0 : i32
    %c0_i32_1 = arith.constant 0 : i32
    %c0_i32_2 = arith.constant 0 : i32
    return %c0_i32, %c0_i32_0, %c0_i32_1 : i32, i32, i32
  }
  func.func @transform_6(%arg0: i32) -> (i32, i32) {
    %c0_i32 = arith.constant 0 : i32
    %c0_i32_0 = arith.constant 0 : i32
    %c0_i32_1 = arith.constant 0 : i32
    return %c0_i32, %c0_i32_0 : i32, i32
  }
  func.func @transform_7(%arg0: i32) -> (i32, i32, i32) {
    %c0_i32 = arith.constant 0 : i32
    %c0_i32_0 = arith.constant 0 : i32
    %c0_i32_1 = arith.constant 0 : i32
    %c0_i32_2 = arith.constant 0 : i32
    return %c0_i32, %c0_i32_0, %c0_i32_1 : i32, i32, i32
  }
  func.func @transform_8(%arg0: i32) -> (i32, i32, i32) {
    %c0_i32 = arith.constant 0 : i32
    %c0_i32_0 = arith.constant 0 : i32
    %c0_i32_1 = arith.constant 0 : i32
    %c0_i32_2 = arith.constant 0 : i32
    return %c0_i32, %c0_i32_0, %c0_i32_1 : i32, i32, i32
  }
  func.func @transform_9(%arg0: i32) -> (i32, i32) {
    %c0_i32 = arith.constant 0 : i32
    %c0_i32_0 = arith.constant 0 : i32
    %c0_i32_1 = arith.constant 0 : i32
    return %c0_i32, %c0_i32_0 : i32, i32
  }
  func.func @transform_10(%arg0: i32) -> (i32, i32, i32) {
    %c0_i32 = arith.constant 0 : i32
    %c0_i32_0 = arith.constant 0 : i32
    %c0_i32_1 = arith.constant 0 : i32
    %c0_i32_2 = arith.constant 0 : i32
    return %c0_i32, %c0_i32_0, %c0_i32_1 : i32, i32, i32
  }
  func.func @transform_11(%arg0: i32) -> (i32, i32) {
    %c0_i32 = arith.constant 0 : i32
    %c0_i32_0 = arith.constant 0 : i32
    %c0_i32_1 = arith.constant 0 : i32
    return %c0_i32, %c0_i32_0 : i32, i32
  }
  func.func @transform_12(%arg0: i32) -> (i32, i32) {
    %c0_i32 = arith.constant 0 : i32
    %c0_i32_0 = arith.constant 0 : i32
    %c0_i32_1 = arith.constant 0 : i32
    return %c0_i32, %c0_i32_0 : i32, i32
  }
  func.func @transform_13(%arg0: i32) -> (i32, i32) {
    %c0_i32 = arith.constant 0 : i32
    %c0_i32_0 = arith.constant 0 : i32
    %c0_i32_1 = arith.constant 0 : i32
    return %c0_i32, %c0_i32_0 : i32, i32
  }
  func.func @transform_14(%arg0: i32) -> (i32, i32) {
    %c0_i32 = arith.constant 0 : i32
    %c0_i32_0 = arith.constant 0 : i32
    %c0_i32_1 = arith.constant 0 : i32
    return %c0_i32, %c0_i32_0 : i32, i32
  }
  func.func @transform_15(%arg0: i32) -> (i32, i32) {
    %c0_i32 = arith.constant 0 : i32
    %c0_i32_0 = arith.constant 0 : i32
    %c0_i32_1 = arith.constant 0 : i32
    return %c0_i32, %c0_i32_0 : i32, i32
  }
  func.func @transform_16(%arg0: i32) -> (i32, i32) {
    %c0_i32 = arith.constant 0 : i32
    %c0_i32_0 = arith.constant 0 : i32
    %c0_i32_1 = arith.constant 0 : i32
    return %c0_i32, %c0_i32_0 : i32, i32
  }
  func.func @transform_17(%arg0: i32) -> (i32, i32) {
    %c0_i32 = arith.constant 0 : i32
    %c0_i32_0 = arith.constant 0 : i32
    %c0_i32_1 = arith.constant 0 : i32
    return %c0_i32, %c0_i32_0 : i32, i32
  }
  func.func @transform_18(%arg0: i32) -> (i32, i32) {
    %c0_i32 = arith.constant 0 : i32
    %c0_i32_0 = arith.constant 0 : i32
    %c0_i32_1 = arith.constant 0 : i32
    return %c0_i32, %c0_i32_0 : i32, i32
  }
  func.func @transform_19(%arg0: i32) -> (i32, i32) {
    %c0_i32 = arith.constant 0 : i32
    %c0_i32_0 = arith.constant 0 : i32
    %c0_i32_1 = arith.constant 0 : i32
    return %c0_i32, %c0_i32_0 : i32, i32
  }
  func.func @transform_20(%arg0: i32) -> (i32, i32) {
    %c0_i32 = arith.constant 0 : i32
    %c0_i32_0 = arith.constant 0 : i32
    %c0_i32_1 = arith.constant 0 : i32
    return %c0_i32, %c0_i32_0 : i32, i32
  }
  func.func @transform_21(%arg0: i32) -> (i32, i32) {
    %c0_i32 = arith.constant 0 : i32
    %c0_i32_0 = arith.constant 0 : i32
    %c0_i32_1 = arith.constant 0 : i32
    return %c0_i32, %c0_i32_0 : i32, i32
  }
  func.func @transform_22(%arg0: i32) -> (i32, i32, i32) {
    %c0_i32 = arith.constant 0 : i32
    %c0_i32_0 = arith.constant 0 : i32
    %c0_i32_1 = arith.constant 0 : i32
    return %arg0, %c0_i32, %c0_i32_0 : i32, i32, i32
  }
}

</mosaic_0001>

<llo_original>
// kernel: hybridnet_forward.1
$region0: #{hybridnet_forward.1}
  #allocation0 [shape = 'u32[]', space=smem, size = 0x4, offset = 0x4, fixed_abs, tag = 'smem constant byte address 0x4 - core index']
  #allocation1 [shape = 'u32[144,128]{1,0:T(1,128)}', space=vmem, size = 0x12000, scoped, tag = 'internal scratch']
  %s0 = inlined_call_operand.vmem [shape: f32[2,256,3], index: 0, kind: input, shape index: {}]
  %s1 = inlined_call_operand.vmem [shape: f32[2,1,8], index: 1, kind: input, shape index: {}]
  %s2 = inlined_call_operand.vmem [shape: bf16[9,3,16], index: 2, kind: input, shape index: {}]
  %s3 = inlined_call_operand.vmem [shape: f32[1,16], index: 3, kind: input, shape index: {}]
  %s4 = inlined_call_operand.vmem [shape: f32[9,256,1], index: 4, kind: input, shape index: {}]
  %s5 = inlined_call_operand.vmem [shape: bf16[9,16,32], index: 5, kind: input, shape index: {}]
  %s6 = inlined_call_operand.vmem [shape: f32[1,32], index: 6, kind: input, shape index: {}]
  %s7 = inlined_call_operand.vmem [shape: f32[9,64,1], index: 7, kind: input, shape index: {}]
  %s8 = inlined_call_operand.vmem [shape: bf16[9,32,64], index: 8, kind: input, shape index: {}]
  %s9 = inlined_call_operand.vmem [shape: f32[1,64], index: 9, kind: input, shape index: {}]
  %s10 = inlined_call_operand.vmem [shape: f32[9,16,1], index: 10, kind: input, shape index: {}]
  %s11 = inlined_call_operand.vmem [shape: bf16[64,256], index: 11, kind: input, shape index: {}]
  %s12 = inlined_call_operand.vmem [shape: bf16[16,64], index: 12, kind: input, shape index: {}]
  %s13 = inlined_call_operand.vmem [shape: bf16[64,32], index: 13, kind: input, shape index: {}]
  %s14 = inlined_call_operand.vmem [shape: f32[1,32], index: 14, kind: input, shape index: {}]
  %s15 = inlined_call_operand.vmem [shape: bf16[8,32], index: 15, kind: input, shape index: {}]
  %s16 = inlined_call_operand.vmem [shape: f32[1,32], index: 16, kind: input, shape index: {}]
  %s17 = inlined_call_operand.vmem [shape: bf16[32,32], index: 17, kind: input, shape index: {}]
  %s18 = inlined_call_operand.vmem [shape: bf16[32,32], index: 18, kind: input, shape index: {}]
  %s19 = inlined_call_operand.vmem [shape: f32[1,32], index: 19, kind: input, shape index: {}]
  %s20 = inlined_call_operand.vmem [shape: bf16[32,2], index: 20, kind: input, shape index: {}]
  %s21 = inlined_call_operand.vmem [shape: f32[1,2], index: 21, kind: input, shape index: {}]
  %s22 = inlined_call_operand.hbm [shape: f32[2,1,2], index: 22, kind: output, shape index: {}]
  %s23 = sld [smem:[#allocation0]]
  $region121: #{hybridnet_forward.1} parent=0
    _
  %s25 = ssub.s32 1, %s23
  %s26 = scalar_select 0, %s25, %s23
  $region1: #{hybridnet_forward.1} parent=0
    #allocation2 [shape = 'u8[1024]{0}', space=vmem, size = 0x400, scoped, tag = 'output window, operand 0']
    #allocation3 [shape = 's32[2]{0}', space=sflag, size = 0x8, scoped, tag = 'scoped memory for hybridnet_forward.1']
    %27 = vsyncpa [#allocation3], 0
    %s28 = scalar_lea.sflag [#allocation3], 1
    %29 = vsyncpa %s28, 0
    loop: start=0, step=1, limit=4
    $region2: #{hybridnet_forward.1} parent=1 // loop_pre_header
      _
    $region3: #{hybridnet_forward.1} parent=1 // loop_header
      %s31 = sphi 0, %s35
      %p32 = scmp.ge.s32.totalorder %s31, 4
      %s41 = sphi 0, %s43
      %s44 = sphi 0, %s41
      %s45 = sphi 0, %s44
      %s61 = sphi 0, %s45
      %s67 = sphi 0, %s69
      %s70 = sphi 0, %s67
      %s71 = sphi 0, %s70
      %s87 = sphi 0, %s71
      %s91 = sphi 0, %s91
      %s93 = sphi 0, %s91
      %s94 = sphi 0, %s93
      %s108 = sphi 0, %s94
      %s112 = sphi 0, %s112
      %s114 = sphi 0, %s112
      %s115 = sphi 0, %s114
      %s129 = sphi 0, %s115
      %s133 = sphi 0, %s133
      %s135 = sphi 0, %s133
      %s136 = sphi 0, %s135
      %s150 = sphi 0, %s136
      %s154 = sphi 0, %s154
      %s156 = sphi 0, %s154
      %s157 = sphi 0, %s156
      %s171 = sphi 0, %s157
      %s175 = sphi 0, %s175
      %s177 = sphi 0, %s175
      %s178 = sphi 0, %s177
      %s192 = sphi 0, %s178
      %s196 = sphi 0, %s196
      %s198 = sphi 0, %s196
      %s199 = sphi 0, %s198
      %s213 = sphi 0, %s199
      %s217 = sphi 0, %s217
      %s219 = sphi 0, %s217
      %s220 = sphi 0, %s219
      %s234 = sphi 0, %s220
      %s238 = sphi 0, %s238
      %s240 = sphi 0, %s238
      %s241 = sphi 0, %s240
      %s255 = sphi 0, %s241
      %s259 = sphi 0, %s259
      %s261 = sphi 0, %s259
      %s262 = sphi 0, %s261
      %s276 = sphi 0, %s262
      %s280 = sphi 0, %s280
      %s282 = sphi 0, %s280
      %s283 = sphi 0, %s282
      %s297 = sphi 0, %s283
      %s301 = sphi 0, %s301
      %s303 = sphi 0, %s301
      %s304 = sphi 0, %s303
      %s318 = sphi 0, %s304
      %s322 = sphi 0, %s322
      %s324 = sphi 0, %s322
      %s325 = sphi 0, %s324
      %s339 = sphi 0, %s325
      %s343 = sphi 0, %s343
      %s345 = sphi 0, %s343
      %s346 = sphi 0, %s345
      %s360 = sphi 0, %s346
      %s364 = sphi 0, %s364
      %s366 = sphi 0, %s364
      %s367 = sphi 0, %s366
      %s381 = sphi 0, %s367
      %s385 = sphi 0, %s385
      %s387 = sphi 0, %s385
      %s388 = sphi 0, %s387
      %s402 = sphi 0, %s388
      %s406 = sphi 0, %s406
      %s408 = sphi 0, %s406
      %s409 = sphi 0, %s408
      %s423 = sphi 0, %s409
      %s427 = sphi 0, %s427
      %s429 = sphi 0, %s427
      %s430 = sphi 0, %s429
      %s444 = sphi 0, %s430
      %s448 = sphi 0, %s448
      %s450 = sphi 0, %s448
      %s451 = sphi 0, %s450
      %s465 = sphi 0, %s451
      %s469 = sphi 0, %s469
      %s471 = sphi 0, %s469
      %s472 = sphi 0, %s471
      %s486 = sphi 0, %s472
      %s490 = sphi 0, %s490
      %s492 = sphi 0, %s490
      %s493 = sphi 0, %s492
      %s507 = sphi 0, %s493
      %s513 = sphi 0, %s515
      %s516 = sphi 0, %s513
      %s517 = sphi 0, %s516
      %s533 = sphi 0, %s517
    $region4: #{hybridnet_forward.1} parent=1 // loop_header_branch
      %34 = sbr.rel (%p32) target = $region8
    $region5: #{hybridnet_forward.1} parent=1 // loop_body
      %s36 = ssub.s32 %s31, 1
      %s37 = ssub.s32 %s31, 2
      %s38 = sadd.s32 %s31, 1
      %s39 = ssub.s32 %s31, %s38
      %p40 = scmp.eq.s32.totalorder %s39, 0
      %s42 = sadd.s32 %s41, 1
      %s43 = scalar_select %p40, %s41, %s42
      %p46 = pneg %p40
      %p47 = scmp.eq.s32.totalorder %s31, 1
      %p48 = por %p46, %p47
      %p49 = scmp.ne.s32.totalorder %s41, %s44
      %p50 = scmp.eq.s32.totalorder %s31, 0
      %p51 = por %p49, %p50
      %p52 = scmp.ne.s32.totalorder %s41, %s44
      %p53 = scmp.eq.s32.totalorder %s36, 1
      %p54 = por %p52, %p53
      %p55 = scmp.ne.s32.totalorder %s44, %s45
      %p56 = scmp.eq.s32.totalorder %s36, 0
      %p57 = por %p55, %p56
      %p58 = scmp.ne.s32.totalorder %s44, %s45
      %p59 = scmp.eq.s32.totalorder %s37, 1
      %p60 = por %p58, %p59
      %p62 = scmp.ne.s32.totalorder %s45, %s61
      %p63 = scmp.eq.s32.totalorder %s37, 0
      %p64 = por %p62, %p63
      %s65 = ssub.s32 %s31, %s38
      %p66 = scmp.eq.s32.totalorder %s65, 0
      %s68 = sadd.s32 %s67, 1
      %s69 = scalar_select %p66, %s67, %s68
      %p72 = pneg %p66
      %p73 = scmp.eq.s32.totalorder %s31, 1
      %p74 = por %p72, %p73
      %p75 = scmp.ne.s32.totalorder %s67, %s70
      %p76 = scmp.eq.s32.totalorder %s31, 0
      %p77 = por %p75, %p76
      %p78 = scmp.ne.s32.totalorder %s67, %s70
      %p79 = scmp.eq.s32.totalorder %s36, 1
      %p80 = por %p78, %p79
      %p81 = scmp.ne.s32.totalorder %s70, %s71
      %p82 = scmp.eq.s32.totalorder %s36, 0
      %p83 = por %p81, %p82
      %p84 = scmp.ne.s32.totalorder %s70, %s71
      %p85 = scmp.eq.s32.totalorder %s37, 1
      %p86 = por %p84, %p85
      %p88 = scmp.ne.s32.totalorder %s71, %s87
      %p89 = scmp.eq.s32.totalorder %s37, 0
      %p90 = por %p88, %p89
      %s92 = sadd.s32 %s91, 1
      %p95 = scmp.eq.s32.totalorder %s31, 1
      %p96 = scmp.ne.s32.totalorder %s91, %s93
      %p97 = scmp.eq.s32.totalorder %s31, 0
      %p98 = por %p96, %p97
      %p99 = scmp.ne.s32.totalorder %s91, %s93
      %p100 = scmp.eq.s32.totalorder %s36, 1
      %p101 = por %p99, %p100
      %p102 = scmp.ne.s32.totalorder %s93, %s94
      %p103 = scmp.eq.s32.totalorder %s36, 0
      %p104 = por %p102, %p103
      %p105 = scmp.ne.s32.totalorder %s93, %s94
      %p106 = scmp.eq.s32.totalorder %s37, 1
      %p107 = por %p105, %p106
      %p109 = scmp.ne.s32.totalorder %s94, %s108
      %p110 = scmp.eq.s32.totalorder %s37, 0
      %p111 = por %p109, %p110
      %s113 = sadd.s32 %s112, 1
      %p116 = scmp.eq.s32.totalorder %s31, 1
      %p117 = scmp.ne.s32.totalorder %s112, %s114
      %p118 = scmp.eq.s32.totalorder %s31, 0
      %p119 = por %p117, %p118
      %p120 = scmp.ne.s32.totalorder %s112, %s114
      %p121 = scmp.eq.s32.totalorder %s36, 1
      %p122 = por %p120, %p121
      %p123 = scmp.ne.s32.totalorder %s114, %s115
      %p124 = scmp.eq.s32.totalorder %s36, 0
      %p125 = por %p123, %p124
      %p126 = scmp.ne.s32.totalorder %s114, %s115
      %p127 = scmp.eq.s32.totalorder %s37, 1
      %p128 = por %p126, %p127
      %p130 = scmp.ne.s32.totalorder %s115, %s129
      %p131 = scmp.eq.s32.totalorder %s37, 0
      %p132 = por %p130, %p131
      %s134 = sadd.s32 %s133, 1
      %p137 = scmp.eq.s32.totalorder %s31, 1
      %p138 = scmp.ne.s32.totalorder %s133, %s135
      %p139 = scmp.eq.s32.totalorder %s31, 0
      %p140 = por %p138, %p139
      %p141 = scmp.ne.s32.totalorder %s133, %s135
      %p142 = scmp.eq.s32.totalorder %s36, 1
      %p143 = por %p141, %p142
      %p144 = scmp.ne.s32.totalorder %s135, %s136
      %p145 = scmp.eq.s32.totalorder %s36, 0
      %p146 = por %p144, %p145
      %p147 = scmp.ne.s32.totalorder %s135, %s136
      %p148 = scmp.eq.s32.totalorder %s37, 1
      %p149 = por %p147, %p148
      %p151 = scmp.ne.s32.totalorder %s136, %s150
      %p152 = scmp.eq.s32.totalorder %s37, 0
      %p153 = por %p151, %p152
      %s155 = sadd.s32 %s154, 1
      %p158 = scmp.eq.s32.totalorder %s31, 1
      %p159 = scmp.ne.s32.totalorder %s154, %s156
      %p160 = scmp.eq.s32.totalorder %s31, 0
      %p161 = por %p159, %p160
      %p162 = scmp.ne.s32.totalorder %s154, %s156
      %p163 = scmp.eq.s32.totalorder %s36, 1
      %p164 = por %p162, %p163
      %p165 = scmp.ne.s32.totalorder %s156, %s157
      %p166 = scmp.eq.s32.totalorder %s36, 0
      %p167 = por %p165, %p166
      %p168 = scmp.ne.s32.totalorder %s156, %s157
      %p169 = scmp.eq.s32.totalorder %s37, 1
      %p170 = por %p168, %p169
      %p172 = scmp.ne.s32.totalorder %s157, %s171
      %p173 = scmp.eq.s32.totalorder %s37, 0
      %p174 = por %p172, %p173
      %s176 = sadd.s32 %s175, 1
      %p179 = scmp.eq.s32.totalorder %s31, 1
      %p180 = scmp.ne.s32.totalorder %s175, %s177
      %p181 = scmp.eq.s32.totalorder %s31, 0
      %p182 = por %p180, %p181
      %p183 = scmp.ne.s32.totalorder %s175, %s177
      %p184 = scmp.eq.s32.totalorder %s36, 1
      %p185 = por %p183, %p184
      %p186 = scmp.ne.s32.totalorder %s177, %s178
      %p187 = scmp.eq.s32.totalorder %s36, 0
      %p188 = por %p186, %p187
      %p189 = scmp.ne.s32.totalorder %s177, %s178
      %p190 = scmp.eq.s32.totalorder %s37, 1
      %p191 = por %p189, %p190
      %p193 = scmp.ne.s32.totalorder %s178, %s192
      %p194 = scmp.eq.s32.totalorder %s37, 0
      %p195 = por %p193, %p194
      %s197 = sadd.s32 %s196, 1
      %p200 = scmp.eq.s32.totalorder %s31, 1
      %p201 = scmp.ne.s32.totalorder %s196, %s198
      %p202 = scmp.eq.s32.totalorder %s31, 0
      %p203 = por %p201, %p202
      %p204 = scmp.ne.s32.totalorder %s196, %s198
      %p205 = scmp.eq.s32.totalorder %s36, 1
      %p206 = por %p204, %p205
      %p207 = scmp.ne.s32.totalorder %s198, %s199
      %p208 = scmp.eq.s32.totalorder %s36, 0
      %p209 = por %p207, %p208
      %p210 = scmp.ne.s32.totalorder %s198, %s199
      %p211 = scmp.eq.s32.totalorder %s37, 1
      %p212 = por %p210, %p211
      %p214 = scmp.ne.s32.totalorder %s199, %s213
      %p215 = scmp.eq.s32.totalorder %s37, 0
      %p216 = por %p214, %p215
      %s218 = sadd.s32 %s217, 1
      %p221 = scmp.eq.s32.totalorder %s31, 1
      %p222 = scmp.ne.s32.totalorder %s217, %s219
      %p223 = scmp.eq.s32.totalorder %s31, 0
      %p224 = por %p222, %p223
      %p225 = scmp.ne.s32.totalorder %s217, %s219
      %p226 = scmp.eq.s32.totalorder %s36, 1
      %p227 = por %p225, %p226
      %p228 = scmp.ne.s32.totalorder %s219, %s220
      %p229 = scmp.eq.s32.totalorder %s36, 0
      %p230 = por %p228, %p229
      %p231 = scmp.ne.s32.totalorder %s219, %s220
      %p232 = scmp.eq.s32.totalorder %s37, 1
      %p233 = por %p231, %p232
      %p235 = scmp.ne.s32.totalorder %s220, %s234
      %p236 = scmp.eq.s32.totalorder %s37, 0
      %p237 = por %p235, %p236
      %s239 = sadd.s32 %s238, 1
      %p242 = scmp.eq.s32.totalorder %s31, 1
      %p243 = scmp.ne.s32.totalorder %s238, %s240
      %p244 = scmp.eq.s32.totalorder %s31, 0
      %p245 = por %p243, %p244
      %p246 = scmp.ne.s32.totalorder %s238, %s240
      %p247 = scmp.eq.s32.totalorder %s36, 1
      %p248 = por %p246, %p247
      %p249 = scmp.ne.s32.totalorder %s240, %s241
      %p250 = scmp.eq.s32.totalorder %s36, 0
      %p251 = por %p249, %p250
      %p252 = scmp.ne.s32.totalorder %s240, %s241
      %p253 = scmp.eq.s32.totalorder %s37, 1
      %p254 = por %p252, %p253
      %p256 = scmp.ne.s32.totalorder %s241, %s255
      %p257 = scmp.eq.s32.totalorder %s37, 0
      %p258 = por %p256, %p257
      %s260 = sadd.s32 %s259, 1
      %p263 = scmp.eq.s32.totalorder %s31, 1
      %p264 = scmp.ne.s32.totalorder %s259, %s261
      %p265 = scmp.eq.s32.totalorder %s31, 0
      %p266 = por %p264, %p265
      %p267 = scmp.ne.s32.totalorder %s259, %s261
      %p268 = scmp.eq.s32.totalorder %s36, 1
      %p269 = por %p267, %p268
      %p270 = scmp.ne.s32.totalorder %s261, %s262
      %p271 = scmp.eq.s32.totalorder %s36, 0
      %p272 = por %p270, %p271
      %p273 = scmp.ne.s32.totalorder %s261, %s262
      %p274 = scmp.eq.s32.totalorder %s37, 1
      %p275 = por %p273, %p274
      %p277 = scmp.ne.s32.totalorder %s262, %s276
      %p278 = scmp.eq.s32.totalorder %s37, 0
      %p279 = por %p277, %p278
      %s281 = sadd.s32 %s280, 1
      %p284 = scmp.eq.s32.totalorder %s31, 1
      %p285 = scmp.ne.s32.totalorder %s280, %s282
      %p286 = scmp.eq.s32.totalorder %s31, 0
      %p287 = por %p285, %p286
      %p288 = scmp.ne.s32.totalorder %s280, %s282
      %p289 = scmp.eq.s32.totalorder %s36, 1
      %p290 = por %p288, %p289
      %p291 = scmp.ne.s32.totalorder %s282, %s283
      %p292 = scmp.eq.s32.totalorder %s36, 0
      %p293 = por %p291, %p292
      %p294 = scmp.ne.s32.totalorder %s282, %s283
      %p295 = scmp.eq.s32.totalorder %s37, 1
      %p296 = por %p294, %p295
      %p298 = scmp.ne.s32.totalorder %s283, %s297
      %p299 = scmp.eq.s32.totalorder %s37, 0
      %p300 = por %p298, %p299
      %s302 = sadd.s32 %s301, 1
      %p305 = scmp.eq.s32.totalorder %s31, 1
      %p306 = scmp.ne.s32.totalorder %s301, %s303
      %p307 = scmp.eq.s32.totalorder %s31, 0
      %p308 = por %p306, %p307
      %p309 = scmp.ne.s32.totalorder %s301, %s303
      %p310 = scmp.eq.s32.totalorder %s36, 1
      %p311 = por %p309, %p310
      %p312 = scmp.ne.s32.totalorder %s303, %s304
      %p313 = scmp.eq.s32.totalorder %s36, 0
      %p314 = por %p312, %p313
      %p315 = scmp.ne.s32.totalorder %s303, %s304
      %p316 = scmp.eq.s32.totalorder %s37, 1
      %p317 = por %p315, %p316
      %p319 = scmp.ne.s32.totalorder %s304, %s318
      %p320 = scmp.eq.s32.totalorder %s37, 0
      %p321 = por %p319, %p320
      %s323 = sadd.s32 %s322, 1
      %p326 = scmp.eq.s32.totalorder %s31, 1
      %p327 = scmp.ne.s32.totalorder %s322, %s324
      %p328 = scmp.eq.s32.totalorder %s31, 0
      %p329 = por %p327, %p328
      %p330 = scmp.ne.s32.totalorder %s322, %s324
      %p331 = scmp.eq.s32.totalorder %s36, 1
      %p332 = por %p330, %p331
      %p333 = scmp.ne.s32.totalorder %s324, %s325
      %p334 = scmp.eq.s32.totalorder %s36, 0
      %p335 = por %p333, %p334
      %p336 = scmp.ne.s32.totalorder %s324, %s325
      %p337 = scmp.eq.s32.totalorder %s37, 1
      %p338 = por %p336, %p337
      %p340 = scmp.ne.s32.totalorder %s325, %s339
      %p341 = scmp.eq.s32.totalorder %s37, 0
      %p342 = por %p340, %p341
      %s344 = sadd.s32 %s343, 1
      %p347 = scmp.eq.s32.totalorder %s31, 1
      %p348 = scmp.ne.s32.totalorder %s343, %s345
      %p349 = scmp.eq.s32.totalorder %s31, 0
      %p350 = por %p348, %p349
      %p351 = scmp.ne.s32.totalorder %s343, %s345
      %p352 = scmp.eq.s32.totalorder %s36, 1
      %p353 = por %p351, %p352
      %p354 = scmp.ne.s32.totalorder %s345, %s346
      %p355 = scmp.eq.s32.totalorder %s36, 0
      %p356 = por %p354, %p355
      %p357 = scmp.ne.s32.totalorder %s345, %s346
      %p358 = scmp.eq.s32.totalorder %s37, 1
      %p359 = por %p357, %p358
      %p361 = scmp.ne.s32.totalorder %s346, %s360
      %p362 = scmp.eq.s32.totalorder %s37, 0
      %p363 = por %p361, %p362
      %s365 = sadd.s32 %s364, 1
      %p368 = scmp.eq.s32.totalorder %s31, 1
      %p369 = scmp.ne.s32.totalorder %s364, %s366
      %p370 = scmp.eq.s32.totalorder %s31, 0
      %p371 = por %p369, %p370
      %p372 = scmp.ne.s32.totalorder %s364, %s366
      %p373 = scmp.eq.s32.totalorder %s36, 1
      %p374 = por %p372, %p373
      %p375 = scmp.ne.s32.totalorder %s366, %s367
      %p376 = scmp.eq.s32.totalorder %s36, 0
      %p377 = por %p375, %p376
      %p378 = scmp.ne.s32.totalorder %s366, %s367
      %p379 = scmp.eq.s32.totalorder %s37, 1
      %p380 = por %p378, %p379
      %p382 = scmp.ne.s32.totalorder %s367, %s381
      %p383 = scmp.eq.s32.totalorder %s37, 0
      %p384 = por %p382, %p383
      %s386 = sadd.s32 %s385, 1
      %p389 = scmp.eq.s32.totalorder %s31, 1
      %p390 = scmp.ne.s32.totalorder %s385, %s387
      %p391 = scmp.eq.s32.totalorder %s31, 0
      %p392 = por %p390, %p391
      %p393 = scmp.ne.s32.totalorder %s385, %s387
      %p394 = scmp.eq.s32.totalorder %s36, 1
      %p395 = por %p393, %p394
      %p396 = scmp.ne.s32.totalorder %s387, %s388
      %p397 = scmp.eq.s32.totalorder %s36, 0
      %p398 = por %p396, %p397
      %p399 = scmp.ne.s32.totalorder %s387, %s388
      %p400 = scmp.eq.s32.totalorder %s37, 1
      %p401 = por %p399, %p400
      %p403 = scmp.ne.s32.totalorder %s388, %s402
      %p404 = scmp.eq.s32.totalorder %s37, 0
      %p405 = por %p403, %p404
      %s407 = sadd.s32 %s406, 1
      %p410 = scmp.eq.s32.totalorder %s31, 1
      %p411 = scmp.ne.s32.totalorder %s406, %s408
      %p412 = scmp.eq.s32.totalorder %s31, 0
      %p413 = por %p411, %p412
      %p414 = scmp.ne.s32.totalorder %s406, %s408
      %p415 = scmp.eq.s32.totalorder %s36, 1
      %p416 = por %p414, %p415
      %p417 = scmp.ne.s32.totalorder %s408, %s409
      %p418 = scmp.eq.s32.totalorder %s36, 0
      %p419 = por %p417, %p418
      %p420 = scmp.ne.s32.totalorder %s408, %s409
      %p421 = scmp.eq.s32.totalorder %s37, 1
      %p422 = por %p420, %p421
      %p424 = scmp.ne.s32.totalorder %s409, %s423
      %p425 = scmp.eq.s32.totalorder %s37, 0
      %p426 = por %p424, %p425
      %s428 = sadd.s32 %s427, 1
      %p431 = scmp.eq.s32.totalorder %s31, 1
      %p432 = scmp.ne.s32.totalorder %s427, %s429
      %p433 = scmp.eq.s32.totalorder %s31, 0
      %p434 = por %p432, %p433
      %p435 = scmp.ne.s32.totalorder %s427, %s429
      %p436 = scmp.eq.s32.totalorder %s36, 1
      %p437 = por %p435, %p436
      %p438 = scmp.ne.s32.totalorder %s429, %s430
      %p439 = scmp.eq.s32.totalorder %s36, 0
      %p440 = por %p438, %p439
      %p441 = scmp.ne.s32.totalorder %s429, %s430
      %p442 = scmp.eq.s32.totalorder %s37, 1
      %p443 = por %p441, %p442
      %p445 = scmp.ne.s32.totalorder %s430, %s444
      %p446 = scmp.eq.s32.totalorder %s37, 0
      %p447 = por %p445, %p446
      %s449 = sadd.s32 %s448, 1
      %p452 = scmp.eq.s32.totalorder %s31, 1
      %p453 = scmp.ne.s32.totalorder %s448, %s450
      %p454 = scmp.eq.s32.totalorder %s31, 0
      %p455 = por %p453, %p454
      %p456 = scmp.ne.s32.totalorder %s448, %s450
      %p457 = scmp.eq.s32.totalorder %s36, 1
      %p458 = por %p456, %p457
      %p459 = scmp.ne.s32.totalorder %s450, %s451
      %p460 = scmp.eq.s32.totalorder %s36, 0
      %p461 = por %p459, %p460
      %p462 = scmp.ne.s32.totalorder %s450, %s451
      %p463 = scmp.eq.s32.totalorder %s37, 1
      %p464 = por %p462, %p463
      %p466 = scmp.ne.s32.totalorder %s451, %s465
      %p467 = scmp.eq.s32.totalorder %s37, 0
      %p468 = por %p466, %p467
      %s470 = sadd.s32 %s469, 1
      %p473 = scmp.eq.s32.totalorder %s31, 1
      %p474 = scmp.ne.s32.totalorder %s469, %s471
      %p475 = scmp.eq.s32.totalorder %s31, 0
      %p476 = por %p474, %p475
      %p477 = scmp.ne.s32.totalorder %s469, %s471
      %p478 = scmp.eq.s32.totalorder %s36, 1
      %p479 = por %p477, %p478
      %p480 = scmp.ne.s32.totalorder %s471, %s472
      %p481 = scmp.eq.s32.totalorder %s36, 0
      %p482 = por %p480, %p481
      %p483 = scmp.ne.s32.totalorder %s471, %s472
      %p484 = scmp.eq.s32.totalorder %s37, 1
      %p485 = por %p483, %p484
      %p487 = scmp.ne.s32.totalorder %s472, %s486
      %p488 = scmp.eq.s32.totalorder %s37, 0
      %p489 = por %p487, %p488
      %s491 = sadd.s32 %s490, 1
      %p494 = scmp.eq.s32.totalorder %s31, 1
      %p495 = scmp.ne.s32.totalorder %s490, %s492
      %p496 = scmp.eq.s32.totalorder %s31, 0
      %p497 = por %p495, %p496
      %p498 = scmp.ne.s32.totalorder %s490, %s492
      %p499 = scmp.eq.s32.totalorder %s36, 1
      %p500 = por %p498, %p499
      %p501 = scmp.ne.s32.totalorder %s492, %s493
      %p502 = scmp.eq.s32.totalorder %s36, 0
      %p503 = por %p501, %p502
      %p504 = scmp.ne.s32.totalorder %s492, %s493
      %p505 = scmp.eq.s32.totalorder %s37, 1
      %p506 = por %p504, %p505
      %p508 = scmp.ne.s32.totalorder %s493, %s507
      %p509 = scmp.eq.s32.totalorder %s37, 0
      %p510 = por %p508, %p509
      %s511 = ssub.s32 %s31, %s38
      %p512 = scmp.eq.s32.totalorder %s511, 0
      %s514 = sadd.s32 %s513, 1
      %s515 = scalar_select %p512, %s513, %s514
      %p518 = pneg %p512
      %p519 = scmp.eq.s32.totalorder %s31, 1
      %p520 = por %p518, %p519
      %p521 = scmp.ne.s32.totalorder %s513, %s516
      %p522 = scmp.eq.s32.totalorder %s31, 0
      %p523 = por %p521, %p522
      %p524 = scmp.ne.s32.totalorder %s513, %s516
      %p525 = scmp.eq.s32.totalorder %s36, 1
      %p526 = por %p524, %p525
      %p527 = scmp.ne.s32.totalorder %s516, %s517
      %p528 = scmp.eq.s32.totalorder %s36, 0
      %p529 = por %p527, %p528
      %p530 = scmp.ne.s32.totalorder %s516, %s517
      %p531 = scmp.eq.s32.totalorder %s37, 1
      %p532 = por %p530, %p531
      %p534 = scmp.ne.s32.totalorder %s517, %s533
      %p535 = scmp.eq.s32.totalorder %s37, 0
      %p536 = por %p534, %p535
      %p537 = scmp.le.s32.totalorder 1, %s31
      %p538 = scmp.lt.s32.totalorder %s31, 3
      %p539 = pnand %p537, %p538
      %p540 = pneg %p539
      // Predicated region
      $region9: #{hybridnet_forward.1} parent=5 // pred_check
        _
      $region10: #{hybridnet_forward.1} parent=5 // pred_check_branch
        %542 = sbr.rel (%p539) target = $region12
      $region11: #{hybridnet_forward.1} parent=5 // pred_region
        %s543 = ssub.s32 %s31, 1
        // Predicated region
        $region13: #{hybridnet_forward.1} parent=11 // pred_check
          %p544 = pneg %p104
        $region14: #{hybridnet_forward.1} parent=11 // pred_check_branch
          %546 = sbr.rel (%p544) target = $region16
        $region15: #{hybridnet_forward.1} parent=11 // pred_region
          _
        $region16: #{hybridnet_forward.1} parent=11 // pred_fallthru
          _
        // Predicated region
        $region17: #{hybridnet_forward.1} parent=11 // pred_check
          %p547 = pneg %p125
        $region18: #{hybridnet_forward.1} parent=11 // pred_check_branch
          %549 = sbr.rel (%p547) target = $region20
        $region19: #{hybridnet_forward.1} parent=11 // pred_region
          _
        $region20: #{hybridnet_forward.1} parent=11 // pred_fallthru
          _
        // Predicated region
        $region21: #{hybridnet_forward.1} parent=11 // pred_check
          %p550 = pneg %p146
        $region22: #{hybridnet_forward.1} parent=11 // pred_check_branch
          %552 = sbr.rel (%p550) target = $region24
        $region23: #{hybridnet_forward.1} parent=11 // pred_region
          _
        $region24: #{hybridnet_forward.1} parent=11 // pred_fallthru
          _
        // Predicated region
        $region25: #{hybridnet_forward.1} parent=11 // pred_check
          %p553 = pneg %p167
        $region26: #{hybridnet_forward.1} parent=11 // pred_check_branch
          %555 = sbr.rel (%p553) target = $region28
        $region27: #{hybridnet_forward.1} parent=11 // pred_region
          _
        $region28: #{hybridnet_forward.1} parent=11 // pred_fallthru
          _
        // Predicated region
        $region29: #{hybridnet_forward.1} parent=11 // pred_check
          %p556 = pneg %p188
        $region30: #{hybridnet_forward.1} parent=11 // pred_check_branch
          %558 = sbr.rel (%p556) target = $region32
        $region31: #{hybridnet_forward.1} parent=11 // pred_region
          _
        $region32: #{hybridnet_forward.1} parent=11 // pred_fallthru
          _
        // Predicated region
        $region33: #{hybridnet_forward.1} parent=11 // pred_check
          %p559 = pneg %p209
        $region34: #{hybridnet_forward.1} parent=11 // pred_check_branch
          %561 = sbr.rel (%p559) target = $region36
        $region35: #{hybridnet_forward.1} parent=11 // pred_region
          _
        $region36: #{hybridnet_forward.1} parent=11 // pred_fallthru
          _
        // Predicated region
        $region37: #{hybridnet_forward.1} parent=11 // pred_check
          %p562 = pneg %p230
        $region38: #{hybridnet_forward.1} parent=11 // pred_check_branch
          %564 = sbr.rel (%p562) target = $region40
        $region39: #{hybridnet_forward.1} parent=11 // pred_region
          _
        $region40: #{hybridnet_forward.1} parent=11 // pred_fallthru
          _
        // Predicated region
        $region41: #{hybridnet_forward.1} parent=11 // pred_check
          %p565 = pneg %p251
        $region42: #{hybridnet_forward.1} parent=11 // pred_check_branch
          %567 = sbr.rel (%p565) target = $region44
        $region43: #{hybridnet_forward.1} parent=11 // pred_region
          _
        $region44: #{hybridnet_forward.1} parent=11 // pred_fallthru
          _
        // Predicated region
        $region45: #{hybridnet_forward.1} parent=11 // pred_check
          %p568 = pneg %p272
        $region46: #{hybridnet_forward.1} parent=11 // pred_check_branch
          %570 = sbr.rel (%p568) target = $region48
        $region47: #{hybridnet_forward.1} parent=11 // pred_region
          _
        $region48: #{hybridnet_forward.1} parent=11 // pred_fallthru
          _
        // Predicated region
        $region49: #{hybridnet_forward.1} parent=11 // pred_check
          %p571 = pneg %p293
        $region50: #{hybridnet_forward.1} parent=11 // pred_check_branch
          %573 = sbr.rel (%p571) target = $region52
        $region51: #{hybridnet_forward.1} parent=11 // pred_region
          _
        $region52: #{hybridnet_forward.1} parent=11 // pred_fallthru
          _
        // Predicated region
        $region53: #{hybridnet_forward.1} parent=11 // pred_check
          %p574 = pneg %p314
        $region54: #{hybridnet_forward.1} parent=11 // pred_check_branch
          %576 = sbr.rel (%p574) target = $region56
        $region55: #{hybridnet_forward.1} parent=11 // pred_region
          _
        $region56: #{hybridnet_forward.1} parent=11 // pred_fallthru
          _
        // Predicated region
        $region57: #{hybridnet_forward.1} parent=11 // pred_check
          %p577 = pneg %p335
        $region58: #{hybridnet_forward.1} parent=11 // pred_check_branch
          %579 = sbr.rel (%p577) target = $region60
        $region59: #{hybridnet_forward.1} parent=11 // pred_region
          _
        $region60: #{hybridnet_forward.1} parent=11 // pred_fallthru
          _
        // Predicated region
        $region61: #{hybridnet_forward.1} parent=11 // pred_check
          %p580 = pneg %p356
        $region62: #{hybridnet_forward.1} parent=11 // pred_check_branch
          %582 = sbr.rel (%p580) target = $region64
        $region63: #{hybridnet_forward.1} parent=11 // pred_region
          _
        $region64: #{hybridnet_forward.1} parent=11 // pred_fallthru
          _
        // Predicated region
        $region65: #{hybridnet_forward.1} parent=11 // pred_check
          %p583 = pneg %p377
        $region66: #{hybridnet_forward.1} parent=11 // pred_check_branch
          %585 = sbr.rel (%p583) target = $region68
        $region67: #{hybridnet_forward.1} parent=11 // pred_region
          _
        $region68: #{hybridnet_forward.1} parent=11 // pred_fallthru
          _
        // Predicated region
        $region69: #{hybridnet_forward.1} parent=11 // pred_check
          %p586 = pneg %p398
        $region70: #{hybridnet_forward.1} parent=11 // pred_check_branch
          %588 = sbr.rel (%p586) target = $region72
        $region71: #{hybridnet_forward.1} parent=11 // pred_region
          _
        $region72: #{hybridnet_forward.1} parent=11 // pred_fallthru
          _
        // Predicated region
        $region73: #{hybridnet_forward.1} parent=11 // pred_check
          %p589 = pneg %p419
        $region74: #{hybridnet_forward.1} parent=11 // pred_check_branch
          %591 = sbr.rel (%p589) target = $region76
        $region75: #{hybridnet_forward.1} parent=11 // pred_region
          _
        $region76: #{hybridnet_forward.1} parent=11 // pred_fallthru
          _
        // Predicated region
        $region77: #{hybridnet_forward.1} parent=11 // pred_check
          %p592 = pneg %p440
        $region78: #{hybridnet_forward.1} parent=11 // pred_check_branch
          %594 = sbr.rel (%p592) target = $region80
        $region79: #{hybridnet_forward.1} parent=11 // pred_region
          _
        $region80: #{hybridnet_forward.1} parent=11 // pred_fallthru
          _
        // Predicated region
        $region81: #{hybridnet_forward.1} parent=11 // pred_check
          %p595 = pneg %p461
        $region82: #{hybridnet_forward.1} parent=11 // pred_check_branch
          %597 = sbr.rel (%p595) target = $region84
        $region83: #{hybridnet_forward.1} parent=11 // pred_region
          _
        $region84: #{hybridnet_forward.1} parent=11 // pred_fallthru
          _
        // Predicated region
        $region85: #{hybridnet_forward.1} parent=11 // pred_check
          %p598 = pneg %p482
        $region86: #{hybridnet_forward.1} parent=11 // pred_check_branch
          %600 = sbr.rel (%p598) target = $region88
        $region87: #{hybridnet_forward.1} parent=11 // pred_region
          _
        $region88: #{hybridnet_forward.1} parent=11 // pred_fallthru
          _
        // Predicated region
        $region89: #{hybridnet_forward.1} parent=11 // pred_check
          %p601 = pneg %p503
        $region90: #{hybridnet_forward.1} parent=11 // pred_check_branch
          %603 = sbr.rel (%p601) target = $region92
        $region91: #{hybridnet_forward.1} parent=11 // pred_region
          _
        $region92: #{hybridnet_forward.1} parent=11 // pred_fallthru
          _
      $region12: #{hybridnet_forward.1} parent=5 // pred_fallthru
        _
      %p604 = scmp.lt.s32.totalorder %s31, 2
      // Predicated region
      $region93: #{hybridnet_forward.1} parent=5 // pred_check
        %p605 = pneg %p604
      $region94: #{hybridnet_forward.1} parent=5 // pred_check_branch
        %607 = sbr.rel (%p605) target = $region96
      $region95: #{hybridnet_forward.1} parent=5 // pred_region
        // Predicated region
        $region97: #{hybridnet_forward.1} parent=95 // pred_check
          %p608 = pneg %p51
        $region98: #{hybridnet_forward.1} parent=95 // pred_check_branch
          %610 = sbr.rel (%p608) target = $region100
        $region99: #{hybridnet_forward.1} parent=95 // pred_region
          %p611 = scmp.lt.s32.totalorder %s31, 1
          %s612 = scalar_select %p611, %s31, 1
          %s613 = smul.addr %s612, 32
          %s614 = smul.addr %s613, 8
          %s615 = scalar_lea.vmem %s0, %s614
        $region100: #{hybridnet_forward.1} parent=95 // pred_fallthru
          _
        // Predicated region
        $region101: #{hybridnet_forward.1} parent=95 // pred_check
          %p616 = pneg %p77
        $region102: #{hybridnet_forward.1} parent=95 // pred_check_branch
          %618 = sbr.rel (%p616) target = $region104
        $region103: #{hybridnet_forward.1} parent=95 // pred_region
          %p619 = scmp.lt.s32.totalorder %s31, 1
          %s620 = scalar_select %p619, %s31, 1
          %s621 = scalar_lea.vmem %s1, %s620
        $region104: #{hybridnet_forward.1} parent=95 // pred_fallthru
          _
      $region96: #{hybridnet_forward.1} parent=5 // pred_fallthru
        _
      %p622 = scmp.le.s32.totalorder 1, %s31
      %p623 = scmp.lt.s32.totalorder %s31, 3
      %p624 = pnand %p622, %p623
      %p625 = pneg %p624
      // Predicated region
      $region105: #{hybridnet_forward.1} parent=5 // pred_check
        _
      $region106: #{hybridnet_forward.1} parent=5 // pred_check_branch
        %627 = sbr.rel (%p624) target = $region108
      $region107: #{hybridnet_forward.1} parent=5 // pred_region
        %s628 = ssub.s32 %s31, 1
        %p629 = scmp.lt.s32.totalorder %s36, 1
        %s630 = scalar_select %p629, %s36, 1
        %s631 = smul.addr %s630, 32
        %s632 = smul.addr %s631, 8
        %s633 = scalar_lea.vmem %s0, %s632
        %p634 = pneg %p57
        %p635 = pneg %p54
        %p636 = scmp.lt.s32.totalorder %s36, 1
        %s637 = scalar_select %p636, %s36, 1
        %s638 = scalar_lea.vmem %s1, %s637
        %p639 = pneg %p83
        %p640 = pneg %p80
        %p641 = pneg %p104
        %p642 = pneg %p101
        %p643 = pneg %p125
        %p644 = pneg %p122
        %p645 = pneg %p146
        %p646 = pneg %p143
        %p647 = pneg %p167
        %p648 = pneg %p164
        %p649 = pneg %p188
        %p650 = pneg %p185
        %p651 = pneg %p209
        %p652 = pneg %p206
        %p653 = pneg %p230
        %p654 = pneg %p227
        %p655 = pneg %p251
        %p656 = pneg %p248
        %p657 = pneg %p272
        %p658 = pneg %p269
        %p659 = pneg %p293
        %p660 = pneg %p290
        %p661 = pneg %p314
        %p662 = pneg %p311
        %p663 = pneg %p335
        %p664 = pneg %p332
        %p665 = pneg %p356
        %p666 = pneg %p353
        %p667 = pneg %p377
        %p668 = pneg %p374
        %p669 = pneg %p398
        %p670 = pneg %p395
        %p671 = pneg %p419
        %p672 = pneg %p416
        %p673 = pneg %p440
        %p674 = pneg %p437
        %p675 = pneg %p461
        %p676 = pneg %p458
        %p677 = pneg %p482
        %p678 = pneg %p479
        %p679 = pneg %p503
        %p680 = pneg %p500
        %p681 = pneg %p529
        %p682 = pneg %p526
        %s683 = sand.u32 %s516, 1
        %s684 = scalar_lea.sflag [#allocation3], %s683
        %s685 = sand.u32 %s516, 1
        %s686 = scalar_lea.vmem [#allocation2], %s685
        %p687 = scmp.lt.s32.totalorder %s36, 1
        %s688 = scalar_select %p687, %s36, 1
        %s689 = smul.addr %s688, 32
        %s690 = smul.addr %s689, 8
        %s691 = scalar_lea.vmem %s0, %s690
        %p692 = scmp.lt.s32.totalorder %s36, 1
        %s693 = scalar_select %p692, %s36, 1
        %s694 = scalar_lea.vmem %s1, %s693
        %v696 = vld [vmem:[%s691] sm:$0xff]
        %v697 = vld [vmem:[%s691 + $0x8] sm:$0xff]
        %v698 = vld [vmem:[%s691 + $0x10] sm:$0xff]
        %v699 = vld [vmem:[%s691 + $0x18] sm:$0xff]
        %v700 = vld [vmem:[%s691 + $0x20] sm:$0xff]
        %v701 = vld [vmem:[%s691 + $0x28] sm:$0xff]
        %v702 = vld [vmem:[%s691 + $0x30] sm:$0xff]
        %v703 = vld [vmem:[%s691 + $0x38] sm:$0xff]
        %v704 = vld [vmem:[%s691 + $0x40] sm:$0xff]
        %v705 = vld [vmem:[%s691 + $0x48] sm:$0xff]
        %v706 = vld [vmem:[%s691 + $0x50] sm:$0xff]
        %v707 = vld [vmem:[%s691 + $0x58] sm:$0xff]
        %v708 = vld [vmem:[%s691 + $0x60] sm:$0xff]
        %v709 = vld [vmem:[%s691 + $0x68] sm:$0xff]
        %v710 = vld [vmem:[%s691 + $0x70] sm:$0xff]
        %v711 = vld [vmem:[%s691 + $0x78] sm:$0xff]
        %v712 = vld [vmem:[%s691 + $0x80] sm:$0xff]
        %v713 = vld [vmem:[%s691 + $0x88] sm:$0xff]
        %v714 = vld [vmem:[%s691 + $0x90] sm:$0xff]
        %v715 = vld [vmem:[%s691 + $0x98] sm:$0xff]
        %v716 = vld [vmem:[%s691 + $0xa0] sm:$0xff]
        %v717 = vld [vmem:[%s691 + $0xa8] sm:$0xff]
        %v718 = vld [vmem:[%s691 + $0xb0] sm:$0xff]
        %v719 = vld [vmem:[%s691 + $0xb8] sm:$0xff]
        %v720 = vld [vmem:[%s691 + $0xc0] sm:$0xff]
        %v721 = vld [vmem:[%s691 + $0xc8] sm:$0xff]
        %v722 = vld [vmem:[%s691 + $0xd0] sm:$0xff]
        %v723 = vld [vmem:[%s691 + $0xd8] sm:$0xff]
        %v724 = vld [vmem:[%s691 + $0xe0] sm:$0xff]
        %v725 = vld [vmem:[%s691 + $0xe8] sm:$0xff]
        %v726 = vld [vmem:[%s691 + $0xf0] sm:$0xff]
        %v727 = vld [vmem:[%s691 + $0xf8] sm:$0xff]
        %v728 = vld [vmem:[%s3] sm:$0x1]
        %v729 = vrot.slane %v696, 7
        %v730 = vrot.slane %v697, 7
        %v731 = vrot.slane %v698, 7
        %v732 = vrot.slane %v699, 7
        %v733 = vrot.slane %v700, 7
        %v734 = vrot.slane %v701, 7
        %v735 = vrot.slane %v702, 7
        %v736 = vrot.slane %v703, 7
        %v737 = vrot.slane %v704, 7
        %v738 = vrot.slane %v705, 7
        %v739 = vrot.slane %v706, 7
        %v740 = vrot.slane %v707, 7
        %v741 = vrot.slane %v708, 7
        %v742 = vrot.slane %v709, 7
        %v743 = vrot.slane %v710, 7
        %v744 = vrot.slane %v711, 7
        %v745 = vrot.slane %v712, 7
        %v746 = vrot.slane %v713, 7
        %v747 = vrot.slane %v714, 7
        %v748 = vrot.slane %v715, 7
        %v749 = vrot.slane %v716, 7
        %v750 = vrot.slane %v717, 7
        %v751 = vrot.slane %v718, 7
        %v752 = vrot.slane %v719, 7
        %v753 = vrot.slane %v720, 7
        %v754 = vrot.slane %v721, 7
        %v755 = vrot.slane %v722, 7
        %v756 = vrot.slane %v723, 7
        %v757 = vrot.slane %v724, 7
        %v758 = vrot.slane %v725, 7
        %v759 = vrot.slane %v726, 7
        %v760 = vrot.slane %v727, 7
        %v761 = vlaneseq
        %v762 = vshrl.u32 %v761, 7
        %vm763 = vcmp.lt.s32.totalorder %v762, 1
        %v764 = vsel %vm763, %v759, %v760
        %v765 = vsel %vm763, %v758, %v759
        %v766 = vsel %vm763, %v757, %v758
        %v767 = vsel %vm763, %v756, %v757
        %v768 = vsel %vm763, %v755, %v756
        %v769 = vsel %vm763, %v754, %v755
        %v770 = vsel %vm763, %v753, %v754
        %v771 = vsel %vm763, %v752, %v753
        %v772 = vsel %vm763, %v751, %v752
        %v773 = vsel %vm763, %v750, %v751
        %v774 = vsel %vm763, %v749, %v750
        %v775 = vsel %vm763, %v748, %v749
        %v776 = vsel %vm763, %v747, %v748
        %v777 = vsel %vm763, %v746, %v747
        %v778 = vsel %vm763, %v745, %v746
        %v779 = vsel %vm763, %v744, %v745
        %v780 = vsel %vm763, %v743, %v744
        %v781 = vsel %vm763, %v742, %v743
        %v782 = vsel %vm763, %v741, %v742
        %v783 = vsel %vm763, %v740, %v741
        %v784 = vsel %vm763, %v739, %v740
        %v785 = vsel %vm763, %v738, %v739
        %v786 = vsel %vm763, %v737, %v738
        %v787 = vsel %vm763, %v736, %v737
        %v788 = vsel %vm763, %v735, %v736
        %v789 = vsel %vm763, %v734, %v735
        %v790 = vsel %vm763, %v733, %v734
        %v791 = vsel %vm763, %v732, %v733
        %v792 = vsel %vm763, %v731, %v732
        %v793 = vsel %vm763, %v730, %v731
        %v794 = vsel %vm763, %v729, %v730
        %v795 = vsel %vm763, %v760, %v729
        %v796 = vld [vmem:[%s4] sm:$0xff]
        %v797 = vld [vmem:[%s4 + $0x8] sm:$0xff]
        %v798 = vld [vmem:[%s4 + $0x10] sm:$0xff]
        %v799 = vld [vmem:[%s4 + $0x18] sm:$0xff]
        %v800 = vld [vmem:[%s4 + $0x20] sm:$0xff]
        %v801 = vld [vmem:[%s4 + $0x28] sm:$0xff]
        %v802 = vld [vmem:[%s4 + $0x30] sm:$0xff]
        %v803 = vld [vmem:[%s4 + $0x38] sm:$0xff]
        %v804 = vld [vmem:[%s4 + $0x40] sm:$0xff]
        %v805 = vld [vmem:[%s4 + $0x48] sm:$0xff]
        %v806 = vld [vmem:[%s4 + $0x50] sm:$0xff]
        %v807 = vld [vmem:[%s4 + $0x58] sm:$0xff]
        %v808 = vld [vmem:[%s4 + $0x60] sm:$0xff]
        %v809 = vld [vmem:[%s4 + $0x68] sm:$0xff]
        %v810 = vld [vmem:[%s4 + $0x70] sm:$0xff]
        %v811 = vld [vmem:[%s4 + $0x78] sm:$0xff]
        %v812 = vld [vmem:[%s4 + $0x80] sm:$0xff]
        %v813 = vld [vmem:[%s4 + $0x88] sm:$0xff]
        %v814 = vld [vmem:[%s4 + $0x90] sm:$0xff]
        %v815 = vld [vmem:[%s4 + $0x98] sm:$0xff]
        %v816 = vld [vmem:[%s4 + $0xa0] sm:$0xff]
        %v817 = vld [vmem:[%s4 + $0xa8] sm:$0xff]
        %v818 = vld [vmem:[%s4 + $0xb0] sm:$0xff]
        %v819 = vld [vmem:[%s4 + $0xb8] sm:$0xff]
        %v820 = vld [vmem:[%s4 + $0xc0] sm:$0xff]
        %v821 = vld [vmem:[%s4 + $0xc8] sm:$0xff]
        %v822 = vld [vmem:[%s4 + $0xd0] sm:$0xff]
        %v823 = vld [vmem:[%s4 + $0xd8] sm:$0xff]
        %v824 = vld [vmem:[%s4 + $0xe0] sm:$0xff]
        %v825 = vld [vmem:[%s4 + $0xe8] sm:$0xff]
        %v826 = vld [vmem:[%s4 + $0xf0] sm:$0xff]
        %v827 = vld [vmem:[%s4 + $0xf8] sm:$0xff]
        %829 = vset.pattern.permute.xlu0 0
        %830 = vperm.xlu0 %829, %v796
        %v831 = vpop.permute.xlu0 %830
        %834 = vset.pattern.permute.xlu0 0
        %835 = vperm.xlu0 %834, %v797
        %v836 = vpop.permute.xlu0 %835
        %839 = vset.pattern.permute.xlu0 0
        %840 = vperm.xlu0 %839, %v798
        %v841 = vpop.permute.xlu0 %840
        %844 = vset.pattern.permute.xlu0 0
        %845 = vperm.xlu0 %844, %v799
        %v846 = vpop.permute.xlu0 %845
        %849 = vset.pattern.permute.xlu0 0
        %850 = vperm.xlu0 %849, %v800
        %v851 = vpop.permute.xlu0 %850
        %854 = vset.pattern.permute.xlu0 0
        %855 = vperm.xlu0 %854, %v801
        %v856 = vpop.permute.xlu0 %855
        %859 = vset.pattern.permute.xlu0 0
        %860 = vperm.xlu0 %859, %v802
        %v861 = vpop.permute.xlu0 %860
        %864 = vset.pattern.permute.xlu0 0
        %865 = vperm.xlu0 %864, %v803
        %v866 = vpop.permute.xlu0 %865
        %869 = vset.pattern.permute.xlu0 0
        %870 = vperm.xlu0 %869, %v804
        %v871 = vpop.permute.xlu0 %870
        %874 = vset.pattern.permute.xlu0 0
        %875 = vperm.xlu0 %874, %v805
        %v876 = vpop.permute.xlu0 %875
        %879 = vset.pattern.permute.xlu0 0
        %880 = vperm.xlu0 %879, %v806
        %v881 = vpop.permute.xlu0 %880
        %884 = vset.pattern.permute.xlu0 0
        %885 = vperm.xlu0 %884, %v807
        %v886 = vpop.permute.xlu0 %885
        %889 = vset.pattern.permute.xlu0 0
        %890 = vperm.xlu0 %889, %v808
        %v891 = vpop.permute.xlu0 %890
        %894 = vset.pattern.permute.xlu0 0
        %895 = vperm.xlu0 %894, %v809
        %v896 = vpop.permute.xlu0 %895
        %899 = vset.pattern.permute.xlu0 0
        %900 = vperm.xlu0 %899, %v810
        %v901 = vpop.permute.xlu0 %900
        %904 = vset.pattern.permute.xlu0 0
        %905 = vperm.xlu0 %904, %v811
        %v906 = vpop.permute.xlu0 %905
        %909 = vset.pattern.permute.xlu0 0
        %910 = vperm.xlu0 %909, %v812
        %v911 = vpop.permute.xlu0 %910
        %914 = vset.pattern.permute.xlu0 0
        %915 = vperm.xlu0 %914, %v813
        %v916 = vpop.permute.xlu0 %915
        %919 = vset.pattern.permute.xlu0 0
        %920 = vperm.xlu0 %919, %v814
        %v921 = vpop.permute.xlu0 %920
        %924 = vset.pattern.permute.xlu0 0
        %925 = vperm.xlu0 %924, %v815
        %v926 = vpop.permute.xlu0 %925
        %929 = vset.pattern.permute.xlu0 0
        %930 = vperm.xlu0 %929, %v816
        %v931 = vpop.permute.xlu0 %930
        %934 = vset.pattern.permute.xlu0 0
        %935 = vperm.xlu0 %934, %v817
        %v936 = vpop.permute.xlu0 %935
        %939 = vset.pattern.permute.xlu0 0
        %940 = vperm.xlu0 %939, %v818
        %v941 = vpop.permute.xlu0 %940
        %944 = vset.pattern.permute.xlu0 0
        %945 = vperm.xlu0 %944, %v819
        %v946 = vpop.permute.xlu0 %945
        %949 = vset.pattern.permute.xlu0 0
        %950 = vperm.xlu0 %949, %v820
        %v951 = vpop.permute.xlu0 %950
        %954 = vset.pattern.permute.xlu0 0
        %955 = vperm.xlu0 %954, %v821
        %v956 = vpop.permute.xlu0 %955
        %959 = vset.pattern.permute.xlu0 0
        %960 = vperm.xlu0 %959, %v822
        %v961 = vpop.permute.xlu0 %960
        %964 = vset.pattern.permute.xlu0 0
        %965 = vperm.xlu0 %964, %v823
        %v966 = vpop.permute.xlu0 %965
        %969 = vset.pattern.permute.xlu0 0
        %970 = vperm.xlu0 %969, %v824
        %v971 = vpop.permute.xlu0 %970
        %974 = vset.pattern.permute.xlu0 0
        %975 = vperm.xlu0 %974, %v825
        %v976 = vpop.permute.xlu0 %975
        %979 = vset.pattern.permute.xlu0 0
        %980 = vperm.xlu0 %979, %v826
        %v981 = vpop.permute.xlu0 %980
        %984 = vset.pattern.permute.xlu0 0
        %985 = vperm.xlu0 %984, %v827
        %v986 = vpop.permute.xlu0 %985
        %v988 = vmul.f32 %v765, %v831
        %v989 = vmul.f32 %v764, %v836
        %v990 = vmul.f32 %v795, %v841
        %v991 = vmul.f32 %v794, %v846
        %v992 = vmul.f32 %v793, %v851
        %v993 = vmul.f32 %v792, %v856
        %v994 = vmul.f32 %v791, %v861
        %v995 = vmul.f32 %v790, %v866
        %v996 = vmul.f32 %v789, %v871
        %v997 = vmul.f32 %v788, %v876
        %v998 = vmul.f32 %v787, %v881
        %v999 = vmul.f32 %v786, %v886
        %v1000 = vmul.f32 %v785, %v891
        %v1001 = vmul.f32 %v784, %v896
        %v1002 = vmul.f32 %v783, %v901
        %v1003 = vmul.f32 %v782, %v906
        %v1004 = vmul.f32 %v781, %v911
        %v1005 = vmul.f32 %v780, %v916
        %v1006 = vmul.f32 %v779, %v921
        %v1007 = vmul.f32 %v778, %v926
        %v1008 = vmul.f32 %v777, %v931
        %v1009 = vmul.f32 %v776, %v936
        %v1010 = vmul.f32 %v775, %v941
        %v1011 = vmul.f32 %v774, %v946
        %v1012 = vmul.f32 %v773, %v951
        %v1013 = vmul.f32 %v772, %v956
        %v1014 = vmul.f32 %v771, %v961
        %v1015 = vmul.f32 %v770, %v966
        %v1016 = vmul.f32 %v769, %v971
        %v1017 = vmul.f32 %v768, %v976
        %v1018 = vmul.f32 %v767, %v981
        %v1019 = vmul.f32 %v766, %v986
        %v1020 = vld [vmem:[%s2] sm:$0x3]
        %v1021 = vpack.c.bf16 %v989, %v988
        %v1022 = vpack.c.bf16 %v991, %v990
        %v1023 = vpack.c.bf16 %v993, %v992
        %v1024 = vpack.c.bf16 %v995, %v994
        %v1025 = vpack.c.bf16 %v997, %v996
        %v1026 = vpack.c.bf16 %v999, %v998
        %v1027 = vpack.c.bf16 %v1001, %v1000
        %v1028 = vpack.c.bf16 %v1003, %v1002
        %v1029 = vpack.c.bf16 %v1005, %v1004
        %v1030 = vpack.c.bf16 %v1007, %v1006
        %v1031 = vpack.c.bf16 %v1009, %v1008
        %v1032 = vpack.c.bf16 %v1011, %v1010
        %v1033 = vpack.c.bf16 %v1013, %v1012
        %v1034 = vpack.c.bf16 %v1015, %v1014
        %v1035 = vpack.c.bf16 %v1017, %v1016
        %v1036 = vpack.c.bf16 %v1019, %v1018
        %s1037 = scalar_lea.vmem %s4, 256
        %v1038 = vld [vmem:[%s1037] sm:$0xff]
        %v1039 = vld [vmem:[%s1037 + $0x8] sm:$0xff]
        %v1040 = vld [vmem:[%s1037 + $0x10] sm:$0xff]
        %v1041 = vld [vmem:[%s1037 + $0x18] sm:$0xff]
        %v1042 = vld [vmem:[%s1037 + $0x20] sm:$0xff]
        %v1043 = vld [vmem:[%s1037 + $0x28] sm:$0xff]
        %v1044 = vld [vmem:[%s1037 + $0x30] sm:$0xff]
        %v1045 = vld [vmem:[%s1037 + $0x38] sm:$0xff]
        %v1046 = vld [vmem:[%s1037 + $0x40] sm:$0xff]
        %v1047 = vld [vmem:[%s1037 + $0x48] sm:$0xff]
        %v1048 = vld [vmem:[%s1037 + $0x50] sm:$0xff]
        %v1049 = vld [vmem:[%s1037 + $0x58] sm:$0xff]
        %v1050 = vld [vmem:[%s1037 + $0x60] sm:$0xff]
        %v1051 = vld [vmem:[%s1037 + $0x68] sm:$0xff]
        %v1052 = vld [vmem:[%s1037 + $0x70] sm:$0xff]
        %v1053 = vld [vmem:[%s1037 + $0x78] sm:$0xff]
        %v1054 = vld [vmem:[%s1037 + $0x80] sm:$0xff]
        %v1055 = vld [vmem:[%s1037 + $0x88] sm:$0xff]
        %v1056 = vld [vmem:[%s1037 + $0x90] sm:$0xff]
        %v1057 = vld [vmem:[%s1037 + $0x98] sm:$0xff]
        %v1058 = vld [vmem:[%s1037 + $0xa0] sm:$0xff]
        %v1059 = vld [vmem:[%s1037 + $0xa8] sm:$0xff]
        %v1060 = vld [vmem:[%s1037 + $0xb0] sm:$0xff]
        %v1061 = vld [vmem:[%s1037 + $0xb8] sm:$0xff]
        %v1062 = vld [vmem:[%s1037 + $0xc0] sm:$0xff]
        %v1063 = vld [vmem:[%s1037 + $0xc8] sm:$0xff]
        %v1064 = vld [vmem:[%s1037 + $0xd0] sm:$0xff]
        %v1065 = vld [vmem:[%s1037 + $0xd8] sm:$0xff]
        %v1066 = vld [vmem:[%s1037 + $0xe0] sm:$0xff]
        %v1067 = vld [vmem:[%s1037 + $0xe8] sm:$0xff]
        %v1068 = vld [vmem:[%s1037 + $0xf0] sm:$0xff]
        %v1069 = vld [vmem:[%s1037 + $0xf8] sm:$0xff]
        %1071 = vset.pattern.permute.xlu0 0
        %1072 = vperm.xlu0 %1071, %v1038
        %v1073 = vpop.permute.xlu0 %1072
        %1076 = vset.pattern.permute.xlu0 0
        %1077 = vperm.xlu0 %1076, %v1039
        %v1078 = vpop.permute.xlu0 %1077
        %1081 = vset.pattern.permute.xlu0 0
        %1082 = vperm.xlu0 %1081, %v1040
        %v1083 = vpop.permute.xlu0 %1082
        %1086 = vset.pattern.permute.xlu0 0
        %1087 = vperm.xlu0 %1086, %v1041
        %v1088 = vpop.permute.xlu0 %1087
        %1091 = vset.pattern.permute.xlu0 0
        %1092 = vperm.xlu0 %1091, %v1042
        %v1093 = vpop.permute.xlu0 %1092
        %1096 = vset.pattern.permute.xlu0 0
        %1097 = vperm.xlu0 %1096, %v1043
        %v1098 = vpop.permute.xlu0 %1097
        %1101 = vset.pattern.permute.xlu0 0
        %1102 = vperm.xlu0 %1101, %v1044
        %v1103 = vpop.permute.xlu0 %1102
        %1106 = vset.pattern.permute.xlu0 0
        %1107 = vperm.xlu0 %1106, %v1045
        %v1108 = vpop.permute.xlu0 %1107
        %1111 = vset.pattern.permute.xlu0 0
        %1112 = vperm.xlu0 %1111, %v1046
        %v1113 = vpop.permute.xlu0 %1112
        %1116 = vset.pattern.permute.xlu0 0
        %1117 = vperm.xlu0 %1116, %v1047
        %v1118 = vpop.permute.xlu0 %1117
        %1121 = vset.pattern.permute.xlu0 0
        %1122 = vperm.xlu0 %1121, %v1048
        %v1123 = vpop.permute.xlu0 %1122
        %1126 = vset.pattern.permute.xlu0 0
        %1127 = vperm.xlu0 %1126, %v1049
        %v1128 = vpop.permute.xlu0 %1127
        %1131 = vset.pattern.permute.xlu0 0
        %1132 = vperm.xlu0 %1131, %v1050
        %v1133 = vpop.permute.xlu0 %1132
        %1136 = vset.pattern.permute.xlu0 0
        %1137 = vperm.xlu0 %1136, %v1051
        %v1138 = vpop.permute.xlu0 %1137
        %1141 = vset.pattern.permute.xlu0 0
        %1142 = vperm.xlu0 %1141, %v1052
        %v1143 = vpop.permute.xlu0 %1142
        %1146 = vset.pattern.permute.xlu0 0
        %1147 = vperm.xlu0 %1146, %v1053
        %v1148 = vpop.permute.xlu0 %1147
        %1151 = vset.pattern.permute.xlu0 0
        %1152 = vperm.xlu0 %1151, %v1054
        %v1153 = vpop.permute.xlu0 %1152
        %1156 = vset.pattern.permute.xlu0 0
        %1157 = vperm.xlu0 %1156, %v1055
        %v1158 = vpop.permute.xlu0 %1157
        %1161 = vset.pattern.permute.xlu0 0
        %1162 = vperm.xlu0 %1161, %v1056
        %v1163 = vpop.permute.xlu0 %1162
        %1166 = vset.pattern.permute.xlu0 0
        %1167 = vperm.xlu0 %1166, %v1057
        %v1168 = vpop.permute.xlu0 %1167
        %1171 = vset.pattern.permute.xlu0 0
        %1172 = vperm.xlu0 %1171, %v1058
        %v1173 = vpop.permute.xlu0 %1172
        %1176 = vset.pattern.permute.xlu0 0
        %1177 = vperm.xlu0 %1176, %v1059
        %v1178 = vpop.permute.xlu0 %1177
        %1181 = vset.pattern.permute.xlu0 0
        %1182 = vperm.xlu0 %1181, %v1060
        %v1183 = vpop.permute.xlu0 %1182
        %1186 = vset.pattern.permute.xlu0 0
        %1187 = vperm.xlu0 %1186, %v1061
        %v1188 = vpop.permute.xlu0 %1187
        %1191 = vset.pattern.permute.xlu0 0
        %1192 = vperm.xlu0 %1191, %v1062
        %v1193 = vpop.permute.xlu0 %1192
        %1196 = vset.pattern.permute.xlu0 0
        %1197 = vperm.xlu0 %1196, %v1063
        %v1198 = vpop.permute.xlu0 %1197
        %1201 = vset.pattern.permute.xlu0 0
        %1202 = vperm.xlu0 %1201, %v1064
        %v1203 = vpop.permute.xlu0 %1202
        %1206 = vset.pattern.permute.xlu0 0
        %1207 = vperm.xlu0 %1206, %v1065
        %v1208 = vpop.permute.xlu0 %1207
        %1211 = vset.pattern.permute.xlu0 0
        %1212 = vperm.xlu0 %1211, %v1066
        %v1213 = vpop.permute.xlu0 %1212
        %1216 = vset.pattern.permute.xlu0 0
        %1217 = vperm.xlu0 %1216, %v1067
        %v1218 = vpop.permute.xlu0 %1217
        %1221 = vset.pattern.permute.xlu0 0
        %1222 = vperm.xlu0 %1221, %v1068
        %v1223 = vpop.permute.xlu0 %1222
        %1226 = vset.pattern.permute.xlu0 0
        %1227 = vperm.xlu0 %1226, %v1069
        %v1228 = vpop.permute.xlu0 %1227
        %v1230 = vmul.f32 %v726, %v1073
        %v1231 = vmul.f32 %v727, %v1078
        %v1232 = vmul.f32 %v696, %v1083
        %v1233 = vmul.f32 %v697, %v1088
        %v1234 = vmul.f32 %v698, %v1093
        %v1235 = vmul.f32 %v699, %v1098
        %v1236 = vmul.f32 %v700, %v1103
        %v1237 = vmul.f32 %v701, %v1108
        %v1238 = vmul.f32 %v702, %v1113
        %v1239 = vmul.f32 %v703, %v1118
        %v1240 = vmul.f32 %v704, %v1123
        %v1241 = vmul.f32 %v705, %v1128
        %v1242 = vmul.f32 %v706, %v1133
        %v1243 = vmul.f32 %v707, %v1138
        %v1244 = vmul.f32 %v708, %v1143
        %v1245 = vmul.f32 %v709, %v1148
        %v1246 = vmul.f32 %v710, %v1153
        %v1247 = vmul.f32 %v711, %v1158
        %v1248 = vmul.f32 %v712, %v1163
        %v1249 = vmul.f32 %v713, %v1168
        %v1250 = vmul.f32 %v714, %v1173
        %v1251 = vmul.f32 %v715, %v1178
        %v1252 = vmul.f32 %v716, %v1183
        %v1253 = vmul.f32 %v717, %v1188
        %v1254 = vmul.f32 %v718, %v1193
        %v1255 = vmul.f32 %v719, %v1198
        %v1256 = vmul.f32 %v720, %v1203
        %v1257 = vmul.f32 %v721, %v1208
        %v1258 = vmul.f32 %v722, %v1213
        %v1259 = vmul.f32 %v723, %v1218
        %v1260 = vmul.f32 %v724, %v1223
        %v1261 = vmul.f32 %v725, %v1228
        %s1262 = scalar_lea.vmem %s2, 2
        %v1263 = vld [vmem:[%s1262] sm:$0x3]
        %v1264 = vpack.c.bf16 %v1231, %v1230
        %v1265 = vpack.c.bf16 %v1233, %v1232
        %v1266 = vpack.c.bf16 %v1235, %v1234
        %v1267 = vpack.c.bf16 %v1237, %v1236
        %v1268 = vpack.c.bf16 %v1239, %v1238
        %v1269 = vpack.c.bf16 %v1241, %v1240
        %v1270 = vpack.c.bf16 %v1243, %v1242
        %v1271 = vpack.c.bf16 %v1245, %v1244
        %v1272 = vpack.c.bf16 %v1247, %v1246
        %v1273 = vpack.c.bf16 %v1249, %v1248
        %v1274 = vpack.c.bf16 %v1251, %v1250
        %v1275 = vpack.c.bf16 %v1253, %v1252
        %v1276 = vpack.c.bf16 %v1255, %v1254
        %v1277 = vpack.c.bf16 %v1257, %v1256
        %v1278 = vpack.c.bf16 %v1259, %v1258
        %v1279 = vpack.c.bf16 %v1261, %v1260
        %vm1280 = vcmask 23552
        %v1282 = vsel %vm1280, %v1264, 0
        %v1285 = vsel %vm1280, %v1265, 0
        %v1288 = vsel %vm1280, %v1266, 0
        %v1291 = vsel %vm1280, %v1267, 0
        %v1294 = vsel %vm1280, %v1268, 0
        %v1297 = vsel %vm1280, %v1269, 0
        %v1300 = vsel %vm1280, %v1270, 0
        %v1303 = vsel %vm1280, %v1271, 0
        %v1306 = vsel %vm1280, %v1272, 0
        %v1309 = vsel %vm1280, %v1273, 0
        %v1312 = vsel %vm1280, %v1274, 0
        %v1315 = vsel %vm1280, %v1275, 0
        %v1318 = vsel %vm1280, %v1276, 0
        %v1321 = vsel %vm1280, %v1277, 0
        %v1324 = vsel %vm1280, %v1278, 0
        %v1327 = vsel %vm1280, %v1279, 0
        %vm1329 = vcmask 1040384
        %vm1330 = vcmask 1041408
        %v1331 = vsel %vm1329, 4294967295, 65535
        %v1332 = vsel %vm1330, %v1331, 0
        %v1334 = vand.u32 %v1263, %v1332
        %1336 = vmatprep.subr.bf16.mxu0 0
        %1337 = vmatpush1.bf16.msra.mxu0 0
        %1338 = vmatprep.subr.bf16.mxu0 0
        %1339 = vmatpush1.bf16.msra.mxu0 0
        %1340 = vmatprep.subr.bf16.mxu0 0
        %1341 = vmatpush1.bf16.msra.mxu0 0
        %1342 = vmatprep.subr.bf16.mxu0 0
        %1343 = vmatpush1.bf16.msra.mxu0 0
        %1344 = vmatprep.subr.bf16.mxu0 0
        %1345 = vmatpush1.bf16.msra.mxu0 0
        %1346 = vmatprep.subr.bf16.mxu0 0
        %1347 = vmatpush1.bf16.msra.mxu0 0
        %1348 = vmatprep.subr.bf16.mxu0 0
        %1349 = vmatpush1.bf16.msra.mxu0 0
        %1350 = vmatprep.subr.bf16.mxu0 0
        %1351 = vmatpush1.bf16.msra.mxu0 %v1334
        %1352 = vmatprep.subr.bf16.mxu0 0
        %1353 = vmatpush2.bf16.msra.mxu0 0
        %1354 = vmatprep.subr.bf16.mxu0 0
        %1355 = vmatpush2.bf16.msra.mxu0 0
        %1356 = vmatprep.subr.bf16.mxu0 0
        %1357 = vmatpush2.bf16.msra.mxu0 0
        %1358 = vmatprep.subr.bf16.mxu0 0
        %1359 = vmatpush2.bf16.msra.mxu0 0
        %1360 = vmatprep.subr.bf16.mxu0 0
        %1361 = vmatpush2.bf16.msra.mxu0 0
        %1362 = vmatprep.subr.bf16.mxu0 0
        %1363 = vmatpush2.bf16.msra.mxu0 0
        %1364 = vmatprep.subr.bf16.mxu0 0
        %1365 = vmatpush2.bf16.msra.mxu0 0
        %1366 = vmatprep.subr.bf16.mxu0 0
        %1367 = vmatpush2.bf16.msra.mxu0 0
        %1368 = vmatprep.mubr.bf16.mxu0 0
        %1369 = vmatmul.mubr.bf16.gmra.mxu0 %v1282
        %v1370 = vpop.f32.mrf.mxu0
        %v1371 = vadd.f32 0.0, %v1370
        %v1372 = vpop.f32.mrf.mxu0
        %v1373 = vpop.f32.mrf.mxu0
        %v1374 = vadd.f32 0.0, %v1373
        %v1375 = vpop.f32.mrf.mxu0
        %1376 = vmatprep.mubr.bf16.mxu0 0
        %1377 = vmatmul.mubr.bf16.gmra.mxu0 %v1285
        %v1378 = vpop.f32.mrf.mxu0
        %v1379 = vadd.f32 0.0, %v1378
        %v1380 = vpop.f32.mrf.mxu0
        %v1381 = vpop.f32.mrf.mxu0
        %v1382 = vadd.f32 0.0, %v1381
        %v1383 = vpop.f32.mrf.mxu0
        %1384 = vmatprep.mubr.bf16.mxu0 0
        %1385 = vmatmul.mubr.bf16.gmra.mxu0 %v1288
        %v1386 = vpop.f32.mrf.mxu0
        %v1387 = vadd.f32 0.0, %v1386
        %v1388 = vpop.f32.mrf.mxu0
        %v1389 = vpop.f32.mrf.mxu0
        %v1390 = vadd.f32 0.0, %v1389
        %v1391 = vpop.f32.mrf.mxu0
        %1392 = vmatprep.mubr.bf16.mxu0 0
        %1393 = vmatmul.mubr.bf16.gmra.mxu0 %v1291
        %v1394 = vpop.f32.mrf.mxu0
        %v1395 = vadd.f32 0.0, %v1394
        %v1396 = vpop.f32.mrf.mxu0
        %v1397 = vpop.f32.mrf.mxu0
        %v1398 = vadd.f32 0.0, %v1397
        %v1399 = vpop.f32.mrf.mxu0
        %1400 = vmatprep.mubr.bf16.mxu0 0
        %1401 = vmatmul.mubr.bf16.gmra.mxu0 %v1294
        %v1402 = vpop.f32.mrf.mxu0
        %v1403 = vadd.f32 0.0, %v1402
        %v1404 = vpop.f32.mrf.mxu0
        %v1405 = vpop.f32.mrf.mxu0
        %v1406 = vadd.f32 0.0, %v1405
        %v1407 = vpop.f32.mrf.mxu0
        %1408 = vmatprep.mubr.bf16.mxu0 0
        %1409 = vmatmul.mubr.bf16.gmra.mxu0 %v1297
        %v1410 = vpop.f32.mrf.mxu0
        %v1411 = vadd.f32 0.0, %v1410
        %v1412 = vpop.f32.mrf.mxu0
        %v1413 = vpop.f32.mrf.mxu0
        %v1414 = vadd.f32 0.0, %v1413
        %v1415 = vpop.f32.mrf.mxu0
        %1416 = vmatprep.mubr.bf16.mxu0 0
        %1417 = vmatmul.mubr.bf16.gmra.mxu0 %v1300
        %v1418 = vpop.f32.mrf.mxu0
        %v1419 = vadd.f32 0.0, %v1418
        %v1420 = vpop.f32.mrf.mxu0
        %v1421 = vpop.f32.mrf.mxu0
        %v1422 = vadd.f32 0.0, %v1421
        %v1423 = vpop.f32.mrf.mxu0
        %1424 = vmatprep.mubr.bf16.mxu0 0
        %1425 = vmatmul.mubr.bf16.gmra.mxu0 %v1303
        %v1426 = vpop.f32.mrf.mxu0
        %v1427 = vadd.f32 0.0, %v1426
        %v1428 = vpop.f32.mrf.mxu0
        %v1429 = vpop.f32.mrf.mxu0
        %v1430 = vadd.f32 0.0, %v1429
        %v1431 = vpop.f32.mrf.mxu0
        %1432 = vmatprep.mubr.bf16.mxu0 0
        %1433 = vmatmul.mubr.bf16.gmra.mxu0 %v1306
        %v1434 = vpop.f32.mrf.mxu0
        %v1435 = vadd.f32 0.0, %v1434
        %v1436 = vpop.f32.mrf.mxu0
        %v1437 = vpop.f32.mrf.mxu0
        %v1438 = vadd.f32 0.0, %v1437
        %v1439 = vpop.f32.mrf.mxu0
        %1440 = vmatprep.mubr.bf16.mxu0 0
        %1441 = vmatmul.mubr.bf16.gmra.mxu0 %v1309
        %v1442 = vpop.f32.mrf.mxu0
        %v1443 = vadd.f32 0.0, %v1442
        %v1444 = vpop.f32.mrf.mxu0
        %v1445 = vpop.f32.mrf.mxu0
        %v1446 = vadd.f32 0.0, %v1445
        %v1447 = vpop.f32.mrf.mxu0
        %1448 = vmatprep.mubr.bf16.mxu0 0
        %1449 = vmatmul.mubr.bf16.gmra.mxu0 %v1312
        %v1450 = vpop.f32.mrf.mxu0
        %v1451 = vadd.f32 0.0, %v1450
        %v1452 = vpop.f32.mrf.mxu0
        %v1453 = vpop.f32.mrf.mxu0
        %v1454 = vadd.f32 0.0, %v1453
        %v1455 = vpop.f32.mrf.mxu0
        %1456 = vmatprep.mubr.bf16.mxu0 0
        %1457 = vmatmul.mubr.bf16.gmra.mxu0 %v1315
        %v1458 = vpop.f32.mrf.mxu0
        %v1459 = vadd.f32 0.0, %v1458
        %v1460 = vpop.f32.mrf.mxu0
        %v1461 = vpop.f32.mrf.mxu0
        %v1462 = vadd.f32 0.0, %v1461
        %v1463 = vpop.f32.mrf.mxu0
        %1464 = vmatprep.mubr.bf16.mxu0 0
        %1465 = vmatmul.mubr.bf16.gmra.mxu0 %v1318
        %v1466 = vpop.f32.mrf.mxu0
        %v1467 = vadd.f32 0.0, %v1466
        %v1468 = vpop.f32.mrf.mxu0
        %v1469 = vpop.f32.mrf.mxu0
        %v1470 = vadd.f32 0.0, %v1469
        %v1471 = vpop.f32.mrf.mxu0
        %1472 = vmatprep.mubr.bf16.mxu0 0
        %1473 = vmatmul.mubr.bf16.gmra.mxu0 %v1321
        %v1474 = vpop.f32.mrf.mxu0
        %v1475 = vadd.f32 0.0, %v1474
        %v1476 = vpop.f32.mrf.mxu0
        %v1477 = vpop.f32.mrf.mxu0
        %v1478 = vadd.f32 0.0, %v1477
        %v1479 = vpop.f32.mrf.mxu0
        %1480 = vmatprep.mubr.bf16.mxu0 0
        %1481 = vmatmul.mubr.bf16.gmra.mxu0 %v1324
        %v1482 = vpop.f32.mrf.mxu0
        %v1483 = vadd.f32 0.0, %v1482
        %v1484 = vpop.f32.mrf.mxu0
        %v1485 = vpop.f32.mrf.mxu0
        %v1486 = vadd.f32 0.0, %v1485
        %v1487 = vpop.f32.mrf.mxu0
        %1488 = vmatprep.mubr.bf16.mxu0 0
        %1489 = vmatmul.mubr.bf16.gmra.mxu0 %v1327
        %v1490 = vpop.f32.mrf.mxu0
        %v1491 = vadd.f32 0.0, %v1490
        %v1492 = vpop.f32.mrf.mxu0
        %v1493 = vpop.f32.mrf.mxu0
        %v1494 = vadd.f32 0.0, %v1493
        %v1495 = vpop.f32.mrf.mxu0
        %1496 = vdwg.mxu0
        %v1498 = vsel %vm1280, %v1021, 0
        %v1501 = vsel %vm1280, %v1022, 0
        %v1504 = vsel %vm1280, %v1023, 0
        %v1507 = vsel %vm1280, %v1024, 0
        %v1510 = vsel %vm1280, %v1025, 0
        %v1513 = vsel %vm1280, %v1026, 0
        %v1516 = vsel %vm1280, %v1027, 0
        %v1519 = vsel %vm1280, %v1028, 0
        %v1522 = vsel %vm1280, %v1029, 0
        %v1525 = vsel %vm1280, %v1030, 0
        %v1528 = vsel %vm1280, %v1031, 0
        %v1531 = vsel %vm1280, %v1032, 0
        %v1534 = vsel %vm1280, %v1033, 0
        %v1537 = vsel %vm1280, %v1034, 0
        %v1540 = vsel %vm1280, %v1035, 0
        %v1543 = vsel %vm1280, %v1036, 0
        %v1546 = vand.u32 %v1020, %v1332
        %1548 = vmatprep.subr.bf16.mxu0 0
        %1549 = vmatpush1.bf16.msra.mxu0 0
        %1550 = vmatprep.subr.bf16.mxu0 0
        %1551 = vmatpush1.bf16.msra.mxu0 0
        %1552 = vmatprep.subr.bf16.mxu0 0
        %1553 = vmatpush1.bf16.msra.mxu0 0
        %1554 = vmatprep.subr.bf16.mxu0 0
        %1555 = vmatpush1.bf16.msra.mxu0 0
        %1556 = vmatprep.subr.bf16.mxu0 0
        %1557 = vmatpush1.bf16.msra.mxu0 0
        %1558 = vmatprep.subr.bf16.mxu0 0
        %1559 = vmatpush1.bf16.msra.mxu0 0
        %1560 = vmatprep.subr.bf16.mxu0 0
        %1561 = vmatpush1.bf16.msra.mxu0 0
        %1562 = vmatprep.subr.bf16.mxu0 0
        %1563 = vmatpush1.bf16.msra.mxu0 %v1546
        %1564 = vmatprep.subr.bf16.mxu0 0
        %1565 = vmatpush2.bf16.msra.mxu0 0
        %1566 = vmatprep.subr.bf16.mxu0 0
        %1567 = vmatpush2.bf16.msra.mxu0 0
        %1568 = vmatprep.subr.bf16.mxu0 0
        %1569 = vmatpush2.bf16.msra.mxu0 0
        %1570 = vmatprep.subr.bf16.mxu0 0
        %1571 = vmatpush2.bf16.msra.mxu0 0
        %1572 = vmatprep.subr.bf16.mxu0 0
        %1573 = vmatpush2.bf16.msra.mxu0 0
        %1574 = vmatprep.subr.bf16.mxu0 0
        %1575 = vmatpush2.bf16.msra.mxu0 0
        %1576 = vmatprep.subr.bf16.mxu0 0
        %1577 = vmatpush2.bf16.msra.mxu0 0
        %1578 = vmatprep.subr.bf16.mxu0 0
        %1579 = vmatpush2.bf16.msra.mxu0 0
        %1580 = vmatprep.mubr.bf16.mxu0 0
        %1581 = vmatmul.mubr.bf16.gmra.mxu0 %v1498
        %v1582 = vpop.f32.mrf.mxu0
        %v1583 = vadd.f32 %v1371, %v1582
        %v1584 = vpop.f32.mrf.mxu0
        %v1585 = vpop.f32.mrf.mxu0
        %v1586 = vadd.f32 %v1374, %v1585
        %v1587 = vpop.f32.mrf.mxu0
        %1588 = vmatprep.mubr.bf16.mxu0 0
        %1589 = vmatmul.mubr.bf16.gmra.mxu0 %v1501
        %v1590 = vpop.f32.mrf.mxu0
        %v1591 = vadd.f32 %v1379, %v1590
        %v1592 = vpop.f32.mrf.mxu0
        %v1593 = vpop.f32.mrf.mxu0
        %v1594 = vadd.f32 %v1382, %v1593
        %v1595 = vpop.f32.mrf.mxu0
        %1596 = vmatprep.mubr.bf16.mxu0 0
        %1597 = vmatmul.mubr.bf16.gmra.mxu0 %v1504
        %v1598 = vpop.f32.mrf.mxu0
        %v1599 = vadd.f32 %v1387, %v1598
        %v1600 = vpop.f32.mrf.mxu0
        %v1601 = vpop.f32.mrf.mxu0
        %v1602 = vadd.f32 %v1390, %v1601
        %v1603 = vpop.f32.mrf.mxu0
        %1604 = vmatprep.mubr.bf16.mxu0 0
        %1605 = vmatmul.mubr.bf16.gmra.mxu0 %v1507
        %v1606 = vpop.f32.mrf.mxu0
        %v1607 = vadd.f32 %v1395, %v1606
        %v1608 = vpop.f32.mrf.mxu0
        %v1609 = vpop.f32.mrf.mxu0
        %v1610 = vadd.f32 %v1398, %v1609
        %v1611 = vpop.f32.mrf.mxu0
        %1612 = vmatprep.mubr.bf16.mxu0 0
        %1613 = vmatmul.mubr.bf16.gmra.mxu0 %v1510
        %v1614 = vpop.f32.mrf.mxu0
        %v1615 = vadd.f32 %v1403, %v1614
        %v1616 = vpop.f32.mrf.mxu0
        %v1617 = vpop.f32.mrf.mxu0
        %v1618 = vadd.f32 %v1406, %v1617
        %v1619 = vpop.f32.mrf.mxu0
        %1620 = vmatprep.mubr.bf16.mxu0 0
        %1621 = vmatmul.mubr.bf16.gmra.mxu0 %v1513
        %v1622 = vpop.f32.mrf.mxu0
        %v1623 = vadd.f32 %v1411, %v1622
        %v1624 = vpop.f32.mrf.mxu0
        %v1625 = vpop.f32.mrf.mxu0
        %v1626 = vadd.f32 %v1414, %v1625
        %v1627 = vpop.f32.mrf.mxu0
        %1628 = vmatprep.mubr.bf16.mxu0 0
        %1629 = vmatmul.mubr.bf16.gmra.mxu0 %v1516
        %v1630 = vpop.f32.mrf.mxu0
        %v1631 = vadd.f32 %v1419, %v1630
        %v1632 = vpop.f32.mrf.mxu0
        %v1633 = vpop.f32.mrf.mxu0
        %v1634 = vadd.f32 %v1422, %v1633
        %v1635 = vpop.f32.mrf.mxu0
        %1636 = vmatprep.mubr.bf16.mxu0 0
        %1637 = vmatmul.mubr.bf16.gmra.mxu0 %v1519
        %v1638 = vpop.f32.mrf.mxu0
        %v1639 = vadd.f32 %v1427, %v1638
        %v1640 = vpop.f32.mrf.mxu0
        %v1641 = vpop.f32.mrf.mxu0
        %v1642 = vadd.f32 %v1430, %v1641
        %v1643 = vpop.f32.mrf.mxu0
        %1644 = vmatprep.mubr.bf16.mxu0 0
        %1645 = vmatmul.mubr.bf16.gmra.mxu0 %v1522
        %v1646 = vpop.f32.mrf.mxu0
        %v1647 = vadd.f32 %v1435, %v1646
        %v1648 = vpop.f32.mrf.mxu0
        %v1649 = vpop.f32.mrf.mxu0
        %v1650 = vadd.f32 %v1438, %v1649
        %v1651 = vpop.f32.mrf.mxu0
        %1652 = vmatprep.mubr.bf16.mxu0 0
        %1653 = vmatmul.mubr.bf16.gmra.mxu0 %v1525
        %v1654 = vpop.f32.mrf.mxu0
        %v1655 = vadd.f32 %v1443, %v1654
        %v1656 = vpop.f32.mrf.mxu0
        %v1657 = vpop.f32.mrf.mxu0
        %v1658 = vadd.f32 %v1446, %v1657
        %v1659 = vpop.f32.mrf.mxu0
        %1660 = vmatprep.mubr.bf16.mxu0 0
        %1661 = vmatmul.mubr.bf16.gmra.mxu0 %v1528
        %v1662 = vpop.f32.mrf.mxu0
        %v1663 = vadd.f32 %v1451, %v1662
        %v1664 = vpop.f32.mrf.mxu0
        %v1665 = vpop.f32.mrf.mxu0
        %v1666 = vadd.f32 %v1454, %v1665
        %v1667 = vpop.f32.mrf.mxu0
        %1668 = vmatprep.mubr.bf16.mxu0 0
        %1669 = vmatmul.mubr.bf16.gmra.mxu0 %v1531
        %v1670 = vpop.f32.mrf.mxu0
        %v1671 = vadd.f32 %v1459, %v1670
        %v1672 = vpop.f32.mrf.mxu0
        %v1673 = vpop.f32.mrf.mxu0
        %v1674 = vadd.f32 %v1462, %v1673
        %v1675 = vpop.f32.mrf.mxu0
        %1676 = vmatprep.mubr.bf16.mxu0 0
        %1677 = vmatmul.mubr.bf16.gmra.mxu0 %v1534
        %v1678 = vpop.f32.mrf.mxu0
        %v1679 = vadd.f32 %v1467, %v1678
        %v1680 = vpop.f32.mrf.mxu0
        %v1681 = vpop.f32.mrf.mxu0
        %v1682 = vadd.f32 %v1470, %v1681
        %v1683 = vpop.f32.mrf.mxu0
        %1684 = vmatprep.mubr.bf16.mxu0 0
        %1685 = vmatmul.mubr.bf16.gmra.mxu0 %v1537
        %v1686 = vpop.f32.mrf.mxu0
        %v1687 = vadd.f32 %v1475, %v1686
        %v1688 = vpop.f32.mrf.mxu0
        %v1689 = vpop.f32.mrf.mxu0
        %v1690 = vadd.f32 %v1478, %v1689
        %v1691 = vpop.f32.mrf.mxu0
        %1692 = vmatprep.mubr.bf16.mxu0 0
        %1693 = vmatmul.mubr.bf16.gmra.mxu0 %v1540
        %v1694 = vpop.f32.mrf.mxu0
        %v1695 = vadd.f32 %v1483, %v1694
        %v1696 = vpop.f32.mrf.mxu0
        %v1697 = vpop.f32.mrf.mxu0
        %v1698 = vadd.f32 %v1486, %v1697
        %v1699 = vpop.f32.mrf.mxu0
        %1700 = vmatprep.mubr.bf16.mxu0 0
        %1701 = vmatmul.mubr.bf16.gmra.mxu0 %v1543
        %v1702 = vpop.f32.mrf.mxu0
        %v1703 = vadd.f32 %v1491, %v1702
        %v1704 = vpop.f32.mrf.mxu0
        %v1705 = vpop.f32.mrf.mxu0
        %v1706 = vadd.f32 %v1494, %v1705
        %v1707 = vpop.f32.mrf.mxu0
        %1708 = vdwg.mxu0
        %v1709 = vrot.slane %v696, 1
        %v1710 = vrot.slane %v697, 1
        %v1711 = vrot.slane %v698, 1
        %v1712 = vrot.slane %v699, 1
        %v1713 = vrot.slane %v700, 1
        %v1714 = vrot.slane %v701, 1
        %v1715 = vrot.slane %v702, 1
        %v1716 = vrot.slane %v703, 1
        %v1717 = vrot.slane %v704, 1
        %v1718 = vrot.slane %v705, 1
        %v1719 = vrot.slane %v706, 1
        %v1720 = vrot.slane %v707, 1
        %v1721 = vrot.slane %v708, 1
        %v1722 = vrot.slane %v709, 1
        %v1723 = vrot.slane %v710, 1
        %v1724 = vrot.slane %v711, 1
        %v1725 = vrot.slane %v712, 1
        %v1726 = vrot.slane %v713, 1
        %v1727 = vrot.slane %v714, 1
        %v1728 = vrot.slane %v715, 1
        %v1729 = vrot.slane %v716, 1
        %v1730 = vrot.slane %v717, 1
        %v1731 = vrot.slane %v718, 1
        %v1732 = vrot.slane %v719, 1
        %v1733 = vrot.slane %v720, 1
        %v1734 = vrot.slane %v721, 1
        %v1735 = vrot.slane %v722, 1
        %v1736 = vrot.slane %v723, 1
        %v1737 = vrot.slane %v724, 1
        %v1738 = vrot.slane %v725, 1
        %v1739 = vrot.slane %v726, 1
        %v1740 = vrot.slane %v727, 1
        %vm1741 = vcmp.lt.s32.totalorder %v762, 7
        %v1742 = vsel %vm1741, %v1739, %v1740
        %v1743 = vsel %vm1741, %v1738, %v1739
        %v1744 = vsel %vm1741, %v1737, %v1738
        %v1745 = vsel %vm1741, %v1736, %v1737
        %v1746 = vsel %vm1741, %v1735, %v1736
        %v1747 = vsel %vm1741, %v1734, %v1735
        %v1748 = vsel %vm1741, %v1733, %v1734
        %v1749 = vsel %vm1741, %v1732, %v1733
        %v1750 = vsel %vm1741, %v1731, %v1732
        %v1751 = vsel %vm1741, %v1730, %v1731
        %v1752 = vsel %vm1741, %v1729, %v1730
        %v1753 = vsel %vm1741, %v1728, %v1729
        %v1754 = vsel %vm1741, %v1727, %v1728
        %v1755 = vsel %vm1741, %v1726, %v1727
        %v1756 = vsel %vm1741, %v1725, %v1726
        %v1757 = vsel %vm1741, %v1724, %v1725
        %v1758 = vsel %vm1741, %v1723, %v1724
        %v1759 = vsel %vm1741, %v1722, %v1723
        %v1760 = vsel %vm1741, %v1721, %v1722
        %v1761 = vsel %vm1741, %v1720, %v1721
        %v1762 = vsel %vm1741, %v1719, %v1720
        %v1763 = vsel %vm1741, %v1718, %v1719
        %v1764 = vsel %vm1741, %v1717, %v1718
        %v1765 = vsel %vm1741, %v1716, %v1717
        %v1766 = vsel %vm1741, %v1715, %v1716
        %v1767 = vsel %vm1741, %v1714, %v1715
        %v1768 = vsel %vm1741, %v1713, %v1714
        %v1769 = vsel %vm1741, %v1712, %v1713
        %v1770 = vsel %vm1741, %v1711, %v1712
        %v1771 = vsel %vm1741, %v1710, %v1711
        %v1772 = vsel %vm1741, %v1709, %v1710
        %v1773 = vsel %vm1741, %v1740, %v1709
        %s1774 = scalar_lea.vmem %s4, 512
        %v1775 = vld [vmem:[%s1774] sm:$0xff]
        %v1776 = vld [vmem:[%s1774 + $0x8] sm:$0xff]
        %v1777 = vld [vmem:[%s1774 + $0x10] sm:$0xff]
        %v1778 = vld [vmem:[%s1774 + $0x18] sm:$0xff]
        %v1779 = vld [vmem:[%s1774 + $0x20] sm:$0xff]
        %v1780 = vld [vmem:[%s1774 + $0x28] sm:$0xff]
        %v1781 = vld [vmem:[%s1774 + $0x30] sm:$0xff]
        %v1782 = vld [vmem:[%s1774 + $0x38] sm:$0xff]
        %v1783 = vld [vmem:[%s1774 + $0x40] sm:$0xff]
        %v1784 = vld [vmem:[%s1774 + $0x48] sm:$0xff]
        %v1785 = vld [vmem:[%s1774 + $0x50] sm:$0xff]
        %v1786 = vld [vmem:[%s1774 + $0x58] sm:$0xff]
        %v1787 = vld [vmem:[%s1774 + $0x60] sm:$0xff]
        %v1788 = vld [vmem:[%s1774 + $0x68] sm:$0xff]
        %v1789 = vld [vmem:[%s1774 + $0x70] sm:$0xff]
        %v1790 = vld [vmem:[%s1774 + $0x78] sm:$0xff]
        %v1791 = vld [vmem:[%s1774 + $0x80] sm:$0xff]
        %v1792 = vld [vmem:[%s1774 + $0x88] sm:$0xff]
        %v1793 = vld [vmem:[%s1774 + $0x90] sm:$0xff]
        %v1794 = vld [vmem:[%s1774 + $0x98] sm:$0xff]
        %v1795 = vld [vmem:[%s1774 + $0xa0] sm:$0xff]
        %v1796 = vld [vmem:[%s1774 + $0xa8] sm:$0xff]
        %v1797 = vld [vmem:[%s1774 + $0xb0] sm:$0xff]
        %v1798 = vld [vmem:[%s1774 + $0xb8] sm:$0xff]
        %v1799 = vld [vmem:[%s1774 + $0xc0] sm:$0xff]
        %v1800 = vld [vmem:[%s1774 + $0xc8] sm:$0xff]
        %v1801 = vld [vmem:[%s1774 + $0xd0] sm:$0xff]
        %v1802 = vld [vmem:[%s1774 + $0xd8] sm:$0xff]
        %v1803 = vld [vmem:[%s1774 + $0xe0] sm:$0xff]
        %v1804 = vld [vmem:[%s1774 + $0xe8] sm:$0xff]
        %v1805 = vld [vmem:[%s1774 + $0xf0] sm:$0xff]
        %v1806 = vld [vmem:[%s1774 + $0xf8] sm:$0xff]
        %1808 = vset.pattern.permute.xlu0 0
        %1809 = vperm.xlu0 %1808, %v1775
        %v1810 = vpop.permute.xlu0 %1809
        %1813 = vset.pattern.permute.xlu0 0
        %1814 = vperm.xlu0 %1813, %v1776
        %v1815 = vpop.permute.xlu0 %1814
        %1818 = vset.pattern.permute.xlu0 0
        %1819 = vperm.xlu0 %1818, %v1777
        %v1820 = vpop.permute.xlu0 %1819
        %1823 = vset.pattern.permute.xlu0 0
        %1824 = vperm.xlu0 %1823, %v1778
        %v1825 = vpop.permute.xlu0 %1824
        %1828 = vset.pattern.permute.xlu0 0
        %1829 = vperm.xlu0 %1828, %v1779
        %v1830 = vpop.permute.xlu0 %1829
        %1833 = vset.pattern.permute.xlu0 0
        %1834 = vperm.xlu0 %1833, %v1780
        %v1835 = vpop.permute.xlu0 %1834
        %1838 = vset.pattern.permute.xlu0 0
        %1839 = vperm.xlu0 %1838, %v1781
        %v1840 = vpop.permute.xlu0 %1839
        %1843 = vset.pattern.permute.xlu0 0
        %1844 = vperm.xlu0 %1843, %v1782
        %v1845 = vpop.permute.xlu0 %1844
        %1848 = vset.pattern.permute.xlu0 0
        %1849 = vperm.xlu0 %1848, %v1783
        %v1850 = vpop.permute.xlu0 %1849
        %1853 = vset.pattern.permute.xlu0 0
        %1854 = vperm.xlu0 %1853, %v1784
        %v1855 = vpop.permute.xlu0 %1854
        %1858 = vset.pattern.permute.xlu0 0
        %1859 = vperm.xlu0 %1858, %v1785
        %v1860 = vpop.permute.xlu0 %1859
        %1863 = vset.pattern.permute.xlu0 0
        %1864 = vperm.xlu0 %1863, %v1786
        %v1865 = vpop.permute.xlu0 %1864
        %1868 = vset.pattern.permute.xlu0 0
        %1869 = vperm.xlu0 %1868, %v1787
        %v1870 = vpop.permute.xlu0 %1869
        %1873 = vset.pattern.permute.xlu0 0
        %1874 = vperm.xlu0 %1873, %v1788
        %v1875 = vpop.permute.xlu0 %1874
        %1878 = vset.pattern.permute.xlu0 0
        %1879 = vperm.xlu0 %1878, %v1789
        %v1880 = vpop.permute.xlu0 %1879
        %1883 = vset.pattern.permute.xlu0 0
        %1884 = vperm.xlu0 %1883, %v1790
        %v1885 = vpop.permute.xlu0 %1884
        %1888 = vset.pattern.permute.xlu0 0
        %1889 = vperm.xlu0 %1888, %v1791
        %v1890 = vpop.permute.xlu0 %1889
        %1893 = vset.pattern.permute.xlu0 0
        %1894 = vperm.xlu0 %1893, %v1792
        %v1895 = vpop.permute.xlu0 %1894
        %1898 = vset.pattern.permute.xlu0 0
        %1899 = vperm.xlu0 %1898, %v1793
        %v1900 = vpop.permute.xlu0 %1899
        %1903 = vset.pattern.permute.xlu0 0
        %1904 = vperm.xlu0 %1903, %v1794
        %v1905 = vpop.permute.xlu0 %1904
        %1908 = vset.pattern.permute.xlu0 0
        %1909 = vperm.xlu0 %1908, %v1795
        %v1910 = vpop.permute.xlu0 %1909
        %1913 = vset.pattern.permute.xlu0 0
        %1914 = vperm.xlu0 %1913, %v1796
        %v1915 = vpop.permute.xlu0 %1914
        %1918 = vset.pattern.permute.xlu0 0
        %1919 = vperm.xlu0 %1918, %v1797
        %v1920 = vpop.permute.xlu0 %1919
        %1923 = vset.pattern.permute.xlu0 0
        %1924 = vperm.xlu0 %1923, %v1798
        %v1925 = vpop.permute.xlu0 %1924
        %1928 = vset.pattern.permute.xlu0 0
        %1929 = vperm.xlu0 %1928, %v1799
        %v1930 = vpop.permute.xlu0 %1929
        %1933 = vset.pattern.permute.xlu0 0
        %1934 = vperm.xlu0 %1933, %v1800
        %v1935 = vpop.permute.xlu0 %1934
        %1938 = vset.pattern.permute.xlu0 0
        %1939 = vperm.xlu0 %1938, %v1801
        %v1940 = vpop.permute.xlu0 %1939
        %1943 = vset.pattern.permute.xlu0 0
        %1944 = vperm.xlu0 %1943, %v1802
        %v1945 = vpop.permute.xlu0 %1944
        %1948 = vset.pattern.permute.xlu0 0
        %1949 = vperm.xlu0 %1948, %v1803
        %v1950 = vpop.permute.xlu0 %1949
        %1953 = vset.pattern.permute.xlu0 0
        %1954 = vperm.xlu0 %1953, %v1804
        %v1955 = vpop.permute.xlu0 %1954
        %1958 = vset.pattern.permute.xlu0 0
        %1959 = vperm.xlu0 %1958, %v1805
        %v1960 = vpop.permute.xlu0 %1959
        %1963 = vset.pattern.permute.xlu0 0
        %1964 = vperm.xlu0 %1963, %v1806
        %v1965 = vpop.permute.xlu0 %1964
        %v1967 = vmul.f32 %v1742, %v1810
        %v1968 = vmul.f32 %v1773, %v1815
        %v1969 = vmul.f32 %v1772, %v1820
        %v1970 = vmul.f32 %v1771, %v1825
        %v1971 = vmul.f32 %v1770, %v1830
        %v1972 = vmul.f32 %v1769, %v1835
        %v1973 = vmul.f32 %v1768, %v1840
        %v1974 = vmul.f32 %v1767, %v1845
        %v1975 = vmul.f32 %v1766, %v1850
        %v1976 = vmul.f32 %v1765, %v1855
        %v1977 = vmul.f32 %v1764, %v1860
        %v1978 = vmul.f32 %v1763, %v1865
        %v1979 = vmul.f32 %v1762, %v1870
        %v1980 = vmul.f32 %v1761, %v1875
        %v1981 = vmul.f32 %v1760, %v1880
        %v1982 = vmul.f32 %v1759, %v1885
        %v1983 = vmul.f32 %v1758, %v1890
        %v1984 = vmul.f32 %v1757, %v1895
        %v1985 = vmul.f32 %v1756, %v1900
        %v1986 = vmul.f32 %v1755, %v1905
        %v1987 = vmul.f32 %v1754, %v1910
        %v1988 = vmul.f32 %v1753, %v1915
        %v1989 = vmul.f32 %v1752, %v1920
        %v1990 = vmul.f32 %v1751, %v1925
        %v1991 = vmul.f32 %v1750, %v1930
        %v1992 = vmul.f32 %v1749, %v1935
        %v1993 = vmul.f32 %v1748, %v1940
        %v1994 = vmul.f32 %v1747, %v1945
        %v1995 = vmul.f32 %v1746, %v1950
        %v1996 = vmul.f32 %v1745, %v1955
        %v1997 = vmul.f32 %v1744, %v1960
        %v1998 = vmul.f32 %v1743, %v1965
        %s1999 = scalar_lea.vmem %s2, 4
        %v2000 = vld [vmem:[%s1999] sm:$0x3]
        %v2001 = vpack.c.bf16 %v1968, %v1967
        %v2002 = vpack.c.bf16 %v1970, %v1969
        %v2003 = vpack.c.bf16 %v1972, %v1971
        %v2004 = vpack.c.bf16 %v1974, %v1973
        %v2005 = vpack.c.bf16 %v1976, %v1975
        %v2006 = vpack.c.bf16 %v1978, %v1977
        %v2007 = vpack.c.bf16 %v1980, %v1979
        %v2008 = vpack.c.bf16 %v1982, %v1981
        %v2009 = vpack.c.bf16 %v1984, %v1983
        %v2010 = vpack.c.bf16 %v1986, %v1985
        %v2011 = vpack.c.bf16 %v1988, %v1987
        %v2012 = vpack.c.bf16 %v1990, %v1989
        %v2013 = vpack.c.bf16 %v1992, %v1991
        %v2014 = vpack.c.bf16 %v1994, %v1993
        %v2015 = vpack.c.bf16 %v1996, %v1995
        %v2016 = vpack.c.bf16 %v1998, %v1997
        %v2018 = vsel %vm1280, %v2001, 0
        %v2021 = vsel %vm1280, %v2002, 0
        %v2024 = vsel %vm1280, %v2003, 0
        %v2027 = vsel %vm1280, %v2004, 0
        %v2030 = vsel %vm1280, %v2005, 0
        %v2033 = vsel %vm1280, %v2006, 0
        %v2036 = vsel %vm1280, %v2007, 0
        %v2039 = vsel %vm1280, %v2008, 0
        %v2042 = vsel %vm1280, %v2009, 0
        %v2045 = vsel %vm1280, %v2010, 0
        %v2048 = vsel %vm1280, %v2011, 0
        %v2051 = vsel %vm1280, %v2012, 0
        %v2054 = vsel %vm1280, %v2013, 0
        %v2057 = vsel %vm1280, %v2014, 0
        %v2060 = vsel %vm1280, %v2015, 0
        %v2063 = vsel %vm1280, %v2016, 0
        %v2066 = vand.u32 %v2000, %v1332
        %2068 = vmatprep.subr.bf16.mxu0 0
        %2069 = vmatpush1.bf16.msra.mxu0 0
        %2070 = vmatprep.subr.bf16.mxu0 0
        %2071 = vmatpush1.bf16.msra.mxu0 0
        %2072 = vmatprep.subr.bf16.mxu0 0
        %2073 = vmatpush1.bf16.msra.mxu0 0
        %2074 = vmatprep.subr.bf16.mxu0 0
        %2075 = vmatpush1.bf16.msra.mxu0 0
        %2076 = vmatprep.subr.bf16.mxu0 0
        %2077 = vmatpush1.bf16.msra.mxu0 0
        %2078 = vmatprep.subr.bf16.mxu0 0
        %2079 = vmatpush1.bf16.msra.mxu0 0
        %2080 = vmatprep.subr.bf16.mxu0 0
        %2081 = vmatpush1.bf16.msra.mxu0 0
        %2082 = vmatprep.subr.bf16.mxu0 0
        %2083 = vmatpush1.bf16.msra.mxu0 %v2066
        %2084 = vmatprep.subr.bf16.mxu0 0
        %2085 = vmatpush2.bf16.msra.mxu0 0
        %2086 = vmatprep.subr.bf16.mxu0 0
        %2087 = vmatpush2.bf16.msra.mxu0 0
        %2088 = vmatprep.subr.bf16.mxu0 0
        %2089 = vmatpush2.bf16.msra.mxu0 0
        %2090 = vmatprep.subr.bf16.mxu0 0
        %2091 = vmatpush2.bf16.msra.mxu0 0
        %2092 = vmatprep.subr.bf16.mxu0 0
        %2093 = vmatpush2.bf16.msra.mxu0 0
        %2094 = vmatprep.subr.bf16.mxu0 0
        %2095 = vmatpush2.bf16.msra.mxu0 0
        %2096 = vmatprep.subr.bf16.mxu0 0
        %2097 = vmatpush2.bf16.msra.mxu0 0
        %2098 = vmatprep.subr.bf16.mxu0 0
        %2099 = vmatpush2.bf16.msra.mxu0 0
        %2100 = vmatprep.mubr.bf16.mxu0 0
        %2101 = vmatmul.mubr.bf16.gmra.mxu0 %v2018
        %v2102 = vpop.f32.mrf.mxu0
        %v2103 = vadd.f32 0.0, %v2102
        %v2104 = vpop.f32.mrf.mxu0
        %v2105 = vpop.f32.mrf.mxu0
        %v2106 = vadd.f32 0.0, %v2105
        %v2107 = vpop.f32.mrf.mxu0
        %2108 = vmatprep.mubr.bf16.mxu0 0
        %2109 = vmatmul.mubr.bf16.gmra.mxu0 %v2021
        %v2110 = vpop.f32.mrf.mxu0
        %v2111 = vadd.f32 0.0, %v2110
        %v2112 = vpop.f32.mrf.mxu0
        %v2113 = vpop.f32.mrf.mxu0
        %v2114 = vadd.f32 0.0, %v2113
        %v2115 = vpop.f32.mrf.mxu0
        %2116 = vmatprep.mubr.bf16.mxu0 0
        %2117 = vmatmul.mubr.bf16.gmra.mxu0 %v2024
        %v2118 = vpop.f32.mrf.mxu0
        %v2119 = vadd.f32 0.0, %v2118
        %v2120 = vpop.f32.mrf.mxu0
        %v2121 = vpop.f32.mrf.mxu0
        %v2122 = vadd.f32 0.0, %v2121
        %v2123 = vpop.f32.mrf.mxu0
        %2124 = vmatprep.mubr.bf16.mxu0 0
        %2125 = vmatmul.mubr.bf16.gmra.mxu0 %v2027
        %v2126 = vpop.f32.mrf.mxu0
        %v2127 = vadd.f32 0.0, %v2126
        %v2128 = vpop.f32.mrf.mxu0
        %v2129 = vpop.f32.mrf.mxu0
        %v2130 = vadd.f32 0.0, %v2129
        %v2131 = vpop.f32.mrf.mxu0
        %2132 = vmatprep.mubr.bf16.mxu0 0
        %2133 = vmatmul.mubr.bf16.gmra.mxu0 %v2030
        %v2134 = vpop.f32.mrf.mxu0
        %v2135 = vadd.f32 0.0, %v2134
        %v2136 = vpop.f32.mrf.mxu0
        %v2137 = vpop.f32.mrf.mxu0
        %v2138 = vadd.f32 0.0, %v2137
        %v2139 = vpop.f32.mrf.mxu0
        %2140 = vmatprep.mubr.bf16.mxu0 0
        %2141 = vmatmul.mubr.bf16.gmra.mxu0 %v2033
        %v2142 = vpop.f32.mrf.mxu0
        %v2143 = vadd.f32 0.0, %v2142
        %v2144 = vpop.f32.mrf.mxu0
        %v2145 = vpop.f32.mrf.mxu0
        %v2146 = vadd.f32 0.0, %v2145
        %v2147 = vpop.f32.mrf.mxu0
        %2148 = vmatprep.mubr.bf16.mxu0 0
        %2149 = vmatmul.mubr.bf16.gmra.mxu0 %v2036
        %v2150 = vpop.f32.mrf.mxu0
        %v2151 = vadd.f32 0.0, %v2150
        %v2152 = vpop.f32.mrf.mxu0
        %v2153 = vpop.f32.mrf.mxu0
        %v2154 = vadd.f32 0.0, %v2153
        %v2155 = vpop.f32.mrf.mxu0
        %2156 = vmatprep.mubr.bf16.mxu0 0
        %2157 = vmatmul.mubr.bf16.gmra.mxu0 %v2039
        %v2158 = vpop.f32.mrf.mxu0
        %v2159 = vadd.f32 0.0, %v2158
        %v2160 = vpop.f32.mrf.mxu0
        %v2161 = vpop.f32.mrf.mxu0
        %v2162 = vadd.f32 0.0, %v2161
        %v2163 = vpop.f32.mrf.mxu0
        %2164 = vmatprep.mubr.bf16.mxu0 0
        %2165 = vmatmul.mubr.bf16.gmra.mxu0 %v2042
        %v2166 = vpop.f32.mrf.mxu0
        %v2167 = vadd.f32 0.0, %v2166
        %v2168 = vpop.f32.mrf.mxu0
        %v2169 = vpop.f32.mrf.mxu0
        %v2170 = vadd.f32 0.0, %v2169
        %v2171 = vpop.f32.mrf.mxu0
        %2172 = vmatprep.mubr.bf16.mxu0 0
        %2173 = vmatmul.mubr.bf16.gmra.mxu0 %v2045
        %v2174 = vpop.f32.mrf.mxu0
        %v2175 = vadd.f32 0.0, %v2174
        %v2176 = vpop.f32.mrf.mxu0
        %v2177 = vpop.f32.mrf.mxu0
        %v2178 = vadd.f32 0.0, %v2177
        %v2179 = vpop.f32.mrf.mxu0
        %2180 = vmatprep.mubr.bf16.mxu0 0
        %2181 = vmatmul.mubr.bf16.gmra.mxu0 %v2048
        %v2182 = vpop.f32.mrf.mxu0
        %v2183 = vadd.f32 0.0, %v2182
        %v2184 = vpop.f32.mrf.mxu0
        %v2185 = vpop.f32.mrf.mxu0
        %v2186 = vadd.f32 0.0, %v2185
        %v2187 = vpop.f32.mrf.mxu0
        %2188 = vmatprep.mubr.bf16.mxu0 0
        %2189 = vmatmul.mubr.bf16.gmra.mxu0 %v2051
        %v2190 = vpop.f32.mrf.mxu0
        %v2191 = vadd.f32 0.0, %v2190
        %v2192 = vpop.f32.mrf.mxu0
        %v2193 = vpop.f32.mrf.mxu0
        %v2194 = vadd.f32 0.0, %v2193
        %v2195 = vpop.f32.mrf.mxu0
        %2196 = vmatprep.mubr.bf16.mxu0 0
        %2197 = vmatmul.mubr.bf16.gmra.mxu0 %v2054
        %v2198 = vpop.f32.mrf.mxu0
        %v2199 = vadd.f32 0.0, %v2198
        %v2200 = vpop.f32.mrf.mxu0
        %v2201 = vpop.f32.mrf.mxu0
        %v2202 = vadd.f32 0.0, %v2201
        %v2203 = vpop.f32.mrf.mxu0
        %2204 = vmatprep.mubr.bf16.mxu0 0
        %2205 = vmatmul.mubr.bf16.gmra.mxu0 %v2057
        %v2206 = vpop.f32.mrf.mxu0
        %v2207 = vadd.f32 0.0, %v2206
        %v2208 = vpop.f32.mrf.mxu0
        %v2209 = vpop.f32.mrf.mxu0
        %v2210 = vadd.f32 0.0, %v2209
        %v2211 = vpop.f32.mrf.mxu0
        %2212 = vmatprep.mubr.bf16.mxu0 0
        %2213 = vmatmul.mubr.bf16.gmra.mxu0 %v2060
        %v2214 = vpop.f32.mrf.mxu0
        %v2215 = vadd.f32 0.0, %v2214
        %v2216 = vpop.f32.mrf.mxu0
        %v2217 = vpop.f32.mrf.mxu0
        %v2218 = vadd.f32 0.0, %v2217
        %v2219 = vpop.f32.mrf.mxu0
        %2220 = vmatprep.mubr.bf16.mxu0 0
        %2221 = vmatmul.mubr.bf16.gmra.mxu0 %v2063
        %v2222 = vpop.f32.mrf.mxu0
        %v2223 = vadd.f32 0.0, %v2222
        %v2224 = vpop.f32.mrf.mxu0
        %v2225 = vpop.f32.mrf.mxu0
        %v2226 = vadd.f32 0.0, %v2225
        %v2227 = vpop.f32.mrf.mxu0
        %2228 = vdwg.mxu0
        %v2229 = vadd.f32 %v1583, %v2103
        %v2230 = vadd.f32 %v1586, %v2106
        %v2231 = vadd.f32 %v1591, %v2111
        %v2232 = vadd.f32 %v1594, %v2114
        %v2233 = vadd.f32 %v1599, %v2119
        %v2234 = vadd.f32 %v1602, %v2122
        %v2235 = vadd.f32 %v1607, %v2127
        %v2236 = vadd.f32 %v1610, %v2130
        %v2237 = vadd.f32 %v1615, %v2135
        %v2238 = vadd.f32 %v1618, %v2138
        %v2239 = vadd.f32 %v1623, %v2143
        %v2240 = vadd.f32 %v1626, %v2146
        %v2241 = vadd.f32 %v1631, %v2151
        %v2242 = vadd.f32 %v1634, %v2154
        %v2243 = vadd.f32 %v1639, %v2159
        %v2244 = vadd.f32 %v1642, %v2162
        %v2245 = vadd.f32 %v1647, %v2167
        %v2246 = vadd.f32 %v1650, %v2170
        %v2247 = vadd.f32 %v1655, %v2175
        %v2248 = vadd.f32 %v1658, %v2178
        %v2249 = vadd.f32 %v1663, %v2183
        %v2250 = vadd.f32 %v1666, %v2186
        %v2251 = vadd.f32 %v1671, %v2191
        %v2252 = vadd.f32 %v1674, %v2194
        %v2253 = vadd.f32 %v1679, %v2199
        %v2254 = vadd.f32 %v1682, %v2202
        %v2255 = vadd.f32 %v1687, %v2207
        %v2256 = vadd.f32 %v1690, %v2210
        %v2257 = vadd.f32 %v1695, %v2215
        %v2258 = vadd.f32 %v1698, %v2218
        %v2259 = vadd.f32 %v1703, %v2223
        %v2260 = vadd.f32 %v1706, %v2226
        %s2261 = scalar_lea.vmem %s4, 768
        %v2262 = vld [vmem:[%s2261] sm:$0xff]
        %v2263 = vld [vmem:[%s2261 + $0x8] sm:$0xff]
        %v2264 = vld [vmem:[%s2261 + $0x10] sm:$0xff]
        %v2265 = vld [vmem:[%s2261 + $0x18] sm:$0xff]
        %v2266 = vld [vmem:[%s2261 + $0x20] sm:$0xff]
        %v2267 = vld [vmem:[%s2261 + $0x28] sm:$0xff]
        %v2268 = vld [vmem:[%s2261 + $0x30] sm:$0xff]
        %v2269 = vld [vmem:[%s2261 + $0x38] sm:$0xff]
        %v2270 = vld [vmem:[%s2261 + $0x40] sm:$0xff]
        %v2271 = vld [vmem:[%s2261 + $0x48] sm:$0xff]
        %v2272 = vld [vmem:[%s2261 + $0x50] sm:$0xff]
        %v2273 = vld [vmem:[%s2261 + $0x58] sm:$0xff]
        %v2274 = vld [vmem:[%s2261 + $0x60] sm:$0xff]
        %v2275 = vld [vmem:[%s2261 + $0x68] sm:$0xff]
        %v2276 = vld [vmem:[%s2261 + $0x70] sm:$0xff]
        %v2277 = vld [vmem:[%s2261 + $0x78] sm:$0xff]
        %v2278 = vld [vmem:[%s2261 + $0x80] sm:$0xff]
        %v2279 = vld [vmem:[%s2261 + $0x88] sm:$0xff]
        %v2280 = vld [vmem:[%s2261 + $0x90] sm:$0xff]
        %v2281 = vld [vmem:[%s2261 + $0x98] sm:$0xff]
        %v2282 = vld [vmem:[%s2261 + $0xa0] sm:$0xff]
        %v2283 = vld [vmem:[%s2261 + $0xa8] sm:$0xff]
        %v2284 = vld [vmem:[%s2261 + $0xb0] sm:$0xff]
        %v2285 = vld [vmem:[%s2261 + $0xb8] sm:$0xff]
        %v2286 = vld [vmem:[%s2261 + $0xc0] sm:$0xff]
        %v2287 = vld [vmem:[%s2261 + $0xc8] sm:$0xff]
        %v2288 = vld [vmem:[%s2261 + $0xd0] sm:$0xff]
        %v2289 = vld [vmem:[%s2261 + $0xd8] sm:$0xff]
        %v2290 = vld [vmem:[%s2261 + $0xe0] sm:$0xff]
        %v2291 = vld [vmem:[%s2261 + $0xe8] sm:$0xff]
        %v2292 = vld [vmem:[%s2261 + $0xf0] sm:$0xff]
        %v2293 = vld [vmem:[%s2261 + $0xf8] sm:$0xff]
        %2295 = vset.pattern.permute.xlu0 0
        %2296 = vperm.xlu0 %2295, %v2262
        %v2297 = vpop.permute.xlu0 %2296
        %2300 = vset.pattern.permute.xlu0 0
        %2301 = vperm.xlu0 %2300, %v2263
        %v2302 = vpop.permute.xlu0 %2301
        %2305 = vset.pattern.permute.xlu0 0
        %2306 = vperm.xlu0 %2305, %v2264
        %v2307 = vpop.permute.xlu0 %2306
        %2310 = vset.pattern.permute.xlu0 0
        %2311 = vperm.xlu0 %2310, %v2265
        %v2312 = vpop.permute.xlu0 %2311
        %2315 = vset.pattern.permute.xlu0 0
        %2316 = vperm.xlu0 %2315, %v2266
        %v2317 = vpop.permute.xlu0 %2316
        %2320 = vset.pattern.permute.xlu0 0
        %2321 = vperm.xlu0 %2320, %v2267
        %v2322 = vpop.permute.xlu0 %2321
        %2325 = vset.pattern.permute.xlu0 0
        %2326 = vperm.xlu0 %2325, %v2268
        %v2327 = vpop.permute.xlu0 %2326
        %2330 = vset.pattern.permute.xlu0 0
        %2331 = vperm.xlu0 %2330, %v2269
        %v2332 = vpop.permute.xlu0 %2331
        %2335 = vset.pattern.permute.xlu0 0
        %2336 = vperm.xlu0 %2335, %v2270
        %v2337 = vpop.permute.xlu0 %2336
        %2340 = vset.pattern.permute.xlu0 0
        %2341 = vperm.xlu0 %2340, %v2271
        %v2342 = vpop.permute.xlu0 %2341
        %2345 = vset.pattern.permute.xlu0 0
        %2346 = vperm.xlu0 %2345, %v2272
        %v2347 = vpop.permute.xlu0 %2346
        %2350 = vset.pattern.permute.xlu0 0
        %2351 = vperm.xlu0 %2350, %v2273
        %v2352 = vpop.permute.xlu0 %2351
        %2355 = vset.pattern.permute.xlu0 0
        %2356 = vperm.xlu0 %2355, %v2274
        %v2357 = vpop.permute.xlu0 %2356
        %2360 = vset.pattern.permute.xlu0 0
        %2361 = vperm.xlu0 %2360, %v2275
        %v2362 = vpop.permute.xlu0 %2361
        %2365 = vset.pattern.permute.xlu0 0
        %2366 = vperm.xlu0 %2365, %v2276
        %v2367 = vpop.permute.xlu0 %2366
        %2370 = vset.pattern.permute.xlu0 0
        %2371 = vperm.xlu0 %2370, %v2277
        %v2372 = vpop.permute.xlu0 %2371
        %2375 = vset.pattern.permute.xlu0 0
        %2376 = vperm.xlu0 %2375, %v2278
        %v2377 = vpop.permute.xlu0 %2376
        %2380 = vset.pattern.permute.xlu0 0
        %2381 = vperm.xlu0 %2380, %v2279
        %v2382 = vpop.permute.xlu0 %2381
        %2385 = vset.pattern.permute.xlu0 0
        %2386 = vperm.xlu0 %2385, %v2280
        %v2387 = vpop.permute.xlu0 %2386
        %2390 = vset.pattern.permute.xlu0 0
        %2391 = vperm.xlu0 %2390, %v2281
        %v2392 = vpop.permute.xlu0 %2391
        %2395 = vset.pattern.permute.xlu0 0
        %2396 = vperm.xlu0 %2395, %v2282
        %v2397 = vpop.permute.xlu0 %2396
        %2400 = vset.pattern.permute.xlu0 0
        %2401 = vperm.xlu0 %2400, %v2283
        %v2402 = vpop.permute.xlu0 %2401
        %2405 = vset.pattern.permute.xlu0 0
        %2406 = vperm.xlu0 %2405, %v2284
        %v2407 = vpop.permute.xlu0 %2406
        %2410 = vset.pattern.permute.xlu0 0
        %2411 = vperm.xlu0 %2410, %v2285
        %v2412 = vpop.permute.xlu0 %2411
        %2415 = vset.pattern.permute.xlu0 0
        %2416 = vperm.xlu0 %2415, %v2286
        %v2417 = vpop.permute.xlu0 %2416
        %2420 = vset.pattern.permute.xlu0 0
        %2421 = vperm.xlu0 %2420, %v2287
        %v2422 = vpop.permute.xlu0 %2421
        %2425 = vset.pattern.permute.xlu0 0
        %2426 = vperm.xlu0 %2425, %v2288
        %v2427 = vpop.permute.xlu0 %2426
        %2430 = vset.pattern.permute.xlu0 0
        %2431 = vperm.xlu0 %2430, %v2289
        %v2432 = vpop.permute.xlu0 %2431
        %2435 = vset.pattern.permute.xlu0 0
        %2436 = vperm.xlu0 %2435, %v2290
        %v2437 = vpop.permute.xlu0 %2436
        %2440 = vset.pattern.permute.xlu0 0
        %2441 = vperm.xlu0 %2440, %v2291
        %v2442 = vpop.permute.xlu0 %2441
        %2445 = vset.pattern.permute.xlu0 0
        %2446 = vperm.xlu0 %2445, %v2292
        %v2447 = vpop.permute.xlu0 %2446
        %2450 = vset.pattern.permute.xlu0 0
        %2451 = vperm.xlu0 %2450, %v2293
        %v2452 = vpop.permute.xlu0 %2451
        %v2454 = vmul.f32 %v795, %v2297
        %v2455 = vmul.f32 %v794, %v2302
        %v2456 = vmul.f32 %v793, %v2307
        %v2457 = vmul.f32 %v792, %v2312
        %v2458 = vmul.f32 %v791, %v2317
        %v2459 = vmul.f32 %v790, %v2322
        %v2460 = vmul.f32 %v789, %v2327
        %v2461 = vmul.f32 %v788, %v2332
        %v2462 = vmul.f32 %v787, %v2337
        %v2463 = vmul.f32 %v786, %v2342
        %v2464 = vmul.f32 %v785, %v2347
        %v2465 = vmul.f32 %v784, %v2352
        %v2466 = vmul.f32 %v783, %v2357
        %v2467 = vmul.f32 %v782, %v2362
        %v2468 = vmul.f32 %v781, %v2367
        %v2469 = vmul.f32 %v780, %v2372
        %v2470 = vmul.f32 %v779, %v2377
        %v2471 = vmul.f32 %v778, %v2382
        %v2472 = vmul.f32 %v777, %v2387
        %v2473 = vmul.f32 %v776, %v2392
        %v2474 = vmul.f32 %v775, %v2397
        %v2475 = vmul.f32 %v774, %v2402
        %v2476 = vmul.f32 %v773, %v2407
        %v2477 = vmul.f32 %v772, %v2412
        %v2478 = vmul.f32 %v771, %v2417
        %v2479 = vmul.f32 %v770, %v2422
        %v2480 = vmul.f32 %v769, %v2427
        %v2481 = vmul.f32 %v768, %v2432
        %v2482 = vmul.f32 %v767, %v2437
        %v2483 = vmul.f32 %v766, %v2442
        %v2484 = vmul.f32 %v765, %v2447
        %v2485 = vmul.f32 %v764, %v2452
        %s2486 = scalar_lea.vmem %s2, 6
        %v2487 = vld [vmem:[%s2486] sm:$0x3]
        %v2488 = vpack.c.bf16 %v2455, %v2454
        %v2489 = vpack.c.bf16 %v2457, %v2456
        %v2490 = vpack.c.bf16 %v2459, %v2458
        %v2491 = vpack.c.bf16 %v2461, %v2460
        %v2492 = vpack.c.bf16 %v2463, %v2462
        %v2493 = vpack.c.bf16 %v2465, %v2464
        %v2494 = vpack.c.bf16 %v2467, %v2466
        %v2495 = vpack.c.bf16 %v2469, %v2468
        %v2496 = vpack.c.bf16 %v2471, %v2470
        %v2497 = vpack.c.bf16 %v2473, %v2472
        %v2498 = vpack.c.bf16 %v2475, %v2474
        %v2499 = vpack.c.bf16 %v2477, %v2476
        %v2500 = vpack.c.bf16 %v2479, %v2478
        %v2501 = vpack.c.bf16 %v2481, %v2480
        %v2502 = vpack.c.bf16 %v2483, %v2482
        %v2503 = vpack.c.bf16 %v2485, %v2484
        %v2505 = vsel %vm1280, %v2488, 0
        %v2508 = vsel %vm1280, %v2489, 0
        %v2511 = vsel %vm1280, %v2490, 0
        %v2514 = vsel %vm1280, %v2491, 0
        %v2517 = vsel %vm1280, %v2492, 0
        %v2520 = vsel %vm1280, %v2493, 0
        %v2523 = vsel %vm1280, %v2494, 0
        %v2526 = vsel %vm1280, %v2495, 0
        %v2529 = vsel %vm1280, %v2496, 0
        %v2532 = vsel %vm1280, %v2497, 0
        %v2535 = vsel %vm1280, %v2498, 0
        %v2538 = vsel %vm1280, %v2499, 0
        %v2541 = vsel %vm1280, %v2500, 0
        %v2544 = vsel %vm1280, %v2501, 0
        %v2547 = vsel %vm1280, %v2502, 0
        %v2550 = vsel %vm1280, %v2503, 0
        %v2553 = vand.u32 %v2487, %v1332
        %2555 = vmatprep.subr.bf16.mxu0 0
        %2556 = vmatpush1.bf16.msra.mxu0 0
        %2557 = vmatprep.subr.bf16.mxu0 0
        %2558 = vmatpush1.bf16.msra.mxu0 0
        %2559 = vmatprep.subr.bf16.mxu0 0
        %2560 = vmatpush1.bf16.msra.mxu0 0
        %2561 = vmatprep.subr.bf16.mxu0 0
        %2562 = vmatpush1.bf16.msra.mxu0 0
        %2563 = vmatprep.subr.bf16.mxu0 0
        %2564 = vmatpush1.bf16.msra.mxu0 0
        %2565 = vmatprep.subr.bf16.mxu0 0
        %2566 = vmatpush1.bf16.msra.mxu0 0
        %2567 = vmatprep.subr.bf16.mxu0 0
        %2568 = vmatpush1.bf16.msra.mxu0 0
        %2569 = vmatprep.subr.bf16.mxu0 0
        %2570 = vmatpush1.bf16.msra.mxu0 %v2553
        %2571 = vmatprep.subr.bf16.mxu0 0
        %2572 = vmatpush2.bf16.msra.mxu0 0
        %2573 = vmatprep.subr.bf16.mxu0 0
        %2574 = vmatpush2.bf16.msra.mxu0 0
        %2575 = vmatprep.subr.bf16.mxu0 0
        %2576 = vmatpush2.bf16.msra.mxu0 0
        %2577 = vmatprep.subr.bf16.mxu0 0
        %2578 = vmatpush2.bf16.msra.mxu0 0
        %2579 = vmatprep.subr.bf16.mxu0 0
        %2580 = vmatpush2.bf16.msra.mxu0 0
        %2581 = vmatprep.subr.bf16.mxu0 0
        %2582 = vmatpush2.bf16.msra.mxu0 0
        %2583 = vmatprep.subr.bf16.mxu0 0
        %2584 = vmatpush2.bf16.msra.mxu0 0
        %2585 = vmatprep.subr.bf16.mxu0 0
        %2586 = vmatpush2.bf16.msra.mxu0 0
        %2587 = vmatprep.mubr.bf16.mxu0 0
        %2588 = vmatmul.mubr.bf16.gmra.mxu0 %v2505
        %v2589 = vpop.f32.mrf.mxu0
        %v2590 = vadd.f32 0.0, %v2589
        %v2591 = vpop.f32.mrf.mxu0
        %v2592 = vpop.f32.mrf.mxu0
        %v2593 = vadd.f32 0.0, %v2592
        %v2594 = vpop.f32.mrf.mxu0
        %2595 = vmatprep.mubr.bf16.mxu0 0
        %2596 = vmatmul.mubr.bf16.gmra.mxu0 %v2508
        %v2597 = vpop.f32.mrf.mxu0
        %v2598 = vadd.f32 0.0, %v2597
        %v2599 = vpop.f32.mrf.mxu0
        %v2600 = vpop.f32.mrf.mxu0
        %v2601 = vadd.f32 0.0, %v2600
        %v2602 = vpop.f32.mrf.mxu0
        %2603 = vmatprep.mubr.bf16.mxu0 0
        %2604 = vmatmul.mubr.bf16.gmra.mxu0 %v2511
        %v2605 = vpop.f32.mrf.mxu0
        %v2606 = vadd.f32 0.0, %v2605
        %v2607 = vpop.f32.mrf.mxu0
        %v2608 = vpop.f32.mrf.mxu0
        %v2609 = vadd.f32 0.0, %v2608
        %v2610 = vpop.f32.mrf.mxu0
        %2611 = vmatprep.mubr.bf16.mxu0 0
        %2612 = vmatmul.mubr.bf16.gmra.mxu0 %v2514
        %v2613 = vpop.f32.mrf.mxu0
        %v2614 = vadd.f32 0.0, %v2613
        %v2615 = vpop.f32.mrf.mxu0
        %v2616 = vpop.f32.mrf.mxu0
        %v2617 = vadd.f32 0.0, %v2616
        %v2618 = vpop.f32.mrf.mxu0
        %2619 = vmatprep.mubr.bf16.mxu0 0
        %2620 = vmatmul.mubr.bf16.gmra.mxu0 %v2517
        %v2621 = vpop.f32.mrf.mxu0
        %v2622 = vadd.f32 0.0, %v2621
        %v2623 = vpop.f32.mrf.mxu0
        %v2624 = vpop.f32.mrf.mxu0
        %v2625 = vadd.f32 0.0, %v2624
        %v2626 = vpop.f32.mrf.mxu0
        %2627 = vmatprep.mubr.bf16.mxu0 0
        %2628 = vmatmul.mubr.bf16.gmra.mxu0 %v2520
        %v2629 = vpop.f32.mrf.mxu0
        %v2630 = vadd.f32 0.0, %v2629
        %v2631 = vpop.f32.mrf.mxu0
        %v2632 = vpop.f32.mrf.mxu0
        %v2633 = vadd.f32 0.0, %v2632
        %v2634 = vpop.f32.mrf.mxu0
        %2635 = vmatprep.mubr.bf16.mxu0 0
        %2636 = vmatmul.mubr.bf16.gmra.mxu0 %v2523
        %v2637 = vpop.f32.mrf.mxu0
        %v2638 = vadd.f32 0.0, %v2637
        %v2639 = vpop.f32.mrf.mxu0
        %v2640 = vpop.f32.mrf.mxu0
        %v2641 = vadd.f32 0.0, %v2640
        %v2642 = vpop.f32.mrf.mxu0
        %2643 = vmatprep.mubr.bf16.mxu0 0
        %2644 = vmatmul.mubr.bf16.gmra.mxu0 %v2526
        %v2645 = vpop.f32.mrf.mxu0
        %v2646 = vadd.f32 0.0, %v2645
        %v2647 = vpop.f32.mrf.mxu0
        %v2648 = vpop.f32.mrf.mxu0
        %v2649 = vadd.f32 0.0, %v2648
        %v2650 = vpop.f32.mrf.mxu0
        %2651 = vmatprep.mubr.bf16.mxu0 0
        %2652 = vmatmul.mubr.bf16.gmra.mxu0 %v2529
        %v2653 = vpop.f32.mrf.mxu0
        %v2654 = vadd.f32 0.0, %v2653
        %v2655 = vpop.f32.mrf.mxu0
        %v2656 = vpop.f32.mrf.mxu0
        %v2657 = vadd.f32 0.0, %v2656
        %v2658 = vpop.f32.mrf.mxu0
        %2659 = vmatprep.mubr.bf16.mxu0 0
        %2660 = vmatmul.mubr.bf16.gmra.mxu0 %v2532
        %v2661 = vpop.f32.mrf.mxu0
        %v2662 = vadd.f32 0.0, %v2661
        %v2663 = vpop.f32.mrf.mxu0
        %v2664 = vpop.f32.mrf.mxu0
        %v2665 = vadd.f32 0.0, %v2664
        %v2666 = vpop.f32.mrf.mxu0
        %2667 = vmatprep.mubr.bf16.mxu0 0
        %2668 = vmatmul.mubr.bf16.gmra.mxu0 %v2535
        %v2669 = vpop.f32.mrf.mxu0
        %v2670 = vadd.f32 0.0, %v2669
        %v2671 = vpop.f32.mrf.mxu0
        %v2672 = vpop.f32.mrf.mxu0
        %v2673 = vadd.f32 0.0, %v2672
        %v2674 = vpop.f32.mrf.mxu0
        %2675 = vmatprep.mubr.bf16.mxu0 0
        %2676 = vmatmul.mubr.bf16.gmra.mxu0 %v2538
        %v2677 = vpop.f32.mrf.mxu0
        %v2678 = vadd.f32 0.0, %v2677
        %v2679 = vpop.f32.mrf.mxu0
        %v2680 = vpop.f32.mrf.mxu0
        %v2681 = vadd.f32 0.0, %v2680
        %v2682 = vpop.f32.mrf.mxu0
        %2683 = vmatprep.mubr.bf16.mxu0 0
        %2684 = vmatmul.mubr.bf16.gmra.mxu0 %v2541
        %v2685 = vpop.f32.mrf.mxu0
        %v2686 = vadd.f32 0.0, %v2685
        %v2687 = vpop.f32.mrf.mxu0
        %v2688 = vpop.f32.mrf.mxu0
        %v2689 = vadd.f32 0.0, %v2688
        %v2690 = vpop.f32.mrf.mxu0
        %2691 = vmatprep.mubr.bf16.mxu0 0
        %2692 = vmatmul.mubr.bf16.gmra.mxu0 %v2544
        %v2693 = vpop.f32.mrf.mxu0
        %v2694 = vadd.f32 0.0, %v2693
        %v2695 = vpop.f32.mrf.mxu0
        %v2696 = vpop.f32.mrf.mxu0
        %v2697 = vadd.f32 0.0, %v2696
        %v2698 = vpop.f32.mrf.mxu0
        %2699 = vmatprep.mubr.bf16.mxu0 0
        %2700 = vmatmul.mubr.bf16.gmra.mxu0 %v2547
        %v2701 = vpop.f32.mrf.mxu0
        %v2702 = vadd.f32 0.0, %v2701
        %v2703 = vpop.f32.mrf.mxu0
        %v2704 = vpop.f32.mrf.mxu0
        %v2705 = vadd.f32 0.0, %v2704
        %v2706 = vpop.f32.mrf.mxu0
        %2707 = vmatprep.mubr.bf16.mxu0 0
        %2708 = vmatmul.mubr.bf16.gmra.mxu0 %v2550
        %v2709 = vpop.f32.mrf.mxu0
        %v2710 = vadd.f32 0.0, %v2709
        %v2711 = vpop.f32.mrf.mxu0
        %v2712 = vpop.f32.mrf.mxu0
        %v2713 = vadd.f32 0.0, %v2712
        %v2714 = vpop.f32.mrf.mxu0
        %2715 = vdwg.mxu0
        %v2716 = vadd.f32 %v2229, %v2590
        %v2717 = vadd.f32 %v2230, %v2593
        %v2718 = vadd.f32 %v2231, %v2598
        %v2719 = vadd.f32 %v2232, %v2601
        %v2720 = vadd.f32 %v2233, %v2606
        %v2721 = vadd.f32 %v2234, %v2609
        %v2722 = vadd.f32 %v2235, %v2614
        %v2723 = vadd.f32 %v2236, %v2617
        %v2724 = vadd.f32 %v2237, %v2622
        %v2725 = vadd.f32 %v2238, %v2625
        %v2726 = vadd.f32 %v2239, %v2630
        %v2727 = vadd.f32 %v2240, %v2633
        %v2728 = vadd.f32 %v2241, %v2638
        %v2729 = vadd.f32 %v2242, %v2641
        %v2730 = vadd.f32 %v2243, %v2646
        %v2731 = vadd.f32 %v2244, %v2649
        %v2732 = vadd.f32 %v2245, %v2654
        %v2733 = vadd.f32 %v2246, %v2657
        %v2734 = vadd.f32 %v2247, %v2662
        %v2735 = vadd.f32 %v2248, %v2665
        %v2736 = vadd.f32 %v2249, %v2670
        %v2737 = vadd.f32 %v2250, %v2673
        %v2738 = vadd.f32 %v2251, %v2678
        %v2739 = vadd.f32 %v2252, %v2681
        %v2740 = vadd.f32 %v2253, %v2686
        %v2741 = vadd.f32 %v2254, %v2689
        %v2742 = vadd.f32 %v2255, %v2694
        %v2743 = vadd.f32 %v2256, %v2697
        %v2744 = vadd.f32 %v2257, %v2702
        %v2745 = vadd.f32 %v2258, %v2705
        %v2746 = vadd.f32 %v2259, %v2710
        %v2747 = vadd.f32 %v2260, %v2713
        %s2748 = scalar_lea.vmem %s2, 8
        %v2749 = vld [vmem:[%s2748] sm:$0x3]
        %v2750 = vpack.c.bf16 %v697, %v696
        %v2751 = vpack.c.bf16 %v699, %v698
        %v2752 = vpack.c.bf16 %v701, %v700
        %v2753 = vpack.c.bf16 %v703, %v702
        %v2754 = vpack.c.bf16 %v705, %v704
        %v2755 = vpack.c.bf16 %v707, %v706
        %v2756 = vpack.c.bf16 %v709, %v708
        %v2757 = vpack.c.bf16 %v711, %v710
        %v2758 = vpack.c.bf16 %v713, %v712
        %v2759 = vpack.c.bf16 %v715, %v714
        %v2760 = vpack.c.bf16 %v717, %v716
        %v2761 = vpack.c.bf16 %v719, %v718
        %v2762 = vpack.c.bf16 %v721, %v720
        %v2763 = vpack.c.bf16 %v723, %v722
        %v2764 = vpack.c.bf16 %v725, %v724
        %v2765 = vpack.c.bf16 %v727, %v726
        %v2767 = vsel %vm1280, %v2750, 0
        %v2770 = vsel %vm1280, %v2751, 0
        %v2773 = vsel %vm1280, %v2752, 0
        %v2776 = vsel %vm1280, %v2753, 0
        %v2779 = vsel %vm1280, %v2754, 0
        %v2782 = vsel %vm1280, %v2755, 0
        %v2785 = vsel %vm1280, %v2756, 0
        %v2788 = vsel %vm1280, %v2757, 0
        %v2791 = vsel %vm1280, %v2758, 0
        %v2794 = vsel %vm1280, %v2759, 0
        %v2797 = vsel %vm1280, %v2760, 0
        %v2800 = vsel %vm1280, %v2761, 0
        %v2803 = vsel %vm1280, %v2762, 0
        %v2806 = vsel %vm1280, %v2763, 0
        %v2809 = vsel %vm1280, %v2764, 0
        %v2812 = vsel %vm1280, %v2765, 0
        %v2815 = vand.u32 %v2749, %v1332
        %2817 = vmatprep.subr.bf16.mxu0 0
        %2818 = vmatpush1.bf16.msra.mxu0 0
        %2819 = vmatprep.subr.bf16.mxu0 0
        %2820 = vmatpush1.bf16.msra.mxu0 0
        %2821 = vmatprep.subr.bf16.mxu0 0
        %2822 = vmatpush1.bf16.msra.mxu0 0
        %2823 = vmatprep.subr.bf16.mxu0 0
        %2824 = vmatpush1.bf16.msra.mxu0 0
        %2825 = vmatprep.subr.bf16.mxu0 0
        %2826 = vmatpush1.bf16.msra.mxu0 0
        %2827 = vmatprep.subr.bf16.mxu0 0
        %2828 = vmatpush1.bf16.msra.mxu0 0
        %2829 = vmatprep.subr.bf16.mxu0 0
        %2830 = vmatpush1.bf16.msra.mxu0 0
        %2831 = vmatprep.subr.bf16.mxu0 0
        %2832 = vmatpush1.bf16.msra.mxu0 %v2815
        %2833 = vmatprep.subr.bf16.mxu0 0
        %2834 = vmatpush2.bf16.msra.mxu0 0
        %2835 = vmatprep.subr.bf16.mxu0 0
        %2836 = vmatpush2.bf16.msra.mxu0 0
        %2837 = vmatprep.subr.bf16.mxu0 0
        %2838 = vmatpush2.bf16.msra.mxu0 0
        %2839 = vmatprep.subr.bf16.mxu0 0
        %2840 = vmatpush2.bf16.msra.mxu0 0
        %2841 = vmatprep.subr.bf16.mxu0 0
        %2842 = vmatpush2.bf16.msra.mxu0 0
        %2843 = vmatprep.subr.bf16.mxu0 0
        %2844 = vmatpush2.bf16.msra.mxu0 0
        %2845 = vmatprep.subr.bf16.mxu0 0
        %2846 = vmatpush2.bf16.msra.mxu0 0
        %2847 = vmatprep.subr.bf16.mxu0 0
        %2848 = vmatpush2.bf16.msra.mxu0 0
        %2849 = vmatprep.mubr.bf16.mxu0 0
        %2850 = vmatmul.mubr.bf16.gmra.mxu0 %v2767
        %v2851 = vpop.f32.mrf.mxu0
        %v2852 = vadd.f32 0.0, %v2851
        %v2853 = vpop.f32.mrf.mxu0
        %v2854 = vpop.f32.mrf.mxu0
        %v2855 = vadd.f32 0.0, %v2854
        %v2856 = vpop.f32.mrf.mxu0
        %2857 = vmatprep.mubr.bf16.mxu0 0
        %2858 = vmatmul.mubr.bf16.gmra.mxu0 %v2770
        %v2859 = vpop.f32.mrf.mxu0
        %v2860 = vadd.f32 0.0, %v2859
        %v2861 = vpop.f32.mrf.mxu0
        %v2862 = vpop.f32.mrf.mxu0
        %v2863 = vadd.f32 0.0, %v2862
        %v2864 = vpop.f32.mrf.mxu0
        %2865 = vmatprep.mubr.bf16.mxu0 0
        %2866 = vmatmul.mubr.bf16.gmra.mxu0 %v2773
        %v2867 = vpop.f32.mrf.mxu0
        %v2868 = vadd.f32 0.0, %v2867
        %v2869 = vpop.f32.mrf.mxu0
        %v2870 = vpop.f32.mrf.mxu0
        %v2871 = vadd.f32 0.0, %v2870
        %v2872 = vpop.f32.mrf.mxu0
        %2873 = vmatprep.mubr.bf16.mxu0 0
        %2874 = vmatmul.mubr.bf16.gmra.mxu0 %v2776
        %v2875 = vpop.f32.mrf.mxu0
        %v2876 = vadd.f32 0.0, %v2875
        %v2877 = vpop.f32.mrf.mxu0
        %v2878 = vpop.f32.mrf.mxu0
        %v2879 = vadd.f32 0.0, %v2878
        %v2880 = vpop.f32.mrf.mxu0
        %2881 = vmatprep.mubr.bf16.mxu0 0
        %2882 = vmatmul.mubr.bf16.gmra.mxu0 %v2779
        %v2883 = vpop.f32.mrf.mxu0
        %v2884 = vadd.f32 0.0, %v2883
        %v2885 = vpop.f32.mrf.mxu0
        %v2886 = vpop.f32.mrf.mxu0
        %v2887 = vadd.f32 0.0, %v2886
        %v2888 = vpop.f32.mrf.mxu0
        %2889 = vmatprep.mubr.bf16.mxu0 0
        %2890 = vmatmul.mubr.bf16.gmra.mxu0 %v2782
        %v2891 = vpop.f32.mrf.mxu0
        %v2892 = vadd.f32 0.0, %v2891
        %v2893 = vpop.f32.mrf.mxu0
        %v2894 = vpop.f32.mrf.mxu0
        %v2895 = vadd.f32 0.0, %v2894
        %v2896 = vpop.f32.mrf.mxu0
        %2897 = vmatprep.mubr.bf16.mxu0 0
        %2898 = vmatmul.mubr.bf16.gmra.mxu0 %v2785
        %v2899 = vpop.f32.mrf.mxu0
        %v2900 = vadd.f32 0.0, %v2899
        %v2901 = vpop.f32.mrf.mxu0
        %v2902 = vpop.f32.mrf.mxu0
        %v2903 = vadd.f32 0.0, %v2902
        %v2904 = vpop.f32.mrf.mxu0
        %2905 = vmatprep.mubr.bf16.mxu0 0
        %2906 = vmatmul.mubr.bf16.gmra.mxu0 %v2788
        %v2907 = vpop.f32.mrf.mxu0
        %v2908 = vadd.f32 0.0, %v2907
        %v2909 = vpop.f32.mrf.mxu0
        %v2910 = vpop.f32.mrf.mxu0
        %v2911 = vadd.f32 0.0, %v2910
        %v2912 = vpop.f32.mrf.mxu0
        %2913 = vmatprep.mubr.bf16.mxu0 0
        %2914 = vmatmul.mubr.bf16.gmra.mxu0 %v2791
        %v2915 = vpop.f32.mrf.mxu0
        %v2916 = vadd.f32 0.0, %v2915
        %v2917 = vpop.f32.mrf.mxu0
        %v2918 = vpop.f32.mrf.mxu0
        %v2919 = vadd.f32 0.0, %v2918
        %v2920 = vpop.f32.mrf.mxu0
        %2921 = vmatprep.mubr.bf16.mxu0 0
        %2922 = vmatmul.mubr.bf16.gmra.mxu0 %v2794
        %v2923 = vpop.f32.mrf.mxu0
        %v2924 = vadd.f32 0.0, %v2923
        %v2925 = vpop.f32.mrf.mxu0
        %v2926 = vpop.f32.mrf.mxu0
        %v2927 = vadd.f32 0.0, %v2926
        %v2928 = vpop.f32.mrf.mxu0
        %2929 = vmatprep.mubr.bf16.mxu0 0
        %2930 = vmatmul.mubr.bf16.gmra.mxu0 %v2797
        %v2931 = vpop.f32.mrf.mxu0
        %v2932 = vadd.f32 0.0, %v2931
        %v2933 = vpop.f32.mrf.mxu0
        %v2934 = vpop.f32.mrf.mxu0
        %v2935 = vadd.f32 0.0, %v2934
        %v2936 = vpop.f32.mrf.mxu0
        %2937 = vmatprep.mubr.bf16.mxu0 0
        %2938 = vmatmul.mubr.bf16.gmra.mxu0 %v2800
        %v2939 = vpop.f32.mrf.mxu0
        %v2940 = vadd.f32 0.0, %v2939
        %v2941 = vpop.f32.mrf.mxu0
        %v2942 = vpop.f32.mrf.mxu0
        %v2943 = vadd.f32 0.0, %v2942
        %v2944 = vpop.f32.mrf.mxu0
        %2945 = vmatprep.mubr.bf16.mxu0 0
        %2946 = vmatmul.mubr.bf16.gmra.mxu0 %v2803
        %v2947 = vpop.f32.mrf.mxu0
        %v2948 = vadd.f32 0.0, %v2947
        %v2949 = vpop.f32.mrf.mxu0
        %v2950 = vpop.f32.mrf.mxu0
        %v2951 = vadd.f32 0.0, %v2950
        %v2952 = vpop.f32.mrf.mxu0
        %2953 = vmatprep.mubr.bf16.mxu0 0
        %2954 = vmatmul.mubr.bf16.gmra.mxu0 %v2806
        %v2955 = vpop.f32.mrf.mxu0
        %v2956 = vadd.f32 0.0, %v2955
        %v2957 = vpop.f32.mrf.mxu0
        %v2958 = vpop.f32.mrf.mxu0
        %v2959 = vadd.f32 0.0, %v2958
        %v2960 = vpop.f32.mrf.mxu0
        %2961 = vmatprep.mubr.bf16.mxu0 0
        %2962 = vmatmul.mubr.bf16.gmra.mxu0 %v2809
        %v2963 = vpop.f32.mrf.mxu0
        %v2964 = vadd.f32 0.0, %v2963
        %v2965 = vpop.f32.mrf.mxu0
        %v2966 = vpop.f32.mrf.mxu0
        %v2967 = vadd.f32 0.0, %v2966
        %v2968 = vpop.f32.mrf.mxu0
        %2969 = vmatprep.mubr.bf16.mxu0 0
        %2970 = vmatmul.mubr.bf16.gmra.mxu0 %v2812
        %v2971 = vpop.f32.mrf.mxu0
        %v2972 = vadd.f32 0.0, %v2971
        %v2973 = vpop.f32.mrf.mxu0
        %v2974 = vpop.f32.mrf.mxu0
        %v2975 = vadd.f32 0.0, %v2974
        %v2976 = vpop.f32.mrf.mxu0
        %2977 = vdwg.mxu0
        %v2978 = vadd.f32 %v2716, %v2852
        %v2979 = vadd.f32 %v2717, %v2855
        %v2980 = vadd.f32 %v2718, %v2860
        %v2981 = vadd.f32 %v2719, %v2863
        %v2982 = vadd.f32 %v2720, %v2868
        %v2983 = vadd.f32 %v2721, %v2871
        %v2984 = vadd.f32 %v2722, %v2876
        %v2985 = vadd.f32 %v2723, %v2879
        %v2986 = vadd.f32 %v2724, %v2884
        %v2987 = vadd.f32 %v2725, %v2887
        %v2988 = vadd.f32 %v2726, %v2892
        %v2989 = vadd.f32 %v2727, %v2895
        %v2990 = vadd.f32 %v2728, %v2900
        %v2991 = vadd.f32 %v2729, %v2903
        %v2992 = vadd.f32 %v2730, %v2908
        %v2993 = vadd.f32 %v2731, %v2911
        %v2994 = vadd.f32 %v2732, %v2916
        %v2995 = vadd.f32 %v2733, %v2919
        %v2996 = vadd.f32 %v2734, %v2924
        %v2997 = vadd.f32 %v2735, %v2927
        %v2998 = vadd.f32 %v2736, %v2932
        %v2999 = vadd.f32 %v2737, %v2935
        %v3000 = vadd.f32 %v2738, %v2940
        %v3001 = vadd.f32 %v2739, %v2943
        %v3002 = vadd.f32 %v2740, %v2948
        %v3003 = vadd.f32 %v2741, %v2951
        %v3004 = vadd.f32 %v2742, %v2956
        %v3005 = vadd.f32 %v2743, %v2959
        %v3006 = vadd.f32 %v2744, %v2964
        %v3007 = vadd.f32 %v2745, %v2967
        %v3008 = vadd.f32 %v2746, %v2972
        %v3009 = vadd.f32 %v2747, %v2975
        %s3010 = scalar_lea.vmem %s4, 1280
        %v3011 = vld [vmem:[%s3010] sm:$0xff]
        %v3012 = vld [vmem:[%s3010 + $0x8] sm:$0xff]
        %v3013 = vld [vmem:[%s3010 + $0x10] sm:$0xff]
        %v3014 = vld [vmem:[%s3010 + $0x18] sm:$0xff]
        %v3015 = vld [vmem:[%s3010 + $0x20] sm:$0xff]
        %v3016 = vld [vmem:[%s3010 + $0x28] sm:$0xff]
        %v3017 = vld [vmem:[%s3010 + $0x30] sm:$0xff]
        %v3018 = vld [vmem:[%s3010 + $0x38] sm:$0xff]
        %v3019 = vld [vmem:[%s3010 + $0x40] sm:$0xff]
        %v3020 = vld [vmem:[%s3010 + $0x48] sm:$0xff]
        %v3021 = vld [vmem:[%s3010 + $0x50] sm:$0xff]
        %v3022 = vld [vmem:[%s3010 + $0x58] sm:$0xff]
        %v3023 = vld [vmem:[%s3010 + $0x60] sm:$0xff]
        %v3024 = vld [vmem:[%s3010 + $0x68] sm:$0xff]
        %v3025 = vld [vmem:[%s3010 + $0x70] sm:$0xff]
        %v3026 = vld [vmem:[%s3010 + $0x78] sm:$0xff]
        %v3027 = vld [vmem:[%s3010 + $0x80] sm:$0xff]
        %v3028 = vld [vmem:[%s3010 + $0x88] sm:$0xff]
        %v3029 = vld [vmem:[%s3010 + $0x90] sm:$0xff]
        %v3030 = vld [vmem:[%s3010 + $0x98] sm:$0xff]
        %v3031 = vld [vmem:[%s3010 + $0xa0] sm:$0xff]
        %v3032 = vld [vmem:[%s3010 + $0xa8] sm:$0xff]
        %v3033 = vld [vmem:[%s3010 + $0xb0] sm:$0xff]
        %v3034 = vld [vmem:[%s3010 + $0xb8] sm:$0xff]
        %v3035 = vld [vmem:[%s3010 + $0xc0] sm:$0xff]
        %v3036 = vld [vmem:[%s3010 + $0xc8] sm:$0xff]
        %v3037 = vld [vmem:[%s3010 + $0xd0] sm:$0xff]
        %v3038 = vld [vmem:[%s3010 + $0xd8] sm:$0xff]
        %v3039 = vld [vmem:[%s3010 + $0xe0] sm:$0xff]
        %v3040 = vld [vmem:[%s3010 + $0xe8] sm:$0xff]
        %v3041 = vld [vmem:[%s3010 + $0xf0] sm:$0xff]
        %v3042 = vld [vmem:[%s3010 + $0xf8] sm:$0xff]
        %3044 = vset.pattern.permute.xlu0 0
        %3045 = vperm.xlu0 %3044, %v3011
        %v3046 = vpop.permute.xlu0 %3045
        %3049 = vset.pattern.permute.xlu0 0
        %3050 = vperm.xlu0 %3049, %v3012
        %v3051 = vpop.permute.xlu0 %3050
        %3054 = vset.pattern.permute.xlu0 0
        %3055 = vperm.xlu0 %3054, %v3013
        %v3056 = vpop.permute.xlu0 %3055
        %3059 = vset.pattern.permute.xlu0 0
        %3060 = vperm.xlu0 %3059, %v3014
        %v3061 = vpop.permute.xlu0 %3060
        %3064 = vset.pattern.permute.xlu0 0
        %3065 = vperm.xlu0 %3064, %v3015
        %v3066 = vpop.permute.xlu0 %3065
        %3069 = vset.pattern.permute.xlu0 0
        %3070 = vperm.xlu0 %3069, %v3016
        %v3071 = vpop.permute.xlu0 %3070
        %3074 = vset.pattern.permute.xlu0 0
        %3075 = vperm.xlu0 %3074, %v3017
        %v3076 = vpop.permute.xlu0 %3075
        %3079 = vset.pattern.permute.xlu0 0
        %3080 = vperm.xlu0 %3079, %v3018
        %v3081 = vpop.permute.xlu0 %3080
        %3084 = vset.pattern.permute.xlu0 0
        %3085 = vperm.xlu0 %3084, %v3019
        %v3086 = vpop.permute.xlu0 %3085
        %3089 = vset.pattern.permute.xlu0 0
        %3090 = vperm.xlu0 %3089, %v3020
        %v3091 = vpop.permute.xlu0 %3090
        %3094 = vset.pattern.permute.xlu0 0
        %3095 = vperm.xlu0 %3094, %v3021
        %v3096 = vpop.permute.xlu0 %3095
        %3099 = vset.pattern.permute.xlu0 0
        %3100 = vperm.xlu0 %3099, %v3022
        %v3101 = vpop.permute.xlu0 %3100
        %3104 = vset.pattern.permute.xlu0 0
        %3105 = vperm.xlu0 %3104, %v3023
        %v3106 = vpop.permute.xlu0 %3105
        %3109 = vset.pattern.permute.xlu0 0
        %3110 = vperm.xlu0 %3109, %v3024
        %v3111 = vpop.permute.xlu0 %3110
        %3114 = vset.pattern.permute.xlu0 0
        %3115 = vperm.xlu0 %3114, %v3025
        %v3116 = vpop.permute.xlu0 %3115
        %3119 = vset.pattern.permute.xlu0 0
        %3120 = vperm.xlu0 %3119, %v3026
        %v3121 = vpop.permute.xlu0 %3120
        %3124 = vset.pattern.permute.xlu0 0
        %3125 = vperm.xlu0 %3124, %v3027
        %v3126 = vpop.permute.xlu0 %3125
        %3129 = vset.pattern.permute.xlu0 0
        %3130 = vperm.xlu0 %3129, %v3028
        %v3131 = vpop.permute.xlu0 %3130
        %3134 = vset.pattern.permute.xlu0 0
        %3135 = vperm.xlu0 %3134, %v3029
        %v3136 = vpop.permute.xlu0 %3135
        %3139 = vset.pattern.permute.xlu0 0
        %3140 = vperm.xlu0 %3139, %v3030
        %v3141 = vpop.permute.xlu0 %3140
        %3144 = vset.pattern.permute.xlu0 0
        %3145 = vperm.xlu0 %3144, %v3031
        %v3146 = vpop.permute.xlu0 %3145
        %3149 = vset.pattern.permute.xlu0 0
        %3150 = vperm.xlu0 %3149, %v3032
        %v3151 = vpop.permute.xlu0 %3150
        %3154 = vset.pattern.permute.xlu0 0
        %3155 = vperm.xlu0 %3154, %v3033
        %v3156 = vpop.permute.xlu0 %3155
        %3159 = vset.pattern.permute.xlu0 0
        %3160 = vperm.xlu0 %3159, %v3034
        %v3161 = vpop.permute.xlu0 %3160
        %3164 = vset.pattern.permute.xlu0 0
        %3165 = vperm.xlu0 %3164, %v3035
        %v3166 = vpop.permute.xlu0 %3165
        %3169 = vset.pattern.permute.xlu0 0
        %3170 = vperm.xlu0 %3169, %v3036
        %v3171 = vpop.permute.xlu0 %3170
        %3174 = vset.pattern.permute.xlu0 0
        %3175 = vperm.xlu0 %3174, %v3037
        %v3176 = vpop.permute.xlu0 %3175
        %3179 = vset.pattern.permute.xlu0 0
        %3180 = vperm.xlu0 %3179, %v3038
        %v3181 = vpop.permute.xlu0 %3180
        %3184 = vset.pattern.permute.xlu0 0
        %3185 = vperm.xlu0 %3184, %v3039
        %v3186 = vpop.permute.xlu0 %3185
        %3189 = vset.pattern.permute.xlu0 0
        %3190 = vperm.xlu0 %3189, %v3040
        %v3191 = vpop.permute.xlu0 %3190
        %3194 = vset.pattern.permute.xlu0 0
        %3195 = vperm.xlu0 %3194, %v3041
        %v3196 = vpop.permute.xlu0 %3195
        %3199 = vset.pattern.permute.xlu0 0
        %3200 = vperm.xlu0 %3199, %v3042
        %v3201 = vpop.permute.xlu0 %3200
        %v3203 = vmul.f32 %v1772, %v3046
        %v3204 = vmul.f32 %v1771, %v3051
        %v3205 = vmul.f32 %v1770, %v3056
        %v3206 = vmul.f32 %v1769, %v3061
        %v3207 = vmul.f32 %v1768, %v3066
        %v3208 = vmul.f32 %v1767, %v3071
        %v3209 = vmul.f32 %v1766, %v3076
        %v3210 = vmul.f32 %v1765, %v3081
        %v3211 = vmul.f32 %v1764, %v3086
        %v3212 = vmul.f32 %v1763, %v3091
        %v3213 = vmul.f32 %v1762, %v3096
        %v3214 = vmul.f32 %v1761, %v3101
        %v3215 = vmul.f32 %v1760, %v3106
        %v3216 = vmul.f32 %v1759, %v3111
        %v3217 = vmul.f32 %v1758, %v3116
        %v3218 = vmul.f32 %v1757, %v3121
        %v3219 = vmul.f32 %v1756, %v3126
        %v3220 = vmul.f32 %v1755, %v3131
        %v3221 = vmul.f32 %v1754, %v3136
        %v3222 = vmul.f32 %v1753, %v3141
        %v3223 = vmul.f32 %v1752, %v3146
        %v3224 = vmul.f32 %v1751, %v3151
        %v3225 = vmul.f32 %v1750, %v3156
        %v3226 = vmul.f32 %v1749, %v3161
        %v3227 = vmul.f32 %v1748, %v3166
        %v3228 = vmul.f32 %v1747, %v3171
        %v3229 = vmul.f32 %v1746, %v3176
        %v3230 = vmul.f32 %v1745, %v3181
        %v3231 = vmul.f32 %v1744, %v3186
        %v3232 = vmul.f32 %v1743, %v3191
        %v3233 = vmul.f32 %v1742, %v3196
        %v3234 = vmul.f32 %v1773, %v3201
        %s3235 = scalar_lea.vmem %s2, 10
        %v3236 = vld [vmem:[%s3235] sm:$0x3]
        %v3237 = vpack.c.bf16 %v3204, %v3203
        %v3238 = vpack.c.bf16 %v3206, %v3205
        %v3239 = vpack.c.bf16 %v3208, %v3207
        %v3240 = vpack.c.bf16 %v3210, %v3209
        %v3241 = vpack.c.bf16 %v3212, %v3211
        %v3242 = vpack.c.bf16 %v3214, %v3213
        %v3243 = vpack.c.bf16 %v3216, %v3215
        %v3244 = vpack.c.bf16 %v3218, %v3217
        %v3245 = vpack.c.bf16 %v3220, %v3219
        %v3246 = vpack.c.bf16 %v3222, %v3221
        %v3247 = vpack.c.bf16 %v3224, %v3223
        %v3248 = vpack.c.bf16 %v3226, %v3225
        %v3249 = vpack.c.bf16 %v3228, %v3227
        %v3250 = vpack.c.bf16 %v3230, %v3229
        %v3251 = vpack.c.bf16 %v3232, %v3231
        %v3252 = vpack.c.bf16 %v3234, %v3233
        %v3254 = vsel %vm1280, %v3237, 0
        %v3257 = vsel %vm1280, %v3238, 0
        %v3260 = vsel %vm1280, %v3239, 0
        %v3263 = vsel %vm1280, %v3240, 0
        %v3266 = vsel %vm1280, %v3241, 0
        %v3269 = vsel %vm1280, %v3242, 0
        %v3272 = vsel %vm1280, %v3243, 0
        %v3275 = vsel %vm1280, %v3244, 0
        %v3278 = vsel %vm1280, %v3245, 0
        %v3281 = vsel %vm1280, %v3246, 0
        %v3284 = vsel %vm1280, %v3247, 0
        %v3287 = vsel %vm1280, %v3248, 0
        %v3290 = vsel %vm1280, %v3249, 0
        %v3293 = vsel %vm1280, %v3250, 0
        %v3296 = vsel %vm1280, %v3251, 0
        %v3299 = vsel %vm1280, %v3252, 0
        %v3302 = vand.u32 %v3236, %v1332
        %3304 = vmatprep.subr.bf16.mxu0 0
        %3305 = vmatpush1.bf16.msra.mxu0 0
        %3306 = vmatprep.subr.bf16.mxu0 0
        %3307 = vmatpush1.bf16.msra.mxu0 0
        %3308 = vmatprep.subr.bf16.mxu0 0
        %3309 = vmatpush1.bf16.msra.mxu0 0
        %3310 = vmatprep.subr.bf16.mxu0 0
        %3311 = vmatpush1.bf16.msra.mxu0 0
        %3312 = vmatprep.subr.bf16.mxu0 0
        %3313 = vmatpush1.bf16.msra.mxu0 0
        %3314 = vmatprep.subr.bf16.mxu0 0
        %3315 = vmatpush1.bf16.msra.mxu0 0
        %3316 = vmatprep.subr.bf16.mxu0 0
        %3317 = vmatpush1.bf16.msra.mxu0 0
        %3318 = vmatprep.subr.bf16.mxu0 0
        %3319 = vmatpush1.bf16.msra.mxu0 %v3302
        %3320 = vmatprep.subr.bf16.mxu0 0
        %3321 = vmatpush2.bf16.msra.mxu0 0
        %3322 = vmatprep.subr.bf16.mxu0 0
        %3323 = vmatpush2.bf16.msra.mxu0 0
        %3324 = vmatprep.subr.bf16.mxu0 0
        %3325 = vmatpush2.bf16.msra.mxu0 0
        %3326 = vmatprep.subr.bf16.mxu0 0
        %3327 = vmatpush2.bf16.msra.mxu0 0
        %3328 = vmatprep.subr.bf16.mxu0 0
        %3329 = vmatpush2.bf16.msra.mxu0 0
        %3330 = vmatprep.subr.bf16.mxu0 0
        %3331 = vmatpush2.bf16.msra.mxu0 0
        %3332 = vmatprep.subr.bf16.mxu0 0
        %3333 = vmatpush2.bf16.msra.mxu0 0
        %3334 = vmatprep.subr.bf16.mxu0 0
        %3335 = vmatpush2.bf16.msra.mxu0 0
        %3336 = vmatprep.mubr.bf16.mxu0 0
        %3337 = vmatmul.mubr.bf16.gmra.mxu0 %v3254
        %v3338 = vpop.f32.mrf.mxu0
        %v3339 = vadd.f32 0.0, %v3338
        %v3340 = vpop.f32.mrf.mxu0
        %v3341 = vpop.f32.mrf.mxu0
        %v3342 = vadd.f32 0.0, %v3341
        %v3343 = vpop.f32.mrf.mxu0
        %3344 = vmatprep.mubr.bf16.mxu0 0
        %3345 = vmatmul.mubr.bf16.gmra.mxu0 %v3257
        %v3346 = vpop.f32.mrf.mxu0
        %v3347 = vadd.f32 0.0, %v3346
        %v3348 = vpop.f32.mrf.mxu0
        %v3349 = vpop.f32.mrf.mxu0
        %v3350 = vadd.f32 0.0, %v3349
        %v3351 = vpop.f32.mrf.mxu0
        %3352 = vmatprep.mubr.bf16.mxu0 0
        %3353 = vmatmul.mubr.bf16.gmra.mxu0 %v3260
        %v3354 = vpop.f32.mrf.mxu0
        %v3355 = vadd.f32 0.0, %v3354
        %v3356 = vpop.f32.mrf.mxu0
        %v3357 = vpop.f32.mrf.mxu0
        %v3358 = vadd.f32 0.0, %v3357
        %v3359 = vpop.f32.mrf.mxu0
        %3360 = vmatprep.mubr.bf16.mxu0 0
        %3361 = vmatmul.mubr.bf16.gmra.mxu0 %v3263
        %v3362 = vpop.f32.mrf.mxu0
        %v3363 = vadd.f32 0.0, %v3362
        %v3364 = vpop.f32.mrf.mxu0
        %v3365 = vpop.f32.mrf.mxu0
        %v3366 = vadd.f32 0.0, %v3365
        %v3367 = vpop.f32.mrf.mxu0
        %3368 = vmatprep.mubr.bf16.mxu0 0
        %3369 = vmatmul.mubr.bf16.gmra.mxu0 %v3266
        %v3370 = vpop.f32.mrf.mxu0
        %v3371 = vadd.f32 0.0, %v3370
        %v3372 = vpop.f32.mrf.mxu0
        %v3373 = vpop.f32.mrf.mxu0
        %v3374 = vadd.f32 0.0, %v3373
        %v3375 = vpop.f32.mrf.mxu0
        %3376 = vmatprep.mubr.bf16.mxu0 0
        %3377 = vmatmul.mubr.bf16.gmra.mxu0 %v3269
        %v3378 = vpop.f32.mrf.mxu0
        %v3379 = vadd.f32 0.0, %v3378
        %v3380 = vpop.f32.mrf.mxu0
        %v3381 = vpop.f32.mrf.mxu0
        %v3382 = vadd.f32 0.0, %v3381
        %v3383 = vpop.f32.mrf.mxu0
        %3384 = vmatprep.mubr.bf16.mxu0 0
        %3385 = vmatmul.mubr.bf16.gmra.mxu0 %v3272
        %v3386 = vpop.f32.mrf.mxu0
        %v3387 = vadd.f32 0.0, %v3386
        %v3388 = vpop.f32.mrf.mxu0
        %v3389 = vpop.f32.mrf.mxu0
        %v3390 = vadd.f32 0.0, %v3389
        %v3391 = vpop.f32.mrf.mxu0
        %3392 = vmatprep.mubr.bf16.mxu0 0
        %3393 = vmatmul.mubr.bf16.gmra.mxu0 %v3275
        %v3394 = vpop.f32.mrf.mxu0
        %v3395 = vadd.f32 0.0, %v3394
        %v3396 = vpop.f32.mrf.mxu0
        %v3397 = vpop.f32.mrf.mxu0
        %v3398 = vadd.f32 0.0, %v3397
        %v3399 = vpop.f32.mrf.mxu0
        %3400 = vmatprep.mubr.bf16.mxu0 0
        %3401 = vmatmul.mubr.bf16.gmra.mxu0 %v3278
        %v3402 = vpop.f32.mrf.mxu0
        %v3403 = vadd.f32 0.0, %v3402
        %v3404 = vpop.f32.mrf.mxu0
        %v3405 = vpop.f32.mrf.mxu0
        %v3406 = vadd.f32 0.0, %v3405
        %v3407 = vpop.f32.mrf.mxu0
        %3408 = vmatprep.mubr.bf16.mxu0 0
        %3409 = vmatmul.mubr.bf16.gmra.mxu0 %v3281
        %v3410 = vpop.f32.mrf.mxu0
        %v3411 = vadd.f32 0.0, %v3410
        %v3412 = vpop.f32.mrf.mxu0
        %v3413 = vpop.f32.mrf.mxu0
        %v3414 = vadd.f32 0.0, %v3413
        %v3415 = vpop.f32.mrf.mxu0
        %3416 = vmatprep.mubr.bf16.mxu0 0
        %3417 = vmatmul.mubr.bf16.gmra.mxu0 %v3284
        %v3418 = vpop.f32.mrf.mxu0
        %v3419 = vadd.f32 0.0, %v3418
        %v3420 = vpop.f32.mrf.mxu0
        %v3421 = vpop.f32.mrf.mxu0
        %v3422 = vadd.f32 0.0, %v3421
        %v3423 = vpop.f32.mrf.mxu0
        %3424 = vmatprep.mubr.bf16.mxu0 0
        %3425 = vmatmul.mubr.bf16.gmra.mxu0 %v3287
        %v3426 = vpop.f32.mrf.mxu0
        %v3427 = vadd.f32 0.0, %v3426
        %v3428 = vpop.f32.mrf.mxu0
        %v3429 = vpop.f32.mrf.mxu0
        %v3430 = vadd.f32 0.0, %v3429
        %v3431 = vpop.f32.mrf.mxu0
        %3432 = vmatprep.mubr.bf16.mxu0 0
        %3433 = vmatmul.mubr.bf16.gmra.mxu0 %v3290
        %v3434 = vpop.f32.mrf.mxu0
        %v3435 = vadd.f32 0.0, %v3434
        %v3436 = vpop.f32.mrf.mxu0
        %v3437 = vpop.f32.mrf.mxu0
        %v3438 = vadd.f32 0.0, %v3437
        %v3439 = vpop.f32.mrf.mxu0
        %3440 = vmatprep.mubr.bf16.mxu0 0
        %3441 = vmatmul.mubr.bf16.gmra.mxu0 %v3293
        %v3442 = vpop.f32.mrf.mxu0
        %v3443 = vadd.f32 0.0, %v3442
        %v3444 = vpop.f32.mrf.mxu0
        %v3445 = vpop.f32.mrf.mxu0
        %v3446 = vadd.f32 0.0, %v3445
        %v3447 = vpop.f32.mrf.mxu0
        %3448 = vmatprep.mubr.bf16.mxu0 0
        %3449 = vmatmul.mubr.bf16.gmra.mxu0 %v3296
        %v3450 = vpop.f32.mrf.mxu0
        %v3451 = vadd.f32 0.0, %v3450
        %v3452 = vpop.f32.mrf.mxu0
        %v3453 = vpop.f32.mrf.mxu0
        %v3454 = vadd.f32 0.0, %v3453
        %v3455 = vpop.f32.mrf.mxu0
        %3456 = vmatprep.mubr.bf16.mxu0 0
        %3457 = vmatmul.mubr.bf16.gmra.mxu0 %v3299
        %v3458 = vpop.f32.mrf.mxu0
        %v3459 = vadd.f32 0.0, %v3458
        %v3460 = vpop.f32.mrf.mxu0
        %v3461 = vpop.f32.mrf.mxu0
        %v3462 = vadd.f32 0.0, %v3461
        %v3463 = vpop.f32.mrf.mxu0
        %3464 = vdwg.mxu0
        %v3465 = vadd.f32 %v2978, %v3339
        %v3466 = vadd.f32 %v2979, %v3342
        %v3467 = vadd.f32 %v2980, %v3347
        %v3468 = vadd.f32 %v2981, %v3350
        %v3469 = vadd.f32 %v2982, %v3355
        %v3470 = vadd.f32 %v2983, %v3358
        %v3471 = vadd.f32 %v2984, %v3363
        %v3472 = vadd.f32 %v2985, %v3366
        %v3473 = vadd.f32 %v2986, %v3371
        %v3474 = vadd.f32 %v2987, %v3374
        %v3475 = vadd.f32 %v2988, %v3379
        %v3476 = vadd.f32 %v2989, %v3382
        %v3477 = vadd.f32 %v2990, %v3387
        %v3478 = vadd.f32 %v2991, %v3390
        %v3479 = vadd.f32 %v2992, %v3395
        %v3480 = vadd.f32 %v2993, %v3398
        %v3481 = vadd.f32 %v2994, %v3403
        %v3482 = vadd.f32 %v2995, %v3406
        %v3483 = vadd.f32 %v2996, %v3411
        %v3484 = vadd.f32 %v2997, %v3414
        %v3485 = vadd.f32 %v2998, %v3419
        %v3486 = vadd.f32 %v2999, %v3422
        %v3487 = vadd.f32 %v3000, %v3427
        %v3488 = vadd.f32 %v3001, %v3430
        %v3489 = vadd.f32 %v3002, %v3435
        %v3490 = vadd.f32 %v3003, %v3438
        %v3491 = vadd.f32 %v3004, %v3443
        %v3492 = vadd.f32 %v3005, %v3446
        %v3493 = vadd.f32 %v3006, %v3451
        %v3494 = vadd.f32 %v3007, %v3454
        %v3495 = vadd.f32 %v3008, %v3459
        %v3496 = vadd.f32 %v3009, %v3462
        %s3497 = scalar_lea.vmem %s4, 1536
        %v3498 = vld [vmem:[%s3497] sm:$0xff]
        %v3499 = vld [vmem:[%s3497 + $0x8] sm:$0xff]
        %v3500 = vld [vmem:[%s3497 + $0x10] sm:$0xff]
        %v3501 = vld [vmem:[%s3497 + $0x18] sm:$0xff]
        %v3502 = vld [vmem:[%s3497 + $0x20] sm:$0xff]
        %v3503 = vld [vmem:[%s3497 + $0x28] sm:$0xff]
        %v3504 = vld [vmem:[%s3497 + $0x30] sm:$0xff]
        %v3505 = vld [vmem:[%s3497 + $0x38] sm:$0xff]
        %v3506 = vld [vmem:[%s3497 + $0x40] sm:$0xff]
        %v3507 = vld [vmem:[%s3497 + $0x48] sm:$0xff]
        %v3508 = vld [vmem:[%s3497 + $0x50] sm:$0xff]
        %v3509 = vld [vmem:[%s3497 + $0x58] sm:$0xff]
        %v3510 = vld [vmem:[%s3497 + $0x60] sm:$0xff]
        %v3511 = vld [vmem:[%s3497 + $0x68] sm:$0xff]
        %v3512 = vld [vmem:[%s3497 + $0x70] sm:$0xff]
        %v3513 = vld [vmem:[%s3497 + $0x78] sm:$0xff]
        %v3514 = vld [vmem:[%s3497 + $0x80] sm:$0xff]
        %v3515 = vld [vmem:[%s3497 + $0x88] sm:$0xff]
        %v3516 = vld [vmem:[%s3497 + $0x90] sm:$0xff]
        %v3517 = vld [vmem:[%s3497 + $0x98] sm:$0xff]
        %v3518 = vld [vmem:[%s3497 + $0xa0] sm:$0xff]
        %v3519 = vld [vmem:[%s3497 + $0xa8] sm:$0xff]
        %v3520 = vld [vmem:[%s3497 + $0xb0] sm:$0xff]
        %v3521 = vld [vmem:[%s3497 + $0xb8] sm:$0xff]
        %v3522 = vld [vmem:[%s3497 + $0xc0] sm:$0xff]
        %v3523 = vld [vmem:[%s3497 + $0xc8] sm:$0xff]
        %v3524 = vld [vmem:[%s3497 + $0xd0] sm:$0xff]
        %v3525 = vld [vmem:[%s3497 + $0xd8] sm:$0xff]
        %v3526 = vld [vmem:[%s3497 + $0xe0] sm:$0xff]
        %v3527 = vld [vmem:[%s3497 + $0xe8] sm:$0xff]
        %v3528 = vld [vmem:[%s3497 + $0xf0] sm:$0xff]
        %v3529 = vld [vmem:[%s3497 + $0xf8] sm:$0xff]
        %3531 = vset.pattern.permute.xlu0 0
        %3532 = vperm.xlu0 %3531, %v3498
        %v3533 = vpop.permute.xlu0 %3532
        %3536 = vset.pattern.permute.xlu0 0
        %3537 = vperm.xlu0 %3536, %v3499
        %v3538 = vpop.permute.xlu0 %3537
        %3541 = vset.pattern.permute.xlu0 0
        %3542 = vperm.xlu0 %3541, %v3500
        %v3543 = vpop.permute.xlu0 %3542
        %3546 = vset.pattern.permute.xlu0 0
        %3547 = vperm.xlu0 %3546, %v3501
        %v3548 = vpop.permute.xlu0 %3547
        %3551 = vset.pattern.permute.xlu0 0
        %3552 = vperm.xlu0 %3551, %v3502
        %v3553 = vpop.permute.xlu0 %3552
        %3556 = vset.pattern.permute.xlu0 0
        %3557 = vperm.xlu0 %3556, %v3503
        %v3558 = vpop.permute.xlu0 %3557
        %3561 = vset.pattern.permute.xlu0 0
        %3562 = vperm.xlu0 %3561, %v3504
        %v3563 = vpop.permute.xlu0 %3562
        %3566 = vset.pattern.permute.xlu0 0
        %3567 = vperm.xlu0 %3566, %v3505
        %v3568 = vpop.permute.xlu0 %3567
        %3571 = vset.pattern.permute.xlu0 0
        %3572 = vperm.xlu0 %3571, %v3506
        %v3573 = vpop.permute.xlu0 %3572
        %3576 = vset.pattern.permute.xlu0 0
        %3577 = vperm.xlu0 %3576, %v3507
        %v3578 = vpop.permute.xlu0 %3577
        %3581 = vset.pattern.permute.xlu0 0
        %3582 = vperm.xlu0 %3581, %v3508
        %v3583 = vpop.permute.xlu0 %3582
        %3586 = vset.pattern.permute.xlu0 0
        %3587 = vperm.xlu0 %3586, %v3509
        %v3588 = vpop.permute.xlu0 %3587
        %3591 = vset.pattern.permute.xlu0 0
        %3592 = vperm.xlu0 %3591, %v3510
        %v3593 = vpop.permute.xlu0 %3592
        %3596 = vset.pattern.permute.xlu0 0
        %3597 = vperm.xlu0 %3596, %v3511
        %v3598 = vpop.permute.xlu0 %3597
        %3601 = vset.pattern.permute.xlu0 0
        %3602 = vperm.xlu0 %3601, %v3512
        %v3603 = vpop.permute.xlu0 %3602
        %3606 = vset.pattern.permute.xlu0 0
        %3607 = vperm.xlu0 %3606, %v3513
        %v3608 = vpop.permute.xlu0 %3607
        %3611 = vset.pattern.permute.xlu0 0
        %3612 = vperm.xlu0 %3611, %v3514
        %v3613 = vpop.permute.xlu0 %3612
        %3616 = vset.pattern.permute.xlu0 0
        %3617 = vperm.xlu0 %3616, %v3515
        %v3618 = vpop.permute.xlu0 %3617
        %3621 = vset.pattern.permute.xlu0 0
        %3622 = vperm.xlu0 %3621, %v3516
        %v3623 = vpop.permute.xlu0 %3622
        %3626 = vset.pattern.permute.xlu0 0
        %3627 = vperm.xlu0 %3626, %v3517
        %v3628 = vpop.permute.xlu0 %3627
        %3631 = vset.pattern.permute.xlu0 0
        %3632 = vperm.xlu0 %3631, %v3518
        %v3633 = vpop.permute.xlu0 %3632
        %3636 = vset.pattern.permute.xlu0 0
        %3637 = vperm.xlu0 %3636, %v3519
        %v3638 = vpop.permute.xlu0 %3637
        %3641 = vset.pattern.permute.xlu0 0
        %3642 = vperm.xlu0 %3641, %v3520
        %v3643 = vpop.permute.xlu0 %3642
        %3646 = vset.pattern.permute.xlu0 0
        %3647 = vperm.xlu0 %3646, %v3521
        %v3648 = vpop.permute.xlu0 %3647
        %3651 = vset.pattern.permute.xlu0 0
        %3652 = vperm.xlu0 %3651, %v3522
        %v3653 = vpop.permute.xlu0 %3652
        %3656 = vset.pattern.permute.xlu0 0
        %3657 = vperm.xlu0 %3656, %v3523
        %v3658 = vpop.permute.xlu0 %3657
        %3661 = vset.pattern.permute.xlu0 0
        %3662 = vperm.xlu0 %3661, %v3524
        %v3663 = vpop.permute.xlu0 %3662
        %3666 = vset.pattern.permute.xlu0 0
        %3667 = vperm.xlu0 %3666, %v3525
        %v3668 = vpop.permute.xlu0 %3667
        %3671 = vset.pattern.permute.xlu0 0
        %3672 = vperm.xlu0 %3671, %v3526
        %v3673 = vpop.permute.xlu0 %3672
        %3676 = vset.pattern.permute.xlu0 0
        %3677 = vperm.xlu0 %3676, %v3527
        %v3678 = vpop.permute.xlu0 %3677
        %3681 = vset.pattern.permute.xlu0 0
        %3682 = vperm.xlu0 %3681, %v3528
        %v3683 = vpop.permute.xlu0 %3682
        %3686 = vset.pattern.permute.xlu0 0
        %3687 = vperm.xlu0 %3686, %v3529
        %v3688 = vpop.permute.xlu0 %3687
        %v3690 = vmul.f32 %v793, %v3533
        %v3691 = vmul.f32 %v792, %v3538
        %v3692 = vmul.f32 %v791, %v3543
        %v3693 = vmul.f32 %v790, %v3548
        %v3694 = vmul.f32 %v789, %v3553
        %v3695 = vmul.f32 %v788, %v3558
        %v3696 = vmul.f32 %v787, %v3563
        %v3697 = vmul.f32 %v786, %v3568
        %v3698 = vmul.f32 %v785, %v3573
        %v3699 = vmul.f32 %v784, %v3578
        %v3700 = vmul.f32 %v783, %v3583
        %v3701 = vmul.f32 %v782, %v3588
        %v3702 = vmul.f32 %v781, %v3593
        %v3703 = vmul.f32 %v780, %v3598
        %v3704 = vmul.f32 %v779, %v3603
        %v3705 = vmul.f32 %v778, %v3608
        %v3706 = vmul.f32 %v777, %v3613
        %v3707 = vmul.f32 %v776, %v3618
        %v3708 = vmul.f32 %v775, %v3623
        %v3709 = vmul.f32 %v774, %v3628
        %v3710 = vmul.f32 %v773, %v3633
        %v3711 = vmul.f32 %v772, %v3638
        %v3712 = vmul.f32 %v771, %v3643
        %v3713 = vmul.f32 %v770, %v3648
        %v3714 = vmul.f32 %v769, %v3653
        %v3715 = vmul.f32 %v768, %v3658
        %v3716 = vmul.f32 %v767, %v3663
        %v3717 = vmul.f32 %v766, %v3668
        %v3718 = vmul.f32 %v765, %v3673
        %v3719 = vmul.f32 %v764, %v3678
        %v3720 = vmul.f32 %v795, %v3683
        %v3721 = vmul.f32 %v794, %v3688
        %s3722 = scalar_lea.vmem %s2, 12
        %v3723 = vld [vmem:[%s3722] sm:$0x3]
        %v3724 = vpack.c.bf16 %v3691, %v3690
        %v3725 = vpack.c.bf16 %v3693, %v3692
        %v3726 = vpack.c.bf16 %v3695, %v3694
        %v3727 = vpack.c.bf16 %v3697, %v3696
        %v3728 = vpack.c.bf16 %v3699, %v3698
        %v3729 = vpack.c.bf16 %v3701, %v3700
        %v3730 = vpack.c.bf16 %v3703, %v3702
        %v3731 = vpack.c.bf16 %v3705, %v3704
        %v3732 = vpack.c.bf16 %v3707, %v3706
        %v3733 = vpack.c.bf16 %v3709, %v3708
        %v3734 = vpack.c.bf16 %v3711, %v3710
        %v3735 = vpack.c.bf16 %v3713, %v3712
        %v3736 = vpack.c.bf16 %v3715, %v3714
        %v3737 = vpack.c.bf16 %v3717, %v3716
        %v3738 = vpack.c.bf16 %v3719, %v3718
        %v3739 = vpack.c.bf16 %v3721, %v3720
        %v3741 = vsel %vm1280, %v3724, 0
        %v3744 = vsel %vm1280, %v3725, 0
        %v3747 = vsel %vm1280, %v3726, 0
        %v3750 = vsel %vm1280, %v3727, 0
        %v3753 = vsel %vm1280, %v3728, 0
        %v3756 = vsel %vm1280, %v3729, 0
        %v3759 = vsel %vm1280, %v3730, 0
        %v3762 = vsel %vm1280, %v3731, 0
        %v3765 = vsel %vm1280, %v3732, 0
        %v3768 = vsel %vm1280, %v3733, 0
        %v3771 = vsel %vm1280, %v3734, 0
        %v3774 = vsel %vm1280, %v3735, 0
        %v3777 = vsel %vm1280, %v3736, 0
        %v3780 = vsel %vm1280, %v3737, 0
        %v3783 = vsel %vm1280, %v3738, 0
        %v3786 = vsel %vm1280, %v3739, 0
        %v3789 = vand.u32 %v3723, %v1332
        %3791 = vmatprep.subr.bf16.mxu0 0
        %3792 = vmatpush1.bf16.msra.mxu0 0
        %3793 = vmatprep.subr.bf16.mxu0 0
        %3794 = vmatpush1.bf16.msra.mxu0 0
        %3795 = vmatprep.subr.bf16.mxu0 0
        %3796 = vmatpush1.bf16.msra.mxu0 0
        %3797 = vmatprep.subr.bf16.mxu0 0
        %3798 = vmatpush1.bf16.msra.mxu0 0
        %3799 = vmatprep.subr.bf16.mxu0 0
        %3800 = vmatpush1.bf16.msra.mxu0 0
        %3801 = vmatprep.subr.bf16.mxu0 0
        %3802 = vmatpush1.bf16.msra.mxu0 0
        %3803 = vmatprep.subr.bf16.mxu0 0
        %3804 = vmatpush1.bf16.msra.mxu0 0
        %3805 = vmatprep.subr.bf16.mxu0 0
        %3806 = vmatpush1.bf16.msra.mxu0 %v3789
        %3807 = vmatprep.subr.bf16.mxu0 0
        %3808 = vmatpush2.bf16.msra.mxu0 0
        %3809 = vmatprep.subr.bf16.mxu0 0
        %3810 = vmatpush2.bf16.msra.mxu0 0
        %3811 = vmatprep.subr.bf16.mxu0 0
        %3812 = vmatpush2.bf16.msra.mxu0 0
        %3813 = vmatprep.subr.bf16.mxu0 0
        %3814 = vmatpush2.bf16.msra.mxu0 0
        %3815 = vmatprep.subr.bf16.mxu0 0
        %3816 = vmatpush2.bf16.msra.mxu0 0
        %3817 = vmatprep.subr.bf16.mxu0 0
        %3818 = vmatpush2.bf16.msra.mxu0 0
        %3819 = vmatprep.subr.bf16.mxu0 0
        %3820 = vmatpush2.bf16.msra.mxu0 0
        %3821 = vmatprep.subr.bf16.mxu0 0
        %3822 = vmatpush2.bf16.msra.mxu0 0
        %3823 = vmatprep.mubr.bf16.mxu0 0
        %3824 = vmatmul.mubr.bf16.gmra.mxu0 %v3741
        %v3825 = vpop.f32.mrf.mxu0
        %v3826 = vadd.f32 0.0, %v3825
        %v3827 = vpop.f32.mrf.mxu0
        %v3828 = vpop.f32.mrf.mxu0
        %v3829 = vadd.f32 0.0, %v3828
        %v3830 = vpop.f32.mrf.mxu0
        %3831 = vmatprep.mubr.bf16.mxu0 0
        %3832 = vmatmul.mubr.bf16.gmra.mxu0 %v3744
        %v3833 = vpop.f32.mrf.mxu0
        %v3834 = vadd.f32 0.0, %v3833
        %v3835 = vpop.f32.mrf.mxu0
        %v3836 = vpop.f32.mrf.mxu0
        %v3837 = vadd.f32 0.0, %v3836
        %v3838 = vpop.f32.mrf.mxu0
        %3839 = vmatprep.mubr.bf16.mxu0 0
        %3840 = vmatmul.mubr.bf16.gmra.mxu0 %v3747
        %v3841 = vpop.f32.mrf.mxu0
        %v3842 = vadd.f32 0.0, %v3841
        %v3843 = vpop.f32.mrf.mxu0
        %v3844 = vpop.f32.mrf.mxu0
        %v3845 = vadd.f32 0.0, %v3844
        %v3846 = vpop.f32.mrf.mxu0
        %3847 = vmatprep.mubr.bf16.mxu0 0
        %3848 = vmatmul.mubr.bf16.gmra.mxu0 %v3750
        %v3849 = vpop.f32.mrf.mxu0
        %v3850 = vadd.f32 0.0, %v3849
        %v3851 = vpop.f32.mrf.mxu0
        %v3852 = vpop.f32.mrf.mxu0
        %v3853 = vadd.f32 0.0, %v3852
        %v3854 = vpop.f32.mrf.mxu0
        %3855 = vmatprep.mubr.bf16.mxu0 0
        %3856 = vmatmul.mubr.bf16.gmra.mxu0 %v3753
        %v3857 = vpop.f32.mrf.mxu0
        %v3858 = vadd.f32 0.0, %v3857
        %v3859 = vpop.f32.mrf.mxu0
        %v3860 = vpop.f32.mrf.mxu0
        %v3861 = vadd.f32 0.0, %v3860
        %v3862 = vpop.f32.mrf.mxu0
        %3863 = vmatprep.mubr.bf16.mxu0 0
        %3864 = vmatmul.mubr.bf16.gmra.mxu0 %v3756
        %v3865 = vpop.f32.mrf.mxu0
        %v3866 = vadd.f32 0.0, %v3865
        %v3867 = vpop.f32.mrf.mxu0
        %v3868 = vpop.f32.mrf.mxu0
        %v3869 = vadd.f32 0.0, %v3868
        %v3870 = vpop.f32.mrf.mxu0
        %3871 = vmatprep.mubr.bf16.mxu0 0
        %3872 = vmatmul.mubr.bf16.gmra.mxu0 %v3759
        %v3873 = vpop.f32.mrf.mxu0
        %v3874 = vadd.f32 0.0, %v3873
        %v3875 = vpop.f32.mrf.mxu0
        %v3876 = vpop.f32.mrf.mxu0
        %v3877 = vadd.f32 0.0, %v3876
        %v3878 = vpop.f32.mrf.mxu0
        %3879 = vmatprep.mubr.bf16.mxu0 0
        %3880 = vmatmul.mubr.bf16.gmra.mxu0 %v3762
        %v3881 = vpop.f32.mrf.mxu0
        %v3882 = vadd.f32 0.0, %v3881
        %v3883 = vpop.f32.mrf.mxu0
        %v3884 = vpop.f32.mrf.mxu0
        %v3885 = vadd.f32 0.0, %v3884
        %v3886 = vpop.f32.mrf.mxu0
        %3887 = vmatprep.mubr.bf16.mxu0 0
        %3888 = vmatmul.mubr.bf16.gmra.mxu0 %v3765
        %v3889 = vpop.f32.mrf.mxu0
        %v3890 = vadd.f32 0.0, %v3889
        %v3891 = vpop.f32.mrf.mxu0
        %v3892 = vpop.f32.mrf.mxu0
        %v3893 = vadd.f32 0.0, %v3892
        %v3894 = vpop.f32.mrf.mxu0
        %3895 = vmatprep.mubr.bf16.mxu0 0
        %3896 = vmatmul.mubr.bf16.gmra.mxu0 %v3768
        %v3897 = vpop.f32.mrf.mxu0
        %v3898 = vadd.f32 0.0, %v3897
        %v3899 = vpop.f32.mrf.mxu0
        %v3900 = vpop.f32.mrf.mxu0
        %v3901 = vadd.f32 0.0, %v3900
        %v3902 = vpop.f32.mrf.mxu0
        %3903 = vmatprep.mubr.bf16.mxu0 0
        %3904 = vmatmul.mubr.bf16.gmra.mxu0 %v3771
        %v3905 = vpop.f32.mrf.mxu0
        %v3906 = vadd.f32 0.0, %v3905
        %v3907 = vpop.f32.mrf.mxu0
        %v3908 = vpop.f32.mrf.mxu0
        %v3909 = vadd.f32 0.0, %v3908
        %v3910 = vpop.f32.mrf.mxu0
        %3911 = vmatprep.mubr.bf16.mxu0 0
        %3912 = vmatmul.mubr.bf16.gmra.mxu0 %v3774
        %v3913 = vpop.f32.mrf.mxu0
        %v3914 = vadd.f32 0.0, %v3913
        %v3915 = vpop.f32.mrf.mxu0
        %v3916 = vpop.f32.mrf.mxu0
        %v3917 = vadd.f32 0.0, %v3916
        %v3918 = vpop.f32.mrf.mxu0
        %3919 = vmatprep.mubr.bf16.mxu0 0
        %3920 = vmatmul.mubr.bf16.gmra.mxu0 %v3777
        %v3921 = vpop.f32.mrf.mxu0
        %v3922 = vadd.f32 0.0, %v3921
        %v3923 = vpop.f32.mrf.mxu0
        %v3924 = vpop.f32.mrf.mxu0
        %v3925 = vadd.f32 0.0, %v3924
        %v3926 = vpop.f32.mrf.mxu0
        %3927 = vmatprep.mubr.bf16.mxu0 0
        %3928 = vmatmul.mubr.bf16.gmra.mxu0 %v3780
        %v3929 = vpop.f32.mrf.mxu0
        %v3930 = vadd.f32 0.0, %v3929
        %v3931 = vpop.f32.mrf.mxu0
        %v3932 = vpop.f32.mrf.mxu0
        %v3933 = vadd.f32 0.0, %v3932
        %v3934 = vpop.f32.mrf.mxu0
        %3935 = vmatprep.mubr.bf16.mxu0 0
        %3936 = vmatmul.mubr.bf16.gmra.mxu0 %v3783
        %v3937 = vpop.f32.mrf.mxu0
        %v3938 = vadd.f32 0.0, %v3937
        %v3939 = vpop.f32.mrf.mxu0
        %v3940 = vpop.f32.mrf.mxu0
        %v3941 = vadd.f32 0.0, %v3940
        %v3942 = vpop.f32.mrf.mxu0
        %3943 = vmatprep.mubr.bf16.mxu0 0
        %3944 = vmatmul.mubr.bf16.gmra.mxu0 %v3786
        %v3945 = vpop.f32.mrf.mxu0
        %v3946 = vadd.f32 0.0, %v3945
        %v3947 = vpop.f32.mrf.mxu0
        %v3948 = vpop.f32.mrf.mxu0
        %v3949 = vadd.f32 0.0, %v3948
        %v3950 = vpop.f32.mrf.mxu0
        %3951 = vdwg.mxu0
        %v3952 = vadd.f32 %v3465, %v3826
        %v3953 = vadd.f32 %v3466, %v3829
        %v3954 = vadd.f32 %v3467, %v3834
        %v3955 = vadd.f32 %v3468, %v3837
        %v3956 = vadd.f32 %v3469, %v3842
        %v3957 = vadd.f32 %v3470, %v3845
        %v3958 = vadd.f32 %v3471, %v3850
        %v3959 = vadd.f32 %v3472, %v3853
        %v3960 = vadd.f32 %v3473, %v3858
        %v3961 = vadd.f32 %v3474, %v3861
        %v3962 = vadd.f32 %v3475, %v3866
        %v3963 = vadd.f32 %v3476, %v3869
        %v3964 = vadd.f32 %v3477, %v3874
        %v3965 = vadd.f32 %v3478, %v3877
        %v3966 = vadd.f32 %v3479, %v3882
        %v3967 = vadd.f32 %v3480, %v3885
        %v3968 = vadd.f32 %v3481, %v3890
        %v3969 = vadd.f32 %v3482, %v3893
        %v3970 = vadd.f32 %v3483, %v3898
        %v3971 = vadd.f32 %v3484, %v3901
        %v3972 = vadd.f32 %v3485, %v3906
        %v3973 = vadd.f32 %v3486, %v3909
        %v3974 = vadd.f32 %v3487, %v3914
        %v3975 = vadd.f32 %v3488, %v3917
        %v3976 = vadd.f32 %v3489, %v3922
        %v3977 = vadd.f32 %v3490, %v3925
        %v3978 = vadd.f32 %v3491, %v3930
        %v3979 = vadd.f32 %v3492, %v3933
        %v3980 = vadd.f32 %v3493, %v3938
        %v3981 = vadd.f32 %v3494, %v3941
        %v3982 = vadd.f32 %v3495, %v3946
        %v3983 = vadd.f32 %v3496, %v3949
        %s3984 = scalar_lea.vmem %s4, 1792
        %v3985 = vld [vmem:[%s3984] sm:$0xff]
        %v3986 = vld [vmem:[%s3984 + $0x8] sm:$0xff]
        %v3987 = vld [vmem:[%s3984 + $0x10] sm:$0xff]
        %v3988 = vld [vmem:[%s3984 + $0x18] sm:$0xff]
        %v3989 = vld [vmem:[%s3984 + $0x20] sm:$0xff]
        %v3990 = vld [vmem:[%s3984 + $0x28] sm:$0xff]
        %v3991 = vld [vmem:[%s3984 + $0x30] sm:$0xff]
        %v3992 = vld [vmem:[%s3984 + $0x38] sm:$0xff]
        %v3993 = vld [vmem:[%s3984 + $0x40] sm:$0xff]
        %v3994 = vld [vmem:[%s3984 + $0x48] sm:$0xff]
        %v3995 = vld [vmem:[%s3984 + $0x50] sm:$0xff]
        %v3996 = vld [vmem:[%s3984 + $0x58] sm:$0xff]
        %v3997 = vld [vmem:[%s3984 + $0x60] sm:$0xff]
        %v3998 = vld [vmem:[%s3984 + $0x68] sm:$0xff]
        %v3999 = vld [vmem:[%s3984 + $0x70] sm:$0xff]
        %v4000 = vld [vmem:[%s3984 + $0x78] sm:$0xff]
        %v4001 = vld [vmem:[%s3984 + $0x80] sm:$0xff]
        %v4002 = vld [vmem:[%s3984 + $0x88] sm:$0xff]
        %v4003 = vld [vmem:[%s3984 + $0x90] sm:$0xff]
        %v4004 = vld [vmem:[%s3984 + $0x98] sm:$0xff]
        %v4005 = vld [vmem:[%s3984 + $0xa0] sm:$0xff]
        %v4006 = vld [vmem:[%s3984 + $0xa8] sm:$0xff]
        %v4007 = vld [vmem:[%s3984 + $0xb0] sm:$0xff]
        %v4008 = vld [vmem:[%s3984 + $0xb8] sm:$0xff]
        %v4009 = vld [vmem:[%s3984 + $0xc0] sm:$0xff]
        %v4010 = vld [vmem:[%s3984 + $0xc8] sm:$0xff]
        %v4011 = vld [vmem:[%s3984 + $0xd0] sm:$0xff]
        %v4012 = vld [vmem:[%s3984 + $0xd8] sm:$0xff]
        %v4013 = vld [vmem:[%s3984 + $0xe0] sm:$0xff]
        %v4014 = vld [vmem:[%s3984 + $0xe8] sm:$0xff]
        %v4015 = vld [vmem:[%s3984 + $0xf0] sm:$0xff]
        %v4016 = vld [vmem:[%s3984 + $0xf8] sm:$0xff]
        %4018 = vset.pattern.permute.xlu0 0
        %4019 = vperm.xlu0 %4018, %v3985
        %v4020 = vpop.permute.xlu0 %4019
        %4023 = vset.pattern.permute.xlu0 0
        %4024 = vperm.xlu0 %4023, %v3986
        %v4025 = vpop.permute.xlu0 %4024
        %4028 = vset.pattern.permute.xlu0 0
        %4029 = vperm.xlu0 %4028, %v3987
        %v4030 = vpop.permute.xlu0 %4029
        %4033 = vset.pattern.permute.xlu0 0
        %4034 = vperm.xlu0 %4033, %v3988
        %v4035 = vpop.permute.xlu0 %4034
        %4038 = vset.pattern.permute.xlu0 0
        %4039 = vperm.xlu0 %4038, %v3989
        %v4040 = vpop.permute.xlu0 %4039
        %4043 = vset.pattern.permute.xlu0 0
        %4044 = vperm.xlu0 %4043, %v3990
        %v4045 = vpop.permute.xlu0 %4044
        %4048 = vset.pattern.permute.xlu0 0
        %4049 = vperm.xlu0 %4048, %v3991
        %v4050 = vpop.permute.xlu0 %4049
        %4053 = vset.pattern.permute.xlu0 0
        %4054 = vperm.xlu0 %4053, %v3992
        %v4055 = vpop.permute.xlu0 %4054
        %4058 = vset.pattern.permute.xlu0 0
        %4059 = vperm.xlu0 %4058, %v3993
        %v4060 = vpop.permute.xlu0 %4059
        %4063 = vset.pattern.permute.xlu0 0
        %4064 = vperm.xlu0 %4063, %v3994
        %v4065 = vpop.permute.xlu0 %4064
        %4068 = vset.pattern.permute.xlu0 0
        %4069 = vperm.xlu0 %4068, %v3995
        %v4070 = vpop.permute.xlu0 %4069
        %4073 = vset.pattern.permute.xlu0 0
        %4074 = vperm.xlu0 %4073, %v3996
        %v4075 = vpop.permute.xlu0 %4074
        %4078 = vset.pattern.permute.xlu0 0
        %4079 = vperm.xlu0 %4078, %v3997
        %v4080 = vpop.permute.xlu0 %4079
        %4083 = vset.pattern.permute.xlu0 0
        %4084 = vperm.xlu0 %4083, %v3998
        %v4085 = vpop.permute.xlu0 %4084
        %4088 = vset.pattern.permute.xlu0 0
        %4089 = vperm.xlu0 %4088, %v3999
        %v4090 = vpop.permute.xlu0 %4089
        %4093 = vset.pattern.permute.xlu0 0
        %4094 = vperm.xlu0 %4093, %v4000
        %v4095 = vpop.permute.xlu0 %4094
        %4098 = vset.pattern.permute.xlu0 0
        %4099 = vperm.xlu0 %4098, %v4001
        %v4100 = vpop.permute.xlu0 %4099
        %4103 = vset.pattern.permute.xlu0 0
        %4104 = vperm.xlu0 %4103, %v4002
        %v4105 = vpop.permute.xlu0 %4104
        %4108 = vset.pattern.permute.xlu0 0
        %4109 = vperm.xlu0 %4108, %v4003
        %v4110 = vpop.permute.xlu0 %4109
        %4113 = vset.pattern.permute.xlu0 0
        %4114 = vperm.xlu0 %4113, %v4004
        %v4115 = vpop.permute.xlu0 %4114
        %4118 = vset.pattern.permute.xlu0 0
        %4119 = vperm.xlu0 %4118, %v4005
        %v4120 = vpop.permute.xlu0 %4119
        %4123 = vset.pattern.permute.xlu0 0
        %4124 = vperm.xlu0 %4123, %v4006
        %v4125 = vpop.permute.xlu0 %4124
        %4128 = vset.pattern.permute.xlu0 0
        %4129 = vperm.xlu0 %4128, %v4007
        %v4130 = vpop.permute.xlu0 %4129
        %4133 = vset.pattern.permute.xlu0 0
        %4134 = vperm.xlu0 %4133, %v4008
        %v4135 = vpop.permute.xlu0 %4134
        %4138 = vset.pattern.permute.xlu0 0
        %4139 = vperm.xlu0 %4138, %v4009
        %v4140 = vpop.permute.xlu0 %4139
        %4143 = vset.pattern.permute.xlu0 0
        %4144 = vperm.xlu0 %4143, %v4010
        %v4145 = vpop.permute.xlu0 %4144
        %4148 = vset.pattern.permute.xlu0 0
        %4149 = vperm.xlu0 %4148, %v4011
        %v4150 = vpop.permute.xlu0 %4149
        %4153 = vset.pattern.permute.xlu0 0
        %4154 = vperm.xlu0 %4153, %v4012
        %v4155 = vpop.permute.xlu0 %4154
        %4158 = vset.pattern.permute.xlu0 0
        %4159 = vperm.xlu0 %4158, %v4013
        %v4160 = vpop.permute.xlu0 %4159
        %4163 = vset.pattern.permute.xlu0 0
        %4164 = vperm.xlu0 %4163, %v4014
        %v4165 = vpop.permute.xlu0 %4164
        %4168 = vset.pattern.permute.xlu0 0
        %4169 = vperm.xlu0 %4168, %v4015
        %v4170 = vpop.permute.xlu0 %4169
        %4173 = vset.pattern.permute.xlu0 0
        %4174 = vperm.xlu0 %4173, %v4016
        %v4175 = vpop.permute.xlu0 %4174
        %v4177 = vmul.f32 %v698, %v4020
        %v4178 = vmul.f32 %v699, %v4025
        %v4179 = vmul.f32 %v700, %v4030
        %v4180 = vmul.f32 %v701, %v4035
        %v4181 = vmul.f32 %v702, %v4040
        %v4182 = vmul.f32 %v703, %v4045
        %v4183 = vmul.f32 %v704, %v4050
        %v4184 = vmul.f32 %v705, %v4055
        %v4185 = vmul.f32 %v706, %v4060
        %v4186 = vmul.f32 %v707, %v4065
        %v4187 = vmul.f32 %v708, %v4070
        %v4188 = vmul.f32 %v709, %v4075
        %v4189 = vmul.f32 %v710, %v4080
        %v4190 = vmul.f32 %v711, %v4085
        %v4191 = vmul.f32 %v712, %v4090
        %v4192 = vmul.f32 %v713, %v4095
        %v4193 = vmul.f32 %v714, %v4100
        %v4194 = vmul.f32 %v715, %v4105
        %v4195 = vmul.f32 %v716, %v4110
        %v4196 = vmul.f32 %v717, %v4115
        %v4197 = vmul.f32 %v718, %v4120
        %v4198 = vmul.f32 %v719, %v4125
        %v4199 = vmul.f32 %v720, %v4130
        %v4200 = vmul.f32 %v721, %v4135
        %v4201 = vmul.f32 %v722, %v4140
        %v4202 = vmul.f32 %v723, %v4145
        %v4203 = vmul.f32 %v724, %v4150
        %v4204 = vmul.f32 %v725, %v4155
        %v4205 = vmul.f32 %v726, %v4160
        %v4206 = vmul.f32 %v727, %v4165
        %v4207 = vmul.f32 %v696, %v4170
        %v4208 = vmul.f32 %v697, %v4175
        %s4209 = scalar_lea.vmem %s2, 14
        %v4210 = vld [vmem:[%s4209] sm:$0x3]
        %v4211 = vpack.c.bf16 %v4178, %v4177
        %v4212 = vpack.c.bf16 %v4180, %v4179
        %v4213 = vpack.c.bf16 %v4182, %v4181
        %v4214 = vpack.c.bf16 %v4184, %v4183
        %v4215 = vpack.c.bf16 %v4186, %v4185
        %v4216 = vpack.c.bf16 %v4188, %v4187
        %v4217 = vpack.c.bf16 %v4190, %v4189
        %v4218 = vpack.c.bf16 %v4192, %v4191
        %v4219 = vpack.c.bf16 %v4194, %v4193
        %v4220 = vpack.c.bf16 %v4196, %v4195
        %v4221 = vpack.c.bf16 %v4198, %v4197
        %v4222 = vpack.c.bf16 %v4200, %v4199
        %v4223 = vpack.c.bf16 %v4202, %v4201
        %v4224 = vpack.c.bf16 %v4204, %v4203
        %v4225 = vpack.c.bf16 %v4206, %v4205
        %v4226 = vpack.c.bf16 %v4208, %v4207
        %v4228 = vsel %vm1280, %v4211, 0
        %v4231 = vsel %vm1280, %v4212, 0
        %v4234 = vsel %vm1280, %v4213, 0
        %v4237 = vsel %vm1280, %v4214, 0
        %v4240 = vsel %vm1280, %v4215, 0
        %v4243 = vsel %vm1280, %v4216, 0
        %v4246 = vsel %vm1280, %v4217, 0
        %v4249 = vsel %vm1280, %v4218, 0
        %v4252 = vsel %vm1280, %v4219, 0
        %v4255 = vsel %vm1280, %v4220, 0
        %v4258 = vsel %vm1280, %v4221, 0
        %v4261 = vsel %vm1280, %v4222, 0
        %v4264 = vsel %vm1280, %v4223, 0
        %v4267 = vsel %vm1280, %v4224, 0
        %v4270 = vsel %vm1280, %v4225, 0
        %v4273 = vsel %vm1280, %v4226, 0
        %v4276 = vand.u32 %v4210, %v1332
        %4278 = vmatprep.subr.bf16.mxu0 0
        %4279 = vmatpush1.bf16.msra.mxu0 0
        %4280 = vmatprep.subr.bf16.mxu0 0
        %4281 = vmatpush1.bf16.msra.mxu0 0
        %4282 = vmatprep.subr.bf16.mxu0 0
        %4283 = vmatpush1.bf16.msra.mxu0 0
        %4284 = vmatprep.subr.bf16.mxu0 0
        %4285 = vmatpush1.bf16.msra.mxu0 0
        %4286 = vmatprep.subr.bf16.mxu0 0
        %4287 = vmatpush1.bf16.msra.mxu0 0
        %4288 = vmatprep.subr.bf16.mxu0 0
        %4289 = vmatpush1.bf16.msra.mxu0 0
        %4290 = vmatprep.subr.bf16.mxu0 0
        %4291 = vmatpush1.bf16.msra.mxu0 0
        %4292 = vmatprep.subr.bf16.mxu0 0
        %4293 = vmatpush1.bf16.msra.mxu0 %v4276
        %4294 = vmatprep.subr.bf16.mxu0 0
        %4295 = vmatpush2.bf16.msra.mxu0 0
        %4296 = vmatprep.subr.bf16.mxu0 0
        %4297 = vmatpush2.bf16.msra.mxu0 0
        %4298 = vmatprep.subr.bf16.mxu0 0
        %4299 = vmatpush2.bf16.msra.mxu0 0
        %4300 = vmatprep.subr.bf16.mxu0 0
        %4301 = vmatpush2.bf16.msra.mxu0 0
        %4302 = vmatprep.subr.bf16.mxu0 0
        %4303 = vmatpush2.bf16.msra.mxu0 0
        %4304 = vmatprep.subr.bf16.mxu0 0
        %4305 = vmatpush2.bf16.msra.mxu0 0
        %4306 = vmatprep.subr.bf16.mxu0 0
        %4307 = vmatpush2.bf16.msra.mxu0 0
        %4308 = vmatprep.subr.bf16.mxu0 0
        %4309 = vmatpush2.bf16.msra.mxu0 0
        %4310 = vmatprep.mubr.bf16.mxu0 0
        %4311 = vmatmul.mubr.bf16.gmra.mxu0 %v4228
        %v4312 = vpop.f32.mrf.mxu0
        %v4313 = vadd.f32 0.0, %v4312
        %v4314 = vpop.f32.mrf.mxu0
        %v4315 = vpop.f32.mrf.mxu0
        %v4316 = vadd.f32 0.0, %v4315
        %v4317 = vpop.f32.mrf.mxu0
        %4318 = vmatprep.mubr.bf16.mxu0 0
        %4319 = vmatmul.mubr.bf16.gmra.mxu0 %v4231
        %v4320 = vpop.f32.mrf.mxu0
        %v4321 = vadd.f32 0.0, %v4320
        %v4322 = vpop.f32.mrf.mxu0
        %v4323 = vpop.f32.mrf.mxu0
        %v4324 = vadd.f32 0.0, %v4323
        %v4325 = vpop.f32.mrf.mxu0
        %4326 = vmatprep.mubr.bf16.mxu0 0
        %4327 = vmatmul.mubr.bf16.gmra.mxu0 %v4234
        %v4328 = vpop.f32.mrf.mxu0
        %v4329 = vadd.f32 0.0, %v4328
        %v4330 = vpop.f32.mrf.mxu0
        %v4331 = vpop.f32.mrf.mxu0
        %v4332 = vadd.f32 0.0, %v4331
        %v4333 = vpop.f32.mrf.mxu0
        %4334 = vmatprep.mubr.bf16.mxu0 0
        %4335 = vmatmul.mubr.bf16.gmra.mxu0 %v4237
        %v4336 = vpop.f32.mrf.mxu0
        %v4337 = vadd.f32 0.0, %v4336
        %v4338 = vpop.f32.mrf.mxu0
        %v4339 = vpop.f32.mrf.mxu0
        %v4340 = vadd.f32 0.0, %v4339
        %v4341 = vpop.f32.mrf.mxu0
        %4342 = vmatprep.mubr.bf16.mxu0 0
        %4343 = vmatmul.mubr.bf16.gmra.mxu0 %v4240
        %v4344 = vpop.f32.mrf.mxu0
        %v4345 = vadd.f32 0.0, %v4344
        %v4346 = vpop.f32.mrf.mxu0
        %v4347 = vpop.f32.mrf.mxu0
        %v4348 = vadd.f32 0.0, %v4347
        %v4349 = vpop.f32.mrf.mxu0
        %4350 = vmatprep.mubr.bf16.mxu0 0
        %4351 = vmatmul.mubr.bf16.gmra.mxu0 %v4243
        %v4352 = vpop.f32.mrf.mxu0
        %v4353 = vadd.f32 0.0, %v4352
        %v4354 = vpop.f32.mrf.mxu0
        %v4355 = vpop.f32.mrf.mxu0
        %v4356 = vadd.f32 0.0, %v4355
        %v4357 = vpop.f32.mrf.mxu0
        %4358 = vmatprep.mubr.bf16.mxu0 0
        %4359 = vmatmul.mubr.bf16.gmra.mxu0 %v4246
        %v4360 = vpop.f32.mrf.mxu0
        %v4361 = vadd.f32 0.0, %v4360
        %v4362 = vpop.f32.mrf.mxu0
        %v4363 = vpop.f32.mrf.mxu0
        %v4364 = vadd.f32 0.0, %v4363
        %v4365 = vpop.f32.mrf.mxu0
        %4366 = vmatprep.mubr.bf16.mxu0 0
        %4367 = vmatmul.mubr.bf16.gmra.mxu0 %v4249
        %v4368 = vpop.f32.mrf.mxu0
        %v4369 = vadd.f32 0.0, %v4368
        %v4370 = vpop.f32.mrf.mxu0
        %v4371 = vpop.f32.mrf.mxu0
        %v4372 = vadd.f32 0.0, %v4371
        %v4373 = vpop.f32.mrf.mxu0
        %4374 = vmatprep.mubr.bf16.mxu0 0
        %4375 = vmatmul.mubr.bf16.gmra.mxu0 %v4252
        %v4376 = vpop.f32.mrf.mxu0
        %v4377 = vadd.f32 0.0, %v4376
        %v4378 = vpop.f32.mrf.mxu0
        %v4379 = vpop.f32.mrf.mxu0
        %v4380 = vadd.f32 0.0, %v4379
        %v4381 = vpop.f32.mrf.mxu0
        %4382 = vmatprep.mubr.bf16.mxu0 0
        %4383 = vmatmul.mubr.bf16.gmra.mxu0 %v4255
        %v4384 = vpop.f32.mrf.mxu0
        %v4385 = vadd.f32 0.0, %v4384
        %v4386 = vpop.f32.mrf.mxu0
        %v4387 = vpop.f32.mrf.mxu0
        %v4388 = vadd.f32 0.0, %v4387
        %v4389 = vpop.f32.mrf.mxu0
        %4390 = vmatprep.mubr.bf16.mxu0 0
        %4391 = vmatmul.mubr.bf16.gmra.mxu0 %v4258
        %v4392 = vpop.f32.mrf.mxu0
        %v4393 = vadd.f32 0.0, %v4392
        %v4394 = vpop.f32.mrf.mxu0
        %v4395 = vpop.f32.mrf.mxu0
        %v4396 = vadd.f32 0.0, %v4395
        %v4397 = vpop.f32.mrf.mxu0
        %4398 = vmatprep.mubr.bf16.mxu0 0
        %4399 = vmatmul.mubr.bf16.gmra.mxu0 %v4261
        %v4400 = vpop.f32.mrf.mxu0
        %v4401 = vadd.f32 0.0, %v4400
        %v4402 = vpop.f32.mrf.mxu0
        %v4403 = vpop.f32.mrf.mxu0
        %v4404 = vadd.f32 0.0, %v4403
        %v4405 = vpop.f32.mrf.mxu0
        %4406 = vmatprep.mubr.bf16.mxu0 0
        %4407 = vmatmul.mubr.bf16.gmra.mxu0 %v4264
        %v4408 = vpop.f32.mrf.mxu0
        %v4409 = vadd.f32 0.0, %v4408
        %v4410 = vpop.f32.mrf.mxu0
        %v4411 = vpop.f32.mrf.mxu0
        %v4412 = vadd.f32 0.0, %v4411
        %v4413 = vpop.f32.mrf.mxu0
        %4414 = vmatprep.mubr.bf16.mxu0 0
        %4415 = vmatmul.mubr.bf16.gmra.mxu0 %v4267
        %v4416 = vpop.f32.mrf.mxu0
        %v4417 = vadd.f32 0.0, %v4416
        %v4418 = vpop.f32.mrf.mxu0
        %v4419 = vpop.f32.mrf.mxu0
        %v4420 = vadd.f32 0.0, %v4419
        %v4421 = vpop.f32.mrf.mxu0
        %4422 = vmatprep.mubr.bf16.mxu0 0
        %4423 = vmatmul.mubr.bf16.gmra.mxu0 %v4270
        %v4424 = vpop.f32.mrf.mxu0
        %v4425 = vadd.f32 0.0, %v4424
        %v4426 = vpop.f32.mrf.mxu0
        %v4427 = vpop.f32.mrf.mxu0
        %v4428 = vadd.f32 0.0, %v4427
        %v4429 = vpop.f32.mrf.mxu0
        %4430 = vmatprep.mubr.bf16.mxu0 0
        %4431 = vmatmul.mubr.bf16.gmra.mxu0 %v4273
        %v4432 = vpop.f32.mrf.mxu0
        %v4433 = vadd.f32 0.0, %v4432
        %v4434 = vpop.f32.mrf.mxu0
        %v4435 = vpop.f32.mrf.mxu0
        %v4436 = vadd.f32 0.0, %v4435
        %v4437 = vpop.f32.mrf.mxu0
        %4438 = vdwg.mxu0
        %v4439 = vadd.f32 %v3952, %v4313
        %v4440 = vadd.f32 %v3953, %v4316
        %v4441 = vadd.f32 %v3954, %v4321
        %v4442 = vadd.f32 %v3955, %v4324
        %v4443 = vadd.f32 %v3956, %v4329
        %v4444 = vadd.f32 %v3957, %v4332
        %v4445 = vadd.f32 %v3958, %v4337
        %v4446 = vadd.f32 %v3959, %v4340
        %v4447 = vadd.f32 %v3960, %v4345
        %v4448 = vadd.f32 %v3961, %v4348
        %v4449 = vadd.f32 %v3962, %v4353
        %v4450 = vadd.f32 %v3963, %v4356
        %v4451 = vadd.f32 %v3964, %v4361
        %v4452 = vadd.f32 %v3965, %v4364
        %v4453 = vadd.f32 %v3966, %v4369
        %v4454 = vadd.f32 %v3967, %v4372
        %v4455 = vadd.f32 %v3968, %v4377
        %v4456 = vadd.f32 %v3969, %v4380
        %v4457 = vadd.f32 %v3970, %v4385
        %v4458 = vadd.f32 %v3971, %v4388
        %v4459 = vadd.f32 %v3972, %v4393
        %v4460 = vadd.f32 %v3973, %v4396
        %v4461 = vadd.f32 %v3974, %v4401
        %v4462 = vadd.f32 %v3975, %v4404
        %v4463 = vadd.f32 %v3976, %v4409
        %v4464 = vadd.f32 %v3977, %v4412
        %v4465 = vadd.f32 %v3978, %v4417
        %v4466 = vadd.f32 %v3979, %v4420
        %v4467 = vadd.f32 %v3980, %v4425
        %v4468 = vadd.f32 %v3981, %v4428
        %v4469 = vadd.f32 %v3982, %v4433
        %v4470 = vadd.f32 %v3983, %v4436
        %s4471 = scalar_lea.vmem %s4, 2048
        %v4472 = vld [vmem:[%s4471] sm:$0xff]
        %v4473 = vld [vmem:[%s4471 + $0x8] sm:$0xff]
        %v4474 = vld [vmem:[%s4471 + $0x10] sm:$0xff]
        %v4475 = vld [vmem:[%s4471 + $0x18] sm:$0xff]
        %v4476 = vld [vmem:[%s4471 + $0x20] sm:$0xff]
        %v4477 = vld [vmem:[%s4471 + $0x28] sm:$0xff]
        %v4478 = vld [vmem:[%s4471 + $0x30] sm:$0xff]
        %v4479 = vld [vmem:[%s4471 + $0x38] sm:$0xff]
        %v4480 = vld [vmem:[%s4471 + $0x40] sm:$0xff]
        %v4481 = vld [vmem:[%s4471 + $0x48] sm:$0xff]
        %v4482 = vld [vmem:[%s4471 + $0x50] sm:$0xff]
        %v4483 = vld [vmem:[%s4471 + $0x58] sm:$0xff]
        %v4484 = vld [vmem:[%s4471 + $0x60] sm:$0xff]
        %v4485 = vld [vmem:[%s4471 + $0x68] sm:$0xff]
        %v4486 = vld [vmem:[%s4471 + $0x70] sm:$0xff]
        %v4487 = vld [vmem:[%s4471 + $0x78] sm:$0xff]
        %v4488 = vld [vmem:[%s4471 + $0x80] sm:$0xff]
        %v4489 = vld [vmem:[%s4471 + $0x88] sm:$0xff]
        %v4490 = vld [vmem:[%s4471 + $0x90] sm:$0xff]
        %v4491 = vld [vmem:[%s4471 + $0x98] sm:$0xff]
        %v4492 = vld [vmem:[%s4471 + $0xa0] sm:$0xff]
        %v4493 = vld [vmem:[%s4471 + $0xa8] sm:$0xff]
        %v4494 = vld [vmem:[%s4471 + $0xb0] sm:$0xff]
        %v4495 = vld [vmem:[%s4471 + $0xb8] sm:$0xff]
        %v4496 = vld [vmem:[%s4471 + $0xc0] sm:$0xff]
        %v4497 = vld [vmem:[%s4471 + $0xc8] sm:$0xff]
        %v4498 = vld [vmem:[%s4471 + $0xd0] sm:$0xff]
        %v4499 = vld [vmem:[%s4471 + $0xd8] sm:$0xff]
        %v4500 = vld [vmem:[%s4471 + $0xe0] sm:$0xff]
        %v4501 = vld [vmem:[%s4471 + $0xe8] sm:$0xff]
        %v4502 = vld [vmem:[%s4471 + $0xf0] sm:$0xff]
        %v4503 = vld [vmem:[%s4471 + $0xf8] sm:$0xff]
        %4505 = vset.pattern.permute.xlu0 0
        %4506 = vperm.xlu0 %4505, %v4472
        %v4507 = vpop.permute.xlu0 %4506
        %4510 = vset.pattern.permute.xlu0 0
        %4511 = vperm.xlu0 %4510, %v4473
        %v4512 = vpop.permute.xlu0 %4511
        %4515 = vset.pattern.permute.xlu0 0
        %4516 = vperm.xlu0 %4515, %v4474
        %v4517 = vpop.permute.xlu0 %4516
        %4520 = vset.pattern.permute.xlu0 0
        %4521 = vperm.xlu0 %4520, %v4475
        %v4522 = vpop.permute.xlu0 %4521
        %4525 = vset.pattern.permute.xlu0 0
        %4526 = vperm.xlu0 %4525, %v4476
        %v4527 = vpop.permute.xlu0 %4526
        %4530 = vset.pattern.permute.xlu0 0
        %4531 = vperm.xlu0 %4530, %v4477
        %v4532 = vpop.permute.xlu0 %4531
        %4535 = vset.pattern.permute.xlu0 0
        %4536 = vperm.xlu0 %4535, %v4478
        %v4537 = vpop.permute.xlu0 %4536
        %4540 = vset.pattern.permute.xlu0 0
        %4541 = vperm.xlu0 %4540, %v4479
        %v4542 = vpop.permute.xlu0 %4541
        %4545 = vset.pattern.permute.xlu0 0
        %4546 = vperm.xlu0 %4545, %v4480
        %v4547 = vpop.permute.xlu0 %4546
        %4550 = vset.pattern.permute.xlu0 0
        %4551 = vperm.xlu0 %4550, %v4481
        %v4552 = vpop.permute.xlu0 %4551
        %4555 = vset.pattern.permute.xlu0 0
        %4556 = vperm.xlu0 %4555, %v4482
        %v4557 = vpop.permute.xlu0 %4556
        %4560 = vset.pattern.permute.xlu0 0
        %4561 = vperm.xlu0 %4560, %v4483
        %v4562 = vpop.permute.xlu0 %4561
        %4565 = vset.pattern.permute.xlu0 0
        %4566 = vperm.xlu0 %4565, %v4484
        %v4567 = vpop.permute.xlu0 %4566
        %4570 = vset.pattern.permute.xlu0 0
        %4571 = vperm.xlu0 %4570, %v4485
        %v4572 = vpop.permute.xlu0 %4571
        %4575 = vset.pattern.permute.xlu0 0
        %4576 = vperm.xlu0 %4575, %v4486
        %v4577 = vpop.permute.xlu0 %4576
        %4580 = vset.pattern.permute.xlu0 0
        %4581 = vperm.xlu0 %4580, %v4487
        %v4582 = vpop.permute.xlu0 %4581
        %4585 = vset.pattern.permute.xlu0 0
        %4586 = vperm.xlu0 %4585, %v4488
        %v4587 = vpop.permute.xlu0 %4586
        %4590 = vset.pattern.permute.xlu0 0
        %4591 = vperm.xlu0 %4590, %v4489
        %v4592 = vpop.permute.xlu0 %4591
        %4595 = vset.pattern.permute.xlu0 0
        %4596 = vperm.xlu0 %4595, %v4490
        %v4597 = vpop.permute.xlu0 %4596
        %4600 = vset.pattern.permute.xlu0 0
        %4601 = vperm.xlu0 %4600, %v4491
        %v4602 = vpop.permute.xlu0 %4601
        %4605 = vset.pattern.permute.xlu0 0
        %4606 = vperm.xlu0 %4605, %v4492
        %v4607 = vpop.permute.xlu0 %4606
        %4610 = vset.pattern.permute.xlu0 0
        %4611 = vperm.xlu0 %4610, %v4493
        %v4612 = vpop.permute.xlu0 %4611
        %4615 = vset.pattern.permute.xlu0 0
        %4616 = vperm.xlu0 %4615, %v4494
        %v4617 = vpop.permute.xlu0 %4616
        %4620 = vset.pattern.permute.xlu0 0
        %4621 = vperm.xlu0 %4620, %v4495
        %v4622 = vpop.permute.xlu0 %4621
        %4625 = vset.pattern.permute.xlu0 0
        %4626 = vperm.xlu0 %4625, %v4496
        %v4627 = vpop.permute.xlu0 %4626
        %4630 = vset.pattern.permute.xlu0 0
        %4631 = vperm.xlu0 %4630, %v4497
        %v4632 = vpop.permute.xlu0 %4631
        %4635 = vset.pattern.permute.xlu0 0
        %4636 = vperm.xlu0 %4635, %v4498
        %v4637 = vpop.permute.xlu0 %4636
        %4640 = vset.pattern.permute.xlu0 0
        %4641 = vperm.xlu0 %4640, %v4499
        %v4642 = vpop.permute.xlu0 %4641
        %4645 = vset.pattern.permute.xlu0 0
        %4646 = vperm.xlu0 %4645, %v4500
        %v4647 = vpop.permute.xlu0 %4646
        %4650 = vset.pattern.permute.xlu0 0
        %4651 = vperm.xlu0 %4650, %v4501
        %v4652 = vpop.permute.xlu0 %4651
        %4655 = vset.pattern.permute.xlu0 0
        %4656 = vperm.xlu0 %4655, %v4502
        %v4657 = vpop.permute.xlu0 %4656
        %4660 = vset.pattern.permute.xlu0 0
        %4661 = vperm.xlu0 %4660, %v4503
        %v4662 = vpop.permute.xlu0 %4661
        %v4664 = vmul.f32 %v1770, %v4507
        %v4665 = vmul.f32 %v1769, %v4512
        %v4666 = vmul.f32 %v1768, %v4517
        %v4667 = vmul.f32 %v1767, %v4522
        %v4668 = vmul.f32 %v1766, %v4527
        %v4669 = vmul.f32 %v1765, %v4532
        %v4670 = vmul.f32 %v1764, %v4537
        %v4671 = vmul.f32 %v1763, %v4542
        %v4672 = vmul.f32 %v1762, %v4547
        %v4673 = vmul.f32 %v1761, %v4552
        %v4674 = vmul.f32 %v1760, %v4557
        %v4675 = vmul.f32 %v1759, %v4562
        %v4676 = vmul.f32 %v1758, %v4567
        %v4677 = vmul.f32 %v1757, %v4572
        %v4678 = vmul.f32 %v1756, %v4577
        %v4679 = vmul.f32 %v1755, %v4582
        %v4680 = vmul.f32 %v1754, %v4587
        %v4681 = vmul.f32 %v1753, %v4592
        %v4682 = vmul.f32 %v1752, %v4597
        %v4683 = vmul.f32 %v1751, %v4602
        %v4684 = vmul.f32 %v1750, %v4607
        %v4685 = vmul.f32 %v1749, %v4612
        %v4686 = vmul.f32 %v1748, %v4617
        %v4687 = vmul.f32 %v1747, %v4622
        %v4688 = vmul.f32 %v1746, %v4627
        %v4689 = vmul.f32 %v1745, %v4632
        %v4690 = vmul.f32 %v1744, %v4637
        %v4691 = vmul.f32 %v1743, %v4642
        %v4692 = vmul.f32 %v1742, %v4647
        %v4693 = vmul.f32 %v1773, %v4652
        %v4694 = vmul.f32 %v1772, %v4657
        %v4695 = vmul.f32 %v1771, %v4662
        %s4696 = scalar_lea.vmem %s2, 16
        %v4697 = vld [vmem:[%s4696] sm:$0x3]
        %v4698 = vpack.c.bf16 %v4665, %v4664
        %v4699 = vpack.c.bf16 %v4667, %v4666
        %v4700 = vpack.c.bf16 %v4669, %v4668
        %v4701 = vpack.c.bf16 %v4671, %v4670
        %v4702 = vpack.c.bf16 %v4673, %v4672
        %v4703 = vpack.c.bf16 %v4675, %v4674
        %v4704 = vpack.c.bf16 %v4677, %v4676
        %v4705 = vpack.c.bf16 %v4679, %v4678
        %v4706 = vpack.c.bf16 %v4681, %v4680
        %v4707 = vpack.c.bf16 %v4683, %v4682
        %v4708 = vpack.c.bf16 %v4685, %v4684
        %v4709 = vpack.c.bf16 %v4687, %v4686
        %v4710 = vpack.c.bf16 %v4689, %v4688
        %v4711 = vpack.c.bf16 %v4691, %v4690
        %v4712 = vpack.c.bf16 %v4693, %v4692
        %v4713 = vpack.c.bf16 %v4695, %v4694
        %v4715 = vsel %vm1280, %v4698, 0
        %v4718 = vsel %vm1280, %v4699, 0
        %v4721 = vsel %vm1280, %v4700, 0
        %v4724 = vsel %vm1280, %v4701, 0
        %v4727 = vsel %vm1280, %v4702, 0
        %v4730 = vsel %vm1280, %v4703, 0
        %v4733 = vsel %vm1280, %v4704, 0
        %v4736 = vsel %vm1280, %v4705, 0
        %v4739 = vsel %vm1280, %v4706, 0
        %v4742 = vsel %vm1280, %v4707, 0
        %v4745 = vsel %vm1280, %v4708, 0
        %v4748 = vsel %vm1280, %v4709, 0
        %v4751 = vsel %vm1280, %v4710, 0
        %v4754 = vsel %vm1280, %v4711, 0
        %v4757 = vsel %vm1280, %v4712, 0
        %v4760 = vsel %vm1280, %v4713, 0
        %v4763 = vand.u32 %v4697, %v1332
        %4765 = vmatprep.subr.bf16.mxu0 0
        %4766 = vmatpush1.bf16.msra.mxu0 0
        %4767 = vmatprep.subr.bf16.mxu0 0
        %4768 = vmatpush1.bf16.msra.mxu0 0
        %4769 = vmatprep.subr.bf16.mxu0 0
        %4770 = vmatpush1.bf16.msra.mxu0 0
        %4771 = vmatprep.subr.bf16.mxu0 0
        %4772 = vmatpush1.bf16.msra.mxu0 0
        %4773 = vmatprep.subr.bf16.mxu0 0
        %4774 = vmatpush1.bf16.msra.mxu0 0
        %4775 = vmatprep.subr.bf16.mxu0 0
        %4776 = vmatpush1.bf16.msra.mxu0 0
        %4777 = vmatprep.subr.bf16.mxu0 0
        %4778 = vmatpush1.bf16.msra.mxu0 0
        %4779 = vmatprep.subr.bf16.mxu0 0
        %4780 = vmatpush1.bf16.msra.mxu0 %v4763
        %4781 = vmatprep.subr.bf16.mxu0 0
        %4782 = vmatpush2.bf16.msra.mxu0 0
        %4783 = vmatprep.subr.bf16.mxu0 0
        %4784 = vmatpush2.bf16.msra.mxu0 0
        %4785 = vmatprep.subr.bf16.mxu0 0
        %4786 = vmatpush2.bf16.msra.mxu0 0
        %4787 = vmatprep.subr.bf16.mxu0 0
        %4788 = vmatpush2.bf16.msra.mxu0 0
        %4789 = vmatprep.subr.bf16.mxu0 0
        %4790 = vmatpush2.bf16.msra.mxu0 0
        %4791 = vmatprep.subr.bf16.mxu0 0
        %4792 = vmatpush2.bf16.msra.mxu0 0
        %4793 = vmatprep.subr.bf16.mxu0 0
        %4794 = vmatpush2.bf16.msra.mxu0 0
        %4795 = vmatprep.subr.bf16.mxu0 0
        %4796 = vmatpush2.bf16.msra.mxu0 0
        %4797 = vmatprep.mubr.bf16.mxu0 0
        %4798 = vmatmul.mubr.bf16.gmra.mxu0 %v4715
        %v4799 = vpop.f32.mrf.mxu0
        %v4800 = vadd.f32 0.0, %v4799
        %v4801 = vpop.f32.mrf.mxu0
        %v4802 = vpop.f32.mrf.mxu0
        %v4803 = vadd.f32 0.0, %v4802
        %v4804 = vpop.f32.mrf.mxu0
        %4805 = vmatprep.mubr.bf16.mxu0 0
        %4806 = vmatmul.mubr.bf16.gmra.mxu0 %v4718
        %v4807 = vpop.f32.mrf.mxu0
        %v4808 = vadd.f32 0.0, %v4807
        %v4809 = vpop.f32.mrf.mxu0
        %v4810 = vpop.f32.mrf.mxu0
        %v4811 = vadd.f32 0.0, %v4810
        %v4812 = vpop.f32.mrf.mxu0
        %4813 = vmatprep.mubr.bf16.mxu0 0
        %4814 = vmatmul.mubr.bf16.gmra.mxu0 %v4721
        %v4815 = vpop.f32.mrf.mxu0
        %v4816 = vadd.f32 0.0, %v4815
        %v4817 = vpop.f32.mrf.mxu0
        %v4818 = vpop.f32.mrf.mxu0
        %v4819 = vadd.f32 0.0, %v4818
        %v4820 = vpop.f32.mrf.mxu0
        %4821 = vmatprep.mubr.bf16.mxu0 0
        %4822 = vmatmul.mubr.bf16.gmra.mxu0 %v4724
        %v4823 = vpop.f32.mrf.mxu0
        %v4824 = vadd.f32 0.0, %v4823
        %v4825 = vpop.f32.mrf.mxu0
        %v4826 = vpop.f32.mrf.mxu0
        %v4827 = vadd.f32 0.0, %v4826
        %v4828 = vpop.f32.mrf.mxu0
        %4829 = vmatprep.mubr.bf16.mxu0 0
        %4830 = vmatmul.mubr.bf16.gmra.mxu0 %v4727
        %v4831 = vpop.f32.mrf.mxu0
        %v4832 = vadd.f32 0.0, %v4831
        %v4833 = vpop.f32.mrf.mxu0
        %v4834 = vpop.f32.mrf.mxu0
        %v4835 = vadd.f32 0.0, %v4834
        %v4836 = vpop.f32.mrf.mxu0
        %4837 = vmatprep.mubr.bf16.mxu0 0
        %4838 = vmatmul.mubr.bf16.gmra.mxu0 %v4730
        %v4839 = vpop.f32.mrf.mxu0
        %v4840 = vadd.f32 0.0, %v4839
        %v4841 = vpop.f32.mrf.mxu0
        %v4842 = vpop.f32.mrf.mxu0
        %v4843 = vadd.f32 0.0, %v4842
        %v4844 = vpop.f32.mrf.mxu0
        %4845 = vmatprep.mubr.bf16.mxu0 0
        %4846 = vmatmul.mubr.bf16.gmra.mxu0 %v4733
        %v4847 = vpop.f32.mrf.mxu0
        %v4848 = vadd.f32 0.0, %v4847
        %v4849 = vpop.f32.mrf.mxu0
        %v4850 = vpop.f32.mrf.mxu0
        %v4851 = vadd.f32 0.0, %v4850
        %v4852 = vpop.f32.mrf.mxu0
        %4853 = vmatprep.mubr.bf16.mxu0 0
        %4854 = vmatmul.mubr.bf16.gmra.mxu0 %v4736
        %v4855 = vpop.f32.mrf.mxu0
        %v4856 = vadd.f32 0.0, %v4855
        %v4857 = vpop.f32.mrf.mxu0
        %v4858 = vpop.f32.mrf.mxu0
        %v4859 = vadd.f32 0.0, %v4858
        %v4860 = vpop.f32.mrf.mxu0
        %4861 = vmatprep.mubr.bf16.mxu0 0
        %4862 = vmatmul.mubr.bf16.gmra.mxu0 %v4739
        %v4863 = vpop.f32.mrf.mxu0
        %v4864 = vadd.f32 0.0, %v4863
        %v4865 = vpop.f32.mrf.mxu0
        %v4866 = vpop.f32.mrf.mxu0
        %v4867 = vadd.f32 0.0, %v4866
        %v4868 = vpop.f32.mrf.mxu0
        %4869 = vmatprep.mubr.bf16.mxu0 0
        %4870 = vmatmul.mubr.bf16.gmra.mxu0 %v4742
        %v4871 = vpop.f32.mrf.mxu0
        %v4872 = vadd.f32 0.0, %v4871
        %v4873 = vpop.f32.mrf.mxu0
        %v4874 = vpop.f32.mrf.mxu0
        %v4875 = vadd.f32 0.0, %v4874
        %v4876 = vpop.f32.mrf.mxu0
        %4877 = vmatprep.mubr.bf16.mxu0 0
        %4878 = vmatmul.mubr.bf16.gmra.mxu0 %v4745
        %v4879 = vpop.f32.mrf.mxu0
        %v4880 = vadd.f32 0.0, %v4879
        %v4881 = vpop.f32.mrf.mxu0
        %v4882 = vpop.f32.mrf.mxu0
        %v4883 = vadd.f32 0.0, %v4882
        %v4884 = vpop.f32.mrf.mxu0
        %4885 = vmatprep.mubr.bf16.mxu0 0
        %4886 = vmatmul.mubr.bf16.gmra.mxu0 %v4748
        %v4887 = vpop.f32.mrf.mxu0
        %v4888 = vadd.f32 0.0, %v4887
        %v4889 = vpop.f32.mrf.mxu0
        %v4890 = vpop.f32.mrf.mxu0
        %v4891 = vadd.f32 0.0, %v4890
        %v4892 = vpop.f32.mrf.mxu0
        %4893 = vmatprep.mubr.bf16.mxu0 0
        %4894 = vmatmul.mubr.bf16.gmra.mxu0 %v4751
        %v4895 = vpop.f32.mrf.mxu0
        %v4896 = vadd.f32 0.0, %v4895
        %v4897 = vpop.f32.mrf.mxu0
        %v4898 = vpop.f32.mrf.mxu0
        %v4899 = vadd.f32 0.0, %v4898
        %v4900 = vpop.f32.mrf.mxu0
        %4901 = vmatprep.mubr.bf16.mxu0 0
        %4902 = vmatmul.mubr.bf16.gmra.mxu0 %v4754
        %v4903 = vpop.f32.mrf.mxu0
        %v4904 = vadd.f32 0.0, %v4903
        %v4905 = vpop.f32.mrf.mxu0
        %v4906 = vpop.f32.mrf.mxu0
        %v4907 = vadd.f32 0.0, %v4906
        %v4908 = vpop.f32.mrf.mxu0
        %4909 = vmatprep.mubr.bf16.mxu0 0
        %4910 = vmatmul.mubr.bf16.gmra.mxu0 %v4757
        %v4911 = vpop.f32.mrf.mxu0
        %v4912 = vadd.f32 0.0, %v4911
        %v4913 = vpop.f32.mrf.mxu0
        %v4914 = vpop.f32.mrf.mxu0
        %v4915 = vadd.f32 0.0, %v4914
        %v4916 = vpop.f32.mrf.mxu0
        %4917 = vmatprep.mubr.bf16.mxu0 0
        %4918 = vmatmul.mubr.bf16.gmra.mxu0 %v4760
        %v4919 = vpop.f32.mrf.mxu0
        %v4920 = vadd.f32 0.0, %v4919
        %v4921 = vpop.f32.mrf.mxu0
        %v4922 = vpop.f32.mrf.mxu0
        %v4923 = vadd.f32 0.0, %v4922
        %v4924 = vpop.f32.mrf.mxu0
        %4925 = vdwg.mxu0
        %v4926 = vadd.f32 %v4439, %v4800
        %v4927 = vadd.f32 %v4440, %v4803
        %v4928 = vadd.f32 %v4441, %v4808
        %v4929 = vadd.f32 %v4442, %v4811
        %v4930 = vadd.f32 %v4443, %v4816
        %v4931 = vadd.f32 %v4444, %v4819
        %v4932 = vadd.f32 %v4445, %v4824
        %v4933 = vadd.f32 %v4446, %v4827
        %v4934 = vadd.f32 %v4447, %v4832
        %v4935 = vadd.f32 %v4448, %v4835
        %v4936 = vadd.f32 %v4449, %v4840
        %v4937 = vadd.f32 %v4450, %v4843
        %v4938 = vadd.f32 %v4451, %v4848
        %v4939 = vadd.f32 %v4452, %v4851
        %v4940 = vadd.f32 %v4453, %v4856
        %v4941 = vadd.f32 %v4454, %v4859
        %v4942 = vadd.f32 %v4455, %v4864
        %v4943 = vadd.f32 %v4456, %v4867
        %v4944 = vadd.f32 %v4457, %v4872
        %v4945 = vadd.f32 %v4458, %v4875
        %v4946 = vadd.f32 %v4459, %v4880
        %v4947 = vadd.f32 %v4460, %v4883
        %v4948 = vadd.f32 %v4461, %v4888
        %v4949 = vadd.f32 %v4462, %v4891
        %v4950 = vadd.f32 %v4463, %v4896
        %v4951 = vadd.f32 %v4464, %v4899
        %v4952 = vadd.f32 %v4465, %v4904
        %v4953 = vadd.f32 %v4466, %v4907
        %v4954 = vadd.f32 %v4467, %v4912
        %v4955 = vadd.f32 %v4468, %v4915
        %v4956 = vadd.f32 %v4469, %v4920
        %v4957 = vadd.f32 %v4470, %v4923
        %v4959 = vlaneseq
        %v4960 = vshrl.u32 %v4959, 7
        %v4961 = vsub.s32 0, %v4960
        %v4962 = vrot.slane %v728, %v4961
        %v4964 = vadd.f32 %v4926, %v4962
        %v4965 = vadd.f32 %v4927, %v4962
        %v4966 = vadd.f32 %v4928, %v4962
        %v4967 = vadd.f32 %v4929, %v4962
        %v4968 = vadd.f32 %v4930, %v4962
        %v4969 = vadd.f32 %v4931, %v4962
        %v4970 = vadd.f32 %v4932, %v4962
        %v4971 = vadd.f32 %v4933, %v4962
        %v4972 = vadd.f32 %v4934, %v4962
        %v4973 = vadd.f32 %v4935, %v4962
        %v4974 = vadd.f32 %v4936, %v4962
        %v4975 = vadd.f32 %v4937, %v4962
        %v4976 = vadd.f32 %v4938, %v4962
        %v4977 = vadd.f32 %v4939, %v4962
        %v4978 = vadd.f32 %v4940, %v4962
        %v4979 = vadd.f32 %v4941, %v4962
        %v4980 = vadd.f32 %v4942, %v4962
        %v4981 = vadd.f32 %v4943, %v4962
        %v4982 = vadd.f32 %v4944, %v4962
        %v4983 = vadd.f32 %v4945, %v4962
        %v4984 = vadd.f32 %v4946, %v4962
        %v4985 = vadd.f32 %v4947, %v4962
        %v4986 = vadd.f32 %v4948, %v4962
        %v4987 = vadd.f32 %v4949, %v4962
        %v4988 = vadd.f32 %v4950, %v4962
        %v4989 = vadd.f32 %v4951, %v4962
        %v4990 = vadd.f32 %v4952, %v4962
        %v4991 = vadd.f32 %v4953, %v4962
        %v4992 = vadd.f32 %v4954, %v4962
        %v4993 = vadd.f32 %v4955, %v4962
        %v4994 = vadd.f32 %v4956, %v4962
        %v4995 = vadd.f32 %v4957, %v4962
        %v4996 = vmax.f32 %v4964, 0.0
        %v4997 = vmax.f32 %v4965, 0.0
        %v4998 = vmax.f32 %v4966, 0.0
        %v4999 = vmax.f32 %v4967, 0.0
        %v5000 = vmax.f32 %v4968, 0.0
        %v5001 = vmax.f32 %v4969, 0.0
        %v5002 = vmax.f32 %v4970, 0.0
        %v5003 = vmax.f32 %v4971, 0.0
        %v5004 = vmax.f32 %v4972, 0.0
        %v5005 = vmax.f32 %v4973, 0.0
        %v5006 = vmax.f32 %v4974, 0.0
        %v5007 = vmax.f32 %v4975, 0.0
        %v5008 = vmax.f32 %v4976, 0.0
        %v5009 = vmax.f32 %v4977, 0.0
        %v5010 = vmax.f32 %v4978, 0.0
        %v5011 = vmax.f32 %v4979, 0.0
        %v5012 = vmax.f32 %v4980, 0.0
        %v5013 = vmax.f32 %v4981, 0.0
        %v5014 = vmax.f32 %v4982, 0.0
        %v5015 = vmax.f32 %v4983, 0.0
        %v5016 = vmax.f32 %v4984, 0.0
        %v5017 = vmax.f32 %v4985, 0.0
        %v5018 = vmax.f32 %v4986, 0.0
        %v5019 = vmax.f32 %v4987, 0.0
        %v5020 = vmax.f32 %v4988, 0.0
        %v5021 = vmax.f32 %v4989, 0.0
        %v5022 = vmax.f32 %v4990, 0.0
        %v5023 = vmax.f32 %v4991, 0.0
        %v5024 = vmax.f32 %v4992, 0.0
        %v5025 = vmax.f32 %v4993, 0.0
        %v5026 = vmax.f32 %v4994, 0.0
        %v5027 = vmax.f32 %v4995, 0.0
        %v5028 = vrot.slane %v4996, 1
        %v5029 = vrot.slane %v4997, 1
        %v5030 = vrot.slane %v4998, 1
        %v5031 = vrot.slane %v4999, 1
        %v5032 = vrot.slane %v5000, 1
        %v5033 = vrot.slane %v5001, 1
        %v5034 = vrot.slane %v5002, 1
        %v5035 = vrot.slane %v5003, 1
        %v5036 = vrot.slane %v5004, 1
        %v5037 = vrot.slane %v5005, 1
        %v5038 = vrot.slane %v5006, 1
        %v5039 = vrot.slane %v5007, 1
        %v5040 = vrot.slane %v5008, 1
        %v5041 = vrot.slane %v5009, 1
        %v5042 = vrot.slane %v5010, 1
        %v5043 = vrot.slane %v5011, 1
        %v5044 = vrot.slane %v5012, 1
        %v5045 = vrot.slane %v5013, 1
        %v5046 = vrot.slane %v5014, 1
        %v5047 = vrot.slane %v5015, 1
        %v5048 = vrot.slane %v5016, 1
        %v5049 = vrot.slane %v5017, 1
        %v5050 = vrot.slane %v5018, 1
        %v5051 = vrot.slane %v5019, 1
        %v5052 = vrot.slane %v5020, 1
        %v5053 = vrot.slane %v5021, 1
        %v5054 = vrot.slane %v5022, 1
        %v5055 = vrot.slane %v5023, 1
        %v5056 = vrot.slane %v5024, 1
        %v5057 = vrot.slane %v5025, 1
        %v5058 = vrot.slane %v5026, 1
        %v5059 = vrot.slane %v5027, 1
        %v5060 = vsel %vm1741, %v5058, %v5059
        %v5061 = vsel %vm1741, %v5057, %v5058
        %v5062 = vsel %vm1741, %v5056, %v5057
        %v5063 = vsel %vm1741, %v5055, %v5056
        %v5064 = vsel %vm1741, %v5054, %v5055
        %v5065 = vsel %vm1741, %v5053, %v5054
        %v5066 = vsel %vm1741, %v5052, %v5053
        %v5067 = vsel %vm1741, %v5051, %v5052
        %v5068 = vsel %vm1741, %v5050, %v5051
        %v5069 = vsel %vm1741, %v5049, %v5050
        %v5070 = vsel %vm1741, %v5048, %v5049
        %v5071 = vsel %vm1741, %v5047, %v5048
        %v5072 = vsel %vm1741, %v5046, %v5047
        %v5073 = vsel %vm1741, %v5045, %v5046
        %v5074 = vsel %vm1741, %v5044, %v5045
        %v5075 = vsel %vm1741, %v5043, %v5044
        %v5076 = vsel %vm1741, %v5042, %v5043
        %v5077 = vsel %vm1741, %v5041, %v5042
        %v5078 = vsel %vm1741, %v5040, %v5041
        %v5079 = vsel %vm1741, %v5039, %v5040
        %v5080 = vsel %vm1741, %v5038, %v5039
        %v5081 = vsel %vm1741, %v5037, %v5038
        %v5082 = vsel %vm1741, %v5036, %v5037
        %v5083 = vsel %vm1741, %v5035, %v5036
        %v5084 = vsel %vm1741, %v5034, %v5035
        %v5085 = vsel %vm1741, %v5033, %v5034
        %v5086 = vsel %vm1741, %v5032, %v5033
        %v5087 = vsel %vm1741, %v5031, %v5032
        %v5088 = vsel %vm1741, %v5030, %v5031
        %v5089 = vsel %vm1741, %v5029, %v5030
        %v5090 = vsel %vm1741, %v5028, %v5029
        %v5091 = vsel %vm1741, %v5059, %v5028
        %v5092 = vmax.f32 %v4996, %v5090
        %v5093 = vmax.f32 %v4997, %v5089
        %v5094 = vmax.f32 %v4998, %v5088
        %v5095 = vmax.f32 %v4999, %v5087
        %v5096 = vmax.f32 %v5000, %v5086
        %v5097 = vmax.f32 %v5001, %v5085
        %v5098 = vmax.f32 %v5002, %v5084
        %v5099 = vmax.f32 %v5003, %v5083
        %v5100 = vmax.f32 %v5004, %v5082
        %v5101 = vmax.f32 %v5005, %v5081
        %v5102 = vmax.f32 %v5006, %v5080
        %v5103 = vmax.f32 %v5007, %v5079
        %v5104 = vmax.f32 %v5008, %v5078
        %v5105 = vmax.f32 %v5009, %v5077
        %v5106 = vmax.f32 %v5010, %v5076
        %v5107 = vmax.f32 %v5011, %v5075
        %v5108 = vmax.f32 %v5012, %v5074
        %v5109 = vmax.f32 %v5013, %v5073
        %v5110 = vmax.f32 %v5014, %v5072
        %v5111 = vmax.f32 %v5015, %v5071
        %v5112 = vmax.f32 %v5016, %v5070
        %v5113 = vmax.f32 %v5017, %v5069
        %v5114 = vmax.f32 %v5018, %v5068
        %v5115 = vmax.f32 %v5019, %v5067
        %v5116 = vmax.f32 %v5020, %v5066
        %v5117 = vmax.f32 %v5021, %v5065
        %v5118 = vmax.f32 %v5022, %v5064
        %v5119 = vmax.f32 %v5023, %v5063
        %v5120 = vmax.f32 %v5024, %v5062
        %v5121 = vmax.f32 %v5025, %v5061
        %v5122 = vmax.f32 %v5026, %v5060
        %v5123 = vmax.f32 %v5027, %v5091
        %v5124 = vmax.f32 %v5092, %v5094
        %v5125 = vmax.f32 %v5093, %v5095
        %v5126 = vmax.f32 %v5094, %v5096
        %v5127 = vmax.f32 %v5095, %v5097
        %v5128 = vmax.f32 %v5096, %v5098
        %v5129 = vmax.f32 %v5097, %v5099
        %v5130 = vmax.f32 %v5098, %v5100
        %v5131 = vmax.f32 %v5099, %v5101
        %v5132 = vmax.f32 %v5100, %v5102
        %v5133 = vmax.f32 %v5101, %v5103
        %v5134 = vmax.f32 %v5102, %v5104
        %v5135 = vmax.f32 %v5103, %v5105
        %v5136 = vmax.f32 %v5104, %v5106
        %v5137 = vmax.f32 %v5105, %v5107
        %v5138 = vmax.f32 %v5106, %v5108
        %v5139 = vmax.f32 %v5107, %v5109
        %v5140 = vmax.f32 %v5108, %v5110
        %v5141 = vmax.f32 %v5109, %v5111
        %v5142 = vmax.f32 %v5110, %v5112
        %v5143 = vmax.f32 %v5111, %v5113
        %v5144 = vmax.f32 %v5112, %v5114
        %v5145 = vmax.f32 %v5113, %v5115
        %v5146 = vmax.f32 %v5114, %v5116
        %v5147 = vmax.f32 %v5115, %v5117
        %v5148 = vmax.f32 %v5116, %v5118
        %v5149 = vmax.f32 %v5117, %v5119
        %v5150 = vmax.f32 %v5118, %v5120
        %v5151 = vmax.f32 %v5119, %v5121
        %v5152 = vmax.f32 %v5120, %v5122
        %v5153 = vmax.f32 %v5121, %v5123
        %v5154 = vmax.f32 %v5122, %v5092
        %v5155 = vmax.f32 %v5123, %v5093
        %v5156 = vld [vmem:[%s11] sm:$0xff]
        %v5157 = vld [vmem:[%s11 + $0x8] sm:$0xff]
        %v5158 = vld [vmem:[%s11 + $0x10] sm:$0xff]
        %v5159 = vld [vmem:[%s11 + $0x18] sm:$0xff]
        %v5160 = vld [vmem:[%s11 + $0x20] sm:$0xff]
        %v5161 = vld [vmem:[%s11 + $0x28] sm:$0xff]
        %v5162 = vld [vmem:[%s11 + $0x30] sm:$0xff]
        %v5163 = vld [vmem:[%s11 + $0x38] sm:$0xff]
        %v5164 = vpack.c.bf16 %v5125, %v5124
        %v5165 = vpack.c.bf16 %v5127, %v5126
        %v5166 = vpack.c.bf16 %v5129, %v5128
        %v5167 = vpack.c.bf16 %v5131, %v5130
        %v5168 = vpack.c.bf16 %v5133, %v5132
        %v5169 = vpack.c.bf16 %v5135, %v5134
        %v5170 = vpack.c.bf16 %v5137, %v5136
        %v5171 = vpack.c.bf16 %v5139, %v5138
        %v5172 = vpack.c.bf16 %v5141, %v5140
        %v5173 = vpack.c.bf16 %v5143, %v5142
        %v5174 = vpack.c.bf16 %v5145, %v5144
        %v5175 = vpack.c.bf16 %v5147, %v5146
        %v5176 = vpack.c.bf16 %v5149, %v5148
        %v5177 = vpack.c.bf16 %v5151, %v5150
        %v5178 = vpack.c.bf16 %v5153, %v5152
        %v5179 = vpack.c.bf16 %v5155, %v5154
        %v5188 = vunpack.c.l.b16 %v5156
        %v5189 = vunpack.c.h.b16 %v5156
        %v5190 = vunpack.c.l.b16 %v5157
        %v5191 = vunpack.c.h.b16 %v5157
        %v5192 = vunpack.c.l.b16 %v5158
        %v5193 = vunpack.c.h.b16 %v5158
        %v5194 = vunpack.c.l.b16 %v5159
        %v5195 = vunpack.c.h.b16 %v5159
        %v5196 = vunpack.c.l.b16 %v5160
        %v5197 = vunpack.c.h.b16 %v5160
        %v5198 = vunpack.c.l.b16 %v5161
        %v5199 = vunpack.c.h.b16 %v5161
        %v5200 = vunpack.c.l.b16 %v5162
        %v5201 = vunpack.c.h.b16 %v5162
        %v5202 = vunpack.c.l.b16 %v5163
        %v5203 = vunpack.c.h.b16 %v5163
        %v5204 = vpack.c.b16 %v5190, %v5188
        %v5205 = vpack.c.b16 %v5191, %v5189
        %v5206 = vpack.c.b16 %v5194, %v5192
        %v5207 = vpack.c.b16 %v5195, %v5193
        %v5208 = vpack.c.b16 %v5198, %v5196
        %v5209 = vpack.c.b16 %v5199, %v5197
        %v5210 = vpack.c.b16 %v5202, %v5200
        %v5211 = vpack.c.b16 %v5203, %v5201
        %5220 = vmatprep.subr.bf16.mxu0 0
        %5221 = vmatpush1.bf16.msra.mxu0 %v5171
        %5222 = vmatprep.subr.bf16.mxu0 0
        %5223 = vmatpush1.bf16.msra.mxu0 %v5170
        %5224 = vmatprep.subr.bf16.mxu0 0
        %5225 = vmatpush1.bf16.msra.mxu0 %v5169
        %5226 = vmatprep.subr.bf16.mxu0 0
        %5227 = vmatpush1.bf16.msra.mxu0 %v5168
        %5228 = vmatprep.subr.bf16.mxu0 0
        %5229 = vmatpush1.bf16.msra.mxu0 %v5167
        %5230 = vmatprep.subr.bf16.mxu0 0
        %5231 = vmatpush1.bf16.msra.mxu0 %v5166
        %5232 = vmatprep.subr.bf16.mxu0 0
        %5233 = vmatpush1.bf16.msra.mxu0 %v5165
        %5234 = vmatprep.subr.bf16.mxu0 0
        %5235 = vmatpush1.bf16.msra.mxu0 %v5164
        %5236 = vmatprep.subr.bf16.mxu0 0
        %5237 = vmatpush2.bf16.msra.mxu0 %v5179
        %5238 = vmatprep.subr.bf16.mxu0 0
        %5239 = vmatpush2.bf16.msra.mxu0 %v5178
        %5240 = vmatprep.subr.bf16.mxu0 0
        %5241 = vmatpush2.bf16.msra.mxu0 %v5177
        %5242 = vmatprep.subr.bf16.mxu0 0
        %5243 = vmatpush2.bf16.msra.mxu0 %v5176
        %5244 = vmatprep.subr.bf16.mxu0 0
        %5245 = vmatpush2.bf16.msra.mxu0 %v5175
        %5246 = vmatprep.subr.bf16.mxu0 0
        %5247 = vmatpush2.bf16.msra.mxu0 %v5174
        %5248 = vmatprep.subr.bf16.mxu0 0
        %5249 = vmatpush2.bf16.msra.mxu0 %v5173
        %5250 = vmatprep.subr.bf16.mxu0 0
        %5251 = vmatpush2.bf16.msra.mxu0 %v5172
        %5252 = vmatprep.mubr.bf16.mxu0 %v5205
        %5253 = vmatmul.mubr.bf16.gmra.mxu0 %v5204
        %v5254 = vpop.f32.mrf.mxu0
        %v5255 = vadd.f32 0.0, %v5254
        %v5256 = vpop.f32.mrf.mxu0
        %v5257 = vpop.f32.mrf.mxu0
        %v5258 = vadd.f32 0.0, %v5257
        %v5259 = vpop.f32.mrf.mxu0
        %5260 = vmatprep.mubr.bf16.mxu0 %v5207
        %5261 = vmatmul.mubr.bf16.gmra.mxu0 %v5206
        %v5262 = vpop.f32.mrf.mxu0
        %v5263 = vadd.f32 0.0, %v5262
        %v5264 = vpop.f32.mrf.mxu0
        %v5265 = vpop.f32.mrf.mxu0
        %v5266 = vadd.f32 0.0, %v5265
        %v5267 = vpop.f32.mrf.mxu0
        %5268 = vmatprep.mubr.bf16.mxu0 %v5209
        %5269 = vmatmul.mubr.bf16.gmra.mxu0 %v5208
        %v5270 = vpop.f32.mrf.mxu0
        %v5271 = vadd.f32 0.0, %v5270
        %v5272 = vpop.f32.mrf.mxu0
        %v5273 = vpop.f32.mrf.mxu0
        %v5274 = vadd.f32 0.0, %v5273
        %v5275 = vpop.f32.mrf.mxu0
        %5276 = vmatprep.mubr.bf16.mxu0 %v5211
        %5277 = vmatmul.mubr.bf16.gmra.mxu0 %v5210
        %v5278 = vpop.f32.mrf.mxu0
        %v5279 = vadd.f32 0.0, %v5278
        %v5280 = vpop.f32.mrf.mxu0
        %v5281 = vpop.f32.mrf.mxu0
        %v5282 = vadd.f32 0.0, %v5281
        %v5283 = vpop.f32.mrf.mxu0
        %5284 = vdwg.mxu0
        %v5285 = vld [vmem:[%s6] sm:$0x1]
        %v5286 = vrot.slane %v5255, 7
        %v5287 = vrot.slane %v5258, 7
        %v5288 = vrot.slane %v5263, 7
        %v5289 = vrot.slane %v5266, 7
        %v5290 = vrot.slane %v5271, 7
        %v5291 = vrot.slane %v5274, 7
        %v5292 = vrot.slane %v5279, 7
        %v5293 = vrot.slane %v5282, 7
        %v5294 = vsel %vm763, %v5292, %v5293
        %v5295 = vsel %vm763, %v5291, %v5292
        %v5296 = vsel %vm763, %v5290, %v5291
        %v5297 = vsel %vm763, %v5289, %v5290
        %v5298 = vsel %vm763, %v5288, %v5289
        %v5299 = vsel %vm763, %v5287, %v5288
        %v5300 = vsel %vm763, %v5286, %v5287
        %v5301 = vsel %vm763, %v5293, %v5286
        %v5302 = vld [vmem:[%s7] sm:$0xff]
        %v5303 = vld [vmem:[%s7 + $0x8] sm:$0xff]
        %v5304 = vld [vmem:[%s7 + $0x10] sm:$0xff]
        %v5305 = vld [vmem:[%s7 + $0x18] sm:$0xff]
        %v5306 = vld [vmem:[%s7 + $0x20] sm:$0xff]
        %v5307 = vld [vmem:[%s7 + $0x28] sm:$0xff]
        %v5308 = vld [vmem:[%s7 + $0x30] sm:$0xff]
        %v5309 = vld [vmem:[%s7 + $0x38] sm:$0xff]
        %5311 = vset.pattern.permute.xlu0 0
        %5312 = vperm.xlu0 %5311, %v5302
        %v5313 = vpop.permute.xlu0 %5312
        %5316 = vset.pattern.permute.xlu0 0
        %5317 = vperm.xlu0 %5316, %v5303
        %v5318 = vpop.permute.xlu0 %5317
        %5321 = vset.pattern.permute.xlu0 0
        %5322 = vperm.xlu0 %5321, %v5304
        %v5323 = vpop.permute.xlu0 %5322
        %5326 = vset.pattern.permute.xlu0 0
        %5327 = vperm.xlu0 %5326, %v5305
        %v5328 = vpop.permute.xlu0 %5327
        %5331 = vset.pattern.permute.xlu0 0
        %5332 = vperm.xlu0 %5331, %v5306
        %v5333 = vpop.permute.xlu0 %5332
        %5336 = vset.pattern.permute.xlu0 0
        %5337 = vperm.xlu0 %5336, %v5307
        %v5338 = vpop.permute.xlu0 %5337
        %5341 = vset.pattern.permute.xlu0 0
        %5342 = vperm.xlu0 %5341, %v5308
        %v5343 = vpop.permute.xlu0 %5342
        %5346 = vset.pattern.permute.xlu0 0
        %5347 = vperm.xlu0 %5346, %v5309
        %v5348 = vpop.permute.xlu0 %5347
        %v5350 = vmul.f32 %v5294, %v5313
        %v5351 = vmul.f32 %v5301, %v5318
        %v5352 = vmul.f32 %v5300, %v5323
        %v5353 = vmul.f32 %v5299, %v5328
        %v5354 = vmul.f32 %v5298, %v5333
        %v5355 = vmul.f32 %v5297, %v5338
        %v5356 = vmul.f32 %v5296, %v5343
        %v5357 = vmul.f32 %v5295, %v5348
        %v5358 = vld [vmem:[%s5] sm:$0xf]
        %v5359 = vld [vmem:[%s5 + $0x4] sm:$0xf]
        %v5360 = vpack.c.bf16 %v5351, %v5350
        %v5361 = vpack.c.bf16 %v5353, %v5352
        %v5362 = vpack.c.bf16 %v5355, %v5354
        %v5363 = vpack.c.bf16 %v5357, %v5356
        %s5364 = scalar_lea.vmem %s7, 64
        %v5365 = vld [vmem:[%s5364] sm:$0xff]
        %v5366 = vld [vmem:[%s5364 + $0x8] sm:$0xff]
        %v5367 = vld [vmem:[%s5364 + $0x10] sm:$0xff]
        %v5368 = vld [vmem:[%s5364 + $0x18] sm:$0xff]
        %v5369 = vld [vmem:[%s5364 + $0x20] sm:$0xff]
        %v5370 = vld [vmem:[%s5364 + $0x28] sm:$0xff]
        %v5371 = vld [vmem:[%s5364 + $0x30] sm:$0xff]
        %v5372 = vld [vmem:[%s5364 + $0x38] sm:$0xff]
        %5374 = vset.pattern.permute.xlu0 0
        %5375 = vperm.xlu0 %5374, %v5365
        %v5376 = vpop.permute.xlu0 %5375
        %5379 = vset.pattern.permute.xlu0 0
        %5380 = vperm.xlu0 %5379, %v5366
        %v5381 = vpop.permute.xlu0 %5380
        %5384 = vset.pattern.permute.xlu0 0
        %5385 = vperm.xlu0 %5384, %v5367
        %v5386 = vpop.permute.xlu0 %5385
        %5389 = vset.pattern.permute.xlu0 0
        %5390 = vperm.xlu0 %5389, %v5368
        %v5391 = vpop.permute.xlu0 %5390
        %5394 = vset.pattern.permute.xlu0 0
        %5395 = vperm.xlu0 %5394, %v5369
        %v5396 = vpop.permute.xlu0 %5395
        %5399 = vset.pattern.permute.xlu0 0
        %5400 = vperm.xlu0 %5399, %v5370
        %v5401 = vpop.permute.xlu0 %5400
        %5404 = vset.pattern.permute.xlu0 0
        %5405 = vperm.xlu0 %5404, %v5371
        %v5406 = vpop.permute.xlu0 %5405
        %5409 = vset.pattern.permute.xlu0 0
        %5410 = vperm.xlu0 %5409, %v5372
        %v5411 = vpop.permute.xlu0 %5410
        %v5413 = vmul.f32 %v5282, %v5376
        %v5414 = vmul.f32 %v5255, %v5381
        %v5415 = vmul.f32 %v5258, %v5386
        %v5416 = vmul.f32 %v5263, %v5391
        %v5417 = vmul.f32 %v5266, %v5396
        %v5418 = vmul.f32 %v5271, %v5401
        %v5419 = vmul.f32 %v5274, %v5406
        %v5420 = vmul.f32 %v5279, %v5411
        %s5421 = scalar_lea.vmem %s5, 8
        %v5422 = vld [vmem:[%s5421] sm:$0xf]
        %v5423 = vld [vmem:[%s5421 + $0x4] sm:$0xf]
        %v5424 = vpack.c.bf16 %v5414, %v5413
        %v5425 = vpack.c.bf16 %v5416, %v5415
        %v5426 = vpack.c.bf16 %v5418, %v5417
        %v5427 = vpack.c.bf16 %v5420, %v5419
        %v5430 = vunpack.c.l.b16 %v5422
        %v5431 = vunpack.c.l.b16 %v5423
        %v5432 = vpack.c.b16 %v5431, %v5430
        %vm5434 = vcmask 130048
        %v5436 = vsel %vm5434, %v5424, 0
        %v5439 = vsel %vm5434, %v5425, 0
        %v5442 = vsel %vm5434, %v5426, 0
        %v5445 = vsel %vm5434, %v5427, 0
        %5447 = vmatprep.subr.bf16.mxu0 0
        %5448 = vmatpush1.bf16.msra.mxu0 0
        %5449 = vmatprep.subr.bf16.mxu0 0
        %5450 = vmatpush1.bf16.msra.mxu0 0
        %5451 = vmatprep.subr.bf16.mxu0 0
        %5452 = vmatpush1.bf16.msra.mxu0 0
        %5453 = vmatprep.subr.bf16.mxu0 0
        %5454 = vmatpush1.bf16.msra.mxu0 0
        %5455 = vmatprep.subr.bf16.mxu0 0
        %5456 = vmatpush1.bf16.msra.mxu0 0
        %5457 = vmatprep.subr.bf16.mxu0 0
        %5458 = vmatpush1.bf16.msra.mxu0 0
        %5459 = vmatprep.subr.bf16.mxu0 0
        %5460 = vmatpush1.bf16.msra.mxu0 0
        %5461 = vmatprep.subr.bf16.mxu0 0
        %5462 = vmatpush1.bf16.msra.mxu0 %v5432
        %5463 = vmatprep.subr.bf16.mxu0 0
        %5464 = vmatpush2.bf16.msra.mxu0 0
        %5465 = vmatprep.subr.bf16.mxu0 0
        %5466 = vmatpush2.bf16.msra.mxu0 0
        %5467 = vmatprep.subr.bf16.mxu0 0
        %5468 = vmatpush2.bf16.msra.mxu0 0
        %5469 = vmatprep.subr.bf16.mxu0 0
        %5470 = vmatpush2.bf16.msra.mxu0 0
        %5471 = vmatprep.subr.bf16.mxu0 0
        %5472 = vmatpush2.bf16.msra.mxu0 0
        %5473 = vmatprep.subr.bf16.mxu0 0
        %5474 = vmatpush2.bf16.msra.mxu0 0
        %5475 = vmatprep.subr.bf16.mxu0 0
        %5476 = vmatpush2.bf16.msra.mxu0 0
        %5477 = vmatprep.subr.bf16.mxu0 0
        %5478 = vmatpush2.bf16.msra.mxu0 0
        %5479 = vmatprep.mubr.bf16.mxu0 0
        %5480 = vmatmul.mubr.bf16.gmra.mxu0 %v5436
        %v5481 = vpop.f32.mrf.mxu0
        %v5482 = vadd.f32 0.0, %v5481
        %v5483 = vpop.f32.mrf.mxu0
        %v5484 = vpop.f32.mrf.mxu0
        %v5485 = vadd.f32 0.0, %v5484
        %v5486 = vpop.f32.mrf.mxu0
        %5487 = vmatprep.mubr.bf16.mxu0 0
        %5488 = vmatmul.mubr.bf16.gmra.mxu0 %v5439
        %v5489 = vpop.f32.mrf.mxu0
        %v5490 = vadd.f32 0.0, %v5489
        %v5491 = vpop.f32.mrf.mxu0
        %v5492 = vpop.f32.mrf.mxu0
        %v5493 = vadd.f32 0.0, %v5492
        %v5494 = vpop.f32.mrf.mxu0
        %5495 = vmatprep.mubr.bf16.mxu0 0
        %5496 = vmatmul.mubr.bf16.gmra.mxu0 %v5442
        %v5497 = vpop.f32.mrf.mxu0
        %v5498 = vadd.f32 0.0, %v5497
        %v5499 = vpop.f32.mrf.mxu0
        %v5500 = vpop.f32.mrf.mxu0
        %v5501 = vadd.f32 0.0, %v5500
        %v5502 = vpop.f32.mrf.mxu0
        %5503 = vmatprep.mubr.bf16.mxu0 0
        %5504 = vmatmul.mubr.bf16.gmra.mxu0 %v5445
        %v5505 = vpop.f32.mrf.mxu0
        %v5506 = vadd.f32 0.0, %v5505
        %v5507 = vpop.f32.mrf.mxu0
        %v5508 = vpop.f32.mrf.mxu0
        %v5509 = vadd.f32 0.0, %v5508
        %v5510 = vpop.f32.mrf.mxu0
        %5511 = vdwg.mxu0
        %v5514 = vunpack.c.l.b16 %v5358
        %v5515 = vunpack.c.l.b16 %v5359
        %v5516 = vpack.c.b16 %v5515, %v5514
        %v5519 = vsel %vm5434, %v5360, 0
        %v5522 = vsel %vm5434, %v5361, 0
        %v5525 = vsel %vm5434, %v5362, 0
        %v5528 = vsel %vm5434, %v5363, 0
        %5530 = vmatprep.subr.bf16.mxu0 0
        %5531 = vmatpush1.bf16.msra.mxu0 0
        %5532 = vmatprep.subr.bf16.mxu0 0
        %5533 = vmatpush1.bf16.msra.mxu0 0
        %5534 = vmatprep.subr.bf16.mxu0 0
        %5535 = vmatpush1.bf16.msra.mxu0 0
        %5536 = vmatprep.subr.bf16.mxu0 0
        %5537 = vmatpush1.bf16.msra.mxu0 0
        %5538 = vmatprep.subr.bf16.mxu0 0
        %5539 = vmatpush1.bf16.msra.mxu0 0
        %5540 = vmatprep.subr.bf16.mxu0 0
        %5541 = vmatpush1.bf16.msra.mxu0 0
        %5542 = vmatprep.subr.bf16.mxu0 0
        %5543 = vmatpush1.bf16.msra.mxu0 0
        %5544 = vmatprep.subr.bf16.mxu0 0
        %5545 = vmatpush1.bf16.msra.mxu0 %v5516
        %5546 = vmatprep.subr.bf16.mxu0 0
        %5547 = vmatpush2.bf16.msra.mxu0 0
        %5548 = vmatprep.subr.bf16.mxu0 0
        %5549 = vmatpush2.bf16.msra.mxu0 0
        %5550 = vmatprep.subr.bf16.mxu0 0
        %5551 = vmatpush2.bf16.msra.mxu0 0
        %5552 = vmatprep.subr.bf16.mxu0 0
        %5553 = vmatpush2.bf16.msra.mxu0 0
        %5554 = vmatprep.subr.bf16.mxu0 0
        %5555 = vmatpush2.bf16.msra.mxu0 0
        %5556 = vmatprep.subr.bf16.mxu0 0
        %5557 = vmatpush2.bf16.msra.mxu0 0
        %5558 = vmatprep.subr.bf16.mxu0 0
        %5559 = vmatpush2.bf16.msra.mxu0 0
        %5560 = vmatprep.subr.bf16.mxu0 0
        %5561 = vmatpush2.bf16.msra.mxu0 0
        %5562 = vmatprep.mubr.bf16.mxu0 0
        %5563 = vmatmul.mubr.bf16.gmra.mxu0 %v5519
        %v5564 = vpop.f32.mrf.mxu0
        %v5565 = vadd.f32 %v5482, %v5564
        %v5566 = vpop.f32.mrf.mxu0
        %v5567 = vpop.f32.mrf.mxu0
        %v5568 = vadd.f32 %v5485, %v5567
        %v5569 = vpop.f32.mrf.mxu0
        %5570 = vmatprep.mubr.bf16.mxu0 0
        %5571 = vmatmul.mubr.bf16.gmra.mxu0 %v5522
        %v5572 = vpop.f32.mrf.mxu0
        %v5573 = vadd.f32 %v5490, %v5572
        %v5574 = vpop.f32.mrf.mxu0
        %v5575 = vpop.f32.mrf.mxu0
        %v5576 = vadd.f32 %v5493, %v5575
        %v5577 = vpop.f32.mrf.mxu0
        %5578 = vmatprep.mubr.bf16.mxu0 0
        %5579 = vmatmul.mubr.bf16.gmra.mxu0 %v5525
        %v5580 = vpop.f32.mrf.mxu0
        %v5581 = vadd.f32 %v5498, %v5580
        %v5582 = vpop.f32.mrf.mxu0
        %v5583 = vpop.f32.mrf.mxu0
        %v5584 = vadd.f32 %v5501, %v5583
        %v5585 = vpop.f32.mrf.mxu0
        %5586 = vmatprep.mubr.bf16.mxu0 0
        %5587 = vmatmul.mubr.bf16.gmra.mxu0 %v5528
        %v5588 = vpop.f32.mrf.mxu0
        %v5589 = vadd.f32 %v5506, %v5588
        %v5590 = vpop.f32.mrf.mxu0
        %v5591 = vpop.f32.mrf.mxu0
        %v5592 = vadd.f32 %v5509, %v5591
        %v5593 = vpop.f32.mrf.mxu0
        %5594 = vdwg.mxu0
        %v5595 = vrot.slane %v5255, 1
        %v5596 = vrot.slane %v5258, 1
        %v5597 = vrot.slane %v5263, 1
        %v5598 = vrot.slane %v5266, 1
        %v5599 = vrot.slane %v5271, 1
        %v5600 = vrot.slane %v5274, 1
        %v5601 = vrot.slane %v5279, 1
        %v5602 = vrot.slane %v5282, 1
        %v5603 = vsel %vm1741, %v5601, %v5602
        %v5604 = vsel %vm1741, %v5600, %v5601
        %v5605 = vsel %vm1741, %v5599, %v5600
        %v5606 = vsel %vm1741, %v5598, %v5599
        %v5607 = vsel %vm1741, %v5597, %v5598
        %v5608 = vsel %vm1741, %v5596, %v5597
        %v5609 = vsel %vm1741, %v5595, %v5596
        %v5610 = vsel %vm1741, %v5602, %v5595
        %s5611 = scalar_lea.vmem %s7, 128
        %v5612 = vld [vmem:[%s5611] sm:$0xff]
        %v5613 = vld [vmem:[%s5611 + $0x8] sm:$0xff]
        %v5614 = vld [vmem:[%s5611 + $0x10] sm:$0xff]
        %v5615 = vld [vmem:[%s5611 + $0x18] sm:$0xff]
        %v5616 = vld [vmem:[%s5611 + $0x20] sm:$0xff]
        %v5617 = vld [vmem:[%s5611 + $0x28] sm:$0xff]
        %v5618 = vld [vmem:[%s5611 + $0x30] sm:$0xff]
        %v5619 = vld [vmem:[%s5611 + $0x38] sm:$0xff]
        %5621 = vset.pattern.permute.xlu0 0
        %5622 = vperm.xlu0 %5621, %v5612
        %v5623 = vpop.permute.xlu0 %5622
        %5626 = vset.pattern.permute.xlu0 0
        %5627 = vperm.xlu0 %5626, %v5613
        %v5628 = vpop.permute.xlu0 %5627
        %5631 = vset.pattern.permute.xlu0 0
        %5632 = vperm.xlu0 %5631, %v5614
        %v5633 = vpop.permute.xlu0 %5632
        %5636 = vset.pattern.permute.xlu0 0
        %5637 = vperm.xlu0 %5636, %v5615
        %v5638 = vpop.permute.xlu0 %5637
        %5641 = vset.pattern.permute.xlu0 0
        %5642 = vperm.xlu0 %5641, %v5616
        %v5643 = vpop.permute.xlu0 %5642
        %5646 = vset.pattern.permute.xlu0 0
        %5647 = vperm.xlu0 %5646, %v5617
        %v5648 = vpop.permute.xlu0 %5647
        %5651 = vset.pattern.permute.xlu0 0
        %5652 = vperm.xlu0 %5651, %v5618
        %v5653 = vpop.permute.xlu0 %5652
        %5656 = vset.pattern.permute.xlu0 0
        %5657 = vperm.xlu0 %5656, %v5619
        %v5658 = vpop.permute.xlu0 %5657
        %v5660 = vmul.f32 %v5610, %v5623
        %v5661 = vmul.f32 %v5609, %v5628
        %v5662 = vmul.f32 %v5608, %v5633
        %v5663 = vmul.f32 %v5607, %v5638
        %v5664 = vmul.f32 %v5606, %v5643
        %v5665 = vmul.f32 %v5605, %v5648
        %v5666 = vmul.f32 %v5604, %v5653
        %v5667 = vmul.f32 %v5603, %v5658
        %s5668 = scalar_lea.vmem %s5, 16
        %v5669 = vld [vmem:[%s5668] sm:$0xf]
        %v5670 = vld [vmem:[%s5668 + $0x4] sm:$0xf]
        %v5671 = vpack.c.bf16 %v5661, %v5660
        %v5672 = vpack.c.bf16 %v5663, %v5662
        %v5673 = vpack.c.bf16 %v5665, %v5664
        %v5674 = vpack.c.bf16 %v5667, %v5666
        %v5677 = vunpack.c.l.b16 %v5669
        %v5678 = vunpack.c.l.b16 %v5670
        %v5679 = vpack.c.b16 %v5678, %v5677
        %v5682 = vsel %vm5434, %v5671, 0
        %v5685 = vsel %vm5434, %v5672, 0
        %v5688 = vsel %vm5434, %v5673, 0
        %v5691 = vsel %vm5434, %v5674, 0
        %5693 = vmatprep.subr.bf16.mxu0 0
        %5694 = vmatpush1.bf16.msra.mxu0 0
        %5695 = vmatprep.subr.bf16.mxu0 0
        %5696 = vmatpush1.bf16.msra.mxu0 0
        %5697 = vmatprep.subr.bf16.mxu0 0
        %5698 = vmatpush1.bf16.msra.mxu0 0
        %5699 = vmatprep.subr.bf16.mxu0 0
        %5700 = vmatpush1.bf16.msra.mxu0 0
        %5701 = vmatprep.subr.bf16.mxu0 0
        %5702 = vmatpush1.bf16.msra.mxu0 0
        %5703 = vmatprep.subr.bf16.mxu0 0
        %5704 = vmatpush1.bf16.msra.mxu0 0
        %5705 = vmatprep.subr.bf16.mxu0 0
        %5706 = vmatpush1.bf16.msra.mxu0 0
        %5707 = vmatprep.subr.bf16.mxu0 0
        %5708 = vmatpush1.bf16.msra.mxu0 %v5679
        %5709 = vmatprep.subr.bf16.mxu0 0
        %5710 = vmatpush2.bf16.msra.mxu0 0
        %5711 = vmatprep.subr.bf16.mxu0 0
        %5712 = vmatpush2.bf16.msra.mxu0 0
        %5713 = vmatprep.subr.bf16.mxu0 0
        %5714 = vmatpush2.bf16.msra.mxu0 0
        %5715 = vmatprep.subr.bf16.mxu0 0
        %5716 = vmatpush2.bf16.msra.mxu0 0
        %5717 = vmatprep.subr.bf16.mxu0 0
        %5718 = vmatpush2.bf16.msra.mxu0 0
        %5719 = vmatprep.subr.bf16.mxu0 0
        %5720 = vmatpush2.bf16.msra.mxu0 0
        %5721 = vmatprep.subr.bf16.mxu0 0
        %5722 = vmatpush2.bf16.msra.mxu0 0
        %5723 = vmatprep.subr.bf16.mxu0 0
        %5724 = vmatpush2.bf16.msra.mxu0 0
        %5725 = vmatprep.mubr.bf16.mxu0 0
        %5726 = vmatmul.mubr.bf16.gmra.mxu0 %v5682
        %v5727 = vpop.f32.mrf.mxu0
        %v5728 = vadd.f32 0.0, %v5727
        %v5729 = vpop.f32.mrf.mxu0
        %v5730 = vpop.f32.mrf.mxu0
        %v5731 = vadd.f32 0.0, %v5730
        %v5732 = vpop.f32.mrf.mxu0
        %5733 = vmatprep.mubr.bf16.mxu0 0
        %5734 = vmatmul.mubr.bf16.gmra.mxu0 %v5685
        %v5735 = vpop.f32.mrf.mxu0
        %v5736 = vadd.f32 0.0, %v5735
        %v5737 = vpop.f32.mrf.mxu0
        %v5738 = vpop.f32.mrf.mxu0
        %v5739 = vadd.f32 0.0, %v5738
        %v5740 = vpop.f32.mrf.mxu0
        %5741 = vmatprep.mubr.bf16.mxu0 0
        %5742 = vmatmul.mubr.bf16.gmra.mxu0 %v5688
        %v5743 = vpop.f32.mrf.mxu0
        %v5744 = vadd.f32 0.0, %v5743
        %v5745 = vpop.f32.mrf.mxu0
        %v5746 = vpop.f32.mrf.mxu0
        %v5747 = vadd.f32 0.0, %v5746
        %v5748 = vpop.f32.mrf.mxu0
        %5749 = vmatprep.mubr.bf16.mxu0 0
        %5750 = vmatmul.mubr.bf16.gmra.mxu0 %v5691
        %v5751 = vpop.f32.mrf.mxu0
        %v5752 = vadd.f32 0.0, %v5751
        %v5753 = vpop.f32.mrf.mxu0
        %v5754 = vpop.f32.mrf.mxu0
        %v5755 = vadd.f32 0.0, %v5754
        %v5756 = vpop.f32.mrf.mxu0
        %5757 = vdwg.mxu0
        %v5758 = vadd.f32 %v5565, %v5728
        %v5759 = vadd.f32 %v5568, %v5731
        %v5760 = vadd.f32 %v5573, %v5736
        %v5761 = vadd.f32 %v5576, %v5739
        %v5762 = vadd.f32 %v5581, %v5744
        %v5763 = vadd.f32 %v5584, %v5747
        %v5764 = vadd.f32 %v5589, %v5752
        %v5765 = vadd.f32 %v5592, %v5755
        %s5766 = scalar_lea.vmem %s7, 192
        %v5767 = vld [vmem:[%s5766] sm:$0xff]
        %v5768 = vld [vmem:[%s5766 + $0x8] sm:$0xff]
        %v5769 = vld [vmem:[%s5766 + $0x10] sm:$0xff]
        %v5770 = vld [vmem:[%s5766 + $0x18] sm:$0xff]
        %v5771 = vld [vmem:[%s5766 + $0x20] sm:$0xff]
        %v5772 = vld [vmem:[%s5766 + $0x28] sm:$0xff]
        %v5773 = vld [vmem:[%s5766 + $0x30] sm:$0xff]
        %v5774 = vld [vmem:[%s5766 + $0x38] sm:$0xff]
        %5776 = vset.pattern.permute.xlu0 0
        %5777 = vperm.xlu0 %5776, %v5767
        %v5778 = vpop.permute.xlu0 %5777
        %5781 = vset.pattern.permute.xlu0 0
        %5782 = vperm.xlu0 %5781, %v5768
        %v5783 = vpop.permute.xlu0 %5782
        %5786 = vset.pattern.permute.xlu0 0
        %5787 = vperm.xlu0 %5786, %v5769
        %v5788 = vpop.permute.xlu0 %5787
        %5791 = vset.pattern.permute.xlu0 0
        %5792 = vperm.xlu0 %5791, %v5770
        %v5793 = vpop.permute.xlu0 %5792
        %5796 = vset.pattern.permute.xlu0 0
        %5797 = vperm.xlu0 %5796, %v5771
        %v5798 = vpop.permute.xlu0 %5797
        %5801 = vset.pattern.permute.xlu0 0
        %5802 = vperm.xlu0 %5801, %v5772
        %v5803 = vpop.permute.xlu0 %5802
        %5806 = vset.pattern.permute.xlu0 0
        %5807 = vperm.xlu0 %5806, %v5773
        %v5808 = vpop.permute.xlu0 %5807
        %5811 = vset.pattern.permute.xlu0 0
        %5812 = vperm.xlu0 %5811, %v5774
        %v5813 = vpop.permute.xlu0 %5812
        %v5815 = vmul.f32 %v5301, %v5778
        %v5816 = vmul.f32 %v5300, %v5783
        %v5817 = vmul.f32 %v5299, %v5788
        %v5818 = vmul.f32 %v5298, %v5793
        %v5819 = vmul.f32 %v5297, %v5798
        %v5820 = vmul.f32 %v5296, %v5803
        %v5821 = vmul.f32 %v5295, %v5808
        %v5822 = vmul.f32 %v5294, %v5813
        %s5823 = scalar_lea.vmem %s5, 24
        %v5824 = vld [vmem:[%s5823] sm:$0xf]
        %v5825 = vld [vmem:[%s5823 + $0x4] sm:$0xf]
        %v5826 = vpack.c.bf16 %v5816, %v5815
        %v5827 = vpack.c.bf16 %v5818, %v5817
        %v5828 = vpack.c.bf16 %v5820, %v5819
        %v5829 = vpack.c.bf16 %v5822, %v5821
        %v5832 = vunpack.c.l.b16 %v5824
        %v5833 = vunpack.c.l.b16 %v5825
        %v5834 = vpack.c.b16 %v5833, %v5832
        %v5837 = vsel %vm5434, %v5826, 0
        %v5840 = vsel %vm5434, %v5827, 0
        %v5843 = vsel %vm5434, %v5828, 0
        %v5846 = vsel %vm5434, %v5829, 0
        %5848 = vmatprep.subr.bf16.mxu0 0
        %5849 = vmatpush1.bf16.msra.mxu0 0
        %5850 = vmatprep.subr.bf16.mxu0 0
        %5851 = vmatpush1.bf16.msra.mxu0 0
        %5852 = vmatprep.subr.bf16.mxu0 0
        %5853 = vmatpush1.bf16.msra.mxu0 0
        %5854 = vmatprep.subr.bf16.mxu0 0
        %5855 = vmatpush1.bf16.msra.mxu0 0
        %5856 = vmatprep.subr.bf16.mxu0 0
        %5857 = vmatpush1.bf16.msra.mxu0 0
        %5858 = vmatprep.subr.bf16.mxu0 0
        %5859 = vmatpush1.bf16.msra.mxu0 0
        %5860 = vmatprep.subr.bf16.mxu0 0
        %5861 = vmatpush1.bf16.msra.mxu0 0
        %5862 = vmatprep.subr.bf16.mxu0 0
        %5863 = vmatpush1.bf16.msra.mxu0 %v5834
        %5864 = vmatprep.subr.bf16.mxu0 0
        %5865 = vmatpush2.bf16.msra.mxu0 0
        %5866 = vmatprep.subr.bf16.mxu0 0
        %5867 = vmatpush2.bf16.msra.mxu0 0
        %5868 = vmatprep.subr.bf16.mxu0 0
        %5869 = vmatpush2.bf16.msra.mxu0 0
        %5870 = vmatprep.subr.bf16.mxu0 0
        %5871 = vmatpush2.bf16.msra.mxu0 0
        %5872 = vmatprep.subr.bf16.mxu0 0
        %5873 = vmatpush2.bf16.msra.mxu0 0
        %5874 = vmatprep.subr.bf16.mxu0 0
        %5875 = vmatpush2.bf16.msra.mxu0 0
        %5876 = vmatprep.subr.bf16.mxu0 0
        %5877 = vmatpush2.bf16.msra.mxu0 0
        %5878 = vmatprep.subr.bf16.mxu0 0
        %5879 = vmatpush2.bf16.msra.mxu0 0
        %5880 = vmatprep.mubr.bf16.mxu0 0
        %5881 = vmatmul.mubr.bf16.gmra.mxu0 %v5837
        %v5882 = vpop.f32.mrf.mxu0
        %v5883 = vadd.f32 0.0, %v5882
        %v5884 = vpop.f32.mrf.mxu0
        %v5885 = vpop.f32.mrf.mxu0
        %v5886 = vadd.f32 0.0, %v5885
        %v5887 = vpop.f32.mrf.mxu0
        %5888 = vmatprep.mubr.bf16.mxu0 0
        %5889 = vmatmul.mubr.bf16.gmra.mxu0 %v5840
        %v5890 = vpop.f32.mrf.mxu0
        %v5891 = vadd.f32 0.0, %v5890
        %v5892 = vpop.f32.mrf.mxu0
        %v5893 = vpop.f32.mrf.mxu0
        %v5894 = vadd.f32 0.0, %v5893
        %v5895 = vpop.f32.mrf.mxu0
        %5896 = vmatprep.mubr.bf16.mxu0 0
        %5897 = vmatmul.mubr.bf16.gmra.mxu0 %v5843
        %v5898 = vpop.f32.mrf.mxu0
        %v5899 = vadd.f32 0.0, %v5898
        %v5900 = vpop.f32.mrf.mxu0
        %v5901 = vpop.f32.mrf.mxu0
        %v5902 = vadd.f32 0.0, %v5901
        %v5903 = vpop.f32.mrf.mxu0
        %5904 = vmatprep.mubr.bf16.mxu0 0
        %5905 = vmatmul.mubr.bf16.gmra.mxu0 %v5846
        %v5906 = vpop.f32.mrf.mxu0
        %v5907 = vadd.f32 0.0, %v5906
        %v5908 = vpop.f32.mrf.mxu0
        %v5909 = vpop.f32.mrf.mxu0
        %v5910 = vadd.f32 0.0, %v5909
        %v5911 = vpop.f32.mrf.mxu0
        %5912 = vdwg.mxu0
        %v5913 = vadd.f32 %v5758, %v5883
        %v5914 = vadd.f32 %v5759, %v5886
        %v5915 = vadd.f32 %v5760, %v5891
        %v5916 = vadd.f32 %v5761, %v5894
        %v5917 = vadd.f32 %v5762, %v5899
        %v5918 = vadd.f32 %v5763, %v5902
        %v5919 = vadd.f32 %v5764, %v5907
        %v5920 = vadd.f32 %v5765, %v5910
        %s5921 = scalar_lea.vmem %s5, 32
        %v5922 = vld [vmem:[%s5921] sm:$0xf]
        %v5923 = vld [vmem:[%s5921 + $0x4] sm:$0xf]
        %v5924 = vpack.c.bf16 %v5258, %v5255
        %v5925 = vpack.c.bf16 %v5266, %v5263
        %v5926 = vpack.c.bf16 %v5274, %v5271
        %v5927 = vpack.c.bf16 %v5282, %v5279
        %v5930 = vunpack.c.l.b16 %v5922
        %v5931 = vunpack.c.l.b16 %v5923
        %v5932 = vpack.c.b16 %v5931, %v5930
        %v5935 = vsel %vm5434, %v5924, 0
        %v5938 = vsel %vm5434, %v5925, 0
        %v5941 = vsel %vm5434, %v5926, 0
        %v5944 = vsel %vm5434, %v5927, 0
        %5946 = vmatprep.subr.bf16.mxu0 0
        %5947 = vmatpush1.bf16.msra.mxu0 0
        %5948 = vmatprep.subr.bf16.mxu0 0
        %5949 = vmatpush1.bf16.msra.mxu0 0
        %5950 = vmatprep.subr.bf16.mxu0 0
        %5951 = vmatpush1.bf16.msra.mxu0 0
        %5952 = vmatprep.subr.bf16.mxu0 0
        %5953 = vmatpush1.bf16.msra.mxu0 0
        %5954 = vmatprep.subr.bf16.mxu0 0
        %5955 = vmatpush1.bf16.msra.mxu0 0
        %5956 = vmatprep.subr.bf16.mxu0 0
        %5957 = vmatpush1.bf16.msra.mxu0 0
        %5958 = vmatprep.subr.bf16.mxu0 0
        %5959 = vmatpush1.bf16.msra.mxu0 0
        %5960 = vmatprep.subr.bf16.mxu0 0
        %5961 = vmatpush1.bf16.msra.mxu0 %v5932
        %5962 = vmatprep.subr.bf16.mxu0 0
        %5963 = vmatpush2.bf16.msra.mxu0 0
        %5964 = vmatprep.subr.bf16.mxu0 0
        %5965 = vmatpush2.bf16.msra.mxu0 0
        %5966 = vmatprep.subr.bf16.mxu0 0
        %5967 = vmatpush2.bf16.msra.mxu0 0
        %5968 = vmatprep.subr.bf16.mxu0 0
        %5969 = vmatpush2.bf16.msra.mxu0 0
        %5970 = vmatprep.subr.bf16.mxu0 0
        %5971 = vmatpush2.bf16.msra.mxu0 0
        %5972 = vmatprep.subr.bf16.mxu0 0
        %5973 = vmatpush2.bf16.msra.mxu0 0
        %5974 = vmatprep.subr.bf16.mxu0 0
        %5975 = vmatpush2.bf16.msra.mxu0 0
        %5976 = vmatprep.subr.bf16.mxu0 0
        %5977 = vmatpush2.bf16.msra.mxu0 0
        %5978 = vmatprep.mubr.bf16.mxu0 0
        %5979 = vmatmul.mubr.bf16.gmra.mxu0 %v5935
        %v5980 = vpop.f32.mrf.mxu0
        %v5981 = vadd.f32 0.0, %v5980
        %v5982 = vpop.f32.mrf.mxu0
        %v5983 = vpop.f32.mrf.mxu0
        %v5984 = vadd.f32 0.0, %v5983
        %v5985 = vpop.f32.mrf.mxu0
        %5986 = vmatprep.mubr.bf16.mxu0 0
        %5987 = vmatmul.mubr.bf16.gmra.mxu0 %v5938
        %v5988 = vpop.f32.mrf.mxu0
        %v5989 = vadd.f32 0.0, %v5988
        %v5990 = vpop.f32.mrf.mxu0
        %v5991 = vpop.f32.mrf.mxu0
        %v5992 = vadd.f32 0.0, %v5991
        %v5993 = vpop.f32.mrf.mxu0
        %5994 = vmatprep.mubr.bf16.mxu0 0
        %5995 = vmatmul.mubr.bf16.gmra.mxu0 %v5941
        %v5996 = vpop.f32.mrf.mxu0
        %v5997 = vadd.f32 0.0, %v5996
        %v5998 = vpop.f32.mrf.mxu0
        %v5999 = vpop.f32.mrf.mxu0
        %v6000 = vadd.f32 0.0, %v5999
        %v6001 = vpop.f32.mrf.mxu0
        %6002 = vmatprep.mubr.bf16.mxu0 0
        %6003 = vmatmul.mubr.bf16.gmra.mxu0 %v5944
        %v6004 = vpop.f32.mrf.mxu0
        %v6005 = vadd.f32 0.0, %v6004
        %v6006 = vpop.f32.mrf.mxu0
        %v6007 = vpop.f32.mrf.mxu0
        %v6008 = vadd.f32 0.0, %v6007
        %v6009 = vpop.f32.mrf.mxu0
        %6010 = vdwg.mxu0
        %v6011 = vadd.f32 %v5913, %v5981
        %v6012 = vadd.f32 %v5914, %v5984
        %v6013 = vadd.f32 %v5915, %v5989
        %v6014 = vadd.f32 %v5916, %v5992
        %v6015 = vadd.f32 %v5917, %v5997
        %v6016 = vadd.f32 %v5918, %v6000
        %v6017 = vadd.f32 %v5919, %v6005
        %v6018 = vadd.f32 %v5920, %v6008
        %s6019 = scalar_lea.vmem %s7, 320
        %v6020 = vld [vmem:[%s6019] sm:$0xff]
        %v6021 = vld [vmem:[%s6019 + $0x8] sm:$0xff]
        %v6022 = vld [vmem:[%s6019 + $0x10] sm:$0xff]
        %v6023 = vld [vmem:[%s6019 + $0x18] sm:$0xff]
        %v6024 = vld [vmem:[%s6019 + $0x20] sm:$0xff]
        %v6025 = vld [vmem:[%s6019 + $0x28] sm:$0xff]
        %v6026 = vld [vmem:[%s6019 + $0x30] sm:$0xff]
        %v6027 = vld [vmem:[%s6019 + $0x38] sm:$0xff]
        %6029 = vset.pattern.permute.xlu0 0
        %6030 = vperm.xlu0 %6029, %v6020
        %v6031 = vpop.permute.xlu0 %6030
        %6034 = vset.pattern.permute.xlu0 0
        %6035 = vperm.xlu0 %6034, %v6021
        %v6036 = vpop.permute.xlu0 %6035
        %6039 = vset.pattern.permute.xlu0 0
        %6040 = vperm.xlu0 %6039, %v6022
        %v6041 = vpop.permute.xlu0 %6040
        %6044 = vset.pattern.permute.xlu0 0
        %6045 = vperm.xlu0 %6044, %v6023
        %v6046 = vpop.permute.xlu0 %6045
        %6049 = vset.pattern.permute.xlu0 0
        %6050 = vperm.xlu0 %6049, %v6024
        %v6051 = vpop.permute.xlu0 %6050
        %6054 = vset.pattern.permute.xlu0 0
        %6055 = vperm.xlu0 %6054, %v6025
        %v6056 = vpop.permute.xlu0 %6055
        %6059 = vset.pattern.permute.xlu0 0
        %6060 = vperm.xlu0 %6059, %v6026
        %v6061 = vpop.permute.xlu0 %6060
        %6064 = vset.pattern.permute.xlu0 0
        %6065 = vperm.xlu0 %6064, %v6027
        %v6066 = vpop.permute.xlu0 %6065
        %v6068 = vmul.f32 %v5609, %v6031
        %v6069 = vmul.f32 %v5608, %v6036
        %v6070 = vmul.f32 %v5607, %v6041
        %v6071 = vmul.f32 %v5606, %v6046
        %v6072 = vmul.f32 %v5605, %v6051
        %v6073 = vmul.f32 %v5604, %v6056
        %v6074 = vmul.f32 %v5603, %v6061
        %v6075 = vmul.f32 %v5610, %v6066
        %s6076 = scalar_lea.vmem %s5, 40
        %v6077 = vld [vmem:[%s6076] sm:$0xf]
        %v6078 = vld [vmem:[%s6076 + $0x4] sm:$0xf]
        %v6079 = vpack.c.bf16 %v6069, %v6068
        %v6080 = vpack.c.bf16 %v6071, %v6070
        %v6081 = vpack.c.bf16 %v6073, %v6072
        %v6082 = vpack.c.bf16 %v6075, %v6074
        %v6085 = vunpack.c.l.b16 %v6077
        %v6086 = vunpack.c.l.b16 %v6078
        %v6087 = vpack.c.b16 %v6086, %v6085
        %v6090 = vsel %vm5434, %v6079, 0
        %v6093 = vsel %vm5434, %v6080, 0
        %v6096 = vsel %vm5434, %v6081, 0
        %v6099 = vsel %vm5434, %v6082, 0
        %6101 = vmatprep.subr.bf16.mxu0 0
        %6102 = vmatpush1.bf16.msra.mxu0 0
        %6103 = vmatprep.subr.bf16.mxu0 0
        %6104 = vmatpush1.bf16.msra.mxu0 0
        %6105 = vmatprep.subr.bf16.mxu0 0
        %6106 = vmatpush1.bf16.msra.mxu0 0
        %6107 = vmatprep.subr.bf16.mxu0 0
        %6108 = vmatpush1.bf16.msra.mxu0 0
        %6109 = vmatprep.subr.bf16.mxu0 0
        %6110 = vmatpush1.bf16.msra.mxu0 0
        %6111 = vmatprep.subr.bf16.mxu0 0
        %6112 = vmatpush1.bf16.msra.mxu0 0
        %6113 = vmatprep.subr.bf16.mxu0 0
        %6114 = vmatpush1.bf16.msra.mxu0 0
        %6115 = vmatprep.subr.bf16.mxu0 0
        %6116 = vmatpush1.bf16.msra.mxu0 %v6087
        %6117 = vmatprep.subr.bf16.mxu0 0
        %6118 = vmatpush2.bf16.msra.mxu0 0
        %6119 = vmatprep.subr.bf16.mxu0 0
        %6120 = vmatpush2.bf16.msra.mxu0 0
        %6121 = vmatprep.subr.bf16.mxu0 0
        %6122 = vmatpush2.bf16.msra.mxu0 0
        %6123 = vmatprep.subr.bf16.mxu0 0
        %6124 = vmatpush2.bf16.msra.mxu0 0
        %6125 = vmatprep.subr.bf16.mxu0 0
        %6126 = vmatpush2.bf16.msra.mxu0 0
        %6127 = vmatprep.subr.bf16.mxu0 0
        %6128 = vmatpush2.bf16.msra.mxu0 0
        %6129 = vmatprep.subr.bf16.mxu0 0
        %6130 = vmatpush2.bf16.msra.mxu0 0
        %6131 = vmatprep.subr.bf16.mxu0 0
        %6132 = vmatpush2.bf16.msra.mxu0 0
        %6133 = vmatprep.mubr.bf16.mxu0 0
        %6134 = vmatmul.mubr.bf16.gmra.mxu0 %v6090
        %v6135 = vpop.f32.mrf.mxu0
        %v6136 = vadd.f32 0.0, %v6135
        %v6137 = vpop.f32.mrf.mxu0
        %v6138 = vpop.f32.mrf.mxu0
        %v6139 = vadd.f32 0.0, %v6138
        %v6140 = vpop.f32.mrf.mxu0
        %6141 = vmatprep.mubr.bf16.mxu0 0
        %6142 = vmatmul.mubr.bf16.gmra.mxu0 %v6093
        %v6143 = vpop.f32.mrf.mxu0
        %v6144 = vadd.f32 0.0, %v6143
        %v6145 = vpop.f32.mrf.mxu0
        %v6146 = vpop.f32.mrf.mxu0
        %v6147 = vadd.f32 0.0, %v6146
        %v6148 = vpop.f32.mrf.mxu0
        %6149 = vmatprep.mubr.bf16.mxu0 0
        %6150 = vmatmul.mubr.bf16.gmra.mxu0 %v6096
        %v6151 = vpop.f32.mrf.mxu0
        %v6152 = vadd.f32 0.0, %v6151
        %v6153 = vpop.f32.mrf.mxu0
        %v6154 = vpop.f32.mrf.mxu0
        %v6155 = vadd.f32 0.0, %v6154
        %v6156 = vpop.f32.mrf.mxu0
        %6157 = vmatprep.mubr.bf16.mxu0 0
        %6158 = vmatmul.mubr.bf16.gmra.mxu0 %v6099
        %v6159 = vpop.f32.mrf.mxu0
        %v6160 = vadd.f32 0.0, %v6159
        %v6161 = vpop.f32.mrf.mxu0
        %v6162 = vpop.f32.mrf.mxu0
        %v6163 = vadd.f32 0.0, %v6162
        %v6164 = vpop.f32.mrf.mxu0
        %6165 = vdwg.mxu0
        %v6166 = vadd.f32 %v6011, %v6136
        %v6167 = vadd.f32 %v6012, %v6139
        %v6168 = vadd.f32 %v6013, %v6144
        %v6169 = vadd.f32 %v6014, %v6147
        %v6170 = vadd.f32 %v6015, %v6152
        %v6171 = vadd.f32 %v6016, %v6155
        %v6172 = vadd.f32 %v6017, %v6160
        %v6173 = vadd.f32 %v6018, %v6163
        %s6174 = scalar_lea.vmem %s7, 384
        %v6175 = vld [vmem:[%s6174] sm:$0xff]
        %v6176 = vld [vmem:[%s6174 + $0x8] sm:$0xff]
        %v6177 = vld [vmem:[%s6174 + $0x10] sm:$0xff]
        %v6178 = vld [vmem:[%s6174 + $0x18] sm:$0xff]
        %v6179 = vld [vmem:[%s6174 + $0x20] sm:$0xff]
        %v6180 = vld [vmem:[%s6174 + $0x28] sm:$0xff]
        %v6181 = vld [vmem:[%s6174 + $0x30] sm:$0xff]
        %v6182 = vld [vmem:[%s6174 + $0x38] sm:$0xff]
        %6184 = vset.pattern.permute.xlu0 0
        %6185 = vperm.xlu0 %6184, %v6175
        %v6186 = vpop.permute.xlu0 %6185
        %6189 = vset.pattern.permute.xlu0 0
        %6190 = vperm.xlu0 %6189, %v6176
        %v6191 = vpop.permute.xlu0 %6190
        %6194 = vset.pattern.permute.xlu0 0
        %6195 = vperm.xlu0 %6194, %v6177
        %v6196 = vpop.permute.xlu0 %6195
        %6199 = vset.pattern.permute.xlu0 0
        %6200 = vperm.xlu0 %6199, %v6178
        %v6201 = vpop.permute.xlu0 %6200
        %6204 = vset.pattern.permute.xlu0 0
        %6205 = vperm.xlu0 %6204, %v6179
        %v6206 = vpop.permute.xlu0 %6205
        %6209 = vset.pattern.permute.xlu0 0
        %6210 = vperm.xlu0 %6209, %v6180
        %v6211 = vpop.permute.xlu0 %6210
        %6214 = vset.pattern.permute.xlu0 0
        %6215 = vperm.xlu0 %6214, %v6181
        %v6216 = vpop.permute.xlu0 %6215
        %6219 = vset.pattern.permute.xlu0 0
        %6220 = vperm.xlu0 %6219, %v6182
        %v6221 = vpop.permute.xlu0 %6220
        %v6223 = vmul.f32 %v5300, %v6186
        %v6224 = vmul.f32 %v5299, %v6191
        %v6225 = vmul.f32 %v5298, %v6196
        %v6226 = vmul.f32 %v5297, %v6201
        %v6227 = vmul.f32 %v5296, %v6206
        %v6228 = vmul.f32 %v5295, %v6211
        %v6229 = vmul.f32 %v5294, %v6216
        %v6230 = vmul.f32 %v5301, %v6221
        %s6231 = scalar_lea.vmem %s5, 48
        %v6232 = vld [vmem:[%s6231] sm:$0xf]
        %v6233 = vld [vmem:[%s6231 + $0x4] sm:$0xf]
        %v6234 = vpack.c.bf16 %v6224, %v6223
        %v6235 = vpack.c.bf16 %v6226, %v6225
        %v6236 = vpack.c.bf16 %v6228, %v6227
        %v6237 = vpack.c.bf16 %v6230, %v6229
        %v6240 = vunpack.c.l.b16 %v6232
        %v6241 = vunpack.c.l.b16 %v6233
        %v6242 = vpack.c.b16 %v6241, %v6240
        %v6245 = vsel %vm5434, %v6234, 0
        %v6248 = vsel %vm5434, %v6235, 0
        %v6251 = vsel %vm5434, %v6236, 0
        %v6254 = vsel %vm5434, %v6237, 0
        %6256 = vmatprep.subr.bf16.mxu0 0
        %6257 = vmatpush1.bf16.msra.mxu0 0
        %6258 = vmatprep.subr.bf16.mxu0 0
        %6259 = vmatpush1.bf16.msra.mxu0 0
        %6260 = vmatprep.subr.bf16.mxu0 0
        %6261 = vmatpush1.bf16.msra.mxu0 0
        %6262 = vmatprep.subr.bf16.mxu0 0
        %6263 = vmatpush1.bf16.msra.mxu0 0
        %6264 = vmatprep.subr.bf16.mxu0 0
        %6265 = vmatpush1.bf16.msra.mxu0 0
        %6266 = vmatprep.subr.bf16.mxu0 0
        %6267 = vmatpush1.bf16.msra.mxu0 0
        %6268 = vmatprep.subr.bf16.mxu0 0
        %6269 = vmatpush1.bf16.msra.mxu0 0
        %6270 = vmatprep.subr.bf16.mxu0 0
        %6271 = vmatpush1.bf16.msra.mxu0 %v6242
        %6272 = vmatprep.subr.bf16.mxu0 0
        %6273 = vmatpush2.bf16.msra.mxu0 0
        %6274 = vmatprep.subr.bf16.mxu0 0
        %6275 = vmatpush2.bf16.msra.mxu0 0
        %6276 = vmatprep.subr.bf16.mxu0 0
        %6277 = vmatpush2.bf16.msra.mxu0 0
        %6278 = vmatprep.subr.bf16.mxu0 0
        %6279 = vmatpush2.bf16.msra.mxu0 0
        %6280 = vmatprep.subr.bf16.mxu0 0
        %6281 = vmatpush2.bf16.msra.mxu0 0
        %6282 = vmatprep.subr.bf16.mxu0 0
        %6283 = vmatpush2.bf16.msra.mxu0 0
        %6284 = vmatprep.subr.bf16.mxu0 0
        %6285 = vmatpush2.bf16.msra.mxu0 0
        %6286 = vmatprep.subr.bf16.mxu0 0
        %6287 = vmatpush2.bf16.msra.mxu0 0
        %6288 = vmatprep.mubr.bf16.mxu0 0
        %6289 = vmatmul.mubr.bf16.gmra.mxu0 %v6245
        %v6290 = vpop.f32.mrf.mxu0
        %v6291 = vadd.f32 0.0, %v6290
        %v6292 = vpop.f32.mrf.mxu0
        %v6293 = vpop.f32.mrf.mxu0
        %v6294 = vadd.f32 0.0, %v6293
        %v6295 = vpop.f32.mrf.mxu0
        %6296 = vmatprep.mubr.bf16.mxu0 0
        %6297 = vmatmul.mubr.bf16.gmra.mxu0 %v6248
        %v6298 = vpop.f32.mrf.mxu0
        %v6299 = vadd.f32 0.0, %v6298
        %v6300 = vpop.f32.mrf.mxu0
        %v6301 = vpop.f32.mrf.mxu0
        %v6302 = vadd.f32 0.0, %v6301
        %v6303 = vpop.f32.mrf.mxu0
        %6304 = vmatprep.mubr.bf16.mxu0 0
        %6305 = vmatmul.mubr.bf16.gmra.mxu0 %v6251
        %v6306 = vpop.f32.mrf.mxu0
        %v6307 = vadd.f32 0.0, %v6306
        %v6308 = vpop.f32.mrf.mxu0
        %v6309 = vpop.f32.mrf.mxu0
        %v6310 = vadd.f32 0.0, %v6309
        %v6311 = vpop.f32.mrf.mxu0
        %6312 = vmatprep.mubr.bf16.mxu0 0
        %6313 = vmatmul.mubr.bf16.gmra.mxu0 %v6254
        %v6314 = vpop.f32.mrf.mxu0
        %v6315 = vadd.f32 0.0, %v6314
        %v6316 = vpop.f32.mrf.mxu0
        %v6317 = vpop.f32.mrf.mxu0
        %v6318 = vadd.f32 0.0, %v6317
        %v6319 = vpop.f32.mrf.mxu0
        %6320 = vdwg.mxu0
        %v6321 = vadd.f32 %v6166, %v6291
        %v6322 = vadd.f32 %v6167, %v6294
        %v6323 = vadd.f32 %v6168, %v6299
        %v6324 = vadd.f32 %v6169, %v6302
        %v6325 = vadd.f32 %v6170, %v6307
        %v6326 = vadd.f32 %v6171, %v6310
        %v6327 = vadd.f32 %v6172, %v6315
        %v6328 = vadd.f32 %v6173, %v6318
        %s6329 = scalar_lea.vmem %s7, 448
        %v6330 = vld [vmem:[%s6329] sm:$0xff]
        %v6331 = vld [vmem:[%s6329 + $0x8] sm:$0xff]
        %v6332 = vld [vmem:[%s6329 + $0x10] sm:$0xff]
        %v6333 = vld [vmem:[%s6329 + $0x18] sm:$0xff]
        %v6334 = vld [vmem:[%s6329 + $0x20] sm:$0xff]
        %v6335 = vld [vmem:[%s6329 + $0x28] sm:$0xff]
        %v6336 = vld [vmem:[%s6329 + $0x30] sm:$0xff]
        %v6337 = vld [vmem:[%s6329 + $0x38] sm:$0xff]
        %6339 = vset.pattern.permute.xlu0 0
        %6340 = vperm.xlu0 %6339, %v6330
        %v6341 = vpop.permute.xlu0 %6340
        %6344 = vset.pattern.permute.xlu0 0
        %6345 = vperm.xlu0 %6344, %v6331
        %v6346 = vpop.permute.xlu0 %6345
        %6349 = vset.pattern.permute.xlu0 0
        %6350 = vperm.xlu0 %6349, %v6332
        %v6351 = vpop.permute.xlu0 %6350
        %6354 = vset.pattern.permute.xlu0 0
        %6355 = vperm.xlu0 %6354, %v6333
        %v6356 = vpop.permute.xlu0 %6355
        %6359 = vset.pattern.permute.xlu0 0
        %6360 = vperm.xlu0 %6359, %v6334
        %v6361 = vpop.permute.xlu0 %6360
        %6364 = vset.pattern.permute.xlu0 0
        %6365 = vperm.xlu0 %6364, %v6335
        %v6366 = vpop.permute.xlu0 %6365
        %6369 = vset.pattern.permute.xlu0 0
        %6370 = vperm.xlu0 %6369, %v6336
        %v6371 = vpop.permute.xlu0 %6370
        %6374 = vset.pattern.permute.xlu0 0
        %6375 = vperm.xlu0 %6374, %v6337
        %v6376 = vpop.permute.xlu0 %6375
        %v6378 = vmul.f32 %v5258, %v6341
        %v6379 = vmul.f32 %v5263, %v6346
        %v6380 = vmul.f32 %v5266, %v6351
        %v6381 = vmul.f32 %v5271, %v6356
        %v6382 = vmul.f32 %v5274, %v6361
        %v6383 = vmul.f32 %v5279, %v6366
        %v6384 = vmul.f32 %v5282, %v6371
        %v6385 = vmul.f32 %v5255, %v6376
        %s6386 = scalar_lea.vmem %s5, 56
        %v6387 = vld [vmem:[%s6386] sm:$0xf]
        %v6388 = vld [vmem:[%s6386 + $0x4] sm:$0xf]
        %v6389 = vpack.c.bf16 %v6379, %v6378
        %v6390 = vpack.c.bf16 %v6381, %v6380
        %v6391 = vpack.c.bf16 %v6383, %v6382
        %v6392 = vpack.c.bf16 %v6385, %v6384
        %v6395 = vunpack.c.l.b16 %v6387
        %v6396 = vunpack.c.l.b16 %v6388
        %v6397 = vpack.c.b16 %v6396, %v6395
        %v6400 = vsel %vm5434, %v6389, 0
        %v6403 = vsel %vm5434, %v6390, 0
        %v6406 = vsel %vm5434, %v6391, 0
        %v6409 = vsel %vm5434, %v6392, 0
        %6411 = vmatprep.subr.bf16.mxu0 0
        %6412 = vmatpush1.bf16.msra.mxu0 0
        %6413 = vmatprep.subr.bf16.mxu0 0
        %6414 = vmatpush1.bf16.msra.mxu0 0
        %6415 = vmatprep.subr.bf16.mxu0 0
        %6416 = vmatpush1.bf16.msra.mxu0 0
        %6417 = vmatprep.subr.bf16.mxu0 0
        %6418 = vmatpush1.bf16.msra.mxu0 0
        %6419 = vmatprep.subr.bf16.mxu0 0
        %6420 = vmatpush1.bf16.msra.mxu0 0
        %6421 = vmatprep.subr.bf16.mxu0 0
        %6422 = vmatpush1.bf16.msra.mxu0 0
        %6423 = vmatprep.subr.bf16.mxu0 0
        %6424 = vmatpush1.bf16.msra.mxu0 0
        %6425 = vmatprep.subr.bf16.mxu0 0
        %6426 = vmatpush1.bf16.msra.mxu0 %v6397
        %6427 = vmatprep.subr.bf16.mxu0 0
        %6428 = vmatpush2.bf16.msra.mxu0 0
        %6429 = vmatprep.subr.bf16.mxu0 0
        %6430 = vmatpush2.bf16.msra.mxu0 0
        %6431 = vmatprep.subr.bf16.mxu0 0
        %6432 = vmatpush2.bf16.msra.mxu0 0
        %6433 = vmatprep.subr.bf16.mxu0 0
        %6434 = vmatpush2.bf16.msra.mxu0 0
        %6435 = vmatprep.subr.bf16.mxu0 0
        %6436 = vmatpush2.bf16.msra.mxu0 0
        %6437 = vmatprep.subr.bf16.mxu0 0
        %6438 = vmatpush2.bf16.msra.mxu0 0
        %6439 = vmatprep.subr.bf16.mxu0 0
        %6440 = vmatpush2.bf16.msra.mxu0 0
        %6441 = vmatprep.subr.bf16.mxu0 0
        %6442 = vmatpush2.bf16.msra.mxu0 0
        %6443 = vmatprep.mubr.bf16.mxu0 0
        %6444 = vmatmul.mubr.bf16.gmra.mxu0 %v6400
        %v6445 = vpop.f32.mrf.mxu0
        %v6446 = vadd.f32 0.0, %v6445
        %v6447 = vpop.f32.mrf.mxu0
        %v6448 = vpop.f32.mrf.mxu0
        %v6449 = vadd.f32 0.0, %v6448
        %v6450 = vpop.f32.mrf.mxu0
        %6451 = vmatprep.mubr.bf16.mxu0 0
        %6452 = vmatmul.mubr.bf16.gmra.mxu0 %v6403
        %v6453 = vpop.f32.mrf.mxu0
        %v6454 = vadd.f32 0.0, %v6453
        %v6455 = vpop.f32.mrf.mxu0
        %v6456 = vpop.f32.mrf.mxu0
        %v6457 = vadd.f32 0.0, %v6456
        %v6458 = vpop.f32.mrf.mxu0
        %6459 = vmatprep.mubr.bf16.mxu0 0
        %6460 = vmatmul.mubr.bf16.gmra.mxu0 %v6406
        %v6461 = vpop.f32.mrf.mxu0
        %v6462 = vadd.f32 0.0, %v6461
        %v6463 = vpop.f32.mrf.mxu0
        %v6464 = vpop.f32.mrf.mxu0
        %v6465 = vadd.f32 0.0, %v6464
        %v6466 = vpop.f32.mrf.mxu0
        %6467 = vmatprep.mubr.bf16.mxu0 0
        %6468 = vmatmul.mubr.bf16.gmra.mxu0 %v6409
        %v6469 = vpop.f32.mrf.mxu0
        %v6470 = vadd.f32 0.0, %v6469
        %v6471 = vpop.f32.mrf.mxu0
        %v6472 = vpop.f32.mrf.mxu0
        %v6473 = vadd.f32 0.0, %v6472
        %v6474 = vpop.f32.mrf.mxu0
        %6475 = vdwg.mxu0
        %v6476 = vadd.f32 %v6321, %v6446
        %v6477 = vadd.f32 %v6322, %v6449
        %v6478 = vadd.f32 %v6323, %v6454
        %v6479 = vadd.f32 %v6324, %v6457
        %v6480 = vadd.f32 %v6325, %v6462
        %v6481 = vadd.f32 %v6326, %v6465
        %v6482 = vadd.f32 %v6327, %v6470
        %v6483 = vadd.f32 %v6328, %v6473
        %s6484 = scalar_lea.vmem %s7, 512
        %v6485 = vld [vmem:[%s6484] sm:$0xff]
        %v6486 = vld [vmem:[%s6484 + $0x8] sm:$0xff]
        %v6487 = vld [vmem:[%s6484 + $0x10] sm:$0xff]
        %v6488 = vld [vmem:[%s6484 + $0x18] sm:$0xff]
        %v6489 = vld [vmem:[%s6484 + $0x20] sm:$0xff]
        %v6490 = vld [vmem:[%s6484 + $0x28] sm:$0xff]
        %v6491 = vld [vmem:[%s6484 + $0x30] sm:$0xff]
        %v6492 = vld [vmem:[%s6484 + $0x38] sm:$0xff]
        %6494 = vset.pattern.permute.xlu0 0
        %6495 = vperm.xlu0 %6494, %v6485
        %v6496 = vpop.permute.xlu0 %6495
        %6499 = vset.pattern.permute.xlu0 0
        %6500 = vperm.xlu0 %6499, %v6486
        %v6501 = vpop.permute.xlu0 %6500
        %6504 = vset.pattern.permute.xlu0 0
        %6505 = vperm.xlu0 %6504, %v6487
        %v6506 = vpop.permute.xlu0 %6505
        %6509 = vset.pattern.permute.xlu0 0
        %6510 = vperm.xlu0 %6509, %v6488
        %v6511 = vpop.permute.xlu0 %6510
        %6514 = vset.pattern.permute.xlu0 0
        %6515 = vperm.xlu0 %6514, %v6489
        %v6516 = vpop.permute.xlu0 %6515
        %6519 = vset.pattern.permute.xlu0 0
        %6520 = vperm.xlu0 %6519, %v6490
        %v6521 = vpop.permute.xlu0 %6520
        %6524 = vset.pattern.permute.xlu0 0
        %6525 = vperm.xlu0 %6524, %v6491
        %v6526 = vpop.permute.xlu0 %6525
        %6529 = vset.pattern.permute.xlu0 0
        %6530 = vperm.xlu0 %6529, %v6492
        %v6531 = vpop.permute.xlu0 %6530
        %v6533 = vmul.f32 %v5608, %v6496
        %v6534 = vmul.f32 %v5607, %v6501
        %v6535 = vmul.f32 %v5606, %v6506
        %v6536 = vmul.f32 %v5605, %v6511
        %v6537 = vmul.f32 %v5604, %v6516
        %v6538 = vmul.f32 %v5603, %v6521
        %v6539 = vmul.f32 %v5610, %v6526
        %v6540 = vmul.f32 %v5609, %v6531
        %s6541 = scalar_lea.vmem %s5, 64
        %v6542 = vld [vmem:[%s6541] sm:$0xf]
        %v6543 = vld [vmem:[%s6541 + $0x4] sm:$0xf]
        %v6544 = vpack.c.bf16 %v6534, %v6533
        %v6545 = vpack.c.bf16 %v6536, %v6535
        %v6546 = vpack.c.bf16 %v6538, %v6537
        %v6547 = vpack.c.bf16 %v6540, %v6539
        %v6550 = vunpack.c.l.b16 %v6542
        %v6551 = vunpack.c.l.b16 %v6543
        %v6552 = vpack.c.b16 %v6551, %v6550
        %v6555 = vsel %vm5434, %v6544, 0
        %v6558 = vsel %vm5434, %v6545, 0
        %v6561 = vsel %vm5434, %v6546, 0
        %v6564 = vsel %vm5434, %v6547, 0
        %6566 = vmatprep.subr.bf16.mxu0 0
        %6567 = vmatpush1.bf16.msra.mxu0 0
        %6568 = vmatprep.subr.bf16.mxu0 0
        %6569 = vmatpush1.bf16.msra.mxu0 0
        %6570 = vmatprep.subr.bf16.mxu0 0
        %6571 = vmatpush1.bf16.msra.mxu0 0
        %6572 = vmatprep.subr.bf16.mxu0 0
        %6573 = vmatpush1.bf16.msra.mxu0 0
        %6574 = vmatprep.subr.bf16.mxu0 0
        %6575 = vmatpush1.bf16.msra.mxu0 0
        %6576 = vmatprep.subr.bf16.mxu0 0
        %6577 = vmatpush1.bf16.msra.mxu0 0
        %6578 = vmatprep.subr.bf16.mxu0 0
        %6579 = vmatpush1.bf16.msra.mxu0 0
        %6580 = vmatprep.subr.bf16.mxu0 0
        %6581 = vmatpush1.bf16.msra.mxu0 %v6552
        %6582 = vmatprep.subr.bf16.mxu0 0
        %6583 = vmatpush2.bf16.msra.mxu0 0
        %6584 = vmatprep.subr.bf16.mxu0 0
        %6585 = vmatpush2.bf16.msra.mxu0 0
        %6586 = vmatprep.subr.bf16.mxu0 0
        %6587 = vmatpush2.bf16.msra.mxu0 0
        %6588 = vmatprep.subr.bf16.mxu0 0
        %6589 = vmatpush2.bf16.msra.mxu0 0
        %6590 = vmatprep.subr.bf16.mxu0 0
        %6591 = vmatpush2.bf16.msra.mxu0 0
        %6592 = vmatprep.subr.bf16.mxu0 0
        %6593 = vmatpush2.bf16.msra.mxu0 0
        %6594 = vmatprep.subr.bf16.mxu0 0
        %6595 = vmatpush2.bf16.msra.mxu0 0
        %6596 = vmatprep.subr.bf16.mxu0 0
        %6597 = vmatpush2.bf16.msra.mxu0 0
        %6598 = vmatprep.mubr.bf16.mxu0 0
        %6599 = vmatmul.mubr.bf16.gmra.mxu0 %v6555
        %v6600 = vpop.f32.mrf.mxu0
        %v6601 = vadd.f32 0.0, %v6600
        %v6602 = vpop.f32.mrf.mxu0
        %v6603 = vpop.f32.mrf.mxu0
        %v6604 = vadd.f32 0.0, %v6603
        %v6605 = vpop.f32.mrf.mxu0
        %6606 = vmatprep.mubr.bf16.mxu0 0
        %6607 = vmatmul.mubr.bf16.gmra.mxu0 %v6558
        %v6608 = vpop.f32.mrf.mxu0
        %v6609 = vadd.f32 0.0, %v6608
        %v6610 = vpop.f32.mrf.mxu0
        %v6611 = vpop.f32.mrf.mxu0
        %v6612 = vadd.f32 0.0, %v6611
        %v6613 = vpop.f32.mrf.mxu0
        %6614 = vmatprep.mubr.bf16.mxu0 0
        %6615 = vmatmul.mubr.bf16.gmra.mxu0 %v6561
        %v6616 = vpop.f32.mrf.mxu0
        %v6617 = vadd.f32 0.0, %v6616
        %v6618 = vpop.f32.mrf.mxu0
        %v6619 = vpop.f32.mrf.mxu0
        %v6620 = vadd.f32 0.0, %v6619
        %v6621 = vpop.f32.mrf.mxu0
        %6622 = vmatprep.mubr.bf16.mxu0 0
        %6623 = vmatmul.mubr.bf16.gmra.mxu0 %v6564
        %v6624 = vpop.f32.mrf.mxu0
        %v6625 = vadd.f32 0.0, %v6624
        %v6626 = vpop.f32.mrf.mxu0
        %v6627 = vpop.f32.mrf.mxu0
        %v6628 = vadd.f32 0.0, %v6627
        %v6629 = vpop.f32.mrf.mxu0
        %6630 = vdwg.mxu0
        %v6631 = vadd.f32 %v6476, %v6601
        %v6632 = vadd.f32 %v6477, %v6604
        %v6633 = vadd.f32 %v6478, %v6609
        %v6634 = vadd.f32 %v6479, %v6612
        %v6635 = vadd.f32 %v6480, %v6617
        %v6636 = vadd.f32 %v6481, %v6620
        %v6637 = vadd.f32 %v6482, %v6625
        %v6638 = vadd.f32 %v6483, %v6628
        %v6640 = vlaneseq
        %v6641 = vshrl.u32 %v6640, 7
        %v6642 = vsub.s32 0, %v6641
        %v6643 = vrot.slane %v5285, %v6642
        %v6645 = vadd.f32 %v6631, %v6643
        %v6646 = vadd.f32 %v6632, %v6643
        %v6647 = vadd.f32 %v6633, %v6643
        %v6648 = vadd.f32 %v6634, %v6643
        %v6649 = vadd.f32 %v6635, %v6643
        %v6650 = vadd.f32 %v6636, %v6643
        %v6651 = vadd.f32 %v6637, %v6643
        %v6652 = vadd.f32 %v6638, %v6643
        %v6653 = vmax.f32 %v6645, 0.0
        %v6654 = vmax.f32 %v6646, 0.0
        %v6655 = vmax.f32 %v6647, 0.0
        %v6656 = vmax.f32 %v6648, 0.0
        %v6657 = vmax.f32 %v6649, 0.0
        %v6658 = vmax.f32 %v6650, 0.0
        %v6659 = vmax.f32 %v6651, 0.0
        %v6660 = vmax.f32 %v6652, 0.0
        %v6661 = vrot.slane %v6653, 1
        %v6662 = vrot.slane %v6654, 1
        %v6663 = vrot.slane %v6655, 1
        %v6664 = vrot.slane %v6656, 1
        %v6665 = vrot.slane %v6657, 1
        %v6666 = vrot.slane %v6658, 1
        %v6667 = vrot.slane %v6659, 1
        %v6668 = vrot.slane %v6660, 1
        %v6669 = vsel %vm1741, %v6667, %v6668
        %v6670 = vsel %vm1741, %v6666, %v6667
        %v6671 = vsel %vm1741, %v6665, %v6666
        %v6672 = vsel %vm1741, %v6664, %v6665
        %v6673 = vsel %vm1741, %v6663, %v6664
        %v6674 = vsel %vm1741, %v6662, %v6663
        %v6675 = vsel %vm1741, %v6661, %v6662
        %v6676 = vsel %vm1741, %v6668, %v6661
        %v6677 = vmax.f32 %v6653, %v6675
        %v6678 = vmax.f32 %v6654, %v6674
        %v6679 = vmax.f32 %v6655, %v6673
        %v6680 = vmax.f32 %v6656, %v6672
        %v6681 = vmax.f32 %v6657, %v6671
        %v6682 = vmax.f32 %v6658, %v6670
        %v6683 = vmax.f32 %v6659, %v6669
        %v6684 = vmax.f32 %v6660, %v6676
        %v6685 = vmax.f32 %v6677, %v6678
        %v6686 = vmax.f32 %v6678, %v6679
        %v6687 = vmax.f32 %v6679, %v6680
        %v6688 = vmax.f32 %v6680, %v6681
        %v6689 = vmax.f32 %v6681, %v6682
        %v6690 = vmax.f32 %v6682, %v6683
        %v6691 = vmax.f32 %v6683, %v6684
        %v6692 = vmax.f32 %v6684, %v6677
        %v6693 = vld [vmem:[%s12] sm:$0xf]
        %v6694 = vld [vmem:[%s12 + $0x4] sm:$0xf]
        %v6695 = vpack.c.bf16 %v6686, %v6685
        %v6696 = vpack.c.bf16 %v6688, %v6687
        %v6697 = vpack.c.bf16 %v6690, %v6689
        %v6698 = vpack.c.bf16 %v6692, %v6691
        %v6701 = vunpack.c.l.b16 %v6693
        %v6702 = vunpack.c.l.b16 %v6694
        %v6703 = vpack.c.b16 %v6702, %v6701
        %vm6704 = vcmask 523264
        %v6706 = vsel %vm6704, %v6703, 0
        %6708 = vmatprep.subr.bf16.mxu0 0
        %6709 = vmatpush1.bf16.msra.mxu0 0
        %6710 = vmatprep.subr.bf16.mxu0 0
        %6711 = vmatpush1.bf16.msra.mxu0 0
        %6712 = vmatprep.subr.bf16.mxu0 0
        %6713 = vmatpush1.bf16.msra.mxu0 0
        %6714 = vmatprep.subr.bf16.mxu0 0
        %6715 = vmatpush1.bf16.msra.mxu0 0
        %6716 = vmatprep.subr.bf16.mxu0 0
        %6717 = vmatpush1.bf16.msra.mxu0 %v6698
        %6718 = vmatprep.subr.bf16.mxu0 0
        %6719 = vmatpush1.bf16.msra.mxu0 %v6697
        %6720 = vmatprep.subr.bf16.mxu0 0
        %6721 = vmatpush1.bf16.msra.mxu0 %v6696
        %6722 = vmatprep.subr.bf16.mxu0 0
        %6723 = vmatpush1.bf16.msra.mxu0 %v6695
        %6724 = vmatprep.subr.bf16.mxu0 0
        %6725 = vmatpush2.bf16.msra.mxu0 0
        %6726 = vmatprep.subr.bf16.mxu0 0
        %6727 = vmatpush2.bf16.msra.mxu0 0
        %6728 = vmatprep.subr.bf16.mxu0 0
        %6729 = vmatpush2.bf16.msra.mxu0 0
        %6730 = vmatprep.subr.bf16.mxu0 0
        %6731 = vmatpush2.bf16.msra.mxu0 0
        %6732 = vmatprep.subr.bf16.mxu0 0
        %6733 = vmatpush2.bf16.msra.mxu0 0
        %6734 = vmatprep.subr.bf16.mxu0 0
        %6735 = vmatpush2.bf16.msra.mxu0 0
        %6736 = vmatprep.subr.bf16.mxu0 0
        %6737 = vmatpush2.bf16.msra.mxu0 0
        %6738 = vmatprep.subr.bf16.mxu0 0
        %6739 = vmatpush2.bf16.msra.mxu0 0
        %6740 = vmatprep.mubr.bf16.mxu0 0
        %6741 = vmatmul.mubr.bf16.gmra.mxu0 %v6706
        %v6742 = vpop.f32.mrf.mxu0
        %v6743 = vadd.f32 0.0, %v6742
        %v6744 = vpop.f32.mrf.mxu0
        %v6745 = vpop.f32.mrf.mxu0
        %v6746 = vadd.f32 0.0, %v6745
        %v6747 = vpop.f32.mrf.mxu0
        %6748 = vdwg.mxu0
        %v6749 = vld [vmem:[%s9] sm:$0x1]
        %v6750 = vrot.slane %v6743, 3
        %v6751 = vrot.slane %v6746, 3
        %vm6752 = vcmp.lt.s32.totalorder %v762, 5
        %v6753 = vsel %vm6752, %v6750, %v6751
        %v6754 = vsel %vm6752, %v6751, %v6750
        %v6755 = vld [vmem:[%s10] sm:$0xff]
        %v6756 = vld [vmem:[%s10 + $0x8] sm:$0xff]
        %6758 = vset.pattern.permute.xlu0 0
        %6759 = vperm.xlu0 %6758, %v6755
        %v6760 = vpop.permute.xlu0 %6759
        %6763 = vset.pattern.permute.xlu0 0
        %6764 = vperm.xlu0 %6763, %v6756
        %v6765 = vpop.permute.xlu0 %6764
        %v6767 = vmul.f32 %v6754, %v6760
        %v6768 = vmul.f32 %v6753, %v6765
        %v6769 = vld [vmem:[%s8] sm:$0xf]
        %v6770 = vld [vmem:[%s8 + $0x4] sm:$0xf]
        %v6771 = vld [vmem:[%s8 + $0x8] sm:$0xf]
        %v6772 = vld [vmem:[%s8 + $0xc] sm:$0xf]
        %v6773 = vpack.c.bf16 %v6768, %v6767
        %v6774 = vrot.slane %v6743, 4
        %v6775 = vrot.slane %v6746, 4
        %vm6776 = vcmp.lt.s32.totalorder %v762, 4
        %v6777 = vsel %vm6776, %v6774, %v6775
        %v6778 = vsel %vm6776, %v6775, %v6774
        %s6779 = scalar_lea.vmem %s10, 16
        %v6780 = vld [vmem:[%s6779] sm:$0xff]
        %v6781 = vld [vmem:[%s6779 + $0x8] sm:$0xff]
        %6783 = vset.pattern.permute.xlu0 0
        %6784 = vperm.xlu0 %6783, %v6780
        %v6785 = vpop.permute.xlu0 %6784
        %6788 = vset.pattern.permute.xlu0 0
        %6789 = vperm.xlu0 %6788, %v6781
        %v6790 = vpop.permute.xlu0 %6789
        %v6792 = vmul.f32 %v6778, %v6785
        %v6793 = vmul.f32 %v6777, %v6790
        %s6794 = scalar_lea.vmem %s8, 16
        %v6795 = vld [vmem:[%s6794] sm:$0xf]
        %v6796 = vld [vmem:[%s6794 + $0x4] sm:$0xf]
        %v6797 = vld [vmem:[%s6794 + $0x8] sm:$0xf]
        %v6798 = vld [vmem:[%s6794 + $0xc] sm:$0xf]
        %v6799 = vpack.c.bf16 %v6793, %v6792
        %v6804 = vunpack.c.l.b16 %v6795
        %v6805 = vunpack.c.l.b16 %v6796
        %v6806 = vunpack.c.l.b16 %v6797
        %v6807 = vunpack.c.l.b16 %v6798
        %v6808 = vpack.c.b16 %v6805, %v6804
        %v6809 = vpack.c.b16 %v6807, %v6806
        %vm6812 = vcmask 261120
        %v6814 = vsel %vm6812, %v6799, 0
        %6816 = vmatprep.subr.bf16.mxu0 0
        %6817 = vmatpush1.bf16.msra.mxu0 0
        %6818 = vmatprep.subr.bf16.mxu0 0
        %6819 = vmatpush1.bf16.msra.mxu0 0
        %6820 = vmatprep.subr.bf16.mxu0 0
        %6821 = vmatpush1.bf16.msra.mxu0 0
        %6822 = vmatprep.subr.bf16.mxu0 0
        %6823 = vmatpush1.bf16.msra.mxu0 0
        %6824 = vmatprep.subr.bf16.mxu0 0
        %6825 = vmatpush1.bf16.msra.mxu0 0
        %6826 = vmatprep.subr.bf16.mxu0 0
        %6827 = vmatpush1.bf16.msra.mxu0 0
        %6828 = vmatprep.subr.bf16.mxu0 0
        %6829 = vmatpush1.bf16.msra.mxu0 %v6809
        %6830 = vmatprep.subr.bf16.mxu0 0
        %6831 = vmatpush1.bf16.msra.mxu0 %v6808
        %6832 = vmatprep.subr.bf16.mxu0 0
        %6833 = vmatpush2.bf16.msra.mxu0 0
        %6834 = vmatprep.subr.bf16.mxu0 0
        %6835 = vmatpush2.bf16.msra.mxu0 0
        %6836 = vmatprep.subr.bf16.mxu0 0
        %6837 = vmatpush2.bf16.msra.mxu0 0
        %6838 = vmatprep.subr.bf16.mxu0 0
        %6839 = vmatpush2.bf16.msra.mxu0 0
        %6840 = vmatprep.subr.bf16.mxu0 0
        %6841 = vmatpush2.bf16.msra.mxu0 0
        %6842 = vmatprep.subr.bf16.mxu0 0
        %6843 = vmatpush2.bf16.msra.mxu0 0
        %6844 = vmatprep.subr.bf16.mxu0 0
        %6845 = vmatpush2.bf16.msra.mxu0 0
        %6846 = vmatprep.subr.bf16.mxu0 0
        %6847 = vmatpush2.bf16.msra.mxu0 0
        %6848 = vmatprep.mubr.bf16.mxu0 0
        %6849 = vmatmul.mubr.bf16.gmra.mxu0 %v6814
        %v6850 = vpop.f32.mrf.mxu0
        %v6851 = vadd.f32 0.0, %v6850
        %v6852 = vpop.f32.mrf.mxu0
        %v6853 = vpop.f32.mrf.mxu0
        %v6854 = vadd.f32 0.0, %v6853
        %v6855 = vpop.f32.mrf.mxu0
        %6856 = vdwg.mxu0
        %v6861 = vunpack.c.l.b16 %v6769
        %v6862 = vunpack.c.l.b16 %v6770
        %v6863 = vunpack.c.l.b16 %v6771
        %v6864 = vunpack.c.l.b16 %v6772
        %v6865 = vpack.c.b16 %v6862, %v6861
        %v6866 = vpack.c.b16 %v6864, %v6863
        %v6870 = vsel %vm6812, %v6773, 0
        %6872 = vmatprep.subr.bf16.mxu0 0
        %6873 = vmatpush1.bf16.msra.mxu0 0
        %6874 = vmatprep.subr.bf16.mxu0 0
        %6875 = vmatpush1.bf16.msra.mxu0 0
        %6876 = vmatprep.subr.bf16.mxu0 0
        %6877 = vmatpush1.bf16.msra.mxu0 0
        %6878 = vmatprep.subr.bf16.mxu0 0
        %6879 = vmatpush1.bf16.msra.mxu0 0
        %6880 = vmatprep.subr.bf16.mxu0 0
        %6881 = vmatpush1.bf16.msra.mxu0 0
        %6882 = vmatprep.subr.bf16.mxu0 0
        %6883 = vmatpush1.bf16.msra.mxu0 0
        %6884 = vmatprep.subr.bf16.mxu0 0
        %6885 = vmatpush1.bf16.msra.mxu0 %v6866
        %6886 = vmatprep.subr.bf16.mxu0 0
        %6887 = vmatpush1.bf16.msra.mxu0 %v6865
        %6888 = vmatprep.subr.bf16.mxu0 0
        %6889 = vmatpush2.bf16.msra.mxu0 0
        %6890 = vmatprep.subr.bf16.mxu0 0
        %6891 = vmatpush2.bf16.msra.mxu0 0
        %6892 = vmatprep.subr.bf16.mxu0 0
        %6893 = vmatpush2.bf16.msra.mxu0 0
        %6894 = vmatprep.subr.bf16.mxu0 0
        %6895 = vmatpush2.bf16.msra.mxu0 0
        %6896 = vmatprep.subr.bf16.mxu0 0
        %6897 = vmatpush2.bf16.msra.mxu0 0
        %6898 = vmatprep.subr.bf16.mxu0 0
        %6899 = vmatpush2.bf16.msra.mxu0 0
        %6900 = vmatprep.subr.bf16.mxu0 0
        %6901 = vmatpush2.bf16.msra.mxu0 0
        %6902 = vmatprep.subr.bf16.mxu0 0
        %6903 = vmatpush2.bf16.msra.mxu0 0
        %6904 = vmatprep.mubr.bf16.mxu0 0
        %6905 = vmatmul.mubr.bf16.gmra.mxu0 %v6870
        %v6906 = vpop.f32.mrf.mxu0
        %v6907 = vadd.f32 %v6851, %v6906
        %v6908 = vpop.f32.mrf.mxu0
        %v6909 = vpop.f32.mrf.mxu0
        %v6910 = vadd.f32 %v6854, %v6909
        %v6911 = vpop.f32.mrf.mxu0
        %6912 = vdwg.mxu0
        %v6913 = vrot.slane %v6743, 5
        %v6914 = vrot.slane %v6746, 5
        %vm6915 = vcmp.lt.s32.totalorder %v762, 3
        %v6916 = vsel %vm6915, %v6913, %v6914
        %v6917 = vsel %vm6915, %v6914, %v6913
        %s6918 = scalar_lea.vmem %s10, 32
        %v6919 = vld [vmem:[%s6918] sm:$0xff]
        %v6920 = vld [vmem:[%s6918 + $0x8] sm:$0xff]
        %6922 = vset.pattern.permute.xlu0 0
        %6923 = vperm.xlu0 %6922, %v6919
        %v6924 = vpop.permute.xlu0 %6923
        %6927 = vset.pattern.permute.xlu0 0
        %6928 = vperm.xlu0 %6927, %v6920
        %v6929 = vpop.permute.xlu0 %6928
        %v6931 = vmul.f32 %v6917, %v6924
        %v6932 = vmul.f32 %v6916, %v6929
        %s6933 = scalar_lea.vmem %s8, 32
        %v6934 = vld [vmem:[%s6933] sm:$0xf]
        %v6935 = vld [vmem:[%s6933 + $0x4] sm:$0xf]
        %v6936 = vld [vmem:[%s6933 + $0x8] sm:$0xf]
        %v6937 = vld [vmem:[%s6933 + $0xc] sm:$0xf]
        %v6938 = vpack.c.bf16 %v6932, %v6931
        %v6943 = vunpack.c.l.b16 %v6934
        %v6944 = vunpack.c.l.b16 %v6935
        %v6945 = vunpack.c.l.b16 %v6936
        %v6946 = vunpack.c.l.b16 %v6937
        %v6947 = vpack.c.b16 %v6944, %v6943
        %v6948 = vpack.c.b16 %v6946, %v6945
        %v6952 = vsel %vm6812, %v6938, 0
        %6954 = vmatprep.subr.bf16.mxu0 0
        %6955 = vmatpush1.bf16.msra.mxu0 0
        %6956 = vmatprep.subr.bf16.mxu0 0
        %6957 = vmatpush1.bf16.msra.mxu0 0
        %6958 = vmatprep.subr.bf16.mxu0 0
        %6959 = vmatpush1.bf16.msra.mxu0 0
        %6960 = vmatprep.subr.bf16.mxu0 0
        %6961 = vmatpush1.bf16.msra.mxu0 0
        %6962 = vmatprep.subr.bf16.mxu0 0
        %6963 = vmatpush1.bf16.msra.mxu0 0
        %6964 = vmatprep.subr.bf16.mxu0 0
        %6965 = vmatpush1.bf16.msra.mxu0 0
        %6966 = vmatprep.subr.bf16.mxu0 0
        %6967 = vmatpush1.bf16.msra.mxu0 %v6948
        %6968 = vmatprep.subr.bf16.mxu0 0
        %6969 = vmatpush1.bf16.msra.mxu0 %v6947
        %6970 = vmatprep.subr.bf16.mxu0 0
        %6971 = vmatpush2.bf16.msra.mxu0 0
        %6972 = vmatprep.subr.bf16.mxu0 0
        %6973 = vmatpush2.bf16.msra.mxu0 0
        %6974 = vmatprep.subr.bf16.mxu0 0
        %6975 = vmatpush2.bf16.msra.mxu0 0
        %6976 = vmatprep.subr.bf16.mxu0 0
        %6977 = vmatpush2.bf16.msra.mxu0 0
        %6978 = vmatprep.subr.bf16.mxu0 0
        %6979 = vmatpush2.bf16.msra.mxu0 0
        %6980 = vmatprep.subr.bf16.mxu0 0
        %6981 = vmatpush2.bf16.msra.mxu0 0
        %6982 = vmatprep.subr.bf16.mxu0 0
        %6983 = vmatpush2.bf16.msra.mxu0 0
        %6984 = vmatprep.subr.bf16.mxu0 0
        %6985 = vmatpush2.bf16.msra.mxu0 0
        %6986 = vmatprep.mubr.bf16.mxu0 0
        %6987 = vmatmul.mubr.bf16.gmra.mxu0 %v6952
        %v6988 = vpop.f32.mrf.mxu0
        %v6989 = vadd.f32 0.0, %v6988
        %v6990 = vpop.f32.mrf.mxu0
        %v6991 = vpop.f32.mrf.mxu0
        %v6992 = vadd.f32 0.0, %v6991
        %v6993 = vpop.f32.mrf.mxu0
        %6994 = vdwg.mxu0
        %v6995 = vadd.f32 %v6907, %v6989
        %v6996 = vadd.f32 %v6910, %v6992
        %v6997 = vrot.slane %v6743, 7
        %v6998 = vrot.slane %v6746, 7
        %v6999 = vsel %vm763, %v6997, %v6998
        %v7000 = vsel %vm763, %v6998, %v6997
        %s7001 = scalar_lea.vmem %s10, 48
        %v7002 = vld [vmem:[%s7001] sm:$0xff]
        %v7003 = vld [vmem:[%s7001 + $0x8] sm:$0xff]
        %7005 = vset.pattern.permute.xlu0 0
        %7006 = vperm.xlu0 %7005, %v7002
        %v7007 = vpop.permute.xlu0 %7006
        %7010 = vset.pattern.permute.xlu0 0
        %7011 = vperm.xlu0 %7010, %v7003
        %v7012 = vpop.permute.xlu0 %7011
        %v7014 = vmul.f32 %v7000, %v7007
        %v7015 = vmul.f32 %v6999, %v7012
        %s7016 = scalar_lea.vmem %s8, 48
        %v7017 = vld [vmem:[%s7016] sm:$0xf]
        %v7018 = vld [vmem:[%s7016 + $0x4] sm:$0xf]
        %v7019 = vld [vmem:[%s7016 + $0x8] sm:$0xf]
        %v7020 = vld [vmem:[%s7016 + $0xc] sm:$0xf]
        %v7021 = vpack.c.bf16 %v7015, %v7014
        %v7026 = vunpack.c.l.b16 %v7017
        %v7027 = vunpack.c.l.b16 %v7018
        %v7028 = vunpack.c.l.b16 %v7019
        %v7029 = vunpack.c.l.b16 %v7020
        %v7030 = vpack.c.b16 %v7027, %v7026
        %v7031 = vpack.c.b16 %v7029, %v7028
        %v7035 = vsel %vm6812, %v7021, 0
        %7037 = vmatprep.subr.bf16.mxu0 0
        %7038 = vmatpush1.bf16.msra.mxu0 0
        %7039 = vmatprep.subr.bf16.mxu0 0
        %7040 = vmatpush1.bf16.msra.mxu0 0
        %7041 = vmatprep.subr.bf16.mxu0 0
        %7042 = vmatpush1.bf16.msra.mxu0 0
        %7043 = vmatprep.subr.bf16.mxu0 0
        %7044 = vmatpush1.bf16.msra.mxu0 0
        %7045 = vmatprep.subr.bf16.mxu0 0
        %7046 = vmatpush1.bf16.msra.mxu0 0
        %7047 = vmatprep.subr.bf16.mxu0 0
        %7048 = vmatpush1.bf16.msra.mxu0 0
        %7049 = vmatprep.subr.bf16.mxu0 0
        %7050 = vmatpush1.bf16.msra.mxu0 %v7031
        %7051 = vmatprep.subr.bf16.mxu0 0
        %7052 = vmatpush1.bf16.msra.mxu0 %v7030
        %7053 = vmatprep.subr.bf16.mxu0 0
        %7054 = vmatpush2.bf16.msra.mxu0 0
        %7055 = vmatprep.subr.bf16.mxu0 0
        %7056 = vmatpush2.bf16.msra.mxu0 0
        %7057 = vmatprep.subr.bf16.mxu0 0
        %7058 = vmatpush2.bf16.msra.mxu0 0
        %7059 = vmatprep.subr.bf16.mxu0 0
        %7060 = vmatpush2.bf16.msra.mxu0 0
        %7061 = vmatprep.subr.bf16.mxu0 0
        %7062 = vmatpush2.bf16.msra.mxu0 0
        %7063 = vmatprep.subr.bf16.mxu0 0
        %7064 = vmatpush2.bf16.msra.mxu0 0
        %7065 = vmatprep.subr.bf16.mxu0 0
        %7066 = vmatpush2.bf16.msra.mxu0 0
        %7067 = vmatprep.subr.bf16.mxu0 0
        %7068 = vmatpush2.bf16.msra.mxu0 0
        %7069 = vmatprep.mubr.bf16.mxu0 0
        %7070 = vmatmul.mubr.bf16.gmra.mxu0 %v7035
        %v7071 = vpop.f32.mrf.mxu0
        %v7072 = vadd.f32 0.0, %v7071
        %v7073 = vpop.f32.mrf.mxu0
        %v7074 = vpop.f32.mrf.mxu0
        %v7075 = vadd.f32 0.0, %v7074
        %v7076 = vpop.f32.mrf.mxu0
        %7077 = vdwg.mxu0
        %v7078 = vadd.f32 %v6995, %v7072
        %v7079 = vadd.f32 %v6996, %v7075
        %s7080 = scalar_lea.vmem %s8, 64
        %v7081 = vld [vmem:[%s7080] sm:$0xf]
        %v7082 = vld [vmem:[%s7080 + $0x4] sm:$0xf]
        %v7083 = vld [vmem:[%s7080 + $0x8] sm:$0xf]
        %v7084 = vld [vmem:[%s7080 + $0xc] sm:$0xf]
        %v7085 = vpack.c.bf16 %v6746, %v6743
        %v7090 = vunpack.c.l.b16 %v7081
        %v7091 = vunpack.c.l.b16 %v7082
        %v7092 = vunpack.c.l.b16 %v7083
        %v7093 = vunpack.c.l.b16 %v7084
        %v7094 = vpack.c.b16 %v7091, %v7090
        %v7095 = vpack.c.b16 %v7093, %v7092
        %v7099 = vsel %vm6812, %v7085, 0
        %7101 = vmatprep.subr.bf16.mxu0 0
        %7102 = vmatpush1.bf16.msra.mxu0 0
        %7103 = vmatprep.subr.bf16.mxu0 0
        %7104 = vmatpush1.bf16.msra.mxu0 0
        %7105 = vmatprep.subr.bf16.mxu0 0
        %7106 = vmatpush1.bf16.msra.mxu0 0
        %7107 = vmatprep.subr.bf16.mxu0 0
        %7108 = vmatpush1.bf16.msra.mxu0 0
        %7109 = vmatprep.subr.bf16.mxu0 0
        %7110 = vmatpush1.bf16.msra.mxu0 0
        %7111 = vmatprep.subr.bf16.mxu0 0
        %7112 = vmatpush1.bf16.msra.mxu0 0
        %7113 = vmatprep.subr.bf16.mxu0 0
        %7114 = vmatpush1.bf16.msra.mxu0 %v7095
        %7115 = vmatprep.subr.bf16.mxu0 0
        %7116 = vmatpush1.bf16.msra.mxu0 %v7094
        %7117 = vmatprep.subr.bf16.mxu0 0
        %7118 = vmatpush2.bf16.msra.mxu0 0
        %7119 = vmatprep.subr.bf16.mxu0 0
        %7120 = vmatpush2.bf16.msra.mxu0 0
        %7121 = vmatprep.subr.bf16.mxu0 0
        %7122 = vmatpush2.bf16.msra.mxu0 0
        %7123 = vmatprep.subr.bf16.mxu0 0
        %7124 = vmatpush2.bf16.msra.mxu0 0
        %7125 = vmatprep.subr.bf16.mxu0 0
        %7126 = vmatpush2.bf16.msra.mxu0 0
        %7127 = vmatprep.subr.bf16.mxu0 0
        %7128 = vmatpush2.bf16.msra.mxu0 0
        %7129 = vmatprep.subr.bf16.mxu0 0
        %7130 = vmatpush2.bf16.msra.mxu0 0
        %7131 = vmatprep.subr.bf16.mxu0 0
        %7132 = vmatpush2.bf16.msra.mxu0 0
        %7133 = vmatprep.mubr.bf16.mxu0 0
        %7134 = vmatmul.mubr.bf16.gmra.mxu0 %v7099
        %v7135 = vpop.f32.mrf.mxu0
        %v7136 = vadd.f32 0.0, %v7135
        %v7137 = vpop.f32.mrf.mxu0
        %v7138 = vpop.f32.mrf.mxu0
        %v7139 = vadd.f32 0.0, %v7138
        %v7140 = vpop.f32.mrf.mxu0
        %7141 = vdwg.mxu0
        %v7142 = vadd.f32 %v7078, %v7136
        %v7143 = vadd.f32 %v7079, %v7139
        %v7144 = vrot.slane %v6743, 1
        %v7145 = vrot.slane %v6746, 1
        %v7146 = vsel %vm1741, %v7144, %v7145
        %v7147 = vsel %vm1741, %v7145, %v7144
        %s7148 = scalar_lea.vmem %s10, 80
        %v7149 = vld [vmem:[%s7148] sm:$0xff]
        %v7150 = vld [vmem:[%s7148 + $0x8] sm:$0xff]
        %7152 = vset.pattern.permute.xlu0 0
        %7153 = vperm.xlu0 %7152, %v7149
        %v7154 = vpop.permute.xlu0 %7153
        %7157 = vset.pattern.permute.xlu0 0
        %7158 = vperm.xlu0 %7157, %v7150
        %v7159 = vpop.permute.xlu0 %7158
        %v7161 = vmul.f32 %v7146, %v7154
        %v7162 = vmul.f32 %v7147, %v7159
        %s7163 = scalar_lea.vmem %s8, 80
        %v7164 = vld [vmem:[%s7163] sm:$0xf]
        %v7165 = vld [vmem:[%s7163 + $0x4] sm:$0xf]
        %v7166 = vld [vmem:[%s7163 + $0x8] sm:$0xf]
        %v7167 = vld [vmem:[%s7163 + $0xc] sm:$0xf]
        %v7168 = vpack.c.bf16 %v7162, %v7161
        %v7173 = vunpack.c.l.b16 %v7164
        %v7174 = vunpack.c.l.b16 %v7165
        %v7175 = vunpack.c.l.b16 %v7166
        %v7176 = vunpack.c.l.b16 %v7167
        %v7177 = vpack.c.b16 %v7174, %v7173
        %v7178 = vpack.c.b16 %v7176, %v7175
        %v7182 = vsel %vm6812, %v7168, 0
        %7184 = vmatprep.subr.bf16.mxu0 0
        %7185 = vmatpush1.bf16.msra.mxu0 0
        %7186 = vmatprep.subr.bf16.mxu0 0
        %7187 = vmatpush1.bf16.msra.mxu0 0
        %7188 = vmatprep.subr.bf16.mxu0 0
        %7189 = vmatpush1.bf16.msra.mxu0 0
        %7190 = vmatprep.subr.bf16.mxu0 0
        %7191 = vmatpush1.bf16.msra.mxu0 0
        %7192 = vmatprep.subr.bf16.mxu0 0
        %7193 = vmatpush1.bf16.msra.mxu0 0
        %7194 = vmatprep.subr.bf16.mxu0 0
        %7195 = vmatpush1.bf16.msra.mxu0 0
        %7196 = vmatprep.subr.bf16.mxu0 0
        %7197 = vmatpush1.bf16.msra.mxu0 %v7178
        %7198 = vmatprep.subr.bf16.mxu0 0
        %7199 = vmatpush1.bf16.msra.mxu0 %v7177
        %7200 = vmatprep.subr.bf16.mxu0 0
        %7201 = vmatpush2.bf16.msra.mxu0 0
        %7202 = vmatprep.subr.bf16.mxu0 0
        %7203 = vmatpush2.bf16.msra.mxu0 0
        %7204 = vmatprep.subr.bf16.mxu0 0
        %7205 = vmatpush2.bf16.msra.mxu0 0
        %7206 = vmatprep.subr.bf16.mxu0 0
        %7207 = vmatpush2.bf16.msra.mxu0 0
        %7208 = vmatprep.subr.bf16.mxu0 0
        %7209 = vmatpush2.bf16.msra.mxu0 0
        %7210 = vmatprep.subr.bf16.mxu0 0
        %7211 = vmatpush2.bf16.msra.mxu0 0
        %7212 = vmatprep.subr.bf16.mxu0 0
        %7213 = vmatpush2.bf16.msra.mxu0 0
        %7214 = vmatprep.subr.bf16.mxu0 0
        %7215 = vmatpush2.bf16.msra.mxu0 0
        %7216 = vmatprep.mubr.bf16.mxu0 0
        %7217 = vmatmul.mubr.bf16.gmra.mxu0 %v7182
        %v7218 = vpop.f32.mrf.mxu0
        %v7219 = vadd.f32 0.0, %v7218
        %v7220 = vpop.f32.mrf.mxu0
        %v7221 = vpop.f32.mrf.mxu0
        %v7222 = vadd.f32 0.0, %v7221
        %v7223 = vpop.f32.mrf.mxu0
        %7224 = vdwg.mxu0
        %v7225 = vadd.f32 %v7142, %v7219
        %v7226 = vadd.f32 %v7143, %v7222
        %s7227 = scalar_lea.vmem %s10, 96
        %v7228 = vld [vmem:[%s7227] sm:$0xff]
        %v7229 = vld [vmem:[%s7227 + $0x8] sm:$0xff]
        %7231 = vset.pattern.permute.xlu0 0
        %7232 = vperm.xlu0 %7231, %v7228
        %v7233 = vpop.permute.xlu0 %7232
        %7236 = vset.pattern.permute.xlu0 0
        %7237 = vperm.xlu0 %7236, %v7229
        %v7238 = vpop.permute.xlu0 %7237
        %v7240 = vmul.f32 %v6753, %v7233
        %v7241 = vmul.f32 %v6754, %v7238
        %s7242 = scalar_lea.vmem %s8, 96
        %v7243 = vld [vmem:[%s7242] sm:$0xf]
        %v7244 = vld [vmem:[%s7242 + $0x4] sm:$0xf]
        %v7245 = vld [vmem:[%s7242 + $0x8] sm:$0xf]
        %v7246 = vld [vmem:[%s7242 + $0xc] sm:$0xf]
        %v7247 = vpack.c.bf16 %v7241, %v7240
        %v7252 = vunpack.c.l.b16 %v7243
        %v7253 = vunpack.c.l.b16 %v7244
        %v7254 = vunpack.c.l.b16 %v7245
        %v7255 = vunpack.c.l.b16 %v7246
        %v7256 = vpack.c.b16 %v7253, %v7252
        %v7257 = vpack.c.b16 %v7255, %v7254
        %v7261 = vsel %vm6812, %v7247, 0
        %7263 = vmatprep.subr.bf16.mxu0 0
        %7264 = vmatpush1.bf16.msra.mxu0 0
        %7265 = vmatprep.subr.bf16.mxu0 0
        %7266 = vmatpush1.bf16.msra.mxu0 0
        %7267 = vmatprep.subr.bf16.mxu0 0
        %7268 = vmatpush1.bf16.msra.mxu0 0
        %7269 = vmatprep.subr.bf16.mxu0 0
        %7270 = vmatpush1.bf16.msra.mxu0 0
        %7271 = vmatprep.subr.bf16.mxu0 0
        %7272 = vmatpush1.bf16.msra.mxu0 0
        %7273 = vmatprep.subr.bf16.mxu0 0
        %7274 = vmatpush1.bf16.msra.mxu0 0
        %7275 = vmatprep.subr.bf16.mxu0 0
        %7276 = vmatpush1.bf16.msra.mxu0 %v7257
        %7277 = vmatprep.subr.bf16.mxu0 0
        %7278 = vmatpush1.bf16.msra.mxu0 %v7256
        %7279 = vmatprep.subr.bf16.mxu0 0
        %7280 = vmatpush2.bf16.msra.mxu0 0
        %7281 = vmatprep.subr.bf16.mxu0 0
        %7282 = vmatpush2.bf16.msra.mxu0 0
        %7283 = vmatprep.subr.bf16.mxu0 0
        %7284 = vmatpush2.bf16.msra.mxu0 0
        %7285 = vmatprep.subr.bf16.mxu0 0
        %7286 = vmatpush2.bf16.msra.mxu0 0
        %7287 = vmatprep.subr.bf16.mxu0 0
        %7288 = vmatpush2.bf16.msra.mxu0 0
        %7289 = vmatprep.subr.bf16.mxu0 0
        %7290 = vmatpush2.bf16.msra.mxu0 0
        %7291 = vmatprep.subr.bf16.mxu0 0
        %7292 = vmatpush2.bf16.msra.mxu0 0
        %7293 = vmatprep.subr.bf16.mxu0 0
        %7294 = vmatpush2.bf16.msra.mxu0 0
        %7295 = vmatprep.mubr.bf16.mxu0 0
        %7296 = vmatmul.mubr.bf16.gmra.mxu0 %v7261
        %v7297 = vpop.f32.mrf.mxu0
        %v7298 = vadd.f32 0.0, %v7297
        %v7299 = vpop.f32.mrf.mxu0
        %v7300 = vpop.f32.mrf.mxu0
        %v7301 = vadd.f32 0.0, %v7300
        %v7302 = vpop.f32.mrf.mxu0
        %7303 = vdwg.mxu0
        %v7304 = vadd.f32 %v7225, %v7298
        %v7305 = vadd.f32 %v7226, %v7301
        %s7306 = scalar_lea.vmem %s10, 112
        %v7307 = vld [vmem:[%s7306] sm:$0xff]
        %v7308 = vld [vmem:[%s7306 + $0x8] sm:$0xff]
        %7310 = vset.pattern.permute.xlu0 0
        %7311 = vperm.xlu0 %7310, %v7307
        %v7312 = vpop.permute.xlu0 %7311
        %7315 = vset.pattern.permute.xlu0 0
        %7316 = vperm.xlu0 %7315, %v7308
        %v7317 = vpop.permute.xlu0 %7316
        %v7319 = vmul.f32 %v6777, %v7312
        %v7320 = vmul.f32 %v6778, %v7317
        %s7321 = scalar_lea.vmem %s8, 112
        %v7322 = vld [vmem:[%s7321] sm:$0xf]
        %v7323 = vld [vmem:[%s7321 + $0x4] sm:$0xf]
        %v7324 = vld [vmem:[%s7321 + $0x8] sm:$0xf]
        %v7325 = vld [vmem:[%s7321 + $0xc] sm:$0xf]
        %v7326 = vpack.c.bf16 %v7320, %v7319
        %v7331 = vunpack.c.l.b16 %v7322
        %v7332 = vunpack.c.l.b16 %v7323
        %v7333 = vunpack.c.l.b16 %v7324
        %v7334 = vunpack.c.l.b16 %v7325
        %v7335 = vpack.c.b16 %v7332, %v7331
        %v7336 = vpack.c.b16 %v7334, %v7333
        %v7340 = vsel %vm6812, %v7326, 0
        %7342 = vmatprep.subr.bf16.mxu0 0
        %7343 = vmatpush1.bf16.msra.mxu0 0
        %7344 = vmatprep.subr.bf16.mxu0 0
        %7345 = vmatpush1.bf16.msra.mxu0 0
        %7346 = vmatprep.subr.bf16.mxu0 0
        %7347 = vmatpush1.bf16.msra.mxu0 0
        %7348 = vmatprep.subr.bf16.mxu0 0
        %7349 = vmatpush1.bf16.msra.mxu0 0
        %7350 = vmatprep.subr.bf16.mxu0 0
        %7351 = vmatpush1.bf16.msra.mxu0 0
        %7352 = vmatprep.subr.bf16.mxu0 0
        %7353 = vmatpush1.bf16.msra.mxu0 0
        %7354 = vmatprep.subr.bf16.mxu0 0
        %7355 = vmatpush1.bf16.msra.mxu0 %v7336
        %7356 = vmatprep.subr.bf16.mxu0 0
        %7357 = vmatpush1.bf16.msra.mxu0 %v7335
        %7358 = vmatprep.subr.bf16.mxu0 0
        %7359 = vmatpush2.bf16.msra.mxu0 0
        %7360 = vmatprep.subr.bf16.mxu0 0
        %7361 = vmatpush2.bf16.msra.mxu0 0
        %7362 = vmatprep.subr.bf16.mxu0 0
        %7363 = vmatpush2.bf16.msra.mxu0 0
        %7364 = vmatprep.subr.bf16.mxu0 0
        %7365 = vmatpush2.bf16.msra.mxu0 0
        %7366 = vmatprep.subr.bf16.mxu0 0
        %7367 = vmatpush2.bf16.msra.mxu0 0
        %7368 = vmatprep.subr.bf16.mxu0 0
        %7369 = vmatpush2.bf16.msra.mxu0 0
        %7370 = vmatprep.subr.bf16.mxu0 0
        %7371 = vmatpush2.bf16.msra.mxu0 0
        %7372 = vmatprep.subr.bf16.mxu0 0
        %7373 = vmatpush2.bf16.msra.mxu0 0
        %7374 = vmatprep.mubr.bf16.mxu0 0
        %7375 = vmatmul.mubr.bf16.gmra.mxu0 %v7340
        %v7376 = vpop.f32.mrf.mxu0
        %v7377 = vadd.f32 0.0, %v7376
        %v7378 = vpop.f32.mrf.mxu0
        %v7379 = vpop.f32.mrf.mxu0
        %v7380 = vadd.f32 0.0, %v7379
        %v7381 = vpop.f32.mrf.mxu0
        %7382 = vdwg.mxu0
        %v7383 = vadd.f32 %v7304, %v7377
        %v7384 = vadd.f32 %v7305, %v7380
        %s7385 = scalar_lea.vmem %s10, 128
        %v7386 = vld [vmem:[%s7385] sm:$0xff]
        %v7387 = vld [vmem:[%s7385 + $0x8] sm:$0xff]
        %7389 = vset.pattern.permute.xlu0 0
        %7390 = vperm.xlu0 %7389, %v7386
        %v7391 = vpop.permute.xlu0 %7390
        %7394 = vset.pattern.permute.xlu0 0
        %7395 = vperm.xlu0 %7394, %v7387
        %v7396 = vpop.permute.xlu0 %7395
        %v7398 = vmul.f32 %v6916, %v7391
        %v7399 = vmul.f32 %v6917, %v7396
        %s7400 = scalar_lea.vmem %s8, 128
        %v7401 = vld [vmem:[%s7400] sm:$0xf]
        %v7402 = vld [vmem:[%s7400 + $0x4] sm:$0xf]
        %v7403 = vld [vmem:[%s7400 + $0x8] sm:$0xf]
        %v7404 = vld [vmem:[%s7400 + $0xc] sm:$0xf]
        %v7405 = vpack.c.bf16 %v7399, %v7398
        %v7410 = vunpack.c.l.b16 %v7401
        %v7411 = vunpack.c.l.b16 %v7402
        %v7412 = vunpack.c.l.b16 %v7403
        %v7413 = vunpack.c.l.b16 %v7404
        %v7414 = vpack.c.b16 %v7411, %v7410
        %v7415 = vpack.c.b16 %v7413, %v7412
        %v7419 = vsel %vm6812, %v7405, 0
        %7421 = vmatprep.subr.bf16.mxu0 0
        %7422 = vmatpush1.bf16.msra.mxu0 0
        %7423 = vmatprep.subr.bf16.mxu0 0
        %7424 = vmatpush1.bf16.msra.mxu0 0
        %7425 = vmatprep.subr.bf16.mxu0 0
        %7426 = vmatpush1.bf16.msra.mxu0 0
        %7427 = vmatprep.subr.bf16.mxu0 0
        %7428 = vmatpush1.bf16.msra.mxu0 0
        %7429 = vmatprep.subr.bf16.mxu0 0
        %7430 = vmatpush1.bf16.msra.mxu0 0
        %7431 = vmatprep.subr.bf16.mxu0 0
        %7432 = vmatpush1.bf16.msra.mxu0 0
        %7433 = vmatprep.subr.bf16.mxu0 0
        %7434 = vmatpush1.bf16.msra.mxu0 %v7415
        %7435 = vmatprep.subr.bf16.mxu0 0
        %7436 = vmatpush1.bf16.msra.mxu0 %v7414
        %7437 = vmatprep.subr.bf16.mxu0 0
        %7438 = vmatpush2.bf16.msra.mxu0 0
        %7439 = vmatprep.subr.bf16.mxu0 0
        %7440 = vmatpush2.bf16.msra.mxu0 0
        %7441 = vmatprep.subr.bf16.mxu0 0
        %7442 = vmatpush2.bf16.msra.mxu0 0
        %7443 = vmatprep.subr.bf16.mxu0 0
        %7444 = vmatpush2.bf16.msra.mxu0 0
        %7445 = vmatprep.subr.bf16.mxu0 0
        %7446 = vmatpush2.bf16.msra.mxu0 0
        %7447 = vmatprep.subr.bf16.mxu0 0
        %7448 = vmatpush2.bf16.msra.mxu0 0
        %7449 = vmatprep.subr.bf16.mxu0 0
        %7450 = vmatpush2.bf16.msra.mxu0 0
        %7451 = vmatprep.subr.bf16.mxu0 0
        %7452 = vmatpush2.bf16.msra.mxu0 0
        %7453 = vmatprep.mubr.bf16.mxu0 0
        %7454 = vmatmul.mubr.bf16.gmra.mxu0 %v7419
        %v7455 = vpop.f32.mrf.mxu0
        %v7456 = vadd.f32 0.0, %v7455
        %v7457 = vpop.f32.mrf.mxu0
        %v7458 = vpop.f32.mrf.mxu0
        %v7459 = vadd.f32 0.0, %v7458
        %v7460 = vpop.f32.mrf.mxu0
        %7461 = vdwg.mxu0
        %v7462 = vadd.f32 %v7383, %v7456
        %v7463 = vadd.f32 %v7384, %v7459
        %v7465 = vlaneseq
        %v7466 = vshrl.u32 %v7465, 7
        %v7467 = vsub.s32 0, %v7466
        %v7468 = vrot.slane %v6749, %v7467
        %v7470 = vadd.f32 %v7462, %v7468
        %v7471 = vadd.f32 %v7463, %v7468
        %v7472 = vmax.f32 %v7470, 0.0
        %v7473 = vmax.f32 %v7471, 0.0
        %v7474 = vsel %vm6704, %v7472, 0.0
        %v7475 = vsel %vm6704, %v7473, 0.0
        %v7476 = vadd.f32 %v7474, %v7475
        %v7477 = vrot.slane %v7476, 4
        %v7478 = vadd.f32 %v7476, %v7477
        %v7479 = vrot.slane %v7478, 2
        %v7480 = vadd.f32 %v7478, %v7479
        %v7481 = vrot.slane %v7480, 1
        %v7482 = vadd.f32 %v7480, %v7481
        %v7483 = vmul.f32 %v7482, 0.0625
        %v7484 = vld [vmem:[%s13] sm:$0xf]
        %v7485 = vld [vmem:[%s13 + $0x4] sm:$0xf]
        %v7486 = vld [vmem:[%s13 + $0x8] sm:$0xf]
        %v7487 = vld [vmem:[%s13 + $0xc] sm:$0xf]
        %v7488 = vld [vmem:[%s13 + $0x10] sm:$0xf]
        %v7489 = vld [vmem:[%s13 + $0x14] sm:$0xf]
        %v7490 = vld [vmem:[%s13 + $0x18] sm:$0xf]
        %v7491 = vld [vmem:[%s13 + $0x1c] sm:$0xf]
        %v7492 = vpack.c.bf16 %v7483, %v7483
        %v7493 = vld [vmem:[%s14] sm:$0x1]
        %v7502 = vunpack.c.l.b16 %v7484
        %v7503 = vunpack.c.l.b16 %v7485
        %v7504 = vunpack.c.l.b16 %v7486
        %v7505 = vunpack.c.l.b16 %v7487
        %v7506 = vunpack.c.l.b16 %v7488
        %v7507 = vunpack.c.l.b16 %v7489
        %v7508 = vunpack.c.l.b16 %v7490
        %v7509 = vunpack.c.l.b16 %v7491
        %v7510 = vpack.c.b16 %v7503, %v7502
        %v7511 = vpack.c.b16 %v7505, %v7504
        %v7512 = vpack.c.b16 %v7507, %v7506
        %v7513 = vpack.c.b16 %v7509, %v7508
        %v7519 = vsel %vm6704, %v7492, 0
        %7521 = vmatprep.subr.bf16.mxu0 0
        %7522 = vmatpush1.bf16.msra.mxu0 0
        %7523 = vmatprep.subr.bf16.mxu0 0
        %7524 = vmatpush1.bf16.msra.mxu0 0
        %7525 = vmatprep.subr.bf16.mxu0 0
        %7526 = vmatpush1.bf16.msra.mxu0 0
        %7527 = vmatprep.subr.bf16.mxu0 0
        %7528 = vmatpush1.bf16.msra.mxu0 0
        %7529 = vmatprep.subr.bf16.mxu0 0
        %7530 = vmatpush1.bf16.msra.mxu0 %v7513
        %7531 = vmatprep.subr.bf16.mxu0 0
        %7532 = vmatpush1.bf16.msra.mxu0 %v7512
        %7533 = vmatprep.subr.bf16.mxu0 0
        %7534 = vmatpush1.bf16.msra.mxu0 %v7511
        %7535 = vmatprep.subr.bf16.mxu0 0
        %7536 = vmatpush1.bf16.msra.mxu0 %v7510
        %7537 = vmatprep.subr.bf16.mxu0 0
        %7538 = vmatpush2.bf16.msra.mxu0 0
        %7539 = vmatprep.subr.bf16.mxu0 0
        %7540 = vmatpush2.bf16.msra.mxu0 0
        %7541 = vmatprep.subr.bf16.mxu0 0
        %7542 = vmatpush2.bf16.msra.mxu0 0
        %7543 = vmatprep.subr.bf16.mxu0 0
        %7544 = vmatpush2.bf16.msra.mxu0 0
        %7545 = vmatprep.subr.bf16.mxu0 0
        %7546 = vmatpush2.bf16.msra.mxu0 0
        %7547 = vmatprep.subr.bf16.mxu0 0
        %7548 = vmatpush2.bf16.msra.mxu0 0
        %7549 = vmatprep.subr.bf16.mxu0 0
        %7550 = vmatpush2.bf16.msra.mxu0 0
        %7551 = vmatprep.subr.bf16.mxu0 0
        %7552 = vmatpush2.bf16.msra.mxu0 0
        %7553 = vmatprep.mubr.bf16.mxu0 0
        %7554 = vmatmul.mubr.bf16.gmra.mxu0 %v7519
        %v7555 = vpop.f32.mrf.mxu0
        %v7556 = vadd.f32 %v7493, %v7555
        %v7557 = vpop.f32.mrf.mxu0
        %v7558 = vpop.f32.mrf.mxu0
        %v7559 = vpop.f32.mrf.mxu0
        %7560 = vdwg.mxu0
        %v7561 = vld [vmem:[%s694] sm:$0x1]
        %v7562 = vld [vmem:[%s15] sm:$0xf]
        %v7563 = vpack.c.bf16 %v7561, %v7561
        %v7564 = vld [vmem:[%s16] sm:$0x1]
        %vm7565 = vcmask 64512
        %v7567 = vsel %vm7565, %v7563, 0
        %vm7569 = vcmask 1043456
        %v7571 = vsel %vm7569, %v7562, 0
        %7573 = vmatprep.subr.bf16.mxu0 0
        %7574 = vmatpush1.bf16.msra.mxu0 0
        %7575 = vmatprep.subr.bf16.mxu0 0
        %7576 = vmatpush1.bf16.msra.mxu0 0
        %7577 = vmatprep.subr.bf16.mxu0 0
        %7578 = vmatpush1.bf16.msra.mxu0 0
        %7579 = vmatprep.subr.bf16.mxu0 0
        %7580 = vmatpush1.bf16.msra.mxu0 0
        %7581 = vmatprep.subr.bf16.mxu0 0
        %7582 = vmatpush1.bf16.msra.mxu0 0
        %7583 = vmatprep.subr.bf16.mxu0 0
        %7584 = vmatpush1.bf16.msra.mxu0 0
        %7585 = vmatprep.subr.bf16.mxu0 0
        %7586 = vmatpush1.bf16.msra.mxu0 0
        %7587 = vmatprep.subr.bf16.mxu0 0
        %7588 = vmatpush1.bf16.msra.mxu0 %v7571
        %7589 = vmatprep.subr.bf16.mxu0 0
        %7590 = vmatpush2.bf16.msra.mxu0 0
        %7591 = vmatprep.subr.bf16.mxu0 0
        %7592 = vmatpush2.bf16.msra.mxu0 0
        %7593 = vmatprep.subr.bf16.mxu0 0
        %7594 = vmatpush2.bf16.msra.mxu0 0
        %7595 = vmatprep.subr.bf16.mxu0 0
        %7596 = vmatpush2.bf16.msra.mxu0 0
        %7597 = vmatprep.subr.bf16.mxu0 0
        %7598 = vmatpush2.bf16.msra.mxu0 0
        %7599 = vmatprep.subr.bf16.mxu0 0
        %7600 = vmatpush2.bf16.msra.mxu0 0
        %7601 = vmatprep.subr.bf16.mxu0 0
        %7602 = vmatpush2.bf16.msra.mxu0 0
        %7603 = vmatprep.subr.bf16.mxu0 0
        %7604 = vmatpush2.bf16.msra.mxu0 0
        %7605 = vmatprep.mubr.bf16.mxu0 0
        %7606 = vmatmul.mubr.bf16.gmra.mxu0 %v7567
        %v7607 = vpop.f32.mrf.mxu0
        %v7608 = vadd.f32 %v7564, %v7607
        %v7609 = vpop.f32.mrf.mxu0
        %v7610 = vpop.f32.mrf.mxu0
        %v7611 = vpop.f32.mrf.mxu0
        %7612 = vdwg.mxu0
        %v7613 = vld [vmem:[%s17] sm:$0xf]
        %v7614 = vld [vmem:[%s17 + $0x4] sm:$0xf]
        %v7615 = vld [vmem:[%s17 + $0x8] sm:$0xf]
        %v7616 = vld [vmem:[%s17 + $0xc] sm:$0xf]
        %v7617 = vpack.c.bf16 %v7556, %v7556
        %v7618 = vld [vmem:[%s18] sm:$0xf]
        %v7619 = vld [vmem:[%s18 + $0x4] sm:$0xf]
        %v7620 = vld [vmem:[%s18 + $0x8] sm:$0xf]
        %v7621 = vld [vmem:[%s18 + $0xc] sm:$0xf]
        %v7622 = vpack.c.bf16 %v7608, %v7608
        %v7627 = vunpack.c.l.b16 %v7618
        %v7628 = vunpack.c.l.b16 %v7619
        %v7629 = vunpack.c.l.b16 %v7620
        %v7630 = vunpack.c.l.b16 %v7621
        %v7631 = vpack.c.b16 %v7628, %v7627
        %v7632 = vpack.c.b16 %v7630, %v7629
        %v7636 = vsel %vm6812, %v7622, 0
        %7638 = vmatprep.subr.bf16.mxu0 0
        %7639 = vmatpush1.bf16.msra.mxu0 0
        %7640 = vmatprep.subr.bf16.mxu0 0
        %7641 = vmatpush1.bf16.msra.mxu0 0
        %7642 = vmatprep.subr.bf16.mxu0 0
        %7643 = vmatpush1.bf16.msra.mxu0 0
        %7644 = vmatprep.subr.bf16.mxu0 0
        %7645 = vmatpush1.bf16.msra.mxu0 0
        %7646 = vmatprep.subr.bf16.mxu0 0
        %7647 = vmatpush1.bf16.msra.mxu0 0
        %7648 = vmatprep.subr.bf16.mxu0 0
        %7649 = vmatpush1.bf16.msra.mxu0 0
        %7650 = vmatprep.subr.bf16.mxu0 0
        %7651 = vmatpush1.bf16.msra.mxu0 %v7632
        %7652 = vmatprep.subr.bf16.mxu0 0
        %7653 = vmatpush1.bf16.msra.mxu0 %v7631
        %7654 = vmatprep.subr.bf16.mxu0 0
        %7655 = vmatpush2.bf16.msra.mxu0 0
        %7656 = vmatprep.subr.bf16.mxu0 0
        %7657 = vmatpush2.bf16.msra.mxu0 0
        %7658 = vmatprep.subr.bf16.mxu0 0
        %7659 = vmatpush2.bf16.msra.mxu0 0
        %7660 = vmatprep.subr.bf16.mxu0 0
        %7661 = vmatpush2.bf16.msra.mxu0 0
        %7662 = vmatprep.subr.bf16.mxu0 0
        %7663 = vmatpush2.bf16.msra.mxu0 0
        %7664 = vmatprep.subr.bf16.mxu0 0
        %7665 = vmatpush2.bf16.msra.mxu0 0
        %7666 = vmatprep.subr.bf16.mxu0 0
        %7667 = vmatpush2.bf16.msra.mxu0 0
        %7668 = vmatprep.subr.bf16.mxu0 0
        %7669 = vmatpush2.bf16.msra.mxu0 0
        %7670 = vmatprep.mubr.bf16.mxu0 0
        %7671 = vmatmul.mubr.bf16.gmra.mxu0 %v7636
        %v7672 = vpop.f32.mrf.mxu0
        %v7673 = vadd.f32 0.0, %v7672
        %v7674 = vpop.f32.mrf.mxu0
        %v7675 = vpop.f32.mrf.mxu0
        %v7676 = vpop.f32.mrf.mxu0
        %7677 = vdwg.mxu0
        %v7682 = vunpack.c.l.b16 %v7613
        %v7683 = vunpack.c.l.b16 %v7614
        %v7684 = vunpack.c.l.b16 %v7615
        %v7685 = vunpack.c.l.b16 %v7616
        %v7686 = vpack.c.b16 %v7683, %v7682
        %v7687 = vpack.c.b16 %v7685, %v7684
        %v7691 = vsel %vm6812, %v7617, 0
        %7693 = vmatprep.subr.bf16.mxu0 0
        %7694 = vmatpush1.bf16.msra.mxu0 0
        %7695 = vmatprep.subr.bf16.mxu0 0
        %7696 = vmatpush1.bf16.msra.mxu0 0
        %7697 = vmatprep.subr.bf16.mxu0 0
        %7698 = vmatpush1.bf16.msra.mxu0 0
        %7699 = vmatprep.subr.bf16.mxu0 0
        %7700 = vmatpush1.bf16.msra.mxu0 0
        %7701 = vmatprep.subr.bf16.mxu0 0
        %7702 = vmatpush1.bf16.msra.mxu0 0
        %7703 = vmatprep.subr.bf16.mxu0 0
        %7704 = vmatpush1.bf16.msra.mxu0 0
        %7705 = vmatprep.subr.bf16.mxu0 0
        %7706 = vmatpush1.bf16.msra.mxu0 %v7687
        %7707 = vmatprep.subr.bf16.mxu0 0
        %7708 = vmatpush1.bf16.msra.mxu0 %v7686
        %7709 = vmatprep.subr.bf16.mxu0 0
        %7710 = vmatpush2.bf16.msra.mxu0 0
        %7711 = vmatprep.subr.bf16.mxu0 0
        %7712 = vmatpush2.bf16.msra.mxu0 0
        %7713 = vmatprep.subr.bf16.mxu0 0
        %7714 = vmatpush2.bf16.msra.mxu0 0
        %7715 = vmatprep.subr.bf16.mxu0 0
        %7716 = vmatpush2.bf16.msra.mxu0 0
        %7717 = vmatprep.subr.bf16.mxu0 0
        %7718 = vmatpush2.bf16.msra.mxu0 0
        %7719 = vmatprep.subr.bf16.mxu0 0
        %7720 = vmatpush2.bf16.msra.mxu0 0
        %7721 = vmatprep.subr.bf16.mxu0 0
        %7722 = vmatpush2.bf16.msra.mxu0 0
        %7723 = vmatprep.subr.bf16.mxu0 0
        %7724 = vmatpush2.bf16.msra.mxu0 0
        %7725 = vmatprep.mubr.bf16.mxu0 0
        %7726 = vmatmul.mubr.bf16.gmra.mxu0 %v7691
        %v7727 = vpop.f32.mrf.mxu0
        %v7728 = vadd.f32 %v7673, %v7727
        %v7729 = vpop.f32.mrf.mxu0
        %v7730 = vpop.f32.mrf.mxu0
        %v7731 = vpop.f32.mrf.mxu0
        %7732 = vdwg.mxu0
        %v7733 = vld [vmem:[%s19] sm:$0x1]
        %v7734 = vadd.f32 %v7728, %v7733
        %v7735 = vmax.f32 %v7734, 0.0
        %v7736 = vld [vmem:[%s20] sm:$0xf]
        %v7737 = vld [vmem:[%s20 + $0x4] sm:$0xf]
        %v7738 = vld [vmem:[%s20 + $0x8] sm:$0xf]
        %v7739 = vld [vmem:[%s20 + $0xc] sm:$0xf]
        %v7740 = vpack.c.bf16 %v7735, %v7735
        %v7741 = vld [vmem:[%s21] sm:$0x1]
        %v7746 = vunpack.c.l.b16 %v7736
        %v7747 = vunpack.c.l.b16 %v7737
        %v7748 = vunpack.c.l.b16 %v7738
        %v7749 = vunpack.c.l.b16 %v7739
        %v7750 = vpack.c.b16 %v7747, %v7746
        %v7751 = vpack.c.b16 %v7749, %v7748
        %v7755 = vsel %vm6812, %v7740, 0
        %7757 = vmatprep.subr.bf16.mxu0 0
        %7758 = vmatpush1.bf16.msra.mxu0 0
        %7759 = vmatprep.subr.bf16.mxu0 0
        %7760 = vmatpush1.bf16.msra.mxu0 0
        %7761 = vmatprep.subr.bf16.mxu0 0
        %7762 = vmatpush1.bf16.msra.mxu0 0
        %7763 = vmatprep.subr.bf16.mxu0 0
        %7764 = vmatpush1.bf16.msra.mxu0 0
        %7765 = vmatprep.subr.bf16.mxu0 0
        %7766 = vmatpush1.bf16.msra.mxu0 0
        %7767 = vmatprep.subr.bf16.mxu0 0
        %7768 = vmatpush1.bf16.msra.mxu0 0
        %7769 = vmatprep.subr.bf16.mxu0 0
        %7770 = vmatpush1.bf16.msra.mxu0 %v7751
        %7771 = vmatprep.subr.bf16.mxu0 0
        %7772 = vmatpush1.bf16.msra.mxu0 %v7750
        %7773 = vmatprep.subr.bf16.mxu0 0
        %7774 = vmatpush2.bf16.msra.mxu0 0
        %7775 = vmatprep.subr.bf16.mxu0 0
        %7776 = vmatpush2.bf16.msra.mxu0 0
        %7777 = vmatprep.subr.bf16.mxu0 0
        %7778 = vmatpush2.bf16.msra.mxu0 0
        %7779 = vmatprep.subr.bf16.mxu0 0
        %7780 = vmatpush2.bf16.msra.mxu0 0
        %7781 = vmatprep.subr.bf16.mxu0 0
        %7782 = vmatpush2.bf16.msra.mxu0 0
        %7783 = vmatprep.subr.bf16.mxu0 0
        %7784 = vmatpush2.bf16.msra.mxu0 0
        %7785 = vmatprep.subr.bf16.mxu0 0
        %7786 = vmatpush2.bf16.msra.mxu0 0
        %7787 = vmatprep.subr.bf16.mxu0 0
        %7788 = vmatpush2.bf16.msra.mxu0 0
        %7789 = vmatprep.mubr.bf16.mxu0 0
        %7790 = vmatmul.mubr.bf16.gmra.mxu0 %v7755
        %v7791 = vpop.f32.mrf.mxu0
        %v7792 = vadd.f32 %v7741, %v7791
        %v7793 = vpop.f32.mrf.mxu0
        %v7794 = vpop.f32.mrf.mxu0
        %v7795 = vpop.f32.mrf.mxu0
        %7796 = vdwg.mxu0
        %vm7797 = vcmask 8192
        %7798 = vst.msk [vmem:[%s686] sm:$0x1] %vm7797, %v7792
        %s7799 = sand.u32 %s516, 1
        %s7800 = scalar_lea.sflag [#allocation3], %s7799
        %s7801 = sand.u32 %s516, 1
        %s7802 = scalar_lea.vmem [#allocation2], %s7801
        // Predicated region
        $region109: #{hybridnet_forward.1} parent=107 // pred_check
          %p7803 = pneg %p526
        $region110: #{hybridnet_forward.1} parent=107 // pred_check_branch
          %7805 = sbr.rel (%p7803) target = $region112
        $region111: #{hybridnet_forward.1} parent=107 // pred_region
          %s7807 = ssub.s32 16, 16
          %7808 = vsyncadd %s7800, %s7807
          %s7809 = smul.addr %s36, 16
          %s7810 = scalar_lea.hbm %s22, %s7809
          %s7812 = sshll.u32 %s7802, 4
          %s7813 = int_to_ptr.vmem [resolvable:$true] %s7812
          %7815 = dma.vmem_to_hbm [thread:$0]  %s7813, 16, %s7810, %s7800
        $region112: #{hybridnet_forward.1} parent=107 // pred_fallthru
          _
      $region108: #{hybridnet_forward.1} parent=5 // pred_fallthru
        _
      %p7816 = scmp.le.s32.totalorder 2, %s31
      // Predicated region
      $region113: #{hybridnet_forward.1} parent=5 // pred_check
        %p7817 = pneg %p7816
      $region114: #{hybridnet_forward.1} parent=5 // pred_check_branch
        %7819 = sbr.rel (%p7817) target = $region116
      $region115: #{hybridnet_forward.1} parent=5 // pred_region
        %s7820 = ssub.s32 %s31, 2
        // Predicated region
        $region117: #{hybridnet_forward.1} parent=115 // pred_check
          %p7821 = pneg %p532
        $region118: #{hybridnet_forward.1} parent=115 // pred_check_branch
          %7823 = sbr.rel (%p7821) target = $region120
        $region119: #{hybridnet_forward.1} parent=115 // pred_region
          %s7824 = sand.u32 %s517, 1
          %s7825 = scalar_lea.sflag [#allocation3], %s7824
          %s7826 = sand.u32 %s517, 1
          %s7827 = scalar_lea.vmem [#allocation2], %s7826
          %7828 = dma.done %s7825, 16
        $region120: #{hybridnet_forward.1} parent=115 // pred_fallthru
          _
      $region116: #{hybridnet_forward.1} parent=5 // pred_fallthru
        _
    $region6: #{hybridnet_forward.1} parent=1 // loop_footer
      %s35 = sadd.s32 1, %s31
    $region7: #{hybridnet_forward.1} parent=1 // loop_footer_branch
      %30 = sbr.rel target = $region3
    $region8: #{hybridnet_forward.1} parent=1 // loop_exit
      _
    %7829 = vsyncpa [#allocation3], 1
    %s7830 = scalar_lea.sflag [#allocation3], 1
    %7831 = vsyncpa %s7830, 1

</llo_original>
